<compile_context>
chip_gen: v5e
topology: v5e:2x2
jax: 0.10.0
libtpu: 0.0.40
codegen_flags: <defaults>
</compile_context>

<pallas_src>
import functools

import numpy as np
import jax
import jax.numpy as jnp
from jax.experimental import pallas as pl
from jax.experimental.pallas import tpu as pltpu

_LN_EPS = 1e-5  # torch.nn.LayerNorm default


# ----------------------------------------------------------------------------
# sinusoid table (matches _get_sinusoid_encoding_table)
# ----------------------------------------------------------------------------
def _sinusoid_encoding_table(n_position, d_hid):
    pos = np.arange(n_position, dtype=np.float64)[:, None]
    hid = np.arange(d_hid, dtype=np.float64)[None, :]
    angle = pos / np.power(10000.0, 2.0 * (hid // 2) / d_hid)
    table = np.zeros((n_position, d_hid), dtype=np.float64)
    table[:, 0::2] = np.sin(angle[:, 0::2])
    table[:, 1::2] = np.cos(angle[:, 1::2])
    return jnp.asarray(table, dtype=jnp.float32)  # (n_position, d_hid)


# ----------------------------------------------------------------------------
# math helpers used both inside the kernel and by the pure-JAX reference
# ----------------------------------------------------------------------------
def _layer_norm(x, g, b):
    mu = jnp.mean(x, axis=-1, keepdims=True)
    var = jnp.mean(jnp.square(x - mu), axis=-1, keepdims=True)
    return (x - mu) * jax.lax.rsqrt(var + _LN_EPS) * g + b


def _attention(q_in, kv_in, wq, wk, wv, wo, bo, heads, dim_head):
    """CrossAttention: no bias on q/k/v, bias on output proj, softmax(QK^T * scale)V."""
    scale = dim_head ** -0.5
    q = jnp.dot(q_in, wq, preferred_element_type=jnp.float32)
    k = jnp.dot(kv_in, wk, preferred_element_type=jnp.float32)
    v = jnp.dot(kv_in, wv, preferred_element_type=jnp.float32)
    head_outs = []
    for h in range(heads):  # static unroll; lane-contiguous static slices
        sl = slice(h * dim_head, (h + 1) * dim_head)
        qh, kh, vh = q[:, sl], k[:, sl], v[:, sl]
        s = jax.lax.dot_general(qh, kh, (((1,), (1,)), ((), ())),
                                preferred_element_type=jnp.float32) * scale
        s = s - jnp.max(s, axis=-1, keepdims=True)
        p = jnp.exp(s)
        p = p / jnp.sum(p, axis=-1, keepdims=True)
        head_outs.append(jnp.dot(p, vh, preferred_element_type=jnp.float32))
    att = head_outs[0] if heads == 1 else jnp.concatenate(head_outs, axis=-1)
    return jnp.dot(att, wo, preferred_element_type=jnp.float32) + bo


# ----------------------------------------------------------------------------
# the single fused Pallas kernel: grid = (batch, decoder_block)
# ----------------------------------------------------------------------------
def _make_fused_kernel(heads, dim_head):
    def kernel(w_ref, ctx_ref, pos_ref, wpos_ref,
               ln1g, ln1b, wq1, wk1, wv1, wo1, bo1,
               ln2g, ln2b, wq2, wk2, wv2, wo2, bo2,
               ln3g, ln3b, wf1, bf1, wf2, bf2,
               lndg, lndb, wdelta,
               o_ref, h_ref):
        l = pl.program_id(1)

        # prologue at block 0: h = weight + pos_table[:N] @ W_pos  (Linear has no bias)
        @pl.when(l == 0)
        def _():
            pe = jnp.dot(pos_ref[...], wpos_ref[...],
                         preferred_element_type=jnp.float32)
            h_ref[...] = w_ref[0].astype(jnp.float32) + pe

        x = h_ref[...]                        # (N, D), carried in VMEM across blocks
        ctx = ctx_ref[0].astype(jnp.float32)  # (M, D)

        # self-attention (context = normed x)
        xn = _layer_norm(x, ln1g[0], ln1b[0])
        x = x + _attention(xn, xn, wq1[0], wk1[0], wv1[0], wo1[0], bo1[0],
                           heads, dim_head)
        # cross-attention on raw features
        xn = _layer_norm(x, ln2g[0], ln2b[0])
        x = x + _attention(xn, ctx, wq2[0], wk2[0], wv2[0], wo2[0], bo2[0],
                           heads, dim_head)
        # feed-forward (non-gated: Linear -> GELU -> Linear)
        xn = _layer_norm(x, ln3g[0], ln3b[0])
        hdn = jnp.dot(xn, wf1[0], preferred_element_type=jnp.float32) + bf1[0]
        hdn = jax.nn.gelu(hdn, approximate=True)
        x = x + jnp.dot(hdn, wf2[0], preferred_element_type=jnp.float32) + bf2[0]

        h_ref[...] = x

        # epilogue at the last block: out = weight + LayerNorm(h) @ W_delta
        @pl.when(l == pl.num_programs(1) - 1)
        def _():
            hn = _layer_norm(x, lndg[...], lndb[...])
            delta = jnp.dot(hn, wdelta[...], preferred_element_type=jnp.float32)
            o_ref[0] = (w_ref[0].astype(jnp.float32) + delta).astype(o_ref.dtype)

    return kernel


# ----------------------------------------------------------------------------
# pallas_call wrapper
# ----------------------------------------------------------------------------
@functools.partial(jax.jit, static_argnames=("heads", "dim_head"))
def weight_decoder_forward(weight, features, params, *, heads, dim_head):
    """Pallas equivalent of WeightDecoder.forward.

    weight:   (B, N, D) float32 — the LoRA weight tokens
    features: (B, M, D) float32 — conditioning context (context_dim == weight_dim)
    """
    B, N, D = weight.shape
    M = features.shape[1]
    blocks = params["blocks"]                  # stacked along leading axis L
    L = blocks["wq1"].shape[0]
    inner = heads * dim_head
    hidden = blocks["wf1"].shape[-1]
    pos_slice = params["pos_table"][:N]        # static slice of the sinusoid buffer

    def batch_spec(rows):
        return pl.BlockSpec((1, rows, D), lambda b, l: (b, 0, 0))

    def const_spec(shape):
        return pl.BlockSpec(shape, lambda b, l: (0,) * len(shape))

    def block_spec(tail):
        # per-decoder-block parameter, streamed along the block grid axis
        return pl.BlockSpec((1,) + tail, lambda b, l: (l,) + (0,) * len(tail))

    in_specs = [
        batch_spec(N), batch_spec(M),                     # weight, features
        const_spec((N, D)), const_spec((D, D)),           # pos table, W_pos
        block_spec((1, D)), block_spec((1, D)),           # ln1
        block_spec((D, inner)), block_spec((D, inner)), block_spec((D, inner)),
        block_spec((inner, D)), block_spec((1, D)),       # attn1 out + bias
        block_spec((1, D)), block_spec((1, D)),           # ln2
        block_spec((D, inner)), block_spec((D, inner)), block_spec((D, inner)),
        block_spec((inner, D)), block_spec((1, D)),       # attn2 out + bias
        block_spec((1, D)), block_spec((1, D)),           # ln3
        block_spec((D, hidden)), block_spec((1, hidden)), # ff in
        block_spec((hidden, D)), block_spec((1, D)),      # ff out
        const_spec((1, D)), const_spec((1, D)),           # delta-proj LN
        const_spec((D, D)),                               # W_delta
    ]
    args = [weight, features, pos_slice, params["w_pos"],
            blocks["ln1g"], blocks["ln1b"],
            blocks["wq1"], blocks["wk1"], blocks["wv1"], blocks["wo1"], blocks["bo1"],
            blocks["ln2g"], blocks["ln2b"],
            blocks["wq2"], blocks["wk2"], blocks["wv2"], blocks["wo2"], blocks["bo2"],
            blocks["ln3g"], blocks["ln3b"],
            blocks["wf1"], blocks["bf1"], blocks["wf2"], blocks["bf2"],
            params["ln_d_g"], params["ln_d_b"], params["w_delta"]]

    return pl.pallas_call(
        _make_fused_kernel(heads, dim_head),
        out_shape=jax.ShapeDtypeStruct((B, N, D), jnp.float32),
        grid=(B, L),
        in_specs=in_specs,
        out_specs=pl.BlockSpec((1, N, D), lambda b, l: (b, 0, 0)),
        scratch_shapes=[pltpu.VMEM((N, D), jnp.float32)],
        compiler_params=pltpu.CompilerParams(
            dimension_semantics=("parallel", "arbitrary")),
    )(*args)


# ----------------------------------------------------------------------------
# deterministic parameter construction (mirrors init_weights: xavier linears,
# zero biases, ones/zeros LayerNorm, delta_proj weight std=0.001).
# Per-block params are stacked along a leading axis for the fused kernel.
# ----------------------------------------------------------------------------
def init_params(key, weight_dim, heads, dim_head, decoder_blocks, weight_num, ff_mult=4):
    D = weight_dim
    inner = heads * dim_head
    hidden = D * ff_mult
    keys = iter(jax.random.split(key, 2 + decoder_blocks * 10))

    def xavier(k, fan_in, fan_out):
        limit = float(np.sqrt(6.0 / (fan_in + fan_out)))
        return jax.random.uniform(k, (fan_in, fan_out), jnp.float32, -limit, limit)

    def ones():
        return jnp.ones((1, D), jnp.float32)

    def zeros(n=None):
        return jnp.zeros((1, D if n is None else n), jnp.float32)

    params = {
        "pos_table": _sinusoid_encoding_table(weight_num * 2, D),
        "w_pos": xavier(next(keys), D, D),
        "ln_d_g": ones(), "ln_d_b": zeros(),
    }
    names = ["ln1g", "ln1b", "wq1", "wk1", "wv1", "wo1", "bo1",
             "ln2g", "ln2b", "wq2", "wk2", "wv2", "wo2", "bo2",
             "ln3g", "ln3b", "wf1", "bf1", "wf2", "bf2"]
    lists = {n: [] for n in names}
    for _ in range(decoder_blocks):
        lists["ln1g"].append(ones()); lists["ln1b"].append(zeros())
        lists["wq1"].append(xavier(next(keys), D, inner))
        lists["wk1"].append(xavier(next(keys), D, inner))
        lists["wv1"].append(xavier(next(keys), D, inner))
        lists["wo1"].append(xavier(next(keys), inner, D))
        lists["bo1"].append(zeros())
        lists["ln2g"].append(ones()); lists["ln2b"].append(zeros())
        lists["wq2"].append(xavier(next(keys), D, inner))
        lists["wk2"].append(xavier(next(keys), D, inner))
        lists["wv2"].append(xavier(next(keys), D, inner))
        lists["wo2"].append(xavier(next(keys), inner, D))
        lists["bo2"].append(zeros())
        lists["ln3g"].append(ones()); lists["ln3b"].append(zeros())
        lists["wf1"].append(xavier(next(keys), D, hidden))
        lists["bf1"].append(zeros(hidden))
        lists["wf2"].append(xavier(next(keys), hidden, D))
        lists["bf2"].append(zeros())
    params["blocks"] = {n: jnp.stack(v, axis=0) for n, v in lists.items()}
    params["w_delta"] = jax.random.normal(next(keys), (D, D), jnp.float32) * 1e-3
    return params


# ----------------------------------------------------------------------------
# pure-JAX (XLA) reference for correctness
# ----------------------------------------------------------------------------
def _reference_forward(weight, features, params, heads, dim_head):
    N = weight.shape[1]
    pos_emb = jnp.dot(params["pos_table"][:N], params["w_pos"],
                      preferred_element_type=jnp.float32)
    bp = params["blocks"]
    L = bp["wq1"].shape[0]

    def one(w, f):
        h = w + pos_emb
        for i in range(L):
            hn = _layer_norm(h, bp["ln1g"][i], bp["ln1b"][i])
            h = h + _attention(hn, hn, bp["wq1"][i], bp["wk1"][i], bp["wv1"][i],
                               bp["wo1"][i], bp["bo1"][i], heads, dim_head)
            hn = _layer_norm(h, bp["ln2g"][i], bp["ln2b"][i])
            h = h + _attention(hn, f, bp["wq2"][i], bp["wk2"][i], bp["wv2"][i],
                               bp["wo2"][i], bp["bo2"][i], heads, dim_head)
            hn = _layer_norm(h, bp["ln3g"][i], bp["ln3b"][i])
            ff = jax.nn.gelu(jnp.dot(hn, bp["wf1"][i]) + bp["bf1"][i],
                             approximate=True)
            h = h + jnp.dot(ff, bp["wf2"][i]) + bp["bf2"][i]
        hn = _layer_norm(h, params["ln_d_g"], params["ln_d_b"])
        return w + jnp.dot(hn, params["w_delta"])

    return jax.vmap(one)(weight, features)


if __name__ == "__main__":
    jax.config.update("jax_default_matmul_precision", "highest")

    # small shapes consistent with the module (weight_dim must exceed 64 so the
    # module's head-derivation loop yields heads >= 1; 128 keeps lanes dense)
    B, N, M = 2, 8, 8
    weight_dim = 128
    weight_num = 8
    decoder_blocks = 2

    # replicate WeightDecoder.__init__ head derivation
    heads = 1
    while weight_dim % heads == 0 and weight_dim // heads > 64:
        heads *= 2
    heads //= 2
    assert heads >= 1
    dim_head = weight_dim // heads  # -> heads=1, dim_head=128

    key = jax.random.PRNGKey(0)
    k_param, k_w, k_f = jax.random.split(key, 3)
    params = init_params(k_param, weight_dim, heads, dim_head,
                         decoder_blocks, weight_num)
    weight = jax.random.normal(k_w, (B, N, weight_dim), dtype=jnp.float32)
    features = jax.random.normal(k_f, (B, M, weight_dim), dtype=jnp.float32)

    out = weight_decoder_forward(weight, features, params,
                                 heads=heads, dim_head=dim_head)
    out = jax.block_until_ready(out)

    ref = _reference_forward(weight, features, params, heads, dim_head)
    assert out.shape == (B, N, weight_dim)
    assert jnp.allclose(out, ref, atol=2e-3, rtol=2e-3), \
        float(jnp.max(jnp.abs(out - ref)))

    print("KERNEL_OK")
</pallas_src>

<mosaic_0001>
module attributes {stable_mosaic.version = 11 : i64} {
  func.func @kernel(%arg0: i32, %arg1: i32, %arg2: memref<1x8x128xf32, #tpu.memory_space<vmem>>, %arg3: memref<1x8x128xf32, #tpu.memory_space<vmem>>, %arg4: memref<8x128xf32, #tpu.memory_space<vmem>>, %arg5: memref<128x128xf32, #tpu.memory_space<vmem>>, %arg6: memref<1x1x128xf32, #tpu.memory_space<vmem>>, %arg7: memref<1x1x128xf32, #tpu.memory_space<vmem>>, %arg8: memref<1x128x128xf32, #tpu.memory_space<vmem>>, %arg9: memref<1x128x128xf32, #tpu.memory_space<vmem>>, %arg10: memref<1x128x128xf32, #tpu.memory_space<vmem>>, %arg11: memref<1x128x128xf32, #tpu.memory_space<vmem>>, %arg12: memref<1x1x128xf32, #tpu.memory_space<vmem>>, %arg13: memref<1x1x128xf32, #tpu.memory_space<vmem>>, %arg14: memref<1x1x128xf32, #tpu.memory_space<vmem>>, %arg15: memref<1x128x128xf32, #tpu.memory_space<vmem>>, %arg16: memref<1x128x128xf32, #tpu.memory_space<vmem>>, %arg17: memref<1x128x128xf32, #tpu.memory_space<vmem>>, %arg18: memref<1x128x128xf32, #tpu.memory_space<vmem>>, %arg19: memref<1x1x128xf32, #tpu.memory_space<vmem>>, %arg20: memref<1x1x128xf32, #tpu.memory_space<vmem>>, %arg21: memref<1x1x128xf32, #tpu.memory_space<vmem>>, %arg22: memref<1x128x512xf32, #tpu.memory_space<vmem>>, %arg23: memref<1x1x512xf32, #tpu.memory_space<vmem>>, %arg24: memref<1x512x128xf32, #tpu.memory_space<vmem>>, %arg25: memref<1x1x128xf32, #tpu.memory_space<vmem>>, %arg26: memref<1x128xf32, #tpu.memory_space<vmem>>, %arg27: memref<1x128xf32, #tpu.memory_space<vmem>>, %arg28: memref<128x128xf32, #tpu.memory_space<vmem>>, %arg29: memref<1x8x128xf32, #tpu.memory_space<vmem>>, %arg30: memref<8x128xf32, #tpu.memory_space<vmem>>) attributes {dimension_semantics = [#tpu.dimension_semantics<parallel>, #tpu.dimension_semantics<arbitrary>], iteration_bounds = array<i64: 2, 2>, scalar_prefetch = 0 : i64, scratch_operands = 1 : i64, tpu.core_type = #tpu.core_type<tc>, window_params = [{transform_indices = @transform_0, window_bounds = array<i64: 1, 8, 128>}, {transform_indices = @transform_1, window_bounds = array<i64: 1, 8, 128>}, {pipeline_mode = #tpu.pipeline_mode<synchronous>, transform_indices = @transform_2, window_bounds = array<i64: 8, 128>}, {pipeline_mode = #tpu.pipeline_mode<synchronous>, transform_indices = @transform_3, window_bounds = array<i64: 128, 128>}, {transform_indices = @transform_4, window_bounds = array<i64: 1, 1, 128>}, {transform_indices = @transform_5, window_bounds = array<i64: 1, 1, 128>}, {transform_indices = @transform_6, window_bounds = array<i64: 1, 128, 128>}, {transform_indices = @transform_7, window_bounds = array<i64: 1, 128, 128>}, {transform_indices = @transform_8, window_bounds = array<i64: 1, 128, 128>}, {transform_indices = @transform_9, window_bounds = array<i64: 1, 128, 128>}, {transform_indices = @transform_10, window_bounds = array<i64: 1, 1, 128>}, {transform_indices = @transform_11, window_bounds = array<i64: 1, 1, 128>}, {transform_indices = @transform_12, window_bounds = array<i64: 1, 1, 128>}, {transform_indices = @transform_13, window_bounds = array<i64: 1, 128, 128>}, {transform_indices = @transform_14, window_bounds = array<i64: 1, 128, 128>}, {transform_indices = @transform_15, window_bounds = array<i64: 1, 128, 128>}, {transform_indices = @transform_16, window_bounds = array<i64: 1, 128, 128>}, {transform_indices = @transform_17, window_bounds = array<i64: 1, 1, 128>}, {transform_indices = @transform_18, window_bounds = array<i64: 1, 1, 128>}, {transform_indices = @transform_19, window_bounds = array<i64: 1, 1, 128>}, {transform_indices = @transform_20, window_bounds = array<i64: 1, 128, 512>}, {transform_indices = @transform_21, window_bounds = array<i64: 1, 1, 512>}, {transform_indices = @transform_22, window_bounds = array<i64: 1, 512, 128>}, {transform_indices = @transform_23, window_bounds = array<i64: 1, 1, 128>}, {pipeline_mode = #tpu.pipeline_mode<synchronous>, transform_indices = @transform_24, window_bounds = array<i64: 1, 128>}, {pipeline_mode = #tpu.pipeline_mode<synchronous>, transform_indices = @transform_25, window_bounds = array<i64: 1, 128>}, {pipeline_mode = #tpu.pipeline_mode<synchronous>, transform_indices = @transform_26, window_bounds = array<i64: 128, 128>}, {transform_indices = @transform_27, window_bounds = array<i64: 1, 8, 128>}]} {
    %c0_i32 = arith.constant 0 : i32
    %0 = arith.cmpi eq, %arg1, %c0_i32 : i32
    %1 = arith.extui %0 : i1 to i32
    %c0_i32_0 = arith.constant 0 : i32
    %2 = arith.cmpi ne, %1, %c0_i32_0 : i32
    scf.if %2 {
      %c0_106 = arith.constant 0 : index
      %c0_107 = arith.constant 0 : index
      %176 = vector.load %arg4[%c0_106, %c0_107] : memref<8x128xf32, #tpu.memory_space<vmem>>, vector<8x128xf32>
      %c0_108 = arith.constant 0 : index
      %c0_109 = arith.constant 0 : index
      %177 = vector.load %arg5[%c0_108, %c0_109] : memref<128x128xf32, #tpu.memory_space<vmem>>, vector<128x128xf32>
      %cst_110 = arith.constant dense<0.000000e+00> : vector<8x128xf32>
      %178 = tpu.matmul %176, %177, %cst_110 {dimension_numbers = #tpu.dot_dimension_numbers<[1], [0], [0], [1], [0, 0, 1, 1], [], []>, precision = #tpu.contract_precision<fp32>} : vector<8x128xf32>, vector<128x128xf32>, vector<8x128xf32> -> vector<8x128xf32>
      %c0_111 = arith.constant 0 : index
      %c0_112 = arith.constant 0 : index
      %c0_113 = arith.constant 0 : index
      %179 = vector.load %arg2[%c0_111, %c0_112, %c0_113] : memref<1x8x128xf32, #tpu.memory_space<vmem>>, vector<1x8x128xf32>
      %180 = vector.shape_cast %179 : vector<1x8x128xf32> to vector<8x128xf32>
      %181 = arith.addf %180, %178 : vector<8x128xf32>
      %c0_114 = arith.constant 0 : index
      %c0_115 = arith.constant 0 : index
      %182 = vector.load %arg30[%c0_114, %c0_115] : memref<8x128xf32, #tpu.memory_space<vmem>>, vector<8x128xf32>
      tpu.vector_store %arg30[%c0_114, %c0_115], %181 {strides = array<i32>} : memref<8x128xf32, #tpu.memory_space<vmem>>, vector<8x128xf32>,
    } else {
    }
    %c0 = arith.constant 0 : index
    %c0_1 = arith.constant 0 : index
    %3 = vector.load %arg30[%c0, %c0_1] : memref<8x128xf32, #tpu.memory_space<vmem>>, vector<8x128xf32>
    %c0_2 = arith.constant 0 : index
    %c0_3 = arith.constant 0 : index
    %c0_4 = arith.constant 0 : index
    %4 = vector.load %arg3[%c0_2, %c0_3, %c0_4] : memref<1x8x128xf32, #tpu.memory_space<vmem>>, vector<1x8x128xf32>
    %5 = vector.shape_cast %4 : vector<1x8x128xf32> to vector<8x128xf32>
    %c0_5 = arith.constant 0 : index
    %c0_6 = arith.constant 0 : index
    %c0_7 = arith.constant 0 : index
    %6 = vector.load %arg6[%c0_5, %c0_6, %c0_7] : memref<1x1x128xf32, #tpu.memory_space<vmem>>, vector<1x1x128xf32>
    %7 = vector.shape_cast %6 : vector<1x1x128xf32> to vector<1x128xf32>
    %c0_8 = arith.constant 0 : index
    %c0_9 = arith.constant 0 : index
    %c0_10 = arith.constant 0 : index
    %8 = vector.load %arg7[%c0_8, %c0_9, %c0_10] : memref<1x1x128xf32, #tpu.memory_space<vmem>>, vector<1x1x128xf32>
    %9 = vector.shape_cast %8 : vector<1x1x128xf32> to vector<1x128xf32>
    %cst = arith.constant dense<0.000000e+00> : vector<8xf32>
    %10 = vector.multi_reduction <add>, %3, %cst [1] : vector<8x128xf32> to vector<8xf32>
    %11 = vector.shape_cast %10 : vector<8xf32> to vector<8x1xf32>
    %cst_11 = arith.constant 1.280000e+02 : f32
    %12 = vector.broadcast %cst_11 : f32 to vector<8x1xf32>
    %13 = arith.divf %11, %12 : vector<8x1xf32>
    %14 = vector.broadcast %13 : vector<8x1xf32> to vector<8x128xf32>
    %15 = arith.subf %3, %14 : vector<8x128xf32>
    %16 = arith.mulf %15, %15 : vector<8x128xf32>
    %cst_12 = arith.constant dense<0.000000e+00> : vector<8xf32>
    %17 = vector.multi_reduction <add>, %16, %cst_12 [1] : vector<8x128xf32> to vector<8xf32>
    %18 = vector.shape_cast %17 : vector<8xf32> to vector<8x1xf32>
    %cst_13 = arith.constant 1.280000e+02 : f32
    %19 = vector.broadcast %cst_13 : f32 to vector<8x1xf32>
    %20 = arith.divf %18, %19 : vector<8x1xf32>
    %21 = vector.broadcast %13 : vector<8x1xf32> to vector<8x128xf32>
    %22 = arith.subf %3, %21 : vector<8x128xf32>
    %cst_14 = arith.constant 9.99999974E-6 : f32
    %23 = vector.broadcast %cst_14 : f32 to vector<8x1xf32>
    %24 = arith.addf %20, %23 : vector<8x1xf32>
    %25 = math.rsqrt %24 : vector<8x1xf32>
    %26 = vector.broadcast %25 : vector<8x1xf32> to vector<8x128xf32>
    %27 = arith.mulf %22, %26 : vector<8x128xf32>
    %28 = vector.broadcast %7 : vector<1x128xf32> to vector<8x128xf32>
    %29 = arith.mulf %27, %28 : vector<8x128xf32>
    %30 = vector.broadcast %9 : vector<1x128xf32> to vector<8x128xf32>
    %31 = arith.addf %29, %30 : vector<8x128xf32>
    %c0_15 = arith.constant 0 : index
    %c0_16 = arith.constant 0 : index
    %c0_17 = arith.constant 0 : index
    %32 = vector.load %arg8[%c0_15, %c0_16, %c0_17] : memref<1x128x128xf32, #tpu.memory_space<vmem>>, vector<1x128x128xf32>
    %33 = vector.shape_cast %32 : vector<1x128x128xf32> to vector<128x128xf32>
    %c0_18 = arith.constant 0 : index
    %c0_19 = arith.constant 0 : index
    %c0_20 = arith.constant 0 : index
    %34 = vector.load %arg9[%c0_18, %c0_19, %c0_20] : memref<1x128x128xf32, #tpu.memory_space<vmem>>, vector<1x128x128xf32>
    %35 = vector.shape_cast %34 : vector<1x128x128xf32> to vector<128x128xf32>
    %c0_21 = arith.constant 0 : index
    %c0_22 = arith.constant 0 : index
    %c0_23 = arith.constant 0 : index
    %36 = vector.load %arg10[%c0_21, %c0_22, %c0_23] : memref<1x128x128xf32, #tpu.memory_space<vmem>>, vector<1x128x128xf32>
    %37 = vector.shape_cast %36 : vector<1x128x128xf32> to vector<128x128xf32>
    %c0_24 = arith.constant 0 : index
    %c0_25 = arith.constant 0 : index
    %c0_26 = arith.constant 0 : index
    %38 = vector.load %arg11[%c0_24, %c0_25, %c0_26] : memref<1x128x128xf32, #tpu.memory_space<vmem>>, vector<1x128x128xf32>
    %39 = vector.shape_cast %38 : vector<1x128x128xf32> to vector<128x128xf32>
    %c0_27 = arith.constant 0 : index
    %c0_28 = arith.constant 0 : index
    %c0_29 = arith.constant 0 : index
    %40 = vector.load %arg12[%c0_27, %c0_28, %c0_29] : memref<1x1x128xf32, #tpu.memory_space<vmem>>, vector<1x1x128xf32>
    %41 = vector.shape_cast %40 : vector<1x1x128xf32> to vector<1x128xf32>
    %cst_30 = arith.constant dense<0.000000e+00> : vector<8x128xf32>
    %42 = tpu.matmul %31, %33, %cst_30 {dimension_numbers = #tpu.dot_dimension_numbers<[1], [0], [0], [1], [0, 0, 1, 1], [], []>, precision = #tpu.contract_precision<fp32>} : vector<8x128xf32>, vector<128x128xf32>, vector<8x128xf32> -> vector<8x128xf32>
    %cst_31 = arith.constant dense<0.000000e+00> : vector<8x128xf32>
    %43 = tpu.matmul %31, %35, %cst_31 {dimension_numbers = #tpu.dot_dimension_numbers<[1], [0], [0], [1], [0, 0, 1, 1], [], []>, precision = #tpu.contract_precision<fp32>} : vector<8x128xf32>, vector<128x128xf32>, vector<8x128xf32> -> vector<8x128xf32>
    %cst_32 = arith.constant dense<0.000000e+00> : vector<8x128xf32>
    %44 = tpu.matmul %31, %37, %cst_32 {dimension_numbers = #tpu.dot_dimension_numbers<[1], [0], [0], [1], [0, 0, 1, 1], [], []>, precision = #tpu.contract_precision<fp32>} : vector<8x128xf32>, vector<128x128xf32>, vector<8x128xf32> -> vector<8x128xf32>
    %cst_33 = arith.constant dense<0.000000e+00> : vector<8x8xf32>
    %45 = tpu.matmul %42, %43, %cst_33 {dimension_numbers = #tpu.dot_dimension_numbers<[1], [1], [0], [0], [0, 0, 1, 0], [], []>, precision = #tpu.contract_precision<fp32>} : vector<8x128xf32>, vector<8x128xf32>, vector<8x8xf32> -> vector<8x8xf32>
    %cst_34 = arith.constant 0.0883883461 : f32
    %46 = vector.broadcast %cst_34 : f32 to vector<8x8xf32>
    %47 = arith.mulf %45, %46 : vector<8x8xf32>
    %cst_35 = arith.constant dense<0xFF800000> : vector<8xf32>
    %48 = vector.multi_reduction <maximumf>, %47, %cst_35 [1] : vector<8x8xf32> to vector<8xf32>
    %49 = vector.shape_cast %48 : vector<8xf32> to vector<8x1xf32>
    %50 = vector.broadcast %49 : vector<8x1xf32> to vector<8x8xf32>
    %51 = arith.subf %47, %50 : vector<8x8xf32>
    %52 = math.exp %51 : vector<8x8xf32>
    %cst_36 = arith.constant dense<0.000000e+00> : vector<8xf32>
    %53 = vector.multi_reduction <add>, %52, %cst_36 [1] : vector<8x8xf32> to vector<8xf32>
    %54 = vector.shape_cast %53 : vector<8xf32> to vector<8x1xf32>
    %55 = vector.broadcast %54 : vector<8x1xf32> to vector<8x8xf32>
    %56 = arith.divf %52, %55 : vector<8x8xf32>
    %cst_37 = arith.constant dense<0.000000e+00> : vector<8x128xf32>
    %57 = tpu.matmul %56, %44, %cst_37 {dimension_numbers = #tpu.dot_dimension_numbers<[1], [0], [0], [1], [0, 0, 1, 1], [], []>, precision = #tpu.contract_precision<fp32>} : vector<8x8xf32>, vector<8x128xf32>, vector<8x128xf32> -> vector<8x128xf32>
    %cst_38 = arith.constant dense<0.000000e+00> : vector<8x128xf32>
    %58 = tpu.matmul %57, %39, %cst_38 {dimension_numbers = #tpu.dot_dimension_numbers<[1], [0], [0], [1], [0, 0, 1, 1], [], []>, precision = #tpu.contract_precision<fp32>} : vector<8x128xf32>, vector<128x128xf32>, vector<8x128xf32> -> vector<8x128xf32>
    %59 = vector.broadcast %41 : vector<1x128xf32> to vector<8x128xf32>
    %60 = arith.addf %58, %59 : vector<8x128xf32>
    %61 = arith.addf %3, %60 : vector<8x128xf32>
    %c0_39 = arith.constant 0 : index
    %c0_40 = arith.constant 0 : index
    %c0_41 = arith.constant 0 : index
    %62 = vector.load %arg13[%c0_39, %c0_40, %c0_41] : memref<1x1x128xf32, #tpu.memory_space<vmem>>, vector<1x1x128xf32>
    %63 = vector.shape_cast %62 : vector<1x1x128xf32> to vector<1x128xf32>
    %c0_42 = arith.constant 0 : index
    %c0_43 = arith.constant 0 : index
    %c0_44 = arith.constant 0 : index
    %64 = vector.load %arg14[%c0_42, %c0_43, %c0_44] : memref<1x1x128xf32, #tpu.memory_space<vmem>>, vector<1x1x128xf32>
    %65 = vector.shape_cast %64 : vector<1x1x128xf32> to vector<1x128xf32>
    %cst_45 = arith.constant dense<0.000000e+00> : vector<8xf32>
    %66 = vector.multi_reduction <add>, %61, %cst_45 [1] : vector<8x128xf32> to vector<8xf32>
    %67 = vector.shape_cast %66 : vector<8xf32> to vector<8x1xf32>
    %cst_46 = arith.constant 1.280000e+02 : f32
    %68 = vector.broadcast %cst_46 : f32 to vector<8x1xf32>
    %69 = arith.divf %67, %68 : vector<8x1xf32>
    %70 = vector.broadcast %69 : vector<8x1xf32> to vector<8x128xf32>
    %71 = arith.subf %61, %70 : vector<8x128xf32>
    %72 = arith.mulf %71, %71 : vector<8x128xf32>
    %cst_47 = arith.constant dense<0.000000e+00> : vector<8xf32>
    %73 = vector.multi_reduction <add>, %72, %cst_47 [1] : vector<8x128xf32> to vector<8xf32>
    %74 = vector.shape_cast %73 : vector<8xf32> to vector<8x1xf32>
    %cst_48 = arith.constant 1.280000e+02 : f32
    %75 = vector.broadcast %cst_48 : f32 to vector<8x1xf32>
    %76 = arith.divf %74, %75 : vector<8x1xf32>
    %77 = vector.broadcast %69 : vector<8x1xf32> to vector<8x128xf32>
    %78 = arith.subf %61, %77 : vector<8x128xf32>
    %cst_49 = arith.constant 9.99999974E-6 : f32
    %79 = vector.broadcast %cst_49 : f32 to vector<8x1xf32>
    %80 = arith.addf %76, %79 : vector<8x1xf32>
    %81 = math.rsqrt %80 : vector<8x1xf32>
    %82 = vector.broadcast %81 : vector<8x1xf32> to vector<8x128xf32>
    %83 = arith.mulf %78, %82 : vector<8x128xf32>
    %84 = vector.broadcast %63 : vector<1x128xf32> to vector<8x128xf32>
    %85 = arith.mulf %83, %84 : vector<8x128xf32>
    %86 = vector.broadcast %65 : vector<1x128xf32> to vector<8x128xf32>
    %87 = arith.addf %85, %86 : vector<8x128xf32>
    %c0_50 = arith.constant 0 : index
    %c0_51 = arith.constant 0 : index
    %c0_52 = arith.constant 0 : index
    %88 = vector.load %arg15[%c0_50, %c0_51, %c0_52] : memref<1x128x128xf32, #tpu.memory_space<vmem>>, vector<1x128x128xf32>
    %89 = vector.shape_cast %88 : vector<1x128x128xf32> to vector<128x128xf32>
    %c0_53 = arith.constant 0 : index
    %c0_54 = arith.constant 0 : index
    %c0_55 = arith.constant 0 : index
    %90 = vector.load %arg16[%c0_53, %c0_54, %c0_55] : memref<1x128x128xf32, #tpu.memory_space<vmem>>, vector<1x128x128xf32>
    %91 = vector.shape_cast %90 : vector<1x128x128xf32> to vector<128x128xf32>
    %c0_56 = arith.constant 0 : index
    %c0_57 = arith.constant 0 : index
    %c0_58 = arith.constant 0 : index
    %92 = vector.load %arg17[%c0_56, %c0_57, %c0_58] : memref<1x128x128xf32, #tpu.memory_space<vmem>>, vector<1x128x128xf32>
    %93 = vector.shape_cast %92 : vector<1x128x128xf32> to vector<128x128xf32>
    %c0_59 = arith.constant 0 : index
    %c0_60 = arith.constant 0 : index
    %c0_61 = arith.constant 0 : index
    %94 = vector.load %arg18[%c0_59, %c0_60, %c0_61] : memref<1x128x128xf32, #tpu.memory_space<vmem>>, vector<1x128x128xf32>
    %95 = vector.shape_cast %94 : vector<1x128x128xf32> to vector<128x128xf32>
    %c0_62 = arith.constant 0 : index
    %c0_63 = arith.constant 0 : index
    %c0_64 = arith.constant 0 : index
    %96 = vector.load %arg19[%c0_62, %c0_63, %c0_64] : memref<1x1x128xf32, #tpu.memory_space<vmem>>, vector<1x1x128xf32>
    %97 = vector.shape_cast %96 : vector<1x1x128xf32> to vector<1x128xf32>
    %cst_65 = arith.constant dense<0.000000e+00> : vector<8x128xf32>
    %98 = tpu.matmul %87, %89, %cst_65 {dimension_numbers = #tpu.dot_dimension_numbers<[1], [0], [0], [1], [0, 0, 1, 1], [], []>, precision = #tpu.contract_precision<fp32>} : vector<8x128xf32>, vector<128x128xf32>, vector<8x128xf32> -> vector<8x128xf32>
    %cst_66 = arith.constant dense<0.000000e+00> : vector<8x128xf32>
    %99 = tpu.matmul %5, %91, %cst_66 {dimension_numbers = #tpu.dot_dimension_numbers<[1], [0], [0], [1], [0, 0, 1, 1], [], []>, precision = #tpu.contract_precision<fp32>} : vector<8x128xf32>, vector<128x128xf32>, vector<8x128xf32> -> vector<8x128xf32>
    %cst_67 = arith.constant dense<0.000000e+00> : vector<8x128xf32>
    %100 = tpu.matmul %5, %93, %cst_67 {dimension_numbers = #tpu.dot_dimension_numbers<[1], [0], [0], [1], [0, 0, 1, 1], [], []>, precision = #tpu.contract_precision<fp32>} : vector<8x128xf32>, vector<128x128xf32>, vector<8x128xf32> -> vector<8x128xf32>
    %cst_68 = arith.constant dense<0.000000e+00> : vector<8x8xf32>
    %101 = tpu.matmul %98, %99, %cst_68 {dimension_numbers = #tpu.dot_dimension_numbers<[1], [1], [0], [0], [0, 0, 1, 0], [], []>, precision = #tpu.contract_precision<fp32>} : vector<8x128xf32>, vector<8x128xf32>, vector<8x8xf32> -> vector<8x8xf32>
    %cst_69 = arith.constant 0.0883883461 : f32
    %102 = vector.broadcast %cst_69 : f32 to vector<8x8xf32>
    %103 = arith.mulf %101, %102 : vector<8x8xf32>
    %cst_70 = arith.constant dense<0xFF800000> : vector<8xf32>
    %104 = vector.multi_reduction <maximumf>, %103, %cst_70 [1] : vector<8x8xf32> to vector<8xf32>
    %105 = vector.shape_cast %104 : vector<8xf32> to vector<8x1xf32>
    %106 = vector.broadcast %105 : vector<8x1xf32> to vector<8x8xf32>
    %107 = arith.subf %103, %106 : vector<8x8xf32>
    %108 = math.exp %107 : vector<8x8xf32>
    %cst_71 = arith.constant dense<0.000000e+00> : vector<8xf32>
    %109 = vector.multi_reduction <add>, %108, %cst_71 [1] : vector<8x8xf32> to vector<8xf32>
    %110 = vector.shape_cast %109 : vector<8xf32> to vector<8x1xf32>
    %111 = vector.broadcast %110 : vector<8x1xf32> to vector<8x8xf32>
    %112 = arith.divf %108, %111 : vector<8x8xf32>
    %cst_72 = arith.constant dense<0.000000e+00> : vector<8x128xf32>
    %113 = tpu.matmul %112, %100, %cst_72 {dimension_numbers = #tpu.dot_dimension_numbers<[1], [0], [0], [1], [0, 0, 1, 1], [], []>, precision = #tpu.contract_precision<fp32>} : vector<8x8xf32>, vector<8x128xf32>, vector<8x128xf32> -> vector<8x128xf32>
    %cst_73 = arith.constant dense<0.000000e+00> : vector<8x128xf32>
    %114 = tpu.matmul %113, %95, %cst_73 {dimension_numbers = #tpu.dot_dimension_numbers<[1], [0], [0], [1], [0, 0, 1, 1], [], []>, precision = #tpu.contract_precision<fp32>} : vector<8x128xf32>, vector<128x128xf32>, vector<8x128xf32> -> vector<8x128xf32>
    %115 = vector.broadcast %97 : vector<1x128xf32> to vector<8x128xf32>
    %116 = arith.addf %114, %115 : vector<8x128xf32>
    %117 = arith.addf %61, %116 : vector<8x128xf32>
    %c0_74 = arith.constant 0 : index
    %c0_75 = arith.constant 0 : index
    %c0_76 = arith.constant 0 : index
    %118 = vector.load %arg20[%c0_74, %c0_75, %c0_76] : memref<1x1x128xf32, #tpu.memory_space<vmem>>, vector<1x1x128xf32>
    %119 = vector.shape_cast %118 : vector<1x1x128xf32> to vector<1x128xf32>
    %c0_77 = arith.constant 0 : index
    %c0_78 = arith.constant 0 : index
    %c0_79 = arith.constant 0 : index
    %120 = vector.load %arg21[%c0_77, %c0_78, %c0_79] : memref<1x1x128xf32, #tpu.memory_space<vmem>>, vector<1x1x128xf32>
    %121 = vector.shape_cast %120 : vector<1x1x128xf32> to vector<1x128xf32>
    %cst_80 = arith.constant dense<0.000000e+00> : vector<8xf32>
    %122 = vector.multi_reduction <add>, %117, %cst_80 [1] : vector<8x128xf32> to vector<8xf32>
    %123 = vector.shape_cast %122 : vector<8xf32> to vector<8x1xf32>
    %cst_81 = arith.constant 1.280000e+02 : f32
    %124 = vector.broadcast %cst_81 : f32 to vector<8x1xf32>
    %125 = arith.divf %123, %124 : vector<8x1xf32>
    %126 = vector.broadcast %125 : vector<8x1xf32> to vector<8x128xf32>
    %127 = arith.subf %117, %126 : vector<8x128xf32>
    %128 = arith.mulf %127, %127 : vector<8x128xf32>
    %cst_82 = arith.constant dense<0.000000e+00> : vector<8xf32>
    %129 = vector.multi_reduction <add>, %128, %cst_82 [1] : vector<8x128xf32> to vector<8xf32>
    %130 = vector.shape_cast %129 : vector<8xf32> to vector<8x1xf32>
    %cst_83 = arith.constant 1.280000e+02 : f32
    %131 = vector.broadcast %cst_83 : f32 to vector<8x1xf32>
    %132 = arith.divf %130, %131 : vector<8x1xf32>
    %133 = vector.broadcast %125 : vector<8x1xf32> to vector<8x128xf32>
    %134 = arith.subf %117, %133 : vector<8x128xf32>
    %cst_84 = arith.constant 9.99999974E-6 : f32
    %135 = vector.broadcast %cst_84 : f32 to vector<8x1xf32>
    %136 = arith.addf %132, %135 : vector<8x1xf32>
    %137 = math.rsqrt %136 : vector<8x1xf32>
    %138 = vector.broadcast %137 : vector<8x1xf32> to vector<8x128xf32>
    %139 = arith.mulf %134, %138 : vector<8x128xf32>
    %140 = vector.broadcast %119 : vector<1x128xf32> to vector<8x128xf32>
    %141 = arith.mulf %139, %140 : vector<8x128xf32>
    %142 = vector.broadcast %121 : vector<1x128xf32> to vector<8x128xf32>
    %143 = arith.addf %141, %142 : vector<8x128xf32>
    %c0_85 = arith.constant 0 : index
    %c0_86 = arith.constant 0 : index
    %c0_87 = arith.constant 0 : index
    %144 = vector.load %arg22[%c0_85, %c0_86, %c0_87] : memref<1x128x512xf32, #tpu.memory_space<vmem>>, vector<1x128x512xf32>
    %145 = vector.shape_cast %144 : vector<1x128x512xf32> to vector<128x512xf32>
    %cst_88 = arith.constant dense<0.000000e+00> : vector<8x512xf32>
    %146 = tpu.matmul %143, %145, %cst_88 {dimension_numbers = #tpu.dot_dimension_numbers<[1], [0], [0], [1], [0, 0, 1, 1], [], []>, precision = #tpu.contract_precision<fp32>} : vector<8x128xf32>, vector<128x512xf32>, vector<8x512xf32> -> vector<8x512xf32>
    %c0_89 = arith.constant 0 : index
    %c0_90 = arith.constant 0 : index
    %c0_91 = arith.constant 0 : index
    %147 = vector.load %arg23[%c0_89, %c0_90, %c0_91] : memref<1x1x512xf32, #tpu.memory_space<vmem>>, vector<1x1x512xf32>
    %148 = vector.shape_cast %147 : vector<1x1x512xf32> to vector<1x512xf32>
    %149 = vector.broadcast %148 : vector<1x512xf32> to vector<8x512xf32>
    %150 = arith.addf %146, %149 : vector<8x512xf32>
    %151 = arith.mulf %150, %150 : vector<8x512xf32>
    %152 = arith.mulf %150, %151 : vector<8x512xf32>
    %cst_92 = arith.constant 4.471500e-02 : f32
    %153 = vector.broadcast %cst_92 : f32 to vector<8x512xf32>
    %154 = arith.mulf %153, %152 : vector<8x512xf32>
    %155 = arith.addf %150, %154 : vector<8x512xf32>
    %cst_93 = arith.constant 0.797884583 : f32
    %156 = vector.broadcast %cst_93 : f32 to vector<8x512xf32>
    %157 = arith.mulf %156, %155 : vector<8x512xf32>
    %158 = math.tanh %157 : vector<8x512xf32>
    %cst_94 = arith.constant 1.000000e+00 : f32
    %159 = vector.broadcast %cst_94 : f32 to vector<8x512xf32>
    %160 = arith.addf %159, %158 : vector<8x512xf32>
    %cst_95 = arith.constant 5.000000e-01 : f32
    %161 = vector.broadcast %cst_95 : f32 to vector<8x512xf32>
    %162 = arith.mulf %161, %160 : vector<8x512xf32>
    %163 = arith.mulf %150, %162 : vector<8x512xf32>
    %c0_96 = arith.constant 0 : index
    %c0_97 = arith.constant 0 : index
    %c0_98 = arith.constant 0 : index
    %164 = vector.load %arg24[%c0_96, %c0_97, %c0_98] : memref<1x512x128xf32, #tpu.memory_space<vmem>>, vector<1x512x128xf32>
    %165 = vector.shape_cast %164 : vector<1x512x128xf32> to vector<512x128xf32>
    %cst_99 = arith.constant dense<0.000000e+00> : vector<8x128xf32>
    %166 = tpu.matmul %163, %165, %cst_99 {dimension_numbers = #tpu.dot_dimension_numbers<[1], [0], [0], [1], [0, 0, 1, 1], [], []>, precision = #tpu.contract_precision<fp32>} : vector<8x512xf32>, vector<512x128xf32>, vector<8x128xf32> -> vector<8x128xf32>
    %167 = arith.addf %117, %166 : vector<8x128xf32>
    %c0_100 = arith.constant 0 : index
    %c0_101 = arith.constant 0 : index
    %c0_102 = arith.constant 0 : index
    %168 = vector.load %arg25[%c0_100, %c0_101, %c0_102] : memref<1x1x128xf32, #tpu.memory_space<vmem>>, vector<1x1x128xf32>
    %169 = vector.shape_cast %168 : vector<1x1x128xf32> to vector<1x128xf32>
    %170 = vector.broadcast %169 : vector<1x128xf32> to vector<8x128xf32>
    %171 = arith.addf %167, %170 : vector<8x128xf32>
    %c0_103 = arith.constant 0 : index
    %c0_104 = arith.constant 0 : index
    %172 = vector.load %arg30[%c0_103, %c0_104] : memref<8x128xf32, #tpu.memory_space<vmem>>, vector<8x128xf32>
    tpu.vector_store %arg30[%c0_103, %c0_104], %171 {strides = array<i32>} : memref<8x128xf32, #tpu.memory_space<vmem>>, vector<8x128xf32>,
    %c1_i32 = arith.constant 1 : i32
    %173 = arith.cmpi eq, %arg1, %c1_i32 : i32
    %174 = arith.extui %173 : i1 to i32
    %c0_i32_105 = arith.constant 0 : i32
    %175 = arith.cmpi ne, %174, %c0_i32_105 : i32
    scf.if %175 {
      %c0_106 = arith.constant 0 : index
      %c0_107 = arith.constant 0 : index
      %176 = vector.load %arg26[%c0_106, %c0_107] : memref<1x128xf32, #tpu.memory_space<vmem>>, vector<1x128xf32>
      %c0_108 = arith.constant 0 : index
      %c0_109 = arith.constant 0 : index
      %177 = vector.load %arg27[%c0_108, %c0_109] : memref<1x128xf32, #tpu.memory_space<vmem>>, vector<1x128xf32>
      %cst_110 = arith.constant dense<0.000000e+00> : vector<8xf32>
      %178 = vector.multi_reduction <add>, %171, %cst_110 [1] : vector<8x128xf32> to vector<8xf32>
      %179 = vector.shape_cast %178 : vector<8xf32> to vector<8x1xf32>
      %cst_111 = arith.constant 1.280000e+02 : f32
      %180 = vector.broadcast %cst_111 : f32 to vector<8x1xf32>
      %181 = arith.divf %179, %180 : vector<8x1xf32>
      %182 = vector.broadcast %181 : vector<8x1xf32> to vector<8x128xf32>
      %183 = arith.subf %171, %182 : vector<8x128xf32>
      %184 = arith.mulf %183, %183 : vector<8x128xf32>
      %cst_112 = arith.constant dense<0.000000e+00> : vector<8xf32>
      %185 = vector.multi_reduction <add>, %184, %cst_112 [1] : vector<8x128xf32> to vector<8xf32>
      %186 = vector.shape_cast %185 : vector<8xf32> to vector<8x1xf32>
      %cst_113 = arith.constant 1.280000e+02 : f32
      %187 = vector.broadcast %cst_113 : f32 to vector<8x1xf32>
      %188 = arith.divf %186, %187 : vector<8x1xf32>
      %189 = vector.broadcast %181 : vector<8x1xf32> to vector<8x128xf32>
      %190 = arith.subf %171, %189 : vector<8x128xf32>
      %cst_114 = arith.constant 9.99999974E-6 : f32
      %191 = vector.broadcast %cst_114 : f32 to vector<8x1xf32>
      %192 = arith.addf %188, %191 : vector<8x1xf32>
      %193 = math.rsqrt %192 : vector<8x1xf32>
      %194 = vector.broadcast %193 : vector<8x1xf32> to vector<8x128xf32>
      %195 = arith.mulf %190, %194 : vector<8x128xf32>
      %196 = vector.broadcast %176 : vector<1x128xf32> to vector<8x128xf32>
      %197 = arith.mulf %195, %196 : vector<8x128xf32>
      %198 = vector.broadcast %177 : vector<1x128xf32> to vector<8x128xf32>
      %199 = arith.addf %197, %198 : vector<8x128xf32>
      %c0_115 = arith.constant 0 : index
      %c0_116 = arith.constant 0 : index
      %200 = vector.load %arg28[%c0_115, %c0_116] : memref<128x128xf32, #tpu.memory_space<vmem>>, vector<128x128xf32>
      %cst_117 = arith.constant dense<0.000000e+00> : vector<8x128xf32>
      %201 = tpu.matmul %199, %200, %cst_117 {dimension_numbers = #tpu.dot_dimension_numbers<[1], [0], [0], [1], [0, 0, 1, 1], [], []>, precision = #tpu.contract_precision<fp32>} : vector<8x128xf32>, vector<128x128xf32>, vector<8x128xf32> -> vector<8x128xf32>
      %c0_118 = arith.constant 0 : index
      %c0_119 = arith.constant 0 : index
      %c0_120 = arith.constant 0 : index
      %202 = vector.load %arg2[%c0_118, %c0_119, %c0_120] : memref<1x8x128xf32, #tpu.memory_space<vmem>>, vector<1x8x128xf32>
      %203 = vector.shape_cast %202 : vector<1x8x128xf32> to vector<8x128xf32>
      %204 = arith.addf %203, %201 : vector<8x128xf32>
      %c0_121 = arith.constant 0 : index
      %c0_122 = arith.constant 0 : index
      %c0_123 = arith.constant 0 : index
      %205 = vector.load %arg29[%c0_121, %c0_122, %c0_123] : memref<1x8x128xf32, #tpu.memory_space<vmem>>, vector<1x8x128xf32>
      %206 = vector.shape_cast %205 : vector<1x8x128xf32> to vector<8x128xf32>
      %207 = vector.shape_cast %204 : vector<8x128xf32> to vector<1x8x128xf32>
      tpu.vector_store %arg29[%c0_121, %c0_122, %c0_123], %207 {strides = array<i32>} : memref<1x8x128xf32, #tpu.memory_space<vmem>>, vector<1x8x128xf32>,
    } else {
    }
    return
  }
  func.func @transform_0(%arg0: i32, %arg1: i32) -> (i32, i32, i32) {
    %c0_i32 = arith.constant 0 : i32
    %c0_i32_0 = arith.constant 0 : i32
    %c0_i32_1 = arith.constant 0 : i32
    return %arg0, %c0_i32, %c0_i32_0 : i32, i32, i32
  }
  func.func @transform_1(%arg0: i32, %arg1: i32) -> (i32, i32, i32) {
    %c0_i32 = arith.constant 0 : i32
    %c0_i32_0 = arith.constant 0 : i32
    %c0_i32_1 = arith.constant 0 : i32
    return %arg0, %c0_i32, %c0_i32_0 : i32, i32, i32
  }
  func.func @transform_2(%arg0: i32, %arg1: i32) -> (i32, i32) {
    %c0_i32 = arith.constant 0 : i32
    %c0_i32_0 = arith.constant 0 : i32
    %c0_i32_1 = arith.constant 0 : i32
    return %c0_i32, %c0_i32_0 : i32, i32
  }
  func.func @transform_3(%arg0: i32, %arg1: i32) -> (i32, i32) {
    %c0_i32 = arith.constant 0 : i32
    %c0_i32_0 = arith.constant 0 : i32
    %c0_i32_1 = arith.constant 0 : i32
    return %c0_i32, %c0_i32_0 : i32, i32
  }
  func.func @transform_4(%arg0: i32, %arg1: i32) -> (i32, i32, i32) {
    %c0_i32 = arith.constant 0 : i32
    %c0_i32_0 = arith.constant 0 : i32
    %c0_i32_1 = arith.constant 0 : i32
    return %arg1, %c0_i32, %c0_i32_0 : i32, i32, i32
  }
  func.func @transform_5(%arg0: i32, %arg1: i32) -> (i32, i32, i32) {
    %c0_i32 = arith.constant 0 : i32
    %c0_i32_0 = arith.constant 0 : i32
    %c0_i32_1 = arith.constant 0 : i32
    return %arg1, %c0_i32, %c0_i32_0 : i32, i32, i32
  }
  func.func @transform_6(%arg0: i32, %arg1: i32) -> (i32, i32, i32) {
    %c0_i32 = arith.constant 0 : i32
    %c0_i32_0 = arith.constant 0 : i32
    %c0_i32_1 = arith.constant 0 : i32
    return %arg1, %c0_i32, %c0_i32_0 : i32, i32, i32
  }
  func.func @transform_7(%arg0: i32, %arg1: i32) -> (i32, i32, i32) {
    %c0_i32 = arith.constant 0 : i32
    %c0_i32_0 = arith.constant 0 : i32
    %c0_i32_1 = arith.constant 0 : i32
    return %arg1, %c0_i32, %c0_i32_0 : i32, i32, i32
  }
  func.func @transform_8(%arg0: i32, %arg1: i32) -> (i32, i32, i32) {
    %c0_i32 = arith.constant 0 : i32
    %c0_i32_0 = arith.constant 0 : i32
    %c0_i32_1 = arith.constant 0 : i32
    return %arg1, %c0_i32, %c0_i32_0 : i32, i32, i32
  }
  func.func @transform_9(%arg0: i32, %arg1: i32) -> (i32, i32, i32) {
    %c0_i32 = arith.constant 0 : i32
    %c0_i32_0 = arith.constant 0 : i32
    %c0_i32_1 = arith.constant 0 : i32
    return %arg1, %c0_i32, %c0_i32_0 : i32, i32, i32
  }
  func.func @transform_10(%arg0: i32, %arg1: i32) -> (i32, i32, i32) {
    %c0_i32 = arith.constant 0 : i32
    %c0_i32_0 = arith.constant 0 : i32
    %c0_i32_1 = arith.constant 0 : i32
    return %arg1, %c0_i32, %c0_i32_0 : i32, i32, i32
  }
  func.func @transform_11(%arg0: i32, %arg1: i32) -> (i32, i32, i32) {
    %c0_i32 = arith.constant 0 : i32
    %c0_i32_0 = arith.constant 0 : i32
    %c0_i32_1 = arith.constant 0 : i32
    return %arg1, %c0_i32, %c0_i32_0 : i32, i32, i32
  }
  func.func @transform_12(%arg0: i32, %arg1: i32) -> (i32, i32, i32) {
    %c0_i32 = arith.constant 0 : i32
    %c0_i32_0 = arith.constant 0 : i32
    %c0_i32_1 = arith.constant 0 : i32
    return %arg1, %c0_i32, %c0_i32_0 : i32, i32, i32
  }
  func.func @transform_13(%arg0: i32, %arg1: i32) -> (i32, i32, i32) {
    %c0_i32 = arith.constant 0 : i32
    %c0_i32_0 = arith.constant 0 : i32
    %c0_i32_1 = arith.constant 0 : i32
    return %arg1, %c0_i32, %c0_i32_0 : i32, i32, i32
  }
  func.func @transform_14(%arg0: i32, %arg1: i32) -> (i32, i32, i32) {
    %c0_i32 = arith.constant 0 : i32
    %c0_i32_0 = arith.constant 0 : i32
    %c0_i32_1 = arith.constant 0 : i32
    return %arg1, %c0_i32, %c0_i32_0 : i32, i32, i32
  }
  func.func @transform_15(%arg0: i32, %arg1: i32) -> (i32, i32, i32) {
    %c0_i32 = arith.constant 0 : i32
    %c0_i32_0 = arith.constant 0 : i32
    %c0_i32_1 = arith.constant 0 : i32
    return %arg1, %c0_i32, %c0_i32_0 : i32, i32, i32
  }
  func.func @transform_16(%arg0: i32, %arg1: i32) -> (i32, i32, i32) {
    %c0_i32 = arith.constant 0 : i32
    %c0_i32_0 = arith.constant 0 : i32
    %c0_i32_1 = arith.constant 0 : i32
    return %arg1, %c0_i32, %c0_i32_0 : i32, i32, i32
  }
  func.func @transform_17(%arg0: i32, %arg1: i32) -> (i32, i32, i32) {
    %c0_i32 = arith.constant 0 : i32
    %c0_i32_0 = arith.constant 0 : i32
    %c0_i32_1 = arith.constant 0 : i32
    return %arg1, %c0_i32, %c0_i32_0 : i32, i32, i32
  }
  func.func @transform_18(%arg0: i32, %arg1: i32) -> (i32, i32, i32) {
    %c0_i32 = arith.constant 0 : i32
    %c0_i32_0 = arith.constant 0 : i32
    %c0_i32_1 = arith.constant 0 : i32
    return %arg1, %c0_i32, %c0_i32_0 : i32, i32, i32
  }
  func.func @transform_19(%arg0: i32, %arg1: i32) -> (i32, i32, i32) {
    %c0_i32 = arith.constant 0 : i32
    %c0_i32_0 = arith.constant 0 : i32
    %c0_i32_1 = arith.constant 0 : i32
    return %arg1, %c0_i32, %c0_i32_0 : i32, i32, i32
  }
  func.func @transform_20(%arg0: i32, %arg1: i32) -> (i32, i32, i32) {
    %c0_i32 = arith.constant 0 : i32
    %c0_i32_0 = arith.constant 0 : i32
    %c0_i32_1 = arith.constant 0 : i32
    return %arg1, %c0_i32, %c0_i32_0 : i32, i32, i32
  }
  func.func @transform_21(%arg0: i32, %arg1: i32) -> (i32, i32, i32) {
    %c0_i32 = arith.constant 0 : i32
    %c0_i32_0 = arith.constant 0 : i32
    %c0_i32_1 = arith.constant 0 : i32
    return %arg1, %c0_i32, %c0_i32_0 : i32, i32, i32
  }
  func.func @transform_22(%arg0: i32, %arg1: i32) -> (i32, i32, i32) {
    %c0_i32 = arith.constant 0 : i32
    %c0_i32_0 = arith.constant 0 : i32
    %c0_i32_1 = arith.constant 0 : i32
    return %arg1, %c0_i32, %c0_i32_0 : i32, i32, i32
  }
  func.func @transform_23(%arg0: i32, %arg1: i32) -> (i32, i32, i32) {
    %c0_i32 = arith.constant 0 : i32
    %c0_i32_0 = arith.constant 0 : i32
    %c0_i32_1 = arith.constant 0 : i32
    return %arg1, %c0_i32, %c0_i32_0 : i32, i32, i32
  }
  func.func @transform_24(%arg0: i32, %arg1: i32) -> (i32, i32) {
    %c0_i32 = arith.constant 0 : i32
    %c0_i32_0 = arith.constant 0 : i32
    %c0_i32_1 = arith.constant 0 : i32
    return %c0_i32, %c0_i32_0 : i32, i32
  }
  func.func @transform_25(%arg0: i32, %arg1: i32) -> (i32, i32) {
    %c0_i32 = arith.constant 0 : i32
    %c0_i32_0 = arith.constant 0 : i32
    %c0_i32_1 = arith.constant 0 : i32
    return %c0_i32, %c0_i32_0 : i32, i32
  }
  func.func @transform_26(%arg0: i32, %arg1: i32) -> (i32, i32) {
    %c0_i32 = arith.constant 0 : i32
    %c0_i32_0 = arith.constant 0 : i32
    %c0_i32_1 = arith.constant 0 : i32
    return %c0_i32, %c0_i32_0 : i32, i32
  }
  func.func @transform_27(%arg0: i32, %arg1: i32) -> (i32, i32, i32) {
    %c0_i32 = arith.constant 0 : i32
    %c0_i32_0 = arith.constant 0 : i32
    %c0_i32_1 = arith.constant 0 : i32
    return %arg0, %c0_i32, %c0_i32_0 : i32, i32, i32
  }
}

</mosaic_0001>

<llo_original>
// kernel: weight_decoder_forward.1
$region0: #{weight_decoder_forward.1}
  #allocation0 [shape = 'u32[]', space=smem, size = 0x4, offset = 0x4, fixed_abs, tag = 'smem constant byte address 0x4 - core index']
  #allocation1 [shape = 'u32[72,128]{1,0:T(1,128)}', space=vmem, size = 0x9000, scoped, tag = 'internal scratch']
  #allocation2 [shape = 'f32[8,128]{1,0:T(8,128)}', space=vmem, size = 0x1000, scoped, tag = 'scratch operand']
  %s0 = inlined_call_operand.hbm [shape: f32[2,8,128], index: 0, kind: input, shape index: {}]
  %s1 = inlined_call_operand.hbm [shape: f32[2,8,128], index: 1, kind: input, shape index: {}]
  %s2 = inlined_call_operand.vmem [shape: f32[8,128], index: 2, kind: input, shape index: {}]
  %s3 = inlined_call_operand.hbm [shape: f32[128,128], index: 3, kind: input, shape index: {}]
  %s4 = inlined_call_operand.vmem [shape: f32[2,1,128], index: 4, kind: input, shape index: {}]
  %s5 = inlined_call_operand.vmem [shape: f32[2,1,128], index: 5, kind: input, shape index: {}]
  %s6 = inlined_call_operand.hbm [shape: f32[2,128,128], index: 6, kind: input, shape index: {}]
  %s7 = inlined_call_operand.hbm [shape: f32[2,128,128], index: 7, kind: input, shape index: {}]
  %s8 = inlined_call_operand.hbm [shape: f32[2,128,128], index: 8, kind: input, shape index: {}]
  %s9 = inlined_call_operand.hbm [shape: f32[2,128,128], index: 9, kind: input, shape index: {}]
  %s10 = inlined_call_operand.hbm [shape: f32[2,1,128], index: 10, kind: input, shape index: {}]
  %s11 = inlined_call_operand.vmem [shape: f32[2,1,128], index: 11, kind: input, shape index: {}]
  %s12 = inlined_call_operand.hbm [shape: f32[2,1,128], index: 12, kind: input, shape index: {}]
  %s13 = inlined_call_operand.hbm [shape: f32[2,128,128], index: 13, kind: input, shape index: {}]
  %s14 = inlined_call_operand.hbm [shape: f32[2,128,128], index: 14, kind: input, shape index: {}]
  %s15 = inlined_call_operand.hbm [shape: f32[2,128,128], index: 15, kind: input, shape index: {}]
  %s16 = inlined_call_operand.hbm [shape: f32[2,128,128], index: 16, kind: input, shape index: {}]
  %s17 = inlined_call_operand.hbm [shape: f32[2,1,128], index: 17, kind: input, shape index: {}]
  %s18 = inlined_call_operand.vmem [shape: f32[2,1,128], index: 18, kind: input, shape index: {}]
  %s19 = inlined_call_operand.hbm [shape: f32[2,1,128], index: 19, kind: input, shape index: {}]
  %s20 = inlined_call_operand.hbm [shape: f32[2,128,512], index: 20, kind: input, shape index: {}]
  %s21 = inlined_call_operand.vmem [shape: f32[2,1,512], index: 21, kind: input, shape index: {}]
  %s22 = inlined_call_operand.hbm [shape: f32[2,512,128], index: 22, kind: input, shape index: {}]
  %s23 = inlined_call_operand.hbm [shape: f32[2,1,128], index: 23, kind: input, shape index: {}]
  %s24 = inlined_call_operand.vmem [shape: f32[1,128], index: 24, kind: input, shape index: {}]
  %s25 = inlined_call_operand.vmem [shape: f32[1,128], index: 25, kind: input, shape index: {}]
  %s26 = inlined_call_operand.hbm [shape: f32[128,128], index: 26, kind: input, shape index: {}]
  %s27 = inlined_call_operand.hbm [shape: f32[2,8,128], index: 27, kind: output, shape index: {}]
  %s28 = sld [smem:[#allocation0]]
  $region225: #{weight_decoder_forward.1} parent=0
    _
  %s30 = ssub.s32 1, %s28
  %s31 = scalar_select 0, %s30, %s28
  $region1: #{weight_decoder_forward.1} parent=0
    #allocation3 [shape = 'u8[8192]{0}', space=vmem, size = 0x2000, scoped, tag = 'input window, operand 0']
    #allocation4 [shape = 's32[2]{0}', space=sflag, size = 0x8, scoped, tag = 'scoped memory for weight_decoder_forward.1']
    #allocation5 [shape = 's32[2]{0}', space=sflag, size = 0x8, scoped, tag = 'scoped memory for weight_decoder_forward.1']
    #allocation6 [shape = 'u8[8192]{0}', space=vmem, size = 0x2000, scoped, tag = 'input window, operand 1']
    #allocation7 [shape = 's32[2]{0}', space=sflag, size = 0x8, scoped, tag = 'scoped memory for weight_decoder_forward.1']
    #allocation8 [shape = 'u8[65536]{0}', space=vmem, size = 0x10000, scoped, tag = 'input window, operand 3, single buffered']
    #allocation9 [shape = 'u8[131072]{0}', space=vmem, size = 0x20000, scoped, tag = 'input window, operand 6']
    #allocation10 [shape = 's32[2]{0}', space=sflag, size = 0x8, scoped, tag = 'scoped memory for weight_decoder_forward.1']
    #allocation11 [shape = 'u8[131072]{0}', space=vmem, size = 0x20000, scoped, tag = 'input window, operand 7']
    #allocation12 [shape = 'u8[131072]{0}', space=vmem, size = 0x20000, scoped, tag = 'input window, operand 8']
    #allocation13 [shape = 's32[2]{0}', space=sflag, size = 0x8, scoped, tag = 'scoped memory for weight_decoder_forward.1']
    #allocation14 [shape = 'u8[131072]{0}', space=vmem, size = 0x20000, scoped, tag = 'input window, operand 9']
    #allocation15 [shape = 'u8[1024]{0}', space=vmem, size = 0x400, scoped, tag = 'input window, operand 10']
    #allocation16 [shape = 's32[2]{0}', space=sflag, size = 0x8, scoped, tag = 'scoped memory for weight_decoder_forward.1']
    #allocation17 [shape = 'u8[1024]{0}', space=vmem, size = 0x400, scoped, tag = 'input window, operand 12']
    #allocation18 [shape = 'u8[131072]{0}', space=vmem, size = 0x20000, scoped, tag = 'input window, operand 13']
    #allocation19 [shape = 's32[2]{0}', space=sflag, size = 0x8, scoped, tag = 'scoped memory for weight_decoder_forward.1']
    #allocation20 [shape = 'u8[131072]{0}', space=vmem, size = 0x20000, scoped, tag = 'input window, operand 14']
    #allocation21 [shape = 'u8[131072]{0}', space=vmem, size = 0x20000, scoped, tag = 'input window, operand 15']
    #allocation22 [shape = 's32[2]{0}', space=sflag, size = 0x8, scoped, tag = 'scoped memory for weight_decoder_forward.1']
    #allocation23 [shape = 'u8[131072]{0}', space=vmem, size = 0x20000, scoped, tag = 'input window, operand 16']
    #allocation24 [shape = 'u8[1024]{0}', space=vmem, size = 0x400, scoped, tag = 'input window, operand 17']
    #allocation25 [shape = 's32[2]{0}', space=sflag, size = 0x8, scoped, tag = 'scoped memory for weight_decoder_forward.1']
    #allocation26 [shape = 'u8[1024]{0}', space=vmem, size = 0x400, scoped, tag = 'input window, operand 19']
    #allocation27 [shape = 'u8[524288]{0}', space=vmem, size = 0x80000, scoped, tag = 'input window, operand 20']
    #allocation28 [shape = 's32[2]{0}', space=sflag, size = 0x8, scoped, tag = 'scoped memory for weight_decoder_forward.1']
    #allocation29 [shape = 'u8[524288]{0}', space=vmem, size = 0x80000, scoped, tag = 'input window, operand 22']
    #allocation30 [shape = 'u8[1024]{0}', space=vmem, size = 0x400, scoped, tag = 'input window, operand 23']
    #allocation31 [shape = 's32[2]{0}', space=sflag, size = 0x8, scoped, tag = 'scoped memory for weight_decoder_forward.1']
    #allocation32 [shape = 'u8[65536]{0}', space=vmem, size = 0x10000, scoped, tag = 'input window, operand 26, single buffered']
    #allocation33 [shape = 'u8[8192]{0}', space=vmem, size = 0x2000, scoped, tag = 'output window, operand 0']
    %32 = vsyncpa [#allocation4], 0
    %s33 = scalar_lea.sflag [#allocation4], 1
    %34 = vsyncpa %s33, 0
    %35 = vsyncpa [#allocation7], 0
    %s36 = scalar_lea.sflag [#allocation7], 1
    %37 = vsyncpa %s36, 0
    %38 = vsyncpa [#allocation10], 0
    %s39 = scalar_lea.sflag [#allocation10], 1
    %40 = vsyncpa %s39, 0
    %41 = vsyncpa [#allocation13], 0
    %s42 = scalar_lea.sflag [#allocation13], 1
    %43 = vsyncpa %s42, 0
    %44 = vsyncpa [#allocation16], 0
    %s45 = scalar_lea.sflag [#allocation16], 1
    %46 = vsyncpa %s45, 0
    %47 = vsyncpa [#allocation19], 0
    %s48 = scalar_lea.sflag [#allocation19], 1
    %49 = vsyncpa %s48, 0
    %50 = vsyncpa [#allocation22], 0
    %s51 = scalar_lea.sflag [#allocation22], 1
    %52 = vsyncpa %s51, 0
    %53 = vsyncpa [#allocation25], 0
    %s54 = scalar_lea.sflag [#allocation25], 1
    %55 = vsyncpa %s54, 0
    %56 = vsyncpa [#allocation28], 0
    %s57 = scalar_lea.sflag [#allocation28], 1
    %58 = vsyncpa %s57, 0
    %59 = vsyncpa [#allocation31], 0
    %s60 = scalar_lea.sflag [#allocation31], 1
    %61 = vsyncpa %s60, 0
    %62 = vsyncpa [#allocation5], 0
    %s63 = scalar_lea.sflag [#allocation5], 1
    %64 = vsyncpa %s63, 0
    loop: start=0, step=1, limit=6
    $region2: #{weight_decoder_forward.1} parent=1 // loop_pre_header
      _
    $region3: #{weight_decoder_forward.1} parent=1 // loop_header
      %s66 = sphi 0, %s70
      %p67 = scmp.ge.s32.totalorder %s66, 6
      %s73 = sphi 0, %s85
      %s74 = sphi 0, %s81
      %s75 = sphi 0, %s73
      %s76 = sphi 0, %s74
      %s77 = sphi 0, %s75
      %s78 = sphi 0, %s76
      %s88 = sphi 0, %s90
      %s91 = sphi 0, %s88
      %s92 = sphi 0, %s91
      %s108 = sphi 0, %s92
      %s114 = sphi 0, %s116
      %s117 = sphi 0, %s114
      %s118 = sphi 0, %s117
      %s134 = sphi 0, %s118
      %s138 = sphi 0, %s138
      %s140 = sphi 0, %s138
      %s141 = sphi 0, %s140
      %s155 = sphi 0, %s141
      %s159 = sphi 0, %s159
      %s161 = sphi 0, %s159
      %s162 = sphi 0, %s161
      %s176 = sphi 0, %s162
      %s182 = sphi 0, %s184
      %s185 = sphi 0, %s182
      %s186 = sphi 0, %s185
      %s202 = sphi 0, %s186
      %s208 = sphi 0, %s210
      %s211 = sphi 0, %s208
      %s212 = sphi 0, %s211
      %s228 = sphi 0, %s212
      %s234 = sphi 0, %s236
      %s237 = sphi 0, %s234
      %s238 = sphi 0, %s237
      %s254 = sphi 0, %s238
      %s260 = sphi 0, %s262
      %s263 = sphi 0, %s260
      %s264 = sphi 0, %s263
      %s280 = sphi 0, %s264
      %s286 = sphi 0, %s288
      %s289 = sphi 0, %s286
      %s290 = sphi 0, %s289
      %s306 = sphi 0, %s290
      %s312 = sphi 0, %s314
      %s315 = sphi 0, %s312
      %s316 = sphi 0, %s315
      %s332 = sphi 0, %s316
      %s338 = sphi 0, %s340
      %s341 = sphi 0, %s338
      %s342 = sphi 0, %s341
      %s358 = sphi 0, %s342
      %s364 = sphi 0, %s366
      %s367 = sphi 0, %s364
      %s368 = sphi 0, %s367
      %s384 = sphi 0, %s368
      %s390 = sphi 0, %s392
      %s393 = sphi 0, %s390
      %s394 = sphi 0, %s393
      %s410 = sphi 0, %s394
      %s416 = sphi 0, %s418
      %s419 = sphi 0, %s416
      %s420 = sphi 0, %s419
      %s436 = sphi 0, %s420
      %s442 = sphi 0, %s444
      %s445 = sphi 0, %s442
      %s446 = sphi 0, %s445
      %s462 = sphi 0, %s446
      %s468 = sphi 0, %s470
      %s471 = sphi 0, %s468
      %s472 = sphi 0, %s471
      %s488 = sphi 0, %s472
      %s494 = sphi 0, %s496
      %s497 = sphi 0, %s494
      %s498 = sphi 0, %s497
      %s514 = sphi 0, %s498
      %s520 = sphi 0, %s522
      %s523 = sphi 0, %s520
      %s524 = sphi 0, %s523
      %s540 = sphi 0, %s524
      %s546 = sphi 0, %s548
      %s549 = sphi 0, %s546
      %s550 = sphi 0, %s549
      %s566 = sphi 0, %s550
      %s572 = sphi 0, %s574
      %s575 = sphi 0, %s572
      %s576 = sphi 0, %s575
      %s592 = sphi 0, %s576
      %s598 = sphi 0, %s600
      %s601 = sphi 0, %s598
      %s602 = sphi 0, %s601
      %s618 = sphi 0, %s602
      %s624 = sphi 0, %s626
      %s627 = sphi 0, %s624
      %s628 = sphi 0, %s627
      %s644 = sphi 0, %s628
      %s650 = sphi 0, %s652
      %s653 = sphi 0, %s650
      %s654 = sphi 0, %s653
      %s670 = sphi 0, %s654
      %s676 = sphi 0, %s678
      %s679 = sphi 0, %s676
      %s680 = sphi 0, %s679
      %s696 = sphi 0, %s680
      %s700 = sphi 0, %s700
      %s702 = sphi 0, %s700
      %s703 = sphi 0, %s702
      %s717 = sphi 0, %s703
      %s721 = sphi 0, %s721
      %s723 = sphi 0, %s721
      %s724 = sphi 0, %s723
      %s738 = sphi 0, %s724
      %s742 = sphi 0, %s742
      %s744 = sphi 0, %s742
      %s745 = sphi 0, %s744
      %s759 = sphi 0, %s745
      %s765 = sphi 0, %s767
      %s768 = sphi 0, %s765
      %s769 = sphi 0, %s768
      %s785 = sphi 0, %s769
    $region4: #{weight_decoder_forward.1} parent=1 // loop_header_branch
      %69 = sbr.rel (%p67) target = $region8
    $region5: #{weight_decoder_forward.1} parent=1 // loop_body
      %s71 = ssub.s32 %s66, 1
      %s72 = ssub.s32 %s66, 2
      %s79 = sadd.s32 1, %s74
      %p80 = scmp.ge.s32.totalorder %s79, 2
      %s81 = scalar_select %p80, 0, %s79
      %s82 = sadd.s32 1, %s73
      %s83 = scalar_select %p80, %s82, %s73
      %p84 = scmp.ge.s32.totalorder %s83, 2
      %s85 = scalar_select %p84, 0, %s83
      %s86 = ssub.s32 %s73, %s85
      %p87 = scmp.eq.s32.totalorder %s86, 0
      %s89 = sadd.s32 %s88, 1
      %s90 = scalar_select %p87, %s88, %s89
      %p93 = pneg %p87
      %p94 = scmp.eq.s32.totalorder %s66, 3
      %p95 = por %p93, %p94
      %p96 = scmp.ne.s32.totalorder %s88, %s91
      %p97 = scmp.eq.s32.totalorder %s66, 0
      %p98 = por %p96, %p97
      %p99 = scmp.ne.s32.totalorder %s88, %s91
      %p100 = scmp.eq.s32.totalorder %s71, 3
      %p101 = por %p99, %p100
      %p102 = scmp.ne.s32.totalorder %s91, %s92
      %p103 = scmp.eq.s32.totalorder %s71, 0
      %p104 = por %p102, %p103
      %p105 = scmp.ne.s32.totalorder %s91, %s92
      %p106 = scmp.eq.s32.totalorder %s72, 3
      %p107 = por %p105, %p106
      %p109 = scmp.ne.s32.totalorder %s92, %s108
      %p110 = scmp.eq.s32.totalorder %s72, 0
      %p111 = por %p109, %p110
      %s112 = ssub.s32 %s73, %s85
      %p113 = scmp.eq.s32.totalorder %s112, 0
      %s115 = sadd.s32 %s114, 1
      %s116 = scalar_select %p113, %s114, %s115
      %p119 = pneg %p113
      %p120 = scmp.eq.s32.totalorder %s66, 3
      %p121 = por %p119, %p120
      %p122 = scmp.ne.s32.totalorder %s114, %s117
      %p123 = scmp.eq.s32.totalorder %s66, 0
      %p124 = por %p122, %p123
      %p125 = scmp.ne.s32.totalorder %s114, %s117
      %p126 = scmp.eq.s32.totalorder %s71, 3
      %p127 = por %p125, %p126
      %p128 = scmp.ne.s32.totalorder %s117, %s118
      %p129 = scmp.eq.s32.totalorder %s71, 0
      %p130 = por %p128, %p129
      %p131 = scmp.ne.s32.totalorder %s117, %s118
      %p132 = scmp.eq.s32.totalorder %s72, 3
      %p133 = por %p131, %p132
      %p135 = scmp.ne.s32.totalorder %s118, %s134
      %p136 = scmp.eq.s32.totalorder %s72, 0
      %p137 = por %p135, %p136
      %s139 = sadd.s32 %s138, 1
      %p142 = scmp.eq.s32.totalorder %s66, 3
      %p143 = scmp.ne.s32.totalorder %s138, %s140
      %p144 = scmp.eq.s32.totalorder %s66, 0
      %p145 = por %p143, %p144
      %p146 = scmp.ne.s32.totalorder %s138, %s140
      %p147 = scmp.eq.s32.totalorder %s71, 3
      %p148 = por %p146, %p147
      %p149 = scmp.ne.s32.totalorder %s140, %s141
      %p150 = scmp.eq.s32.totalorder %s71, 0
      %p151 = por %p149, %p150
      %p152 = scmp.ne.s32.totalorder %s140, %s141
      %p153 = scmp.eq.s32.totalorder %s72, 3
      %p154 = por %p152, %p153
      %p156 = scmp.ne.s32.totalorder %s141, %s155
      %p157 = scmp.eq.s32.totalorder %s72, 0
      %p158 = por %p156, %p157
      %s160 = sadd.s32 %s159, 1
      %p163 = scmp.eq.s32.totalorder %s66, 3
      %p164 = scmp.ne.s32.totalorder %s159, %s161
      %p165 = scmp.eq.s32.totalorder %s66, 0
      %p166 = por %p164, %p165
      %p167 = scmp.ne.s32.totalorder %s159, %s161
      %p168 = scmp.eq.s32.totalorder %s71, 3
      %p169 = por %p167, %p168
      %p170 = scmp.ne.s32.totalorder %s161, %s162
      %p171 = scmp.eq.s32.totalorder %s71, 0
      %p172 = por %p170, %p171
      %p173 = scmp.ne.s32.totalorder %s161, %s162
      %p174 = scmp.eq.s32.totalorder %s72, 3
      %p175 = por %p173, %p174
      %p177 = scmp.ne.s32.totalorder %s162, %s176
      %p178 = scmp.eq.s32.totalorder %s72, 0
      %p179 = por %p177, %p178
      %s180 = ssub.s32 %s74, %s81
      %p181 = scmp.eq.s32.totalorder %s180, 0
      %s183 = sadd.s32 %s182, 1
      %s184 = scalar_select %p181, %s182, %s183
      %p187 = pneg %p181
      %p188 = scmp.eq.s32.totalorder %s66, 3
      %p189 = por %p187, %p188
      %p190 = scmp.ne.s32.totalorder %s182, %s185
      %p191 = scmp.eq.s32.totalorder %s66, 0
      %p192 = por %p190, %p191
      %p193 = scmp.ne.s32.totalorder %s182, %s185
      %p194 = scmp.eq.s32.totalorder %s71, 3
      %p195 = por %p193, %p194
      %p196 = scmp.ne.s32.totalorder %s185, %s186
      %p197 = scmp.eq.s32.totalorder %s71, 0
      %p198 = por %p196, %p197
      %p199 = scmp.ne.s32.totalorder %s185, %s186
      %p200 = scmp.eq.s32.totalorder %s72, 3
      %p201 = por %p199, %p200
      %p203 = scmp.ne.s32.totalorder %s186, %s202
      %p204 = scmp.eq.s32.totalorder %s72, 0
      %p205 = por %p203, %p204
      %s206 = ssub.s32 %s74, %s81
      %p207 = scmp.eq.s32.totalorder %s206, 0
      %s209 = sadd.s32 %s208, 1
      %s210 = scalar_select %p207, %s208, %s209
      %p213 = pneg %p207
      %p214 = scmp.eq.s32.totalorder %s66, 3
      %p215 = por %p213, %p214
      %p216 = scmp.ne.s32.totalorder %s208, %s211
      %p217 = scmp.eq.s32.totalorder %s66, 0
      %p218 = por %p216, %p217
      %p219 = scmp.ne.s32.totalorder %s208, %s211
      %p220 = scmp.eq.s32.totalorder %s71, 3
      %p221 = por %p219, %p220
      %p222 = scmp.ne.s32.totalorder %s211, %s212
      %p223 = scmp.eq.s32.totalorder %s71, 0
      %p224 = por %p222, %p223
      %p225 = scmp.ne.s32.totalorder %s211, %s212
      %p226 = scmp.eq.s32.totalorder %s72, 3
      %p227 = por %p225, %p226
      %p229 = scmp.ne.s32.totalorder %s212, %s228
      %p230 = scmp.eq.s32.totalorder %s72, 0
      %p231 = por %p229, %p230
      %s232 = ssub.s32 %s74, %s81
      %p233 = scmp.eq.s32.totalorder %s232, 0
      %s235 = sadd.s32 %s234, 1
      %s236 = scalar_select %p233, %s234, %s235
      %p239 = pneg %p233
      %p240 = scmp.eq.s32.totalorder %s66, 3
      %p241 = por %p239, %p240
      %p242 = scmp.ne.s32.totalorder %s234, %s237
      %p243 = scmp.eq.s32.totalorder %s66, 0
      %p244 = por %p242, %p243
      %p245 = scmp.ne.s32.totalorder %s234, %s237
      %p246 = scmp.eq.s32.totalorder %s71, 3
      %p247 = por %p245, %p246
      %p248 = scmp.ne.s32.totalorder %s237, %s238
      %p249 = scmp.eq.s32.totalorder %s71, 0
      %p250 = por %p248, %p249
      %p251 = scmp.ne.s32.totalorder %s237, %s238
      %p252 = scmp.eq.s32.totalorder %s72, 3
      %p253 = por %p251, %p252
      %p255 = scmp.ne.s32.totalorder %s238, %s254
      %p256 = scmp.eq.s32.totalorder %s72, 0
      %p257 = por %p255, %p256
      %s258 = ssub.s32 %s74, %s81
      %p259 = scmp.eq.s32.totalorder %s258, 0
      %s261 = sadd.s32 %s260, 1
      %s262 = scalar_select %p259, %s260, %s261
      %p265 = pneg %p259
      %p266 = scmp.eq.s32.totalorder %s66, 3
      %p267 = por %p265, %p266
      %p268 = scmp.ne.s32.totalorder %s260, %s263
      %p269 = scmp.eq.s32.totalorder %s66, 0
      %p270 = por %p268, %p269
      %p271 = scmp.ne.s32.totalorder %s260, %s263
      %p272 = scmp.eq.s32.totalorder %s71, 3
      %p273 = por %p271, %p272
      %p274 = scmp.ne.s32.totalorder %s263, %s264
      %p275 = scmp.eq.s32.totalorder %s71, 0
      %p276 = por %p274, %p275
      %p277 = scmp.ne.s32.totalorder %s263, %s264
      %p278 = scmp.eq.s32.totalorder %s72, 3
      %p279 = por %p277, %p278
      %p281 = scmp.ne.s32.totalorder %s264, %s280
      %p282 = scmp.eq.s32.totalorder %s72, 0
      %p283 = por %p281, %p282
      %s284 = ssub.s32 %s74, %s81
      %p285 = scmp.eq.s32.totalorder %s284, 0
      %s287 = sadd.s32 %s286, 1
      %s288 = scalar_select %p285, %s286, %s287
      %p291 = pneg %p285
      %p292 = scmp.eq.s32.totalorder %s66, 3
      %p293 = por %p291, %p292
      %p294 = scmp.ne.s32.totalorder %s286, %s289
      %p295 = scmp.eq.s32.totalorder %s66, 0
      %p296 = por %p294, %p295
      %p297 = scmp.ne.s32.totalorder %s286, %s289
      %p298 = scmp.eq.s32.totalorder %s71, 3
      %p299 = por %p297, %p298
      %p300 = scmp.ne.s32.totalorder %s289, %s290
      %p301 = scmp.eq.s32.totalorder %s71, 0
      %p302 = por %p300, %p301
      %p303 = scmp.ne.s32.totalorder %s289, %s290
      %p304 = scmp.eq.s32.totalorder %s72, 3
      %p305 = por %p303, %p304
      %p307 = scmp.ne.s32.totalorder %s290, %s306
      %p308 = scmp.eq.s32.totalorder %s72, 0
      %p309 = por %p307, %p308
      %s310 = ssub.s32 %s74, %s81
      %p311 = scmp.eq.s32.totalorder %s310, 0
      %s313 = sadd.s32 %s312, 1
      %s314 = scalar_select %p311, %s312, %s313
      %p317 = pneg %p311
      %p318 = scmp.eq.s32.totalorder %s66, 3
      %p319 = por %p317, %p318
      %p320 = scmp.ne.s32.totalorder %s312, %s315
      %p321 = scmp.eq.s32.totalorder %s66, 0
      %p322 = por %p320, %p321
      %p323 = scmp.ne.s32.totalorder %s312, %s315
      %p324 = scmp.eq.s32.totalorder %s71, 3
      %p325 = por %p323, %p324
      %p326 = scmp.ne.s32.totalorder %s315, %s316
      %p327 = scmp.eq.s32.totalorder %s71, 0
      %p328 = por %p326, %p327
      %p329 = scmp.ne.s32.totalorder %s315, %s316
      %p330 = scmp.eq.s32.totalorder %s72, 3
      %p331 = por %p329, %p330
      %p333 = scmp.ne.s32.totalorder %s316, %s332
      %p334 = scmp.eq.s32.totalorder %s72, 0
      %p335 = por %p333, %p334
      %s336 = ssub.s32 %s74, %s81
      %p337 = scmp.eq.s32.totalorder %s336, 0
      %s339 = sadd.s32 %s338, 1
      %s340 = scalar_select %p337, %s338, %s339
      %p343 = pneg %p337
      %p344 = scmp.eq.s32.totalorder %s66, 3
      %p345 = por %p343, %p344
      %p346 = scmp.ne.s32.totalorder %s338, %s341
      %p347 = scmp.eq.s32.totalorder %s66, 0
      %p348 = por %p346, %p347
      %p349 = scmp.ne.s32.totalorder %s338, %s341
      %p350 = scmp.eq.s32.totalorder %s71, 3
      %p351 = por %p349, %p350
      %p352 = scmp.ne.s32.totalorder %s341, %s342
      %p353 = scmp.eq.s32.totalorder %s71, 0
      %p354 = por %p352, %p353
      %p355 = scmp.ne.s32.totalorder %s341, %s342
      %p356 = scmp.eq.s32.totalorder %s72, 3
      %p357 = por %p355, %p356
      %p359 = scmp.ne.s32.totalorder %s342, %s358
      %p360 = scmp.eq.s32.totalorder %s72, 0
      %p361 = por %p359, %p360
      %s362 = ssub.s32 %s74, %s81
      %p363 = scmp.eq.s32.totalorder %s362, 0
      %s365 = sadd.s32 %s364, 1
      %s366 = scalar_select %p363, %s364, %s365
      %p369 = pneg %p363
      %p370 = scmp.eq.s32.totalorder %s66, 3
      %p371 = por %p369, %p370
      %p372 = scmp.ne.s32.totalorder %s364, %s367
      %p373 = scmp.eq.s32.totalorder %s66, 0
      %p374 = por %p372, %p373
      %p375 = scmp.ne.s32.totalorder %s364, %s367
      %p376 = scmp.eq.s32.totalorder %s71, 3
      %p377 = por %p375, %p376
      %p378 = scmp.ne.s32.totalorder %s367, %s368
      %p379 = scmp.eq.s32.totalorder %s71, 0
      %p380 = por %p378, %p379
      %p381 = scmp.ne.s32.totalorder %s367, %s368
      %p382 = scmp.eq.s32.totalorder %s72, 3
      %p383 = por %p381, %p382
      %p385 = scmp.ne.s32.totalorder %s368, %s384
      %p386 = scmp.eq.s32.totalorder %s72, 0
      %p387 = por %p385, %p386
      %s388 = ssub.s32 %s74, %s81
      %p389 = scmp.eq.s32.totalorder %s388, 0
      %s391 = sadd.s32 %s390, 1
      %s392 = scalar_select %p389, %s390, %s391
      %p395 = pneg %p389
      %p396 = scmp.eq.s32.totalorder %s66, 3
      %p397 = por %p395, %p396
      %p398 = scmp.ne.s32.totalorder %s390, %s393
      %p399 = scmp.eq.s32.totalorder %s66, 0
      %p400 = por %p398, %p399
      %p401 = scmp.ne.s32.totalorder %s390, %s393
      %p402 = scmp.eq.s32.totalorder %s71, 3
      %p403 = por %p401, %p402
      %p404 = scmp.ne.s32.totalorder %s393, %s394
      %p405 = scmp.eq.s32.totalorder %s71, 0
      %p406 = por %p404, %p405
      %p407 = scmp.ne.s32.totalorder %s393, %s394
      %p408 = scmp.eq.s32.totalorder %s72, 3
      %p409 = por %p407, %p408
      %p411 = scmp.ne.s32.totalorder %s394, %s410
      %p412 = scmp.eq.s32.totalorder %s72, 0
      %p413 = por %p411, %p412
      %s414 = ssub.s32 %s74, %s81
      %p415 = scmp.eq.s32.totalorder %s414, 0
      %s417 = sadd.s32 %s416, 1
      %s418 = scalar_select %p415, %s416, %s417
      %p421 = pneg %p415
      %p422 = scmp.eq.s32.totalorder %s66, 3
      %p423 = por %p421, %p422
      %p424 = scmp.ne.s32.totalorder %s416, %s419
      %p425 = scmp.eq.s32.totalorder %s66, 0
      %p426 = por %p424, %p425
      %p427 = scmp.ne.s32.totalorder %s416, %s419
      %p428 = scmp.eq.s32.totalorder %s71, 3
      %p429 = por %p427, %p428
      %p430 = scmp.ne.s32.totalorder %s419, %s420
      %p431 = scmp.eq.s32.totalorder %s71, 0
      %p432 = por %p430, %p431
      %p433 = scmp.ne.s32.totalorder %s419, %s420
      %p434 = scmp.eq.s32.totalorder %s72, 3
      %p435 = por %p433, %p434
      %p437 = scmp.ne.s32.totalorder %s420, %s436
      %p438 = scmp.eq.s32.totalorder %s72, 0
      %p439 = por %p437, %p438
      %s440 = ssub.s32 %s74, %s81
      %p441 = scmp.eq.s32.totalorder %s440, 0
      %s443 = sadd.s32 %s442, 1
      %s444 = scalar_select %p441, %s442, %s443
      %p447 = pneg %p441
      %p448 = scmp.eq.s32.totalorder %s66, 3
      %p449 = por %p447, %p448
      %p450 = scmp.ne.s32.totalorder %s442, %s445
      %p451 = scmp.eq.s32.totalorder %s66, 0
      %p452 = por %p450, %p451
      %p453 = scmp.ne.s32.totalorder %s442, %s445
      %p454 = scmp.eq.s32.totalorder %s71, 3
      %p455 = por %p453, %p454
      %p456 = scmp.ne.s32.totalorder %s445, %s446
      %p457 = scmp.eq.s32.totalorder %s71, 0
      %p458 = por %p456, %p457
      %p459 = scmp.ne.s32.totalorder %s445, %s446
      %p460 = scmp.eq.s32.totalorder %s72, 3
      %p461 = por %p459, %p460
      %p463 = scmp.ne.s32.totalorder %s446, %s462
      %p464 = scmp.eq.s32.totalorder %s72, 0
      %p465 = por %p463, %p464
      %s466 = ssub.s32 %s74, %s81
      %p467 = scmp.eq.s32.totalorder %s466, 0
      %s469 = sadd.s32 %s468, 1
      %s470 = scalar_select %p467, %s468, %s469
      %p473 = pneg %p467
      %p474 = scmp.eq.s32.totalorder %s66, 3
      %p475 = por %p473, %p474
      %p476 = scmp.ne.s32.totalorder %s468, %s471
      %p477 = scmp.eq.s32.totalorder %s66, 0
      %p478 = por %p476, %p477
      %p479 = scmp.ne.s32.totalorder %s468, %s471
      %p480 = scmp.eq.s32.totalorder %s71, 3
      %p481 = por %p479, %p480
      %p482 = scmp.ne.s32.totalorder %s471, %s472
      %p483 = scmp.eq.s32.totalorder %s71, 0
      %p484 = por %p482, %p483
      %p485 = scmp.ne.s32.totalorder %s471, %s472
      %p486 = scmp.eq.s32.totalorder %s72, 3
      %p487 = por %p485, %p486
      %p489 = scmp.ne.s32.totalorder %s472, %s488
      %p490 = scmp.eq.s32.totalorder %s72, 0
      %p491 = por %p489, %p490
      %s492 = ssub.s32 %s74, %s81
      %p493 = scmp.eq.s32.totalorder %s492, 0
      %s495 = sadd.s32 %s494, 1
      %s496 = scalar_select %p493, %s494, %s495
      %p499 = pneg %p493
      %p500 = scmp.eq.s32.totalorder %s66, 3
      %p501 = por %p499, %p500
      %p502 = scmp.ne.s32.totalorder %s494, %s497
      %p503 = scmp.eq.s32.totalorder %s66, 0
      %p504 = por %p502, %p503
      %p505 = scmp.ne.s32.totalorder %s494, %s497
      %p506 = scmp.eq.s32.totalorder %s71, 3
      %p507 = por %p505, %p506
      %p508 = scmp.ne.s32.totalorder %s497, %s498
      %p509 = scmp.eq.s32.totalorder %s71, 0
      %p510 = por %p508, %p509
      %p511 = scmp.ne.s32.totalorder %s497, %s498
      %p512 = scmp.eq.s32.totalorder %s72, 3
      %p513 = por %p511, %p512
      %p515 = scmp.ne.s32.totalorder %s498, %s514
      %p516 = scmp.eq.s32.totalorder %s72, 0
      %p517 = por %p515, %p516
      %s518 = ssub.s32 %s74, %s81
      %p519 = scmp.eq.s32.totalorder %s518, 0
      %s521 = sadd.s32 %s520, 1
      %s522 = scalar_select %p519, %s520, %s521
      %p525 = pneg %p519
      %p526 = scmp.eq.s32.totalorder %s66, 3
      %p527 = por %p525, %p526
      %p528 = scmp.ne.s32.totalorder %s520, %s523
      %p529 = scmp.eq.s32.totalorder %s66, 0
      %p530 = por %p528, %p529
      %p531 = scmp.ne.s32.totalorder %s520, %s523
      %p532 = scmp.eq.s32.totalorder %s71, 3
      %p533 = por %p531, %p532
      %p534 = scmp.ne.s32.totalorder %s523, %s524
      %p535 = scmp.eq.s32.totalorder %s71, 0
      %p536 = por %p534, %p535
      %p537 = scmp.ne.s32.totalorder %s523, %s524
      %p538 = scmp.eq.s32.totalorder %s72, 3
      %p539 = por %p537, %p538
      %p541 = scmp.ne.s32.totalorder %s524, %s540
      %p542 = scmp.eq.s32.totalorder %s72, 0
      %p543 = por %p541, %p542
      %s544 = ssub.s32 %s74, %s81
      %p545 = scmp.eq.s32.totalorder %s544, 0
      %s547 = sadd.s32 %s546, 1
      %s548 = scalar_select %p545, %s546, %s547
      %p551 = pneg %p545
      %p552 = scmp.eq.s32.totalorder %s66, 3
      %p553 = por %p551, %p552
      %p554 = scmp.ne.s32.totalorder %s546, %s549
      %p555 = scmp.eq.s32.totalorder %s66, 0
      %p556 = por %p554, %p555
      %p557 = scmp.ne.s32.totalorder %s546, %s549
      %p558 = scmp.eq.s32.totalorder %s71, 3
      %p559 = por %p557, %p558
      %p560 = scmp.ne.s32.totalorder %s549, %s550
      %p561 = scmp.eq.s32.totalorder %s71, 0
      %p562 = por %p560, %p561
      %p563 = scmp.ne.s32.totalorder %s549, %s550
      %p564 = scmp.eq.s32.totalorder %s72, 3
      %p565 = por %p563, %p564
      %p567 = scmp.ne.s32.totalorder %s550, %s566
      %p568 = scmp.eq.s32.totalorder %s72, 0
      %p569 = por %p567, %p568
      %s570 = ssub.s32 %s74, %s81
      %p571 = scmp.eq.s32.totalorder %s570, 0
      %s573 = sadd.s32 %s572, 1
      %s574 = scalar_select %p571, %s572, %s573
      %p577 = pneg %p571
      %p578 = scmp.eq.s32.totalorder %s66, 3
      %p579 = por %p577, %p578
      %p580 = scmp.ne.s32.totalorder %s572, %s575
      %p581 = scmp.eq.s32.totalorder %s66, 0
      %p582 = por %p580, %p581
      %p583 = scmp.ne.s32.totalorder %s572, %s575
      %p584 = scmp.eq.s32.totalorder %s71, 3
      %p585 = por %p583, %p584
      %p586 = scmp.ne.s32.totalorder %s575, %s576
      %p587 = scmp.eq.s32.totalorder %s71, 0
      %p588 = por %p586, %p587
      %p589 = scmp.ne.s32.totalorder %s575, %s576
      %p590 = scmp.eq.s32.totalorder %s72, 3
      %p591 = por %p589, %p590
      %p593 = scmp.ne.s32.totalorder %s576, %s592
      %p594 = scmp.eq.s32.totalorder %s72, 0
      %p595 = por %p593, %p594
      %s596 = ssub.s32 %s74, %s81
      %p597 = scmp.eq.s32.totalorder %s596, 0
      %s599 = sadd.s32 %s598, 1
      %s600 = scalar_select %p597, %s598, %s599
      %p603 = pneg %p597
      %p604 = scmp.eq.s32.totalorder %s66, 3
      %p605 = por %p603, %p604
      %p606 = scmp.ne.s32.totalorder %s598, %s601
      %p607 = scmp.eq.s32.totalorder %s66, 0
      %p608 = por %p606, %p607
      %p609 = scmp.ne.s32.totalorder %s598, %s601
      %p610 = scmp.eq.s32.totalorder %s71, 3
      %p611 = por %p609, %p610
      %p612 = scmp.ne.s32.totalorder %s601, %s602
      %p613 = scmp.eq.s32.totalorder %s71, 0
      %p614 = por %p612, %p613
      %p615 = scmp.ne.s32.totalorder %s601, %s602
      %p616 = scmp.eq.s32.totalorder %s72, 3
      %p617 = por %p615, %p616
      %p619 = scmp.ne.s32.totalorder %s602, %s618
      %p620 = scmp.eq.s32.totalorder %s72, 0
      %p621 = por %p619, %p620
      %s622 = ssub.s32 %s74, %s81
      %p623 = scmp.eq.s32.totalorder %s622, 0
      %s625 = sadd.s32 %s624, 1
      %s626 = scalar_select %p623, %s624, %s625
      %p629 = pneg %p623
      %p630 = scmp.eq.s32.totalorder %s66, 3
      %p631 = por %p629, %p630
      %p632 = scmp.ne.s32.totalorder %s624, %s627
      %p633 = scmp.eq.s32.totalorder %s66, 0
      %p634 = por %p632, %p633
      %p635 = scmp.ne.s32.totalorder %s624, %s627
      %p636 = scmp.eq.s32.totalorder %s71, 3
      %p637 = por %p635, %p636
      %p638 = scmp.ne.s32.totalorder %s627, %s628
      %p639 = scmp.eq.s32.totalorder %s71, 0
      %p640 = por %p638, %p639
      %p641 = scmp.ne.s32.totalorder %s627, %s628
      %p642 = scmp.eq.s32.totalorder %s72, 3
      %p643 = por %p641, %p642
      %p645 = scmp.ne.s32.totalorder %s628, %s644
      %p646 = scmp.eq.s32.totalorder %s72, 0
      %p647 = por %p645, %p646
      %s648 = ssub.s32 %s74, %s81
      %p649 = scmp.eq.s32.totalorder %s648, 0
      %s651 = sadd.s32 %s650, 1
      %s652 = scalar_select %p649, %s650, %s651
      %p655 = pneg %p649
      %p656 = scmp.eq.s32.totalorder %s66, 3
      %p657 = por %p655, %p656
      %p658 = scmp.ne.s32.totalorder %s650, %s653
      %p659 = scmp.eq.s32.totalorder %s66, 0
      %p660 = por %p658, %p659
      %p661 = scmp.ne.s32.totalorder %s650, %s653
      %p662 = scmp.eq.s32.totalorder %s71, 3
      %p663 = por %p661, %p662
      %p664 = scmp.ne.s32.totalorder %s653, %s654
      %p665 = scmp.eq.s32.totalorder %s71, 0
      %p666 = por %p664, %p665
      %p667 = scmp.ne.s32.totalorder %s653, %s654
      %p668 = scmp.eq.s32.totalorder %s72, 3
      %p669 = por %p667, %p668
      %p671 = scmp.ne.s32.totalorder %s654, %s670
      %p672 = scmp.eq.s32.totalorder %s72, 0
      %p673 = por %p671, %p672
      %s674 = ssub.s32 %s74, %s81
      %p675 = scmp.eq.s32.totalorder %s674, 0
      %s677 = sadd.s32 %s676, 1
      %s678 = scalar_select %p675, %s676, %s677
      %p681 = pneg %p675
      %p682 = scmp.eq.s32.totalorder %s66, 3
      %p683 = por %p681, %p682
      %p684 = scmp.ne.s32.totalorder %s676, %s679
      %p685 = scmp.eq.s32.totalorder %s66, 0
      %p686 = por %p684, %p685
      %p687 = scmp.ne.s32.totalorder %s676, %s679
      %p688 = scmp.eq.s32.totalorder %s71, 3
      %p689 = por %p687, %p688
      %p690 = scmp.ne.s32.totalorder %s679, %s680
      %p691 = scmp.eq.s32.totalorder %s71, 0
      %p692 = por %p690, %p691
      %p693 = scmp.ne.s32.totalorder %s679, %s680
      %p694 = scmp.eq.s32.totalorder %s72, 3
      %p695 = por %p693, %p694
      %p697 = scmp.ne.s32.totalorder %s680, %s696
      %p698 = scmp.eq.s32.totalorder %s72, 0
      %p699 = por %p697, %p698
      %s701 = sadd.s32 %s700, 1
      %p704 = scmp.eq.s32.totalorder %s66, 3
      %p705 = scmp.ne.s32.totalorder %s700, %s702
      %p706 = scmp.eq.s32.totalorder %s66, 0
      %p707 = por %p705, %p706
      %p708 = scmp.ne.s32.totalorder %s700, %s702
      %p709 = scmp.eq.s32.totalorder %s71, 3
      %p710 = por %p708, %p709
      %p711 = scmp.ne.s32.totalorder %s702, %s703
      %p712 = scmp.eq.s32.totalorder %s71, 0
      %p713 = por %p711, %p712
      %p714 = scmp.ne.s32.totalorder %s702, %s703
      %p715 = scmp.eq.s32.totalorder %s72, 3
      %p716 = por %p714, %p715
      %p718 = scmp.ne.s32.totalorder %s703, %s717
      %p719 = scmp.eq.s32.totalorder %s72, 0
      %p720 = por %p718, %p719
      %s722 = sadd.s32 %s721, 1
      %p725 = scmp.eq.s32.totalorder %s66, 3
      %p726 = scmp.ne.s32.totalorder %s721, %s723
      %p727 = scmp.eq.s32.totalorder %s66, 0
      %p728 = por %p726, %p727
      %p729 = scmp.ne.s32.totalorder %s721, %s723
      %p730 = scmp.eq.s32.totalorder %s71, 3
      %p731 = por %p729, %p730
      %p732 = scmp.ne.s32.totalorder %s723, %s724
      %p733 = scmp.eq.s32.totalorder %s71, 0
      %p734 = por %p732, %p733
      %p735 = scmp.ne.s32.totalorder %s723, %s724
      %p736 = scmp.eq.s32.totalorder %s72, 3
      %p737 = por %p735, %p736
      %p739 = scmp.ne.s32.totalorder %s724, %s738
      %p740 = scmp.eq.s32.totalorder %s72, 0
      %p741 = por %p739, %p740
      %s743 = sadd.s32 %s742, 1
      %p746 = scmp.eq.s32.totalorder %s66, 3
      %p747 = scmp.ne.s32.totalorder %s742, %s744
      %p748 = scmp.eq.s32.totalorder %s66, 0
      %p749 = por %p747, %p748
      %p750 = scmp.ne.s32.totalorder %s742, %s744
      %p751 = scmp.eq.s32.totalorder %s71, 3
      %p752 = por %p750, %p751
      %p753 = scmp.ne.s32.totalorder %s744, %s745
      %p754 = scmp.eq.s32.totalorder %s71, 0
      %p755 = por %p753, %p754
      %p756 = scmp.ne.s32.totalorder %s744, %s745
      %p757 = scmp.eq.s32.totalorder %s72, 3
      %p758 = por %p756, %p757
      %p760 = scmp.ne.s32.totalorder %s745, %s759
      %p761 = scmp.eq.s32.totalorder %s72, 0
      %p762 = por %p760, %p761
      %s763 = ssub.s32 %s73, %s85
      %p764 = scmp.eq.s32.totalorder %s763, 0
      %s766 = sadd.s32 %s765, 1
      %s767 = scalar_select %p764, %s765, %s766
      %p770 = pneg %p764
      %p771 = scmp.eq.s32.totalorder %s66, 3
      %p772 = por %p770, %p771
      %p773 = scmp.ne.s32.totalorder %s765, %s768
      %p774 = scmp.eq.s32.totalorder %s66, 0
      %p775 = por %p773, %p774
      %p776 = scmp.ne.s32.totalorder %s765, %s768
      %p777 = scmp.eq.s32.totalorder %s71, 3
      %p778 = por %p776, %p777
      %p779 = scmp.ne.s32.totalorder %s768, %s769
      %p780 = scmp.eq.s32.totalorder %s71, 0
      %p781 = por %p779, %p780
      %p782 = scmp.ne.s32.totalorder %s768, %s769
      %p783 = scmp.eq.s32.totalorder %s72, 3
      %p784 = por %p782, %p783
      %p786 = scmp.ne.s32.totalorder %s769, %s785
      %p787 = scmp.eq.s32.totalorder %s72, 0
      %p788 = por %p786, %p787
      %p789 = scmp.le.s32.totalorder 1, %s66
      %p790 = scmp.lt.s32.totalorder %s66, 5
      %p791 = pnand %p789, %p790
      %p792 = pneg %p791
      // Predicated region
      $region9: #{weight_decoder_forward.1} parent=5 // pred_check
        _
      $region10: #{weight_decoder_forward.1} parent=5 // pred_check_branch
        %794 = sbr.rel (%p791) target = $region12
      $region11: #{weight_decoder_forward.1} parent=5 // pred_region
        %s795 = ssub.s32 %s66, 1
        // Predicated region
        $region13: #{weight_decoder_forward.1} parent=11 // pred_check
          %p796 = pneg %p151
        $region14: #{weight_decoder_forward.1} parent=11 // pred_check_branch
          %798 = sbr.rel (%p796) target = $region16
        $region15: #{weight_decoder_forward.1} parent=11 // pred_region
          _
        $region16: #{weight_decoder_forward.1} parent=11 // pred_fallthru
          _
        // Predicated region
        $region17: #{weight_decoder_forward.1} parent=11 // pred_check
          %p799 = pneg %p172
        $region18: #{weight_decoder_forward.1} parent=11 // pred_check_branch
          %801 = sbr.rel (%p799) target = $region20
        $region19: #{weight_decoder_forward.1} parent=11 // pred_region
          %803 = vsyncadd [#allocation7], 0
          %s804 = sshll.u32 %s3, 4
          %s805 = int_to_ptr.hbm [resolvable:$true] %s804
          %s806 = sshll.u32 [#allocation8], 4
          %s807 = int_to_ptr.vmem [resolvable:$true] %s806
          %812 = dma.hbm_to_vmem [thread:$0]  %s805, 2048, %s807, [#allocation7], 128, 128, 8
        $region20: #{weight_decoder_forward.1} parent=11 // pred_fallthru
          _
        // Predicated region
        $region21: #{weight_decoder_forward.1} parent=11 // pred_check
          %p813 = pneg %p713
        $region22: #{weight_decoder_forward.1} parent=11 // pred_check_branch
          %815 = sbr.rel (%p813) target = $region24
        $region23: #{weight_decoder_forward.1} parent=11 // pred_region
          _
        $region24: #{weight_decoder_forward.1} parent=11 // pred_fallthru
          _
        // Predicated region
        $region25: #{weight_decoder_forward.1} parent=11 // pred_check
          %p816 = pneg %p734
        $region26: #{weight_decoder_forward.1} parent=11 // pred_check_branch
          %818 = sbr.rel (%p816) target = $region28
        $region27: #{weight_decoder_forward.1} parent=11 // pred_region
          _
        $region28: #{weight_decoder_forward.1} parent=11 // pred_fallthru
          _
        // Predicated region
        $region29: #{weight_decoder_forward.1} parent=11 // pred_check
          %p819 = pneg %p755
        $region30: #{weight_decoder_forward.1} parent=11 // pred_check_branch
          %821 = sbr.rel (%p819) target = $region32
        $region31: #{weight_decoder_forward.1} parent=11 // pred_region
          %823 = vsyncadd [#allocation31], 0
          %s824 = sshll.u32 %s26, 4
          %s825 = int_to_ptr.hbm [resolvable:$true] %s824
          %s826 = sshll.u32 [#allocation32], 4
          %s827 = int_to_ptr.vmem [resolvable:$true] %s826
          %832 = dma.hbm_to_vmem [thread:$0]  %s825, 2048, %s827, [#allocation31], 128, 128, 8
        $region32: #{weight_decoder_forward.1} parent=11 // pred_fallthru
          _
      $region12: #{weight_decoder_forward.1} parent=5 // pred_fallthru
        _
      %p833 = scmp.lt.s32.totalorder %s66, 4
      // Predicated region
      $region33: #{weight_decoder_forward.1} parent=5 // pred_check
        %p834 = pneg %p833
      $region34: #{weight_decoder_forward.1} parent=5 // pred_check_branch
        %836 = sbr.rel (%p834) target = $region36
      $region35: #{weight_decoder_forward.1} parent=5 // pred_region
        // Predicated region
        $region37: #{weight_decoder_forward.1} parent=35 // pred_check
          %p837 = pneg %p98
        $region38: #{weight_decoder_forward.1} parent=35 // pred_check_branch
          %839 = sbr.rel (%p837) target = $region40
        $region39: #{weight_decoder_forward.1} parent=35 // pred_region
          %s840 = sand.u32 %s88, 1
          %s841 = scalar_lea.sflag [#allocation4], %s840
          %s842 = sand.u32 %s88, 1
          %s843 = smul.addr %s842, 8
          %s844 = scalar_lea.vmem [#allocation3], %s843
          %846 = vsyncadd %s841, 0
          %s847 = smul.addr %s73, 8
          %s848 = scalar_lea.hbm %s0, %s847
          %s850 = sshll.u32 %s848, 4
          %s851 = int_to_ptr.hbm [resolvable:$true] %s850
          %s852 = sshll.u32 %s844, 4
          %s853 = int_to_ptr.vmem [resolvable:$true] %s852
          %855 = dma.hbm_to_vmem [thread:$0]  %s851, 128, %s853, %s841
        $region40: #{weight_decoder_forward.1} parent=35 // pred_fallthru
          _
        // Predicated region
        $region41: #{weight_decoder_forward.1} parent=35 // pred_check
          %p856 = pneg %p124
        $region42: #{weight_decoder_forward.1} parent=35 // pred_check_branch
          %858 = sbr.rel (%p856) target = $region44
        $region43: #{weight_decoder_forward.1} parent=35 // pred_region
          %s859 = sand.u32 %s66, 1
          %s860 = scalar_lea.sflag [#allocation7], %s859
          %s861 = sand.u32 %s114, 1
          %s862 = smul.addr %s861, 8
          %s863 = scalar_lea.vmem [#allocation6], %s862
          %865 = vsyncadd %s860, 0
          %s866 = smul.addr %s73, 8
          %s867 = scalar_lea.hbm %s1, %s866
          %s869 = sshll.u32 %s867, 4
          %s870 = int_to_ptr.hbm [resolvable:$true] %s869
          %s871 = sshll.u32 %s863, 4
          %s872 = int_to_ptr.vmem [resolvable:$true] %s871
          %874 = dma.hbm_to_vmem [thread:$0]  %s870, 128, %s872, %s860
        $region44: #{weight_decoder_forward.1} parent=35 // pred_fallthru
          _
        // Predicated region
        $region45: #{weight_decoder_forward.1} parent=35 // pred_check
          %p875 = pneg %p192
        $region46: #{weight_decoder_forward.1} parent=35 // pred_check_branch
          %877 = sbr.rel (%p875) target = $region48
        $region47: #{weight_decoder_forward.1} parent=35 // pred_region
          %p878 = scmp.lt.s32.totalorder %s74, 1
          %s879 = scalar_select %p878, %s74, 1
          %s880 = scalar_lea.vmem %s4, %s879
        $region48: #{weight_decoder_forward.1} parent=35 // pred_fallthru
          _
        // Predicated region
        $region49: #{weight_decoder_forward.1} parent=35 // pred_check
          %p881 = pneg %p218
        $region50: #{weight_decoder_forward.1} parent=35 // pred_check_branch
          %883 = sbr.rel (%p881) target = $region52
        $region51: #{weight_decoder_forward.1} parent=35 // pred_region
          %p884 = scmp.lt.s32.totalorder %s74, 1
          %s885 = scalar_select %p884, %s74, 1
          %s886 = scalar_lea.vmem %s5, %s885
        $region52: #{weight_decoder_forward.1} parent=35 // pred_fallthru
          _
        // Predicated region
        $region53: #{weight_decoder_forward.1} parent=35 // pred_check
          %p887 = pneg %p244
        $region54: #{weight_decoder_forward.1} parent=35 // pred_check_branch
          %889 = sbr.rel (%p887) target = $region56
        $region55: #{weight_decoder_forward.1} parent=35 // pred_region
          %s890 = sand.u32 %s66, 1
          %s891 = scalar_lea.sflag [#allocation10], %s890
          %s892 = sand.u32 %s234, 1
          %s893 = smul.addr %s892, 128
          %s894 = scalar_lea.vmem [#allocation9], %s893
          %896 = vsyncadd %s891, 0
          %s897 = smul.addr %s74, 16
          %s898 = smul.addr %s897, 8
          %s899 = scalar_lea.hbm %s6, %s898
          %s900 = sshll.u32 %s899, 4
          %s901 = int_to_ptr.hbm [resolvable:$true] %s900
          %s902 = sshll.u32 %s894, 4
          %s903 = int_to_ptr.vmem [resolvable:$true] %s902
          %908 = dma.hbm_to_vmem [thread:$0]  %s901, 2048, %s903, %s891, 128, 128, 8
        $region56: #{weight_decoder_forward.1} parent=35 // pred_fallthru
          _
        // Predicated region
        $region57: #{weight_decoder_forward.1} parent=35 // pred_check
          %p909 = pneg %p270
        $region58: #{weight_decoder_forward.1} parent=35 // pred_check_branch
          %911 = sbr.rel (%p909) target = $region60
        $region59: #{weight_decoder_forward.1} parent=35 // pred_region
          %s912 = sand.u32 %s66, 1
          %s913 = scalar_lea.sflag [#allocation10], %s912
          %s914 = sand.u32 %s260, 1
          %s915 = smul.addr %s914, 128
          %s916 = scalar_lea.vmem [#allocation11], %s915
          %918 = vsyncadd %s913, 0
          %s919 = smul.addr %s74, 16
          %s920 = smul.addr %s919, 8
          %s921 = scalar_lea.hbm %s7, %s920
          %s922 = sshll.u32 %s921, 4
          %s923 = int_to_ptr.hbm [resolvable:$true] %s922
          %s924 = sshll.u32 %s916, 4
          %s925 = int_to_ptr.vmem [resolvable:$true] %s924
          %930 = dma.hbm_to_vmem [thread:$0]  %s923, 2048, %s925, %s913, 128, 128, 8
        $region60: #{weight_decoder_forward.1} parent=35 // pred_fallthru
          _
        // Predicated region
        $region61: #{weight_decoder_forward.1} parent=35 // pred_check
          %p931 = pneg %p296
        $region62: #{weight_decoder_forward.1} parent=35 // pred_check_branch
          %933 = sbr.rel (%p931) target = $region64
        $region63: #{weight_decoder_forward.1} parent=35 // pred_region
          %s934 = sand.u32 %s66, 1
          %s935 = scalar_lea.sflag [#allocation13], %s934
          %s936 = sand.u32 %s286, 1
          %s937 = smul.addr %s936, 128
          %s938 = scalar_lea.vmem [#allocation12], %s937
          %940 = vsyncadd %s935, 0
          %s941 = smul.addr %s74, 16
          %s942 = smul.addr %s941, 8
          %s943 = scalar_lea.hbm %s8, %s942
          %s944 = sshll.u32 %s943, 4
          %s945 = int_to_ptr.hbm [resolvable:$true] %s944
          %s946 = sshll.u32 %s938, 4
          %s947 = int_to_ptr.vmem [resolvable:$true] %s946
          %952 = dma.hbm_to_vmem [thread:$0]  %s945, 2048, %s947, %s935, 128, 128, 8
        $region64: #{weight_decoder_forward.1} parent=35 // pred_fallthru
          _
        // Predicated region
        $region65: #{weight_decoder_forward.1} parent=35 // pred_check
          %p953 = pneg %p322
        $region66: #{weight_decoder_forward.1} parent=35 // pred_check_branch
          %955 = sbr.rel (%p953) target = $region68
        $region67: #{weight_decoder_forward.1} parent=35 // pred_region
          %s956 = sand.u32 %s66, 1
          %s957 = scalar_lea.sflag [#allocation13], %s956
          %s958 = sand.u32 %s312, 1
          %s959 = smul.addr %s958, 128
          %s960 = scalar_lea.vmem [#allocation14], %s959
          %962 = vsyncadd %s957, 0
          %s963 = smul.addr %s74, 16
          %s964 = smul.addr %s963, 8
          %s965 = scalar_lea.hbm %s9, %s964
          %s966 = sshll.u32 %s965, 4
          %s967 = int_to_ptr.hbm [resolvable:$true] %s966
          %s968 = sshll.u32 %s960, 4
          %s969 = int_to_ptr.vmem [resolvable:$true] %s968
          %974 = dma.hbm_to_vmem [thread:$0]  %s967, 2048, %s969, %s957, 128, 128, 8
        $region68: #{weight_decoder_forward.1} parent=35 // pred_fallthru
          _
        // Predicated region
        $region69: #{weight_decoder_forward.1} parent=35 // pred_check
          %p975 = pneg %p348
        $region70: #{weight_decoder_forward.1} parent=35 // pred_check_branch
          %977 = sbr.rel (%p975) target = $region72
        $region71: #{weight_decoder_forward.1} parent=35 // pred_region
          %s978 = sand.u32 %s66, 1
          %s979 = scalar_lea.sflag [#allocation16], %s978
          %s980 = sand.u32 %s338, 1
          %s981 = scalar_lea.vmem [#allocation15], %s980
          %983 = vsyncadd %s979, 0
          %s984 = scalar_lea.hbm %s10, %s74
          %s986 = sshll.u32 %s984, 4
          %s987 = int_to_ptr.hbm [resolvable:$true] %s986
          %s988 = sshll.u32 %s981, 4
          %s989 = int_to_ptr.vmem [resolvable:$true] %s988
          %991 = dma.hbm_to_vmem [thread:$0]  %s987, 16, %s989, %s979
        $region72: #{weight_decoder_forward.1} parent=35 // pred_fallthru
          _
        // Predicated region
        $region73: #{weight_decoder_forward.1} parent=35 // pred_check
          %p992 = pneg %p374
        $region74: #{weight_decoder_forward.1} parent=35 // pred_check_branch
          %994 = sbr.rel (%p992) target = $region76
        $region75: #{weight_decoder_forward.1} parent=35 // pred_region
          %p995 = scmp.lt.s32.totalorder %s74, 1
          %s996 = scalar_select %p995, %s74, 1
          %s997 = scalar_lea.vmem %s11, %s996
        $region76: #{weight_decoder_forward.1} parent=35 // pred_fallthru
          _
        // Predicated region
        $region77: #{weight_decoder_forward.1} parent=35 // pred_check
          %p998 = pneg %p400
        $region78: #{weight_decoder_forward.1} parent=35 // pred_check_branch
          %1000 = sbr.rel (%p998) target = $region80
        $region79: #{weight_decoder_forward.1} parent=35 // pred_region
          %s1001 = sand.u32 %s66, 1
          %s1002 = scalar_lea.sflag [#allocation16], %s1001
          %s1003 = sand.u32 %s390, 1
          %s1004 = scalar_lea.vmem [#allocation17], %s1003
          %1006 = vsyncadd %s1002, 0
          %s1007 = scalar_lea.hbm %s12, %s74
          %s1009 = sshll.u32 %s1007, 4
          %s1010 = int_to_ptr.hbm [resolvable:$true] %s1009
          %s1011 = sshll.u32 %s1004, 4
          %s1012 = int_to_ptr.vmem [resolvable:$true] %s1011
          %1014 = dma.hbm_to_vmem [thread:$0]  %s1010, 16, %s1012, %s1002
        $region80: #{weight_decoder_forward.1} parent=35 // pred_fallthru
          _
        // Predicated region
        $region81: #{weight_decoder_forward.1} parent=35 // pred_check
          %p1015 = pneg %p426
        $region82: #{weight_decoder_forward.1} parent=35 // pred_check_branch
          %1017 = sbr.rel (%p1015) target = $region84
        $region83: #{weight_decoder_forward.1} parent=35 // pred_region
          %s1018 = sand.u32 %s66, 1
          %s1019 = scalar_lea.sflag [#allocation19], %s1018
          %s1020 = sand.u32 %s416, 1
          %s1021 = smul.addr %s1020, 128
          %s1022 = scalar_lea.vmem [#allocation18], %s1021
          %1024 = vsyncadd %s1019, 0
          %s1025 = smul.addr %s74, 16
          %s1026 = smul.addr %s1025, 8
          %s1027 = scalar_lea.hbm %s13, %s1026
          %s1028 = sshll.u32 %s1027, 4
          %s1029 = int_to_ptr.hbm [resolvable:$true] %s1028
          %s1030 = sshll.u32 %s1022, 4
          %s1031 = int_to_ptr.vmem [resolvable:$true] %s1030
          %1036 = dma.hbm_to_vmem [thread:$0]  %s1029, 2048, %s1031, %s1019, 128, 128, 8
        $region84: #{weight_decoder_forward.1} parent=35 // pred_fallthru
          _
        // Predicated region
        $region85: #{weight_decoder_forward.1} parent=35 // pred_check
          %p1037 = pneg %p452
        $region86: #{weight_decoder_forward.1} parent=35 // pred_check_branch
          %1039 = sbr.rel (%p1037) target = $region88
        $region87: #{weight_decoder_forward.1} parent=35 // pred_region
          %s1040 = sand.u32 %s66, 1
          %s1041 = scalar_lea.sflag [#allocation19], %s1040
          %s1042 = sand.u32 %s442, 1
          %s1043 = smul.addr %s1042, 128
          %s1044 = scalar_lea.vmem [#allocation20], %s1043
          %1046 = vsyncadd %s1041, 0
          %s1047 = smul.addr %s74, 16
          %s1048 = smul.addr %s1047, 8
          %s1049 = scalar_lea.hbm %s14, %s1048
          %s1050 = sshll.u32 %s1049, 4
          %s1051 = int_to_ptr.hbm [resolvable:$true] %s1050
          %s1052 = sshll.u32 %s1044, 4
          %s1053 = int_to_ptr.vmem [resolvable:$true] %s1052
          %1058 = dma.hbm_to_vmem [thread:$0]  %s1051, 2048, %s1053, %s1041, 128, 128, 8
        $region88: #{weight_decoder_forward.1} parent=35 // pred_fallthru
          _
        // Predicated region
        $region89: #{weight_decoder_forward.1} parent=35 // pred_check
          %p1059 = pneg %p478
        $region90: #{weight_decoder_forward.1} parent=35 // pred_check_branch
          %1061 = sbr.rel (%p1059) target = $region92
        $region91: #{weight_decoder_forward.1} parent=35 // pred_region
          %s1062 = sand.u32 %s66, 1
          %s1063 = scalar_lea.sflag [#allocation22], %s1062
          %s1064 = sand.u32 %s468, 1
          %s1065 = smul.addr %s1064, 128
          %s1066 = scalar_lea.vmem [#allocation21], %s1065
          %1068 = vsyncadd %s1063, 0
          %s1069 = smul.addr %s74, 16
          %s1070 = smul.addr %s1069, 8
          %s1071 = scalar_lea.hbm %s15, %s1070
          %s1072 = sshll.u32 %s1071, 4
          %s1073 = int_to_ptr.hbm [resolvable:$true] %s1072
          %s1074 = sshll.u32 %s1066, 4
          %s1075 = int_to_ptr.vmem [resolvable:$true] %s1074
          %1080 = dma.hbm_to_vmem [thread:$0]  %s1073, 2048, %s1075, %s1063, 128, 128, 8
        $region92: #{weight_decoder_forward.1} parent=35 // pred_fallthru
          _
        // Predicated region
        $region93: #{weight_decoder_forward.1} parent=35 // pred_check
          %p1081 = pneg %p504
        $region94: #{weight_decoder_forward.1} parent=35 // pred_check_branch
          %1083 = sbr.rel (%p1081) target = $region96
        $region95: #{weight_decoder_forward.1} parent=35 // pred_region
          %s1084 = sand.u32 %s66, 1
          %s1085 = scalar_lea.sflag [#allocation22], %s1084
          %s1086 = sand.u32 %s494, 1
          %s1087 = smul.addr %s1086, 128
          %s1088 = scalar_lea.vmem [#allocation23], %s1087
          %1090 = vsyncadd %s1085, 0
          %s1091 = smul.addr %s74, 16
          %s1092 = smul.addr %s1091, 8
          %s1093 = scalar_lea.hbm %s16, %s1092
          %s1094 = sshll.u32 %s1093, 4
          %s1095 = int_to_ptr.hbm [resolvable:$true] %s1094
          %s1096 = sshll.u32 %s1088, 4
          %s1097 = int_to_ptr.vmem [resolvable:$true] %s1096
          %1102 = dma.hbm_to_vmem [thread:$0]  %s1095, 2048, %s1097, %s1085, 128, 128, 8
        $region96: #{weight_decoder_forward.1} parent=35 // pred_fallthru
          _
        // Predicated region
        $region97: #{weight_decoder_forward.1} parent=35 // pred_check
          %p1103 = pneg %p530
        $region98: #{weight_decoder_forward.1} parent=35 // pred_check_branch
          %1105 = sbr.rel (%p1103) target = $region100
        $region99: #{weight_decoder_forward.1} parent=35 // pred_region
          %s1106 = sand.u32 %s66, 1
          %s1107 = scalar_lea.sflag [#allocation25], %s1106
          %s1108 = sand.u32 %s520, 1
          %s1109 = scalar_lea.vmem [#allocation24], %s1108
          %1111 = vsyncadd %s1107, 0
          %s1112 = scalar_lea.hbm %s17, %s74
          %s1114 = sshll.u32 %s1112, 4
          %s1115 = int_to_ptr.hbm [resolvable:$true] %s1114
          %s1116 = sshll.u32 %s1109, 4
          %s1117 = int_to_ptr.vmem [resolvable:$true] %s1116
          %1119 = dma.hbm_to_vmem [thread:$0]  %s1115, 16, %s1117, %s1107
        $region100: #{weight_decoder_forward.1} parent=35 // pred_fallthru
          _
        // Predicated region
        $region101: #{weight_decoder_forward.1} parent=35 // pred_check
          %p1120 = pneg %p556
        $region102: #{weight_decoder_forward.1} parent=35 // pred_check_branch
          %1122 = sbr.rel (%p1120) target = $region104
        $region103: #{weight_decoder_forward.1} parent=35 // pred_region
          %p1123 = scmp.lt.s32.totalorder %s74, 1
          %s1124 = scalar_select %p1123, %s74, 1
          %s1125 = scalar_lea.vmem %s18, %s1124
        $region104: #{weight_decoder_forward.1} parent=35 // pred_fallthru
          _
        // Predicated region
        $region105: #{weight_decoder_forward.1} parent=35 // pred_check
          %p1126 = pneg %p582
        $region106: #{weight_decoder_forward.1} parent=35 // pred_check_branch
          %1128 = sbr.rel (%p1126) target = $region108
        $region107: #{weight_decoder_forward.1} parent=35 // pred_region
          %s1129 = sand.u32 %s66, 1
          %s1130 = scalar_lea.sflag [#allocation25], %s1129
          %s1131 = sand.u32 %s572, 1
          %s1132 = scalar_lea.vmem [#allocation26], %s1131
          %1134 = vsyncadd %s1130, 0
          %s1135 = scalar_lea.hbm %s19, %s74
          %s1137 = sshll.u32 %s1135, 4
          %s1138 = int_to_ptr.hbm [resolvable:$true] %s1137
          %s1139 = sshll.u32 %s1132, 4
          %s1140 = int_to_ptr.vmem [resolvable:$true] %s1139
          %1142 = dma.hbm_to_vmem [thread:$0]  %s1138, 16, %s1140, %s1130
        $region108: #{weight_decoder_forward.1} parent=35 // pred_fallthru
          _
        // Predicated region
        $region109: #{weight_decoder_forward.1} parent=35 // pred_check
          %p1143 = pneg %p608
        $region110: #{weight_decoder_forward.1} parent=35 // pred_check_branch
          %1145 = sbr.rel (%p1143) target = $region112
        $region111: #{weight_decoder_forward.1} parent=35 // pred_region
          %s1146 = sand.u32 %s66, 1
          %s1147 = scalar_lea.sflag [#allocation28], %s1146
          %s1148 = sand.u32 %s598, 1
          %s1149 = smul.addr %s1148, 512
          %s1150 = scalar_lea.vmem [#allocation27], %s1149
          %1152 = vsyncadd %s1147, 0
          %s1153 = smul.addr %s74, 64
          %s1154 = smul.addr %s1153, 8
          %s1155 = scalar_lea.hbm %s20, %s1154
          %s1156 = sshll.u32 %s1155, 4
          %s1157 = int_to_ptr.hbm [resolvable:$true] %s1156
          %s1158 = sshll.u32 %s1150, 4
          %s1159 = int_to_ptr.vmem [resolvable:$true] %s1158
          %1164 = dma.hbm_to_vmem [thread:$0]  %s1157, 8192, %s1159, %s1147, 512, 512, 32
        $region112: #{weight_decoder_forward.1} parent=35 // pred_fallthru
          _
        // Predicated region
        $region113: #{weight_decoder_forward.1} parent=35 // pred_check
          %p1165 = pneg %p634
        $region114: #{weight_decoder_forward.1} parent=35 // pred_check_branch
          %1167 = sbr.rel (%p1165) target = $region116
        $region115: #{weight_decoder_forward.1} parent=35 // pred_region
          %p1168 = scmp.lt.s32.totalorder %s74, 1
          %s1169 = scalar_select %p1168, %s74, 1
          %s1170 = smul.addr %s1169, 4
          %s1171 = scalar_lea.vmem %s21, %s1170
        $region116: #{weight_decoder_forward.1} parent=35 // pred_fallthru
          _
        // Predicated region
        $region117: #{weight_decoder_forward.1} parent=35 // pred_check
          %p1172 = pneg %p660
        $region118: #{weight_decoder_forward.1} parent=35 // pred_check_branch
          %1174 = sbr.rel (%p1172) target = $region120
        $region119: #{weight_decoder_forward.1} parent=35 // pred_region
          %s1175 = sand.u32 %s66, 1
          %s1176 = scalar_lea.sflag [#allocation28], %s1175
          %s1177 = sand.u32 %s650, 1
          %s1178 = smul.addr %s1177, 512
          %s1179 = scalar_lea.vmem [#allocation29], %s1178
          %1181 = vsyncadd %s1176, 0
          %s1182 = smul.addr %s74, 64
          %s1183 = smul.addr %s1182, 8
          %s1184 = scalar_lea.hbm %s22, %s1183
          %s1185 = sshll.u32 %s1184, 4
          %s1186 = int_to_ptr.hbm [resolvable:$true] %s1185
          %s1187 = sshll.u32 %s1179, 4
          %s1188 = int_to_ptr.vmem [resolvable:$true] %s1187
          %1193 = dma.hbm_to_vmem [thread:$0]  %s1186, 8192, %s1188, %s1176, 128, 128, 8
        $region120: #{weight_decoder_forward.1} parent=35 // pred_fallthru
          _
        // Predicated region
        $region121: #{weight_decoder_forward.1} parent=35 // pred_check
          %p1194 = pneg %p686
        $region122: #{weight_decoder_forward.1} parent=35 // pred_check_branch
          %1196 = sbr.rel (%p1194) target = $region124
        $region123: #{weight_decoder_forward.1} parent=35 // pred_region
          %s1197 = sand.u32 %s66, 1
          %s1198 = scalar_lea.sflag [#allocation31], %s1197
          %s1199 = sand.u32 %s676, 1
          %s1200 = scalar_lea.vmem [#allocation30], %s1199
          %1202 = vsyncadd %s1198, 0
          %s1203 = scalar_lea.hbm %s23, %s74
          %s1205 = sshll.u32 %s1203, 4
          %s1206 = int_to_ptr.hbm [resolvable:$true] %s1205
          %s1207 = sshll.u32 %s1200, 4
          %s1208 = int_to_ptr.vmem [resolvable:$true] %s1207
          %1210 = dma.hbm_to_vmem [thread:$0]  %s1206, 16, %s1208, %s1198
        $region124: #{weight_decoder_forward.1} parent=35 // pred_fallthru
          _
      $region36: #{weight_decoder_forward.1} parent=5 // pred_fallthru
        _
      %p1211 = scmp.le.s32.totalorder 1, %s66
      %p1212 = scmp.lt.s32.totalorder %s66, 5
      %p1213 = pnand %p1211, %p1212
      %p1214 = pneg %p1213
      // Predicated region
      $region125: #{weight_decoder_forward.1} parent=5 // pred_check
        _
      $region126: #{weight_decoder_forward.1} parent=5 // pred_check_branch
        %1216 = sbr.rel (%p1213) target = $region128
      $region127: #{weight_decoder_forward.1} parent=5 // pred_region
        %s1217 = ssub.s32 %s66, 1
        %s1218 = sand.u32 %s91, 1
        %s1219 = scalar_lea.sflag [#allocation4], %s1218
        %s1220 = sand.u32 %s91, 1
        %s1221 = smul.addr %s1220, 8
        %s1222 = scalar_lea.vmem [#allocation3], %s1221
        // Predicated region
        $region129: #{weight_decoder_forward.1} parent=127 // pred_check
          %p1223 = pneg %p104
        $region130: #{weight_decoder_forward.1} parent=127 // pred_check_branch
          %1225 = sbr.rel (%p1223) target = $region132
        $region131: #{weight_decoder_forward.1} parent=127 // pred_region
          %1227 = dma.done %s1219, 128
        $region132: #{weight_decoder_forward.1} parent=127 // pred_fallthru
          _
        %s1228 = sand.u32 %s71, 1
        %s1229 = scalar_lea.sflag [#allocation7], %s1228
        %s1230 = sand.u32 %s117, 1
        %s1231 = smul.addr %s1230, 8
        %s1232 = scalar_lea.vmem [#allocation6], %s1231
        // Predicated region
        $region133: #{weight_decoder_forward.1} parent=127 // pred_check
          %p1233 = pneg %p130
        $region134: #{weight_decoder_forward.1} parent=127 // pred_check_branch
          %1235 = sbr.rel (%p1233) target = $region136
        $region135: #{weight_decoder_forward.1} parent=127 // pred_region
          %1237 = dma.done %s1229, 128
        $region136: #{weight_decoder_forward.1} parent=127 // pred_fallthru
          _
        // Predicated region
        $region137: #{weight_decoder_forward.1} parent=127 // pred_check
          %p1238 = pneg %p172
        $region138: #{weight_decoder_forward.1} parent=127 // pred_check_branch
          %1240 = sbr.rel (%p1238) target = $region140
        $region139: #{weight_decoder_forward.1} parent=127 // pred_region
          %1242 = dma.done [#allocation7], 2048
        $region140: #{weight_decoder_forward.1} parent=127 // pred_fallthru
          _
        %s1243 = sand.u32 %s71, 1
        %s1244 = scalar_lea.sflag [#allocation10], %s1243
        %s1245 = sand.u32 %s237, 1
        %s1246 = smul.addr %s1245, 128
        %s1247 = scalar_lea.vmem [#allocation9], %s1246
        // Predicated region
        $region141: #{weight_decoder_forward.1} parent=127 // pred_check
          %p1248 = pneg %p250
        $region142: #{weight_decoder_forward.1} parent=127 // pred_check_branch
          %1250 = sbr.rel (%p1248) target = $region144
        $region143: #{weight_decoder_forward.1} parent=127 // pred_region
          %1252 = dma.done %s1244, 2048
        $region144: #{weight_decoder_forward.1} parent=127 // pred_fallthru
          _
        %s1253 = sand.u32 %s71, 1
        %s1254 = scalar_lea.sflag [#allocation10], %s1253
        %s1255 = sand.u32 %s263, 1
        %s1256 = smul.addr %s1255, 128
        %s1257 = scalar_lea.vmem [#allocation11], %s1256
        // Predicated region
        $region145: #{weight_decoder_forward.1} parent=127 // pred_check
          %p1258 = pneg %p276
        $region146: #{weight_decoder_forward.1} parent=127 // pred_check_branch
          %1260 = sbr.rel (%p1258) target = $region148
        $region147: #{weight_decoder_forward.1} parent=127 // pred_region
          %1262 = dma.done %s1254, 2048
        $region148: #{weight_decoder_forward.1} parent=127 // pred_fallthru
          _
        %s1263 = sand.u32 %s71, 1
        %s1264 = scalar_lea.sflag [#allocation13], %s1263
        %s1265 = sand.u32 %s289, 1
        %s1266 = smul.addr %s1265, 128
        %s1267 = scalar_lea.vmem [#allocation12], %s1266
        // Predicated region
        $region149: #{weight_decoder_forward.1} parent=127 // pred_check
          %p1268 = pneg %p302
        $region150: #{weight_decoder_forward.1} parent=127 // pred_check_branch
          %1270 = sbr.rel (%p1268) target = $region152
        $region151: #{weight_decoder_forward.1} parent=127 // pred_region
          %1272 = dma.done %s1264, 2048
        $region152: #{weight_decoder_forward.1} parent=127 // pred_fallthru
          _
        %s1273 = sand.u32 %s71, 1
        %s1274 = scalar_lea.sflag [#allocation13], %s1273
        %s1275 = sand.u32 %s315, 1
        %s1276 = smul.addr %s1275, 128
        %s1277 = scalar_lea.vmem [#allocation14], %s1276
        // Predicated region
        $region153: #{weight_decoder_forward.1} parent=127 // pred_check
          %p1278 = pneg %p328
        $region154: #{weight_decoder_forward.1} parent=127 // pred_check_branch
          %1280 = sbr.rel (%p1278) target = $region156
        $region155: #{weight_decoder_forward.1} parent=127 // pred_region
          %1282 = dma.done %s1274, 2048
        $region156: #{weight_decoder_forward.1} parent=127 // pred_fallthru
          _
        %s1283 = sand.u32 %s71, 1
        %s1284 = scalar_lea.sflag [#allocation16], %s1283
        %s1285 = sand.u32 %s341, 1
        %s1286 = scalar_lea.vmem [#allocation15], %s1285
        // Predicated region
        $region157: #{weight_decoder_forward.1} parent=127 // pred_check
          %p1287 = pneg %p354
        $region158: #{weight_decoder_forward.1} parent=127 // pred_check_branch
          %1289 = sbr.rel (%p1287) target = $region160
        $region159: #{weight_decoder_forward.1} parent=127 // pred_region
          %1291 = dma.done %s1284, 16
        $region160: #{weight_decoder_forward.1} parent=127 // pred_fallthru
          _
        %s1292 = sand.u32 %s71, 1
        %s1293 = scalar_lea.sflag [#allocation16], %s1292
        %s1294 = sand.u32 %s393, 1
        %s1295 = scalar_lea.vmem [#allocation17], %s1294
        // Predicated region
        $region161: #{weight_decoder_forward.1} parent=127 // pred_check
          %p1296 = pneg %p406
        $region162: #{weight_decoder_forward.1} parent=127 // pred_check_branch
          %1298 = sbr.rel (%p1296) target = $region164
        $region163: #{weight_decoder_forward.1} parent=127 // pred_region
          %1300 = dma.done %s1293, 16
        $region164: #{weight_decoder_forward.1} parent=127 // pred_fallthru
          _
        %s1301 = sand.u32 %s71, 1
        %s1302 = scalar_lea.sflag [#allocation19], %s1301
        %s1303 = sand.u32 %s419, 1
        %s1304 = smul.addr %s1303, 128
        %s1305 = scalar_lea.vmem [#allocation18], %s1304
        // Predicated region
        $region165: #{weight_decoder_forward.1} parent=127 // pred_check
          %p1306 = pneg %p432
        $region166: #{weight_decoder_forward.1} parent=127 // pred_check_branch
          %1308 = sbr.rel (%p1306) target = $region168
        $region167: #{weight_decoder_forward.1} parent=127 // pred_region
          %1310 = dma.done %s1302, 2048
        $region168: #{weight_decoder_forward.1} parent=127 // pred_fallthru
          _
        %s1311 = sand.u32 %s71, 1
        %s1312 = scalar_lea.sflag [#allocation19], %s1311
        %s1313 = sand.u32 %s445, 1
        %s1314 = smul.addr %s1313, 128
        %s1315 = scalar_lea.vmem [#allocation20], %s1314
        // Predicated region
        $region169: #{weight_decoder_forward.1} parent=127 // pred_check
          %p1316 = pneg %p458
        $region170: #{weight_decoder_forward.1} parent=127 // pred_check_branch
          %1318 = sbr.rel (%p1316) target = $region172
        $region171: #{weight_decoder_forward.1} parent=127 // pred_region
          %1320 = dma.done %s1312, 2048
        $region172: #{weight_decoder_forward.1} parent=127 // pred_fallthru
          _
        %s1321 = sand.u32 %s71, 1
        %s1322 = scalar_lea.sflag [#allocation22], %s1321
        %s1323 = sand.u32 %s471, 1
        %s1324 = smul.addr %s1323, 128
        %s1325 = scalar_lea.vmem [#allocation21], %s1324
        // Predicated region
        $region173: #{weight_decoder_forward.1} parent=127 // pred_check
          %p1326 = pneg %p484
        $region174: #{weight_decoder_forward.1} parent=127 // pred_check_branch
          %1328 = sbr.rel (%p1326) target = $region176
        $region175: #{weight_decoder_forward.1} parent=127 // pred_region
          %1330 = dma.done %s1322, 2048
        $region176: #{weight_decoder_forward.1} parent=127 // pred_fallthru
          _
        %s1331 = sand.u32 %s71, 1
        %s1332 = scalar_lea.sflag [#allocation22], %s1331
        %s1333 = sand.u32 %s497, 1
        %s1334 = smul.addr %s1333, 128
        %s1335 = scalar_lea.vmem [#allocation23], %s1334
        // Predicated region
        $region177: #{weight_decoder_forward.1} parent=127 // pred_check
          %p1336 = pneg %p510
        $region178: #{weight_decoder_forward.1} parent=127 // pred_check_branch
          %1338 = sbr.rel (%p1336) target = $region180
        $region179: #{weight_decoder_forward.1} parent=127 // pred_region
          %1340 = dma.done %s1332, 2048
        $region180: #{weight_decoder_forward.1} parent=127 // pred_fallthru
          _
        %s1341 = sand.u32 %s71, 1
        %s1342 = scalar_lea.sflag [#allocation25], %s1341
        %s1343 = sand.u32 %s523, 1
        %s1344 = scalar_lea.vmem [#allocation24], %s1343
        // Predicated region
        $region181: #{weight_decoder_forward.1} parent=127 // pred_check
          %p1345 = pneg %p536
        $region182: #{weight_decoder_forward.1} parent=127 // pred_check_branch
          %1347 = sbr.rel (%p1345) target = $region184
        $region183: #{weight_decoder_forward.1} parent=127 // pred_region
          %1349 = dma.done %s1342, 16
        $region184: #{weight_decoder_forward.1} parent=127 // pred_fallthru
          _
        %s1350 = sand.u32 %s71, 1
        %s1351 = scalar_lea.sflag [#allocation25], %s1350
        %s1352 = sand.u32 %s575, 1
        %s1353 = scalar_lea.vmem [#allocation26], %s1352
        // Predicated region
        $region185: #{weight_decoder_forward.1} parent=127 // pred_check
          %p1354 = pneg %p588
        $region186: #{weight_decoder_forward.1} parent=127 // pred_check_branch
          %1356 = sbr.rel (%p1354) target = $region188
        $region187: #{weight_decoder_forward.1} parent=127 // pred_region
          %1358 = dma.done %s1351, 16
        $region188: #{weight_decoder_forward.1} parent=127 // pred_fallthru
          _
        %s1359 = sand.u32 %s71, 1
        %s1360 = scalar_lea.sflag [#allocation28], %s1359
        %s1361 = sand.u32 %s601, 1
        %s1362 = smul.addr %s1361, 512
        %s1363 = scalar_lea.vmem [#allocation27], %s1362
        // Predicated region
        $region189: #{weight_decoder_forward.1} parent=127 // pred_check
          %p1364 = pneg %p614
        $region190: #{weight_decoder_forward.1} parent=127 // pred_check_branch
          %1366 = sbr.rel (%p1364) target = $region192
        $region191: #{weight_decoder_forward.1} parent=127 // pred_region
          %1368 = dma.done %s1360, 8192
        $region192: #{weight_decoder_forward.1} parent=127 // pred_fallthru
          _
        %s1369 = sand.u32 %s71, 1
        %s1370 = scalar_lea.sflag [#allocation28], %s1369
        %s1371 = sand.u32 %s653, 1
        %s1372 = smul.addr %s1371, 512
        %s1373 = scalar_lea.vmem [#allocation29], %s1372
        // Predicated region
        $region193: #{weight_decoder_forward.1} parent=127 // pred_check
          %p1374 = pneg %p666
        $region194: #{weight_decoder_forward.1} parent=127 // pred_check_branch
          %1376 = sbr.rel (%p1374) target = $region196
        $region195: #{weight_decoder_forward.1} parent=127 // pred_region
          %1378 = dma.done %s1370, 8192
        $region196: #{weight_decoder_forward.1} parent=127 // pred_fallthru
          _
        %s1379 = sand.u32 %s71, 1
        %s1380 = scalar_lea.sflag [#allocation31], %s1379
        %s1381 = sand.u32 %s679, 1
        %s1382 = scalar_lea.vmem [#allocation30], %s1381
        // Predicated region
        $region197: #{weight_decoder_forward.1} parent=127 // pred_check
          %p1383 = pneg %p692
        $region198: #{weight_decoder_forward.1} parent=127 // pred_check_branch
          %1385 = sbr.rel (%p1383) target = $region200
        $region199: #{weight_decoder_forward.1} parent=127 // pred_region
          %1387 = dma.done %s1380, 16
        $region200: #{weight_decoder_forward.1} parent=127 // pred_fallthru
          _
        // Predicated region
        $region201: #{weight_decoder_forward.1} parent=127 // pred_check
          %p1388 = pneg %p755
        $region202: #{weight_decoder_forward.1} parent=127 // pred_check_branch
          %1390 = sbr.rel (%p1388) target = $region204
        $region203: #{weight_decoder_forward.1} parent=127 // pred_region
          %1392 = dma.done [#allocation31], 2048
        $region204: #{weight_decoder_forward.1} parent=127 // pred_fallthru
          _
        %s1393 = sand.u32 %s91, 1
        %s1394 = scalar_lea.sflag [#allocation4], %s1393
        %s1395 = sand.u32 %s91, 1
        %s1396 = smul.addr %s1395, 8
        %s1397 = scalar_lea.vmem [#allocation3], %s1396
        %p1398 = pneg %p104
        %p1399 = pneg %p101
        %s1400 = sand.u32 %s71, 1
        %s1401 = scalar_lea.sflag [#allocation7], %s1400
        %s1402 = sand.u32 %s117, 1
        %s1403 = smul.addr %s1402, 8
        %s1404 = scalar_lea.vmem [#allocation6], %s1403
        %p1405 = pneg %p130
        %p1406 = pneg %p127
        %p1407 = pneg %p151
        %p1408 = pneg %p148
        %p1409 = pneg %p172
        %p1410 = pneg %p169
        %p1411 = scmp.lt.s32.totalorder %s76, 1
        %s1412 = scalar_select %p1411, %s76, 1
        %s1413 = scalar_lea.vmem %s4, %s1412
        %p1414 = pneg %p198
        %p1415 = pneg %p195
        %p1416 = scmp.lt.s32.totalorder %s76, 1
        %s1417 = scalar_select %p1416, %s76, 1
        %s1418 = scalar_lea.vmem %s5, %s1417
        %p1419 = pneg %p224
        %p1420 = pneg %p221
        %s1421 = sand.u32 %s71, 1
        %s1422 = scalar_lea.sflag [#allocation10], %s1421
        %s1423 = sand.u32 %s237, 1
        %s1424 = smul.addr %s1423, 128
        %s1425 = scalar_lea.vmem [#allocation9], %s1424
        %p1426 = pneg %p250
        %p1427 = pneg %p247
        %s1428 = sand.u32 %s71, 1
        %s1429 = scalar_lea.sflag [#allocation10], %s1428
        %s1430 = sand.u32 %s263, 1
        %s1431 = smul.addr %s1430, 128
        %s1432 = scalar_lea.vmem [#allocation11], %s1431
        %p1433 = pneg %p276
        %p1434 = pneg %p273
        %s1435 = sand.u32 %s71, 1
        %s1436 = scalar_lea.sflag [#allocation13], %s1435
        %s1437 = sand.u32 %s289, 1
        %s1438 = smul.addr %s1437, 128
        %s1439 = scalar_lea.vmem [#allocation12], %s1438
        %p1440 = pneg %p302
        %p1441 = pneg %p299
        %s1442 = sand.u32 %s71, 1
        %s1443 = scalar_lea.sflag [#allocation13], %s1442
        %s1444 = sand.u32 %s315, 1
        %s1445 = smul.addr %s1444, 128
        %s1446 = scalar_lea.vmem [#allocation14], %s1445
        %p1447 = pneg %p328
        %p1448 = pneg %p325
        %s1449 = sand.u32 %s71, 1
        %s1450 = scalar_lea.sflag [#allocation16], %s1449
        %s1451 = sand.u32 %s341, 1
        %s1452 = scalar_lea.vmem [#allocation15], %s1451
        %p1453 = pneg %p354
        %p1454 = pneg %p351
        %p1455 = scmp.lt.s32.totalorder %s76, 1
        %s1456 = scalar_select %p1455, %s76, 1
        %s1457 = scalar_lea.vmem %s11, %s1456
        %p1458 = pneg %p380
        %p1459 = pneg %p377
        %s1460 = sand.u32 %s71, 1
        %s1461 = scalar_lea.sflag [#allocation16], %s1460
        %s1462 = sand.u32 %s393, 1
        %s1463 = scalar_lea.vmem [#allocation17], %s1462
        %p1464 = pneg %p406
        %p1465 = pneg %p403
        %s1466 = sand.u32 %s71, 1
        %s1467 = scalar_lea.sflag [#allocation19], %s1466
        %s1468 = sand.u32 %s419, 1
        %s1469 = smul.addr %s1468, 128
        %s1470 = scalar_lea.vmem [#allocation18], %s1469
        %p1471 = pneg %p432
        %p1472 = pneg %p429
        %s1473 = sand.u32 %s71, 1
        %s1474 = scalar_lea.sflag [#allocation19], %s1473
        %s1475 = sand.u32 %s445, 1
        %s1476 = smul.addr %s1475, 128
        %s1477 = scalar_lea.vmem [#allocation20], %s1476
        %p1478 = pneg %p458
        %p1479 = pneg %p455
        %s1480 = sand.u32 %s71, 1
        %s1481 = scalar_lea.sflag [#allocation22], %s1480
        %s1482 = sand.u32 %s471, 1
        %s1483 = smul.addr %s1482, 128
        %s1484 = scalar_lea.vmem [#allocation21], %s1483
        %p1485 = pneg %p484
        %p1486 = pneg %p481
        %s1487 = sand.u32 %s71, 1
        %s1488 = scalar_lea.sflag [#allocation22], %s1487
        %s1489 = sand.u32 %s497, 1
        %s1490 = smul.addr %s1489, 128
        %s1491 = scalar_lea.vmem [#allocation23], %s1490
        %p1492 = pneg %p510
        %p1493 = pneg %p507
        %s1494 = sand.u32 %s71, 1
        %s1495 = scalar_lea.sflag [#allocation25], %s1494
        %s1496 = sand.u32 %s523, 1
        %s1497 = scalar_lea.vmem [#allocation24], %s1496
        %p1498 = pneg %p536
        %p1499 = pneg %p533
        %p1500 = scmp.lt.s32.totalorder %s76, 1
        %s1501 = scalar_select %p1500, %s76, 1
        %s1502 = scalar_lea.vmem %s18, %s1501
        %p1503 = pneg %p562
        %p1504 = pneg %p559
        %s1505 = sand.u32 %s71, 1
        %s1506 = scalar_lea.sflag [#allocation25], %s1505
        %s1507 = sand.u32 %s575, 1
        %s1508 = scalar_lea.vmem [#allocation26], %s1507
        %p1509 = pneg %p588
        %p1510 = pneg %p585
        %s1511 = sand.u32 %s71, 1
        %s1512 = scalar_lea.sflag [#allocation28], %s1511
        %s1513 = sand.u32 %s601, 1
        %s1514 = smul.addr %s1513, 512
        %s1515 = scalar_lea.vmem [#allocation27], %s1514
        %p1516 = pneg %p614
        %p1517 = pneg %p611
        %p1518 = scmp.lt.s32.totalorder %s76, 1
        %s1519 = scalar_select %p1518, %s76, 1
        %s1520 = smul.addr %s1519, 4
        %s1521 = scalar_lea.vmem %s21, %s1520
        %p1522 = pneg %p640
        %p1523 = pneg %p637
        %s1524 = sand.u32 %s71, 1
        %s1525 = scalar_lea.sflag [#allocation28], %s1524
        %s1526 = sand.u32 %s653, 1
        %s1527 = smul.addr %s1526, 512
        %s1528 = scalar_lea.vmem [#allocation29], %s1527
        %p1529 = pneg %p666
        %p1530 = pneg %p663
        %s1531 = sand.u32 %s71, 1
        %s1532 = scalar_lea.sflag [#allocation31], %s1531
        %s1533 = sand.u32 %s679, 1
        %s1534 = scalar_lea.vmem [#allocation30], %s1533
        %p1535 = pneg %p692
        %p1536 = pneg %p689
        %p1537 = pneg %p713
        %p1538 = pneg %p710
        %p1539 = pneg %p734
        %p1540 = pneg %p731
        %p1541 = pneg %p755
        %p1542 = pneg %p752
        %p1543 = pneg %p781
        %p1544 = pneg %p778
        %s1545 = sand.u32 %s768, 1
        %s1546 = scalar_lea.sflag [#allocation5], %s1545
        %s1547 = sand.u32 %s768, 1
        %s1548 = smul.addr %s1547, 8
        %s1549 = scalar_lea.vmem [#allocation33], %s1548
        %p1550 = scmp.lt.s32.totalorder %s76, 1
        %s1551 = scalar_select %p1550, %s76, 1
        %s1552 = scalar_lea.vmem %s4, %s1551
        %p1553 = scmp.lt.s32.totalorder %s76, 1
        %s1554 = scalar_select %p1553, %s76, 1
        %s1555 = scalar_lea.vmem %s5, %s1554
        %p1556 = scmp.lt.s32.totalorder %s76, 1
        %s1557 = scalar_select %p1556, %s76, 1
        %s1558 = scalar_lea.vmem %s11, %s1557
        %p1559 = scmp.lt.s32.totalorder %s76, 1
        %s1560 = scalar_select %p1559, %s76, 1
        %s1561 = scalar_lea.vmem %s18, %s1560
        %p1562 = scmp.lt.s32.totalorder %s76, 1
        %s1563 = scalar_select %p1562, %s76, 1
        %s1564 = smul.addr %s1563, 4
        %s1565 = scalar_lea.vmem %s21, %s1564
        %p1566 = scmp.eq.s32.totalorder %s76, 0
        // Predicated region
        $region205: #{weight_decoder_forward.1} parent=127 // pred_check
          %p1567 = pneg %p1566
        $region206: #{weight_decoder_forward.1} parent=127 // pred_check_branch
          %1569 = sbr.rel (%p1567) target = $region208
        $region207: #{weight_decoder_forward.1} parent=127 // pred_region
          %v1570 = vld [vmem:[%s2] sm:$0xff]
          %v1571 = vld [vmem:[#allocation8] sm:$0xff]
          %v1572 = vld [vmem:[#allocation8 + $0x8] sm:$0xff]
          %v1573 = vld [vmem:[#allocation8 + $0x10] sm:$0xff]
          %v1574 = vld [vmem:[#allocation8 + $0x18] sm:$0xff]
          %v1575 = vld [vmem:[#allocation8 + $0x20] sm:$0xff]
          %v1576 = vld [vmem:[#allocation8 + $0x28] sm:$0xff]
          %v1577 = vld [vmem:[#allocation8 + $0x30] sm:$0xff]
          %v1578 = vld [vmem:[#allocation8 + $0x38] sm:$0xff]
          %v1579 = vld [vmem:[#allocation8 + $0x40] sm:$0xff]
          %v1580 = vld [vmem:[#allocation8 + $0x48] sm:$0xff]
          %v1581 = vld [vmem:[#allocation8 + $0x50] sm:$0xff]
          %v1582 = vld [vmem:[#allocation8 + $0x58] sm:$0xff]
          %v1583 = vld [vmem:[#allocation8 + $0x60] sm:$0xff]
          %v1584 = vld [vmem:[#allocation8 + $0x68] sm:$0xff]
          %v1585 = vld [vmem:[#allocation8 + $0x70] sm:$0xff]
          %v1586 = vld [vmem:[#allocation8 + $0x78] sm:$0xff]
          %v1587 = vand.u32 %v1586, 4294901760
          %1588 = vmatpush.msra.mxu0 %v1587
          %v1589 = vand.u32 %v1585, 4294901760
          %1590 = vmatpush.msra.mxu0 %v1589
          %v1591 = vand.u32 %v1584, 4294901760
          %1592 = vmatpush.msra.mxu0 %v1591
          %v1593 = vand.u32 %v1583, 4294901760
          %1594 = vmatpush.msra.mxu0 %v1593
          %v1595 = vand.u32 %v1582, 4294901760
          %1596 = vmatpush.msra.mxu0 %v1595
          %v1597 = vand.u32 %v1581, 4294901760
          %1598 = vmatpush.msra.mxu0 %v1597
          %v1599 = vand.u32 %v1580, 4294901760
          %1600 = vmatpush.msra.mxu0 %v1599
          %v1601 = vand.u32 %v1579, 4294901760
          %1602 = vmatpush.msra.mxu0 %v1601
          %v1603 = vand.u32 %v1578, 4294901760
          %1604 = vmatpush.msra.mxu0 %v1603
          %v1605 = vand.u32 %v1577, 4294901760
          %1606 = vmatpush.msra.mxu0 %v1605
          %v1607 = vand.u32 %v1576, 4294901760
          %1608 = vmatpush.msra.mxu0 %v1607
          %v1609 = vand.u32 %v1575, 4294901760
          %1610 = vmatpush.msra.mxu0 %v1609
          %v1611 = vand.u32 %v1574, 4294901760
          %1612 = vmatpush.msra.mxu0 %v1611
          %v1613 = vand.u32 %v1573, 4294901760
          %1614 = vmatpush.msra.mxu0 %v1613
          %v1615 = vand.u32 %v1572, 4294901760
          %1616 = vmatpush.msra.mxu0 %v1615
          %v1617 = vand.u32 %v1571, 4294901760
          %1618 = vmatpush.msra.mxu0 %v1617
          %v1619 = vand.u32 %v1570, 4294901760
          %v1620 = vsub.f32 %v1570, %v1619
          %v1621 = vand.u32 %v1620, 4294901760
          %v1622 = vsub.f32 %v1620, %v1621
          %v1623 = vand.u32 %v1622, 4294901760
          %1624 = vmatmul.f32.gmra.mxu0 %v1623
          %v1625 = vpop.f32.mrf.mxu0
          %v1626 = vadd.f32 0.0, %v1625
          %1627 = vdwg.mxu0
          %v1628 = vand.u32 %v1586, 4294901760
          %v1629 = vsub.f32 %v1586, %v1628
          %v1630 = vand.u32 %v1629, 4294901760
          %v1631 = vsub.f32 %v1629, %v1630
          %v1632 = vand.u32 %v1631, 4294901760
          %1633 = vmatpush.msra.mxu0 %v1632
          %v1634 = vand.u32 %v1585, 4294901760
          %v1635 = vsub.f32 %v1585, %v1634
          %v1636 = vand.u32 %v1635, 4294901760
          %v1637 = vsub.f32 %v1635, %v1636
          %v1638 = vand.u32 %v1637, 4294901760
          %1639 = vmatpush.msra.mxu0 %v1638
          %v1640 = vand.u32 %v1584, 4294901760
          %v1641 = vsub.f32 %v1584, %v1640
          %v1642 = vand.u32 %v1641, 4294901760
          %v1643 = vsub.f32 %v1641, %v1642
          %v1644 = vand.u32 %v1643, 4294901760
          %1645 = vmatpush.msra.mxu0 %v1644
          %v1646 = vand.u32 %v1583, 4294901760
          %v1647 = vsub.f32 %v1583, %v1646
          %v1648 = vand.u32 %v1647, 4294901760
          %v1649 = vsub.f32 %v1647, %v1648
          %v1650 = vand.u32 %v1649, 4294901760
          %1651 = vmatpush.msra.mxu0 %v1650
          %v1652 = vand.u32 %v1582, 4294901760
          %v1653 = vsub.f32 %v1582, %v1652
          %v1654 = vand.u32 %v1653, 4294901760
          %v1655 = vsub.f32 %v1653, %v1654
          %v1656 = vand.u32 %v1655, 4294901760
          %1657 = vmatpush.msra.mxu0 %v1656
          %v1658 = vand.u32 %v1581, 4294901760
          %v1659 = vsub.f32 %v1581, %v1658
          %v1660 = vand.u32 %v1659, 4294901760
          %v1661 = vsub.f32 %v1659, %v1660
          %v1662 = vand.u32 %v1661, 4294901760
          %1663 = vmatpush.msra.mxu0 %v1662
          %v1664 = vand.u32 %v1580, 4294901760
          %v1665 = vsub.f32 %v1580, %v1664
          %v1666 = vand.u32 %v1665, 4294901760
          %v1667 = vsub.f32 %v1665, %v1666
          %v1668 = vand.u32 %v1667, 4294901760
          %1669 = vmatpush.msra.mxu0 %v1668
          %v1670 = vand.u32 %v1579, 4294901760
          %v1671 = vsub.f32 %v1579, %v1670
          %v1672 = vand.u32 %v1671, 4294901760
          %v1673 = vsub.f32 %v1671, %v1672
          %v1674 = vand.u32 %v1673, 4294901760
          %1675 = vmatpush.msra.mxu0 %v1674
          %v1676 = vand.u32 %v1578, 4294901760
          %v1677 = vsub.f32 %v1578, %v1676
          %v1678 = vand.u32 %v1677, 4294901760
          %v1679 = vsub.f32 %v1677, %v1678
          %v1680 = vand.u32 %v1679, 4294901760
          %1681 = vmatpush.msra.mxu0 %v1680
          %v1682 = vand.u32 %v1577, 4294901760
          %v1683 = vsub.f32 %v1577, %v1682
          %v1684 = vand.u32 %v1683, 4294901760
          %v1685 = vsub.f32 %v1683, %v1684
          %v1686 = vand.u32 %v1685, 4294901760
          %1687 = vmatpush.msra.mxu0 %v1686
          %v1688 = vand.u32 %v1576, 4294901760
          %v1689 = vsub.f32 %v1576, %v1688
          %v1690 = vand.u32 %v1689, 4294901760
          %v1691 = vsub.f32 %v1689, %v1690
          %v1692 = vand.u32 %v1691, 4294901760
          %1693 = vmatpush.msra.mxu0 %v1692
          %v1694 = vand.u32 %v1575, 4294901760
          %v1695 = vsub.f32 %v1575, %v1694
          %v1696 = vand.u32 %v1695, 4294901760
          %v1697 = vsub.f32 %v1695, %v1696
          %v1698 = vand.u32 %v1697, 4294901760
          %1699 = vmatpush.msra.mxu0 %v1698
          %v1700 = vand.u32 %v1574, 4294901760
          %v1701 = vsub.f32 %v1574, %v1700
          %v1702 = vand.u32 %v1701, 4294901760
          %v1703 = vsub.f32 %v1701, %v1702
          %v1704 = vand.u32 %v1703, 4294901760
          %1705 = vmatpush.msra.mxu0 %v1704
          %v1706 = vand.u32 %v1573, 4294901760
          %v1707 = vsub.f32 %v1573, %v1706
          %v1708 = vand.u32 %v1707, 4294901760
          %v1709 = vsub.f32 %v1707, %v1708
          %v1710 = vand.u32 %v1709, 4294901760
          %1711 = vmatpush.msra.mxu0 %v1710
          %v1712 = vand.u32 %v1572, 4294901760
          %v1713 = vsub.f32 %v1572, %v1712
          %v1714 = vand.u32 %v1713, 4294901760
          %v1715 = vsub.f32 %v1713, %v1714
          %v1716 = vand.u32 %v1715, 4294901760
          %1717 = vmatpush.msra.mxu0 %v1716
          %v1718 = vand.u32 %v1571, 4294901760
          %v1719 = vsub.f32 %v1571, %v1718
          %v1720 = vand.u32 %v1719, 4294901760
          %v1721 = vsub.f32 %v1719, %v1720
          %v1722 = vand.u32 %v1721, 4294901760
          %1723 = vmatpush.msra.mxu0 %v1722
          %v1724 = vand.u32 %v1570, 4294901760
          %1725 = vmatmul.f32.gmra.mxu0 %v1724
          %v1726 = vpop.f32.mrf.mxu0
          %v1727 = vadd.f32 %v1626, %v1726
          %1728 = vdwg.mxu0
          %v1729 = vand.u32 %v1586, 4294901760
          %v1730 = vsub.f32 %v1586, %v1729
          %1731 = vmatpush.msra.mxu0 %v1730
          %v1732 = vand.u32 %v1585, 4294901760
          %v1733 = vsub.f32 %v1585, %v1732
          %1734 = vmatpush.msra.mxu0 %v1733
          %v1735 = vand.u32 %v1584, 4294901760
          %v1736 = vsub.f32 %v1584, %v1735
          %1737 = vmatpush.msra.mxu0 %v1736
          %v1738 = vand.u32 %v1583, 4294901760
          %v1739 = vsub.f32 %v1583, %v1738
          %1740 = vmatpush.msra.mxu0 %v1739
          %v1741 = vand.u32 %v1582, 4294901760
          %v1742 = vsub.f32 %v1582, %v1741
          %1743 = vmatpush.msra.mxu0 %v1742
          %v1744 = vand.u32 %v1581, 4294901760
          %v1745 = vsub.f32 %v1581, %v1744
          %1746 = vmatpush.msra.mxu0 %v1745
          %v1747 = vand.u32 %v1580, 4294901760
          %v1748 = vsub.f32 %v1580, %v1747
          %1749 = vmatpush.msra.mxu0 %v1748
          %v1750 = vand.u32 %v1579, 4294901760
          %v1751 = vsub.f32 %v1579, %v1750
          %1752 = vmatpush.msra.mxu0 %v1751
          %v1753 = vand.u32 %v1578, 4294901760
          %v1754 = vsub.f32 %v1578, %v1753
          %1755 = vmatpush.msra.mxu0 %v1754
          %v1756 = vand.u32 %v1577, 4294901760
          %v1757 = vsub.f32 %v1577, %v1756
          %1758 = vmatpush.msra.mxu0 %v1757
          %v1759 = vand.u32 %v1576, 4294901760
          %v1760 = vsub.f32 %v1576, %v1759
          %1761 = vmatpush.msra.mxu0 %v1760
          %v1762 = vand.u32 %v1575, 4294901760
          %v1763 = vsub.f32 %v1575, %v1762
          %1764 = vmatpush.msra.mxu0 %v1763
          %v1765 = vand.u32 %v1574, 4294901760
          %v1766 = vsub.f32 %v1574, %v1765
          %1767 = vmatpush.msra.mxu0 %v1766
          %v1768 = vand.u32 %v1573, 4294901760
          %v1769 = vsub.f32 %v1573, %v1768
          %1770 = vmatpush.msra.mxu0 %v1769
          %v1771 = vand.u32 %v1572, 4294901760
          %v1772 = vsub.f32 %v1572, %v1771
          %1773 = vmatpush.msra.mxu0 %v1772
          %v1774 = vand.u32 %v1571, 4294901760
          %v1775 = vsub.f32 %v1571, %v1774
          %1776 = vmatpush.msra.mxu0 %v1775
          %v1777 = vand.u32 %v1570, 4294901760
          %v1778 = vsub.f32 %v1570, %v1777
          %1779 = vmatmul.f32.gmra.mxu0 %v1778
          %v1780 = vpop.f32.mrf.mxu0
          %v1781 = vadd.f32 %v1727, %v1780
          %1782 = vdwg.mxu0
          %v1783 = vand.u32 %v1586, 4294901760
          %1784 = vmatpush.msra.mxu0 %v1783
          %v1785 = vand.u32 %v1585, 4294901760
          %1786 = vmatpush.msra.mxu0 %v1785
          %v1787 = vand.u32 %v1584, 4294901760
          %1788 = vmatpush.msra.mxu0 %v1787
          %v1789 = vand.u32 %v1583, 4294901760
          %1790 = vmatpush.msra.mxu0 %v1789
          %v1791 = vand.u32 %v1582, 4294901760
          %1792 = vmatpush.msra.mxu0 %v1791
          %v1793 = vand.u32 %v1581, 4294901760
          %1794 = vmatpush.msra.mxu0 %v1793
          %v1795 = vand.u32 %v1580, 4294901760
          %1796 = vmatpush.msra.mxu0 %v1795
          %v1797 = vand.u32 %v1579, 4294901760
          %1798 = vmatpush.msra.mxu0 %v1797
          %v1799 = vand.u32 %v1578, 4294901760
          %1800 = vmatpush.msra.mxu0 %v1799
          %v1801 = vand.u32 %v1577, 4294901760
          %1802 = vmatpush.msra.mxu0 %v1801
          %v1803 = vand.u32 %v1576, 4294901760
          %1804 = vmatpush.msra.mxu0 %v1803
          %v1805 = vand.u32 %v1575, 4294901760
          %1806 = vmatpush.msra.mxu0 %v1805
          %v1807 = vand.u32 %v1574, 4294901760
          %1808 = vmatpush.msra.mxu0 %v1807
          %v1809 = vand.u32 %v1573, 4294901760
          %1810 = vmatpush.msra.mxu0 %v1809
          %v1811 = vand.u32 %v1572, 4294901760
          %1812 = vmatpush.msra.mxu0 %v1811
          %v1813 = vand.u32 %v1571, 4294901760
          %1814 = vmatpush.msra.mxu0 %v1813
          %v1815 = vand.u32 %v1570, 4294901760
          %v1816 = vsub.f32 %v1570, %v1815
          %v1817 = vand.u32 %v1816, 4294901760
          %1818 = vmatmul.f32.gmra.mxu0 %v1817
          %v1819 = vpop.f32.mrf.mxu0
          %v1820 = vadd.f32 %v1781, %v1819
          %1821 = vdwg.mxu0
          %v1822 = vand.u32 %v1586, 4294901760
          %v1823 = vsub.f32 %v1586, %v1822
          %v1824 = vand.u32 %v1823, 4294901760
          %1825 = vmatpush.msra.mxu0 %v1824
          %v1826 = vand.u32 %v1585, 4294901760
          %v1827 = vsub.f32 %v1585, %v1826
          %v1828 = vand.u32 %v1827, 4294901760
          %1829 = vmatpush.msra.mxu0 %v1828
          %v1830 = vand.u32 %v1584, 4294901760
          %v1831 = vsub.f32 %v1584, %v1830
          %v1832 = vand.u32 %v1831, 4294901760
          %1833 = vmatpush.msra.mxu0 %v1832
          %v1834 = vand.u32 %v1583, 4294901760
          %v1835 = vsub.f32 %v1583, %v1834
          %v1836 = vand.u32 %v1835, 4294901760
          %1837 = vmatpush.msra.mxu0 %v1836
          %v1838 = vand.u32 %v1582, 4294901760
          %v1839 = vsub.f32 %v1582, %v1838
          %v1840 = vand.u32 %v1839, 4294901760
          %1841 = vmatpush.msra.mxu0 %v1840
          %v1842 = vand.u32 %v1581, 4294901760
          %v1843 = vsub.f32 %v1581, %v1842
          %v1844 = vand.u32 %v1843, 4294901760
          %1845 = vmatpush.msra.mxu0 %v1844
          %v1846 = vand.u32 %v1580, 4294901760
          %v1847 = vsub.f32 %v1580, %v1846
          %v1848 = vand.u32 %v1847, 4294901760
          %1849 = vmatpush.msra.mxu0 %v1848
          %v1850 = vand.u32 %v1579, 4294901760
          %v1851 = vsub.f32 %v1579, %v1850
          %v1852 = vand.u32 %v1851, 4294901760
          %1853 = vmatpush.msra.mxu0 %v1852
          %v1854 = vand.u32 %v1578, 4294901760
          %v1855 = vsub.f32 %v1578, %v1854
          %v1856 = vand.u32 %v1855, 4294901760
          %1857 = vmatpush.msra.mxu0 %v1856
          %v1858 = vand.u32 %v1577, 4294901760
          %v1859 = vsub.f32 %v1577, %v1858
          %v1860 = vand.u32 %v1859, 4294901760
          %1861 = vmatpush.msra.mxu0 %v1860
          %v1862 = vand.u32 %v1576, 4294901760
          %v1863 = vsub.f32 %v1576, %v1862
          %v1864 = vand.u32 %v1863, 4294901760
          %1865 = vmatpush.msra.mxu0 %v1864
          %v1866 = vand.u32 %v1575, 4294901760
          %v1867 = vsub.f32 %v1575, %v1866
          %v1868 = vand.u32 %v1867, 4294901760
          %1869 = vmatpush.msra.mxu0 %v1868
          %v1870 = vand.u32 %v1574, 4294901760
          %v1871 = vsub.f32 %v1574, %v1870
          %v1872 = vand.u32 %v1871, 4294901760
          %1873 = vmatpush.msra.mxu0 %v1872
          %v1874 = vand.u32 %v1573, 4294901760
          %v1875 = vsub.f32 %v1573, %v1874
          %v1876 = vand.u32 %v1875, 4294901760
          %1877 = vmatpush.msra.mxu0 %v1876
          %v1878 = vand.u32 %v1572, 4294901760
          %v1879 = vsub.f32 %v1572, %v1878
          %v1880 = vand.u32 %v1879, 4294901760
          %1881 = vmatpush.msra.mxu0 %v1880
          %v1882 = vand.u32 %v1571, 4294901760
          %v1883 = vsub.f32 %v1571, %v1882
          %v1884 = vand.u32 %v1883, 4294901760
          %1885 = vmatpush.msra.mxu0 %v1884
          %v1886 = vand.u32 %v1570, 4294901760
          %1887 = vmatmul.f32.gmra.mxu0 %v1886
          %v1888 = vpop.f32.mrf.mxu0
          %v1889 = vadd.f32 %v1820, %v1888
          %1890 = vdwg.mxu0
          %v1891 = vand.u32 %v1586, 4294901760
          %1892 = vmatpush.msra.mxu0 %v1891
          %v1893 = vand.u32 %v1585, 4294901760
          %1894 = vmatpush.msra.mxu0 %v1893
          %v1895 = vand.u32 %v1584, 4294901760
          %1896 = vmatpush.msra.mxu0 %v1895
          %v1897 = vand.u32 %v1583, 4294901760
          %1898 = vmatpush.msra.mxu0 %v1897
          %v1899 = vand.u32 %v1582, 4294901760
          %1900 = vmatpush.msra.mxu0 %v1899
          %v1901 = vand.u32 %v1581, 4294901760
          %1902 = vmatpush.msra.mxu0 %v1901
          %v1903 = vand.u32 %v1580, 4294901760
          %1904 = vmatpush.msra.mxu0 %v1903
          %v1905 = vand.u32 %v1579, 4294901760
          %1906 = vmatpush.msra.mxu0 %v1905
          %v1907 = vand.u32 %v1578, 4294901760
          %1908 = vmatpush.msra.mxu0 %v1907
          %v1909 = vand.u32 %v1577, 4294901760
          %1910 = vmatpush.msra.mxu0 %v1909
          %v1911 = vand.u32 %v1576, 4294901760
          %1912 = vmatpush.msra.mxu0 %v1911
          %v1913 = vand.u32 %v1575, 4294901760
          %1914 = vmatpush.msra.mxu0 %v1913
          %v1915 = vand.u32 %v1574, 4294901760
          %1916 = vmatpush.msra.mxu0 %v1915
          %v1917 = vand.u32 %v1573, 4294901760
          %1918 = vmatpush.msra.mxu0 %v1917
          %v1919 = vand.u32 %v1572, 4294901760
          %1920 = vmatpush.msra.mxu0 %v1919
          %v1921 = vand.u32 %v1571, 4294901760
          %1922 = vmatpush.msra.mxu0 %v1921
          %v1923 = vand.u32 %v1570, 4294901760
          %1924 = vmatmul.f32.gmra.mxu0 %v1923
          %v1925 = vpop.f32.mrf.mxu0
          %v1926 = vadd.f32 %v1889, %v1925
          %1927 = vdwg.mxu0
          %v1928 = vld [vmem:[%s1222] sm:$0xff]
          %v1929 = vadd.f32 %v1928, %v1926
          %1930 = vst [vmem:[#allocation2] sm:$0xff] %v1929
        $region208: #{weight_decoder_forward.1} parent=127 // pred_fallthru
          _
        %v1931 = vld [vmem:[#allocation2] sm:$0xff]
        %v1932 = vld [vmem:[%s1232] sm:$0xff]
        %v1933 = vld [vmem:[%s1552] sm:$0x1]
        %v1934 = vld [vmem:[%s1555] sm:$0x1]
        %1935 = vadd.xlane.f32.xlu0 %v1931
        %v1936 = vpop.xlane.xlu0 %1935
        %v1937 = vrcp.pop 128.0
        %v1938 = vmul.f32 128.0, %v1937
        %v1939 = vsub.f32 1.0, %v1938
        %v1940 = vmul.f32 %v1937, %v1939
        %v1941 = vadd.f32 %v1937, %v1940
        %vm1942 = vweird.f32 %v1937
        %v1943 = vsel %vm1942, %v1937, %v1941
        %v1944 = vmul.f32 %v1936, %v1943
        %v1945 = vsub.f32 %v1931, %v1944
        %v1946 = vmul.f32 %v1945, %v1945
        %1947 = vadd.xlane.f32.xlu0 %v1946
        %v1948 = vpop.xlane.xlu0 %1947
        %v1949 = vmul.f32 %v1948, %v1943
        %v1950 = vadd.f32 %v1949, 1e-05
        %v1951 = vrsqrt.pop %v1950
        %v1952 = vmul.f32 %v1951, %v1950
        %v1953 = vmul.f32 %v1952, %v1951
        %v1954 = vmul.f32 0.5, %v1953
        %v1955 = vsub.f32 1.5, %v1954
        %v1956 = vmul.f32 %v1951, %v1955
        %vm1957 = vweird.f32 %v1950
        %vm1958 = vweird.f32 %v1951
        %vm1959 = vmor %vm1957, %vm1958
        %v1960 = vsel %vm1959, %v1951, %v1956
        %v1961 = vmul.f32 %v1945, %v1960
        %v1963 = vperm.slane %v1933, 0
        %v1965 = vmul.f32 %v1961, %v1963
        %v1967 = vperm.slane %v1934, 0
        %v1969 = vadd.f32 %v1965, %v1967
        %v1970 = vld [vmem:[%s1247] sm:$0xff]
        %v1971 = vld [vmem:[%s1247 + $0x8] sm:$0xff]
        %v1972 = vld [vmem:[%s1247 + $0x10] sm:$0xff]
        %v1973 = vld [vmem:[%s1247 + $0x18] sm:$0xff]
        %v1974 = vld [vmem:[%s1247 + $0x20] sm:$0xff]
        %v1975 = vld [vmem:[%s1247 + $0x28] sm:$0xff]
        %v1976 = vld [vmem:[%s1247 + $0x30] sm:$0xff]
        %v1977 = vld [vmem:[%s1247 + $0x38] sm:$0xff]
        %v1978 = vld [vmem:[%s1247 + $0x40] sm:$0xff]
        %v1979 = vld [vmem:[%s1247 + $0x48] sm:$0xff]
        %v1980 = vld [vmem:[%s1247 + $0x50] sm:$0xff]
        %v1981 = vld [vmem:[%s1247 + $0x58] sm:$0xff]
        %v1982 = vld [vmem:[%s1247 + $0x60] sm:$0xff]
        %v1983 = vld [vmem:[%s1247 + $0x68] sm:$0xff]
        %v1984 = vld [vmem:[%s1247 + $0x70] sm:$0xff]
        %v1985 = vld [vmem:[%s1247 + $0x78] sm:$0xff]
        %v1986 = vld [vmem:[%s1257] sm:$0xff]
        %v1987 = vld [vmem:[%s1257 + $0x8] sm:$0xff]
        %v1988 = vld [vmem:[%s1257 + $0x10] sm:$0xff]
        %v1989 = vld [vmem:[%s1257 + $0x18] sm:$0xff]
        %v1990 = vld [vmem:[%s1257 + $0x20] sm:$0xff]
        %v1991 = vld [vmem:[%s1257 + $0x28] sm:$0xff]
        %v1992 = vld [vmem:[%s1257 + $0x30] sm:$0xff]
        %v1993 = vld [vmem:[%s1257 + $0x38] sm:$0xff]
        %v1994 = vld [vmem:[%s1257 + $0x40] sm:$0xff]
        %v1995 = vld [vmem:[%s1257 + $0x48] sm:$0xff]
        %v1996 = vld [vmem:[%s1257 + $0x50] sm:$0xff]
        %v1997 = vld [vmem:[%s1257 + $0x58] sm:$0xff]
        %v1998 = vld [vmem:[%s1257 + $0x60] sm:$0xff]
        %v1999 = vld [vmem:[%s1257 + $0x68] sm:$0xff]
        %v2000 = vld [vmem:[%s1257 + $0x70] sm:$0xff]
        %v2001 = vld [vmem:[%s1257 + $0x78] sm:$0xff]
        %v2002 = vld [vmem:[%s1267] sm:$0xff]
        %v2003 = vld [vmem:[%s1267 + $0x8] sm:$0xff]
        %v2004 = vld [vmem:[%s1267 + $0x10] sm:$0xff]
        %v2005 = vld [vmem:[%s1267 + $0x18] sm:$0xff]
        %v2006 = vld [vmem:[%s1267 + $0x20] sm:$0xff]
        %v2007 = vld [vmem:[%s1267 + $0x28] sm:$0xff]
        %v2008 = vld [vmem:[%s1267 + $0x30] sm:$0xff]
        %v2009 = vld [vmem:[%s1267 + $0x38] sm:$0xff]
        %v2010 = vld [vmem:[%s1267 + $0x40] sm:$0xff]
        %v2011 = vld [vmem:[%s1267 + $0x48] sm:$0xff]
        %v2012 = vld [vmem:[%s1267 + $0x50] sm:$0xff]
        %v2013 = vld [vmem:[%s1267 + $0x58] sm:$0xff]
        %v2014 = vld [vmem:[%s1267 + $0x60] sm:$0xff]
        %v2015 = vld [vmem:[%s1267 + $0x68] sm:$0xff]
        %v2016 = vld [vmem:[%s1267 + $0x70] sm:$0xff]
        %v2017 = vld [vmem:[%s1267 + $0x78] sm:$0xff]
        %v2018 = vld [vmem:[%s1277] sm:$0xff]
        %v2019 = vld [vmem:[%s1277 + $0x8] sm:$0xff]
        %v2020 = vld [vmem:[%s1277 + $0x10] sm:$0xff]
        %v2021 = vld [vmem:[%s1277 + $0x18] sm:$0xff]
        %v2022 = vld [vmem:[%s1277 + $0x20] sm:$0xff]
        %v2023 = vld [vmem:[%s1277 + $0x28] sm:$0xff]
        %v2024 = vld [vmem:[%s1277 + $0x30] sm:$0xff]
        %v2025 = vld [vmem:[%s1277 + $0x38] sm:$0xff]
        %v2026 = vld [vmem:[%s1277 + $0x40] sm:$0xff]
        %v2027 = vld [vmem:[%s1277 + $0x48] sm:$0xff]
        %v2028 = vld [vmem:[%s1277 + $0x50] sm:$0xff]
        %v2029 = vld [vmem:[%s1277 + $0x58] sm:$0xff]
        %v2030 = vld [vmem:[%s1277 + $0x60] sm:$0xff]
        %v2031 = vld [vmem:[%s1277 + $0x68] sm:$0xff]
        %v2032 = vld [vmem:[%s1277 + $0x70] sm:$0xff]
        %v2033 = vld [vmem:[%s1277 + $0x78] sm:$0xff]
        %v2034 = vld [vmem:[%s1286] sm:$0x1]
        %v2035 = vand.u32 %v1985, 4294901760
        %2036 = vmatpush.msra.mxu0 %v2035
        %v2037 = vand.u32 %v1984, 4294901760
        %2038 = vmatpush.msra.mxu0 %v2037
        %v2039 = vand.u32 %v1983, 4294901760
        %2040 = vmatpush.msra.mxu0 %v2039
        %v2041 = vand.u32 %v1982, 4294901760
        %2042 = vmatpush.msra.mxu0 %v2041
        %v2043 = vand.u32 %v1981, 4294901760
        %2044 = vmatpush.msra.mxu0 %v2043
        %v2045 = vand.u32 %v1980, 4294901760
        %2046 = vmatpush.msra.mxu0 %v2045
        %v2047 = vand.u32 %v1979, 4294901760
        %2048 = vmatpush.msra.mxu0 %v2047
        %v2049 = vand.u32 %v1978, 4294901760
        %2050 = vmatpush.msra.mxu0 %v2049
        %v2051 = vand.u32 %v1977, 4294901760
        %2052 = vmatpush.msra.mxu0 %v2051
        %v2053 = vand.u32 %v1976, 4294901760
        %2054 = vmatpush.msra.mxu0 %v2053
        %v2055 = vand.u32 %v1975, 4294901760
        %2056 = vmatpush.msra.mxu0 %v2055
        %v2057 = vand.u32 %v1974, 4294901760
        %2058 = vmatpush.msra.mxu0 %v2057
        %v2059 = vand.u32 %v1973, 4294901760
        %2060 = vmatpush.msra.mxu0 %v2059
        %v2061 = vand.u32 %v1972, 4294901760
        %2062 = vmatpush.msra.mxu0 %v2061
        %v2063 = vand.u32 %v1971, 4294901760
        %2064 = vmatpush.msra.mxu0 %v2063
        %v2065 = vand.u32 %v1970, 4294901760
        %2066 = vmatpush.msra.mxu0 %v2065
        %v2067 = vand.u32 %v1969, 4294901760
        %v2068 = vsub.f32 %v1969, %v2067
        %v2069 = vand.u32 %v2068, 4294901760
        %v2070 = vsub.f32 %v2068, %v2069
        %v2071 = vand.u32 %v2070, 4294901760
        %2072 = vmatmul.f32.gmra.mxu0 %v2071
        %v2073 = vpop.f32.mrf.mxu0
        %v2074 = vadd.f32 0.0, %v2073
        %2075 = vdwg.mxu0
        %v2076 = vand.u32 %v1985, 4294901760
        %v2077 = vsub.f32 %v1985, %v2076
        %v2078 = vand.u32 %v2077, 4294901760
        %v2079 = vsub.f32 %v2077, %v2078
        %v2080 = vand.u32 %v2079, 4294901760
        %2081 = vmatpush.msra.mxu0 %v2080
        %v2082 = vand.u32 %v1984, 4294901760
        %v2083 = vsub.f32 %v1984, %v2082
        %v2084 = vand.u32 %v2083, 4294901760
        %v2085 = vsub.f32 %v2083, %v2084
        %v2086 = vand.u32 %v2085, 4294901760
        %2087 = vmatpush.msra.mxu0 %v2086
        %v2088 = vand.u32 %v1983, 4294901760
        %v2089 = vsub.f32 %v1983, %v2088
        %v2090 = vand.u32 %v2089, 4294901760
        %v2091 = vsub.f32 %v2089, %v2090
        %v2092 = vand.u32 %v2091, 4294901760
        %2093 = vmatpush.msra.mxu0 %v2092
        %v2094 = vand.u32 %v1982, 4294901760
        %v2095 = vsub.f32 %v1982, %v2094
        %v2096 = vand.u32 %v2095, 4294901760
        %v2097 = vsub.f32 %v2095, %v2096
        %v2098 = vand.u32 %v2097, 4294901760
        %2099 = vmatpush.msra.mxu0 %v2098
        %v2100 = vand.u32 %v1981, 4294901760
        %v2101 = vsub.f32 %v1981, %v2100
        %v2102 = vand.u32 %v2101, 4294901760
        %v2103 = vsub.f32 %v2101, %v2102
        %v2104 = vand.u32 %v2103, 4294901760
        %2105 = vmatpush.msra.mxu0 %v2104
        %v2106 = vand.u32 %v1980, 4294901760
        %v2107 = vsub.f32 %v1980, %v2106
        %v2108 = vand.u32 %v2107, 4294901760
        %v2109 = vsub.f32 %v2107, %v2108
        %v2110 = vand.u32 %v2109, 4294901760
        %2111 = vmatpush.msra.mxu0 %v2110
        %v2112 = vand.u32 %v1979, 4294901760
        %v2113 = vsub.f32 %v1979, %v2112
        %v2114 = vand.u32 %v2113, 4294901760
        %v2115 = vsub.f32 %v2113, %v2114
        %v2116 = vand.u32 %v2115, 4294901760
        %2117 = vmatpush.msra.mxu0 %v2116
        %v2118 = vand.u32 %v1978, 4294901760
        %v2119 = vsub.f32 %v1978, %v2118
        %v2120 = vand.u32 %v2119, 4294901760
        %v2121 = vsub.f32 %v2119, %v2120
        %v2122 = vand.u32 %v2121, 4294901760
        %2123 = vmatpush.msra.mxu0 %v2122
        %v2124 = vand.u32 %v1977, 4294901760
        %v2125 = vsub.f32 %v1977, %v2124
        %v2126 = vand.u32 %v2125, 4294901760
        %v2127 = vsub.f32 %v2125, %v2126
        %v2128 = vand.u32 %v2127, 4294901760
        %2129 = vmatpush.msra.mxu0 %v2128
        %v2130 = vand.u32 %v1976, 4294901760
        %v2131 = vsub.f32 %v1976, %v2130
        %v2132 = vand.u32 %v2131, 4294901760
        %v2133 = vsub.f32 %v2131, %v2132
        %v2134 = vand.u32 %v2133, 4294901760
        %2135 = vmatpush.msra.mxu0 %v2134
        %v2136 = vand.u32 %v1975, 4294901760
        %v2137 = vsub.f32 %v1975, %v2136
        %v2138 = vand.u32 %v2137, 4294901760
        %v2139 = vsub.f32 %v2137, %v2138
        %v2140 = vand.u32 %v2139, 4294901760
        %2141 = vmatpush.msra.mxu0 %v2140
        %v2142 = vand.u32 %v1974, 4294901760
        %v2143 = vsub.f32 %v1974, %v2142
        %v2144 = vand.u32 %v2143, 4294901760
        %v2145 = vsub.f32 %v2143, %v2144
        %v2146 = vand.u32 %v2145, 4294901760
        %2147 = vmatpush.msra.mxu0 %v2146
        %v2148 = vand.u32 %v1973, 4294901760
        %v2149 = vsub.f32 %v1973, %v2148
        %v2150 = vand.u32 %v2149, 4294901760
        %v2151 = vsub.f32 %v2149, %v2150
        %v2152 = vand.u32 %v2151, 4294901760
        %2153 = vmatpush.msra.mxu0 %v2152
        %v2154 = vand.u32 %v1972, 4294901760
        %v2155 = vsub.f32 %v1972, %v2154
        %v2156 = vand.u32 %v2155, 4294901760
        %v2157 = vsub.f32 %v2155, %v2156
        %v2158 = vand.u32 %v2157, 4294901760
        %2159 = vmatpush.msra.mxu0 %v2158
        %v2160 = vand.u32 %v1971, 4294901760
        %v2161 = vsub.f32 %v1971, %v2160
        %v2162 = vand.u32 %v2161, 4294901760
        %v2163 = vsub.f32 %v2161, %v2162
        %v2164 = vand.u32 %v2163, 4294901760
        %2165 = vmatpush.msra.mxu0 %v2164
        %v2166 = vand.u32 %v1970, 4294901760
        %v2167 = vsub.f32 %v1970, %v2166
        %v2168 = vand.u32 %v2167, 4294901760
        %v2169 = vsub.f32 %v2167, %v2168
        %v2170 = vand.u32 %v2169, 4294901760
        %2171 = vmatpush.msra.mxu0 %v2170
        %v2172 = vand.u32 %v1969, 4294901760
        %2173 = vmatmul.f32.gmra.mxu0 %v2172
        %v2174 = vpop.f32.mrf.mxu0
        %v2175 = vadd.f32 %v2074, %v2174
        %2176 = vdwg.mxu0
        %v2177 = vand.u32 %v1985, 4294901760
        %v2178 = vsub.f32 %v1985, %v2177
        %2179 = vmatpush.msra.mxu0 %v2178
        %v2180 = vand.u32 %v1984, 4294901760
        %v2181 = vsub.f32 %v1984, %v2180
        %2182 = vmatpush.msra.mxu0 %v2181
        %v2183 = vand.u32 %v1983, 4294901760
        %v2184 = vsub.f32 %v1983, %v2183
        %2185 = vmatpush.msra.mxu0 %v2184
        %v2186 = vand.u32 %v1982, 4294901760
        %v2187 = vsub.f32 %v1982, %v2186
        %2188 = vmatpush.msra.mxu0 %v2187
        %v2189 = vand.u32 %v1981, 4294901760
        %v2190 = vsub.f32 %v1981, %v2189
        %2191 = vmatpush.msra.mxu0 %v2190
        %v2192 = vand.u32 %v1980, 4294901760
        %v2193 = vsub.f32 %v1980, %v2192
        %2194 = vmatpush.msra.mxu0 %v2193
        %v2195 = vand.u32 %v1979, 4294901760
        %v2196 = vsub.f32 %v1979, %v2195
        %2197 = vmatpush.msra.mxu0 %v2196
        %v2198 = vand.u32 %v1978, 4294901760
        %v2199 = vsub.f32 %v1978, %v2198
        %2200 = vmatpush.msra.mxu0 %v2199
        %v2201 = vand.u32 %v1977, 4294901760
        %v2202 = vsub.f32 %v1977, %v2201
        %2203 = vmatpush.msra.mxu0 %v2202
        %v2204 = vand.u32 %v1976, 4294901760
        %v2205 = vsub.f32 %v1976, %v2204
        %2206 = vmatpush.msra.mxu0 %v2205
        %v2207 = vand.u32 %v1975, 4294901760
        %v2208 = vsub.f32 %v1975, %v2207
        %2209 = vmatpush.msra.mxu0 %v2208
        %v2210 = vand.u32 %v1974, 4294901760
        %v2211 = vsub.f32 %v1974, %v2210
        %2212 = vmatpush.msra.mxu0 %v2211
        %v2213 = vand.u32 %v1973, 4294901760
        %v2214 = vsub.f32 %v1973, %v2213
        %2215 = vmatpush.msra.mxu0 %v2214
        %v2216 = vand.u32 %v1972, 4294901760
        %v2217 = vsub.f32 %v1972, %v2216
        %2218 = vmatpush.msra.mxu0 %v2217
        %v2219 = vand.u32 %v1971, 4294901760
        %v2220 = vsub.f32 %v1971, %v2219
        %2221 = vmatpush.msra.mxu0 %v2220
        %v2222 = vand.u32 %v1970, 4294901760
        %v2223 = vsub.f32 %v1970, %v2222
        %2224 = vmatpush.msra.mxu0 %v2223
        %v2225 = vand.u32 %v1969, 4294901760
        %v2226 = vsub.f32 %v1969, %v2225
        %2227 = vmatmul.f32.gmra.mxu0 %v2226
        %v2228 = vpop.f32.mrf.mxu0
        %v2229 = vadd.f32 %v2175, %v2228
        %2230 = vdwg.mxu0
        %v2231 = vand.u32 %v1985, 4294901760
        %2232 = vmatpush.msra.mxu0 %v2231
        %v2233 = vand.u32 %v1984, 4294901760
        %2234 = vmatpush.msra.mxu0 %v2233
        %v2235 = vand.u32 %v1983, 4294901760
        %2236 = vmatpush.msra.mxu0 %v2235
        %v2237 = vand.u32 %v1982, 4294901760
        %2238 = vmatpush.msra.mxu0 %v2237
        %v2239 = vand.u32 %v1981, 4294901760
        %2240 = vmatpush.msra.mxu0 %v2239
        %v2241 = vand.u32 %v1980, 4294901760
        %2242 = vmatpush.msra.mxu0 %v2241
        %v2243 = vand.u32 %v1979, 4294901760
        %2244 = vmatpush.msra.mxu0 %v2243
        %v2245 = vand.u32 %v1978, 4294901760
        %2246 = vmatpush.msra.mxu0 %v2245
        %v2247 = vand.u32 %v1977, 4294901760
        %2248 = vmatpush.msra.mxu0 %v2247
        %v2249 = vand.u32 %v1976, 4294901760
        %2250 = vmatpush.msra.mxu0 %v2249
        %v2251 = vand.u32 %v1975, 4294901760
        %2252 = vmatpush.msra.mxu0 %v2251
        %v2253 = vand.u32 %v1974, 4294901760
        %2254 = vmatpush.msra.mxu0 %v2253
        %v2255 = vand.u32 %v1973, 4294901760
        %2256 = vmatpush.msra.mxu0 %v2255
        %v2257 = vand.u32 %v1972, 4294901760
        %2258 = vmatpush.msra.mxu0 %v2257
        %v2259 = vand.u32 %v1971, 4294901760
        %2260 = vmatpush.msra.mxu0 %v2259
        %v2261 = vand.u32 %v1970, 4294901760
        %2262 = vmatpush.msra.mxu0 %v2261
        %v2263 = vand.u32 %v1969, 4294901760
        %v2264 = vsub.f32 %v1969, %v2263
        %v2265 = vand.u32 %v2264, 4294901760
        %2266 = vmatmul.f32.gmra.mxu0 %v2265
        %v2267 = vpop.f32.mrf.mxu0
        %v2268 = vadd.f32 %v2229, %v2267
        %2269 = vdwg.mxu0
        %v2270 = vand.u32 %v1985, 4294901760
        %v2271 = vsub.f32 %v1985, %v2270
        %v2272 = vand.u32 %v2271, 4294901760
        %2273 = vmatpush.msra.mxu0 %v2272
        %v2274 = vand.u32 %v1984, 4294901760
        %v2275 = vsub.f32 %v1984, %v2274
        %v2276 = vand.u32 %v2275, 4294901760
        %2277 = vmatpush.msra.mxu0 %v2276
        %v2278 = vand.u32 %v1983, 4294901760
        %v2279 = vsub.f32 %v1983, %v2278
        %v2280 = vand.u32 %v2279, 4294901760
        %2281 = vmatpush.msra.mxu0 %v2280
        %v2282 = vand.u32 %v1982, 4294901760
        %v2283 = vsub.f32 %v1982, %v2282
        %v2284 = vand.u32 %v2283, 4294901760
        %2285 = vmatpush.msra.mxu0 %v2284
        %v2286 = vand.u32 %v1981, 4294901760
        %v2287 = vsub.f32 %v1981, %v2286
        %v2288 = vand.u32 %v2287, 4294901760
        %2289 = vmatpush.msra.mxu0 %v2288
        %v2290 = vand.u32 %v1980, 4294901760
        %v2291 = vsub.f32 %v1980, %v2290
        %v2292 = vand.u32 %v2291, 4294901760
        %2293 = vmatpush.msra.mxu0 %v2292
        %v2294 = vand.u32 %v1979, 4294901760
        %v2295 = vsub.f32 %v1979, %v2294
        %v2296 = vand.u32 %v2295, 4294901760
        %2297 = vmatpush.msra.mxu0 %v2296
        %v2298 = vand.u32 %v1978, 4294901760
        %v2299 = vsub.f32 %v1978, %v2298
        %v2300 = vand.u32 %v2299, 4294901760
        %2301 = vmatpush.msra.mxu0 %v2300
        %v2302 = vand.u32 %v1977, 4294901760
        %v2303 = vsub.f32 %v1977, %v2302
        %v2304 = vand.u32 %v2303, 4294901760
        %2305 = vmatpush.msra.mxu0 %v2304
        %v2306 = vand.u32 %v1976, 4294901760
        %v2307 = vsub.f32 %v1976, %v2306
        %v2308 = vand.u32 %v2307, 4294901760
        %2309 = vmatpush.msra.mxu0 %v2308
        %v2310 = vand.u32 %v1975, 4294901760
        %v2311 = vsub.f32 %v1975, %v2310
        %v2312 = vand.u32 %v2311, 4294901760
        %2313 = vmatpush.msra.mxu0 %v2312
        %v2314 = vand.u32 %v1974, 4294901760
        %v2315 = vsub.f32 %v1974, %v2314
        %v2316 = vand.u32 %v2315, 4294901760
        %2317 = vmatpush.msra.mxu0 %v2316
        %v2318 = vand.u32 %v1973, 4294901760
        %v2319 = vsub.f32 %v1973, %v2318
        %v2320 = vand.u32 %v2319, 4294901760
        %2321 = vmatpush.msra.mxu0 %v2320
        %v2322 = vand.u32 %v1972, 4294901760
        %v2323 = vsub.f32 %v1972, %v2322
        %v2324 = vand.u32 %v2323, 4294901760
        %2325 = vmatpush.msra.mxu0 %v2324
        %v2326 = vand.u32 %v1971, 4294901760
        %v2327 = vsub.f32 %v1971, %v2326
        %v2328 = vand.u32 %v2327, 4294901760
        %2329 = vmatpush.msra.mxu0 %v2328
        %v2330 = vand.u32 %v1970, 4294901760
        %v2331 = vsub.f32 %v1970, %v2330
        %v2332 = vand.u32 %v2331, 4294901760
        %2333 = vmatpush.msra.mxu0 %v2332
        %v2334 = vand.u32 %v1969, 4294901760
        %2335 = vmatmul.f32.gmra.mxu0 %v2334
        %v2336 = vpop.f32.mrf.mxu0
        %v2337 = vadd.f32 %v2268, %v2336
        %2338 = vdwg.mxu0
        %v2339 = vand.u32 %v1985, 4294901760
        %2340 = vmatpush.msra.mxu0 %v2339
        %v2341 = vand.u32 %v1984, 4294901760
        %2342 = vmatpush.msra.mxu0 %v2341
        %v2343 = vand.u32 %v1983, 4294901760
        %2344 = vmatpush.msra.mxu0 %v2343
        %v2345 = vand.u32 %v1982, 4294901760
        %2346 = vmatpush.msra.mxu0 %v2345
        %v2347 = vand.u32 %v1981, 4294901760
        %2348 = vmatpush.msra.mxu0 %v2347
        %v2349 = vand.u32 %v1980, 4294901760
        %2350 = vmatpush.msra.mxu0 %v2349
        %v2351 = vand.u32 %v1979, 4294901760
        %2352 = vmatpush.msra.mxu0 %v2351
        %v2353 = vand.u32 %v1978, 4294901760
        %2354 = vmatpush.msra.mxu0 %v2353
        %v2355 = vand.u32 %v1977, 4294901760
        %2356 = vmatpush.msra.mxu0 %v2355
        %v2357 = vand.u32 %v1976, 4294901760
        %2358 = vmatpush.msra.mxu0 %v2357
        %v2359 = vand.u32 %v1975, 4294901760
        %2360 = vmatpush.msra.mxu0 %v2359
        %v2361 = vand.u32 %v1974, 4294901760
        %2362 = vmatpush.msra.mxu0 %v2361
        %v2363 = vand.u32 %v1973, 4294901760
        %2364 = vmatpush.msra.mxu0 %v2363
        %v2365 = vand.u32 %v1972, 4294901760
        %2366 = vmatpush.msra.mxu0 %v2365
        %v2367 = vand.u32 %v1971, 4294901760
        %2368 = vmatpush.msra.mxu0 %v2367
        %v2369 = vand.u32 %v1970, 4294901760
        %2370 = vmatpush.msra.mxu0 %v2369
        %v2371 = vand.u32 %v1969, 4294901760
        %2372 = vmatmul.f32.gmra.mxu0 %v2371
        %v2373 = vpop.f32.mrf.mxu0
        %v2374 = vadd.f32 %v2337, %v2373
        %2375 = vdwg.mxu0
        %v2376 = vand.u32 %v2001, 4294901760
        %2377 = vmatpush.msra.mxu0 %v2376
        %v2378 = vand.u32 %v2000, 4294901760
        %2379 = vmatpush.msra.mxu0 %v2378
        %v2380 = vand.u32 %v1999, 4294901760
        %2381 = vmatpush.msra.mxu0 %v2380
        %v2382 = vand.u32 %v1998, 4294901760
        %2383 = vmatpush.msra.mxu0 %v2382
        %v2384 = vand.u32 %v1997, 4294901760
        %2385 = vmatpush.msra.mxu0 %v2384
        %v2386 = vand.u32 %v1996, 4294901760
        %2387 = vmatpush.msra.mxu0 %v2386
        %v2388 = vand.u32 %v1995, 4294901760
        %2389 = vmatpush.msra.mxu0 %v2388
        %v2390 = vand.u32 %v1994, 4294901760
        %2391 = vmatpush.msra.mxu0 %v2390
        %v2392 = vand.u32 %v1993, 4294901760
        %2393 = vmatpush.msra.mxu0 %v2392
        %v2394 = vand.u32 %v1992, 4294901760
        %2395 = vmatpush.msra.mxu0 %v2394
        %v2396 = vand.u32 %v1991, 4294901760
        %2397 = vmatpush.msra.mxu0 %v2396
        %v2398 = vand.u32 %v1990, 4294901760
        %2399 = vmatpush.msra.mxu0 %v2398
        %v2400 = vand.u32 %v1989, 4294901760
        %2401 = vmatpush.msra.mxu0 %v2400
        %v2402 = vand.u32 %v1988, 4294901760
        %2403 = vmatpush.msra.mxu0 %v2402
        %v2404 = vand.u32 %v1987, 4294901760
        %2405 = vmatpush.msra.mxu0 %v2404
        %v2406 = vand.u32 %v1986, 4294901760
        %2407 = vmatpush.msra.mxu0 %v2406
        %v2408 = vand.u32 %v1969, 4294901760
        %v2409 = vsub.f32 %v1969, %v2408
        %v2410 = vand.u32 %v2409, 4294901760
        %v2411 = vsub.f32 %v2409, %v2410
        %v2412 = vand.u32 %v2411, 4294901760
        %2413 = vmatmul.f32.gmra.mxu0 %v2412
        %v2414 = vpop.f32.mrf.mxu0
        %v2415 = vadd.f32 0.0, %v2414
        %2416 = vdwg.mxu0
        %v2417 = vand.u32 %v2001, 4294901760
        %v2418 = vsub.f32 %v2001, %v2417
        %v2419 = vand.u32 %v2418, 4294901760
        %v2420 = vsub.f32 %v2418, %v2419
        %v2421 = vand.u32 %v2420, 4294901760
        %2422 = vmatpush.msra.mxu0 %v2421
        %v2423 = vand.u32 %v2000, 4294901760
        %v2424 = vsub.f32 %v2000, %v2423
        %v2425 = vand.u32 %v2424, 4294901760
        %v2426 = vsub.f32 %v2424, %v2425
        %v2427 = vand.u32 %v2426, 4294901760
        %2428 = vmatpush.msra.mxu0 %v2427
        %v2429 = vand.u32 %v1999, 4294901760
        %v2430 = vsub.f32 %v1999, %v2429
        %v2431 = vand.u32 %v2430, 4294901760
        %v2432 = vsub.f32 %v2430, %v2431
        %v2433 = vand.u32 %v2432, 4294901760
        %2434 = vmatpush.msra.mxu0 %v2433
        %v2435 = vand.u32 %v1998, 4294901760
        %v2436 = vsub.f32 %v1998, %v2435
        %v2437 = vand.u32 %v2436, 4294901760
        %v2438 = vsub.f32 %v2436, %v2437
        %v2439 = vand.u32 %v2438, 4294901760
        %2440 = vmatpush.msra.mxu0 %v2439
        %v2441 = vand.u32 %v1997, 4294901760
        %v2442 = vsub.f32 %v1997, %v2441
        %v2443 = vand.u32 %v2442, 4294901760
        %v2444 = vsub.f32 %v2442, %v2443
        %v2445 = vand.u32 %v2444, 4294901760
        %2446 = vmatpush.msra.mxu0 %v2445
        %v2447 = vand.u32 %v1996, 4294901760
        %v2448 = vsub.f32 %v1996, %v2447
        %v2449 = vand.u32 %v2448, 4294901760
        %v2450 = vsub.f32 %v2448, %v2449
        %v2451 = vand.u32 %v2450, 4294901760
        %2452 = vmatpush.msra.mxu0 %v2451
        %v2453 = vand.u32 %v1995, 4294901760
        %v2454 = vsub.f32 %v1995, %v2453
        %v2455 = vand.u32 %v2454, 4294901760
        %v2456 = vsub.f32 %v2454, %v2455
        %v2457 = vand.u32 %v2456, 4294901760
        %2458 = vmatpush.msra.mxu0 %v2457
        %v2459 = vand.u32 %v1994, 4294901760
        %v2460 = vsub.f32 %v1994, %v2459
        %v2461 = vand.u32 %v2460, 4294901760
        %v2462 = vsub.f32 %v2460, %v2461
        %v2463 = vand.u32 %v2462, 4294901760
        %2464 = vmatpush.msra.mxu0 %v2463
        %v2465 = vand.u32 %v1993, 4294901760
        %v2466 = vsub.f32 %v1993, %v2465
        %v2467 = vand.u32 %v2466, 4294901760
        %v2468 = vsub.f32 %v2466, %v2467
        %v2469 = vand.u32 %v2468, 4294901760
        %2470 = vmatpush.msra.mxu0 %v2469
        %v2471 = vand.u32 %v1992, 4294901760
        %v2472 = vsub.f32 %v1992, %v2471
        %v2473 = vand.u32 %v2472, 4294901760
        %v2474 = vsub.f32 %v2472, %v2473
        %v2475 = vand.u32 %v2474, 4294901760
        %2476 = vmatpush.msra.mxu0 %v2475
        %v2477 = vand.u32 %v1991, 4294901760
        %v2478 = vsub.f32 %v1991, %v2477
        %v2479 = vand.u32 %v2478, 4294901760
        %v2480 = vsub.f32 %v2478, %v2479
        %v2481 = vand.u32 %v2480, 4294901760
        %2482 = vmatpush.msra.mxu0 %v2481
        %v2483 = vand.u32 %v1990, 4294901760
        %v2484 = vsub.f32 %v1990, %v2483
        %v2485 = vand.u32 %v2484, 4294901760
        %v2486 = vsub.f32 %v2484, %v2485
        %v2487 = vand.u32 %v2486, 4294901760
        %2488 = vmatpush.msra.mxu0 %v2487
        %v2489 = vand.u32 %v1989, 4294901760
        %v2490 = vsub.f32 %v1989, %v2489
        %v2491 = vand.u32 %v2490, 4294901760
        %v2492 = vsub.f32 %v2490, %v2491
        %v2493 = vand.u32 %v2492, 4294901760
        %2494 = vmatpush.msra.mxu0 %v2493
        %v2495 = vand.u32 %v1988, 4294901760
        %v2496 = vsub.f32 %v1988, %v2495
        %v2497 = vand.u32 %v2496, 4294901760
        %v2498 = vsub.f32 %v2496, %v2497
        %v2499 = vand.u32 %v2498, 4294901760
        %2500 = vmatpush.msra.mxu0 %v2499
        %v2501 = vand.u32 %v1987, 4294901760
        %v2502 = vsub.f32 %v1987, %v2501
        %v2503 = vand.u32 %v2502, 4294901760
        %v2504 = vsub.f32 %v2502, %v2503
        %v2505 = vand.u32 %v2504, 4294901760
        %2506 = vmatpush.msra.mxu0 %v2505
        %v2507 = vand.u32 %v1986, 4294901760
        %v2508 = vsub.f32 %v1986, %v2507
        %v2509 = vand.u32 %v2508, 4294901760
        %v2510 = vsub.f32 %v2508, %v2509
        %v2511 = vand.u32 %v2510, 4294901760
        %2512 = vmatpush.msra.mxu0 %v2511
        %v2513 = vand.u32 %v1969, 4294901760
        %2514 = vmatmul.f32.gmra.mxu0 %v2513
        %v2515 = vpop.f32.mrf.mxu0
        %v2516 = vadd.f32 %v2415, %v2515
        %2517 = vdwg.mxu0
        %v2518 = vand.u32 %v2001, 4294901760
        %v2519 = vsub.f32 %v2001, %v2518
        %2520 = vmatpush.msra.mxu0 %v2519
        %v2521 = vand.u32 %v2000, 4294901760
        %v2522 = vsub.f32 %v2000, %v2521
        %2523 = vmatpush.msra.mxu0 %v2522
        %v2524 = vand.u32 %v1999, 4294901760
        %v2525 = vsub.f32 %v1999, %v2524
        %2526 = vmatpush.msra.mxu0 %v2525
        %v2527 = vand.u32 %v1998, 4294901760
        %v2528 = vsub.f32 %v1998, %v2527
        %2529 = vmatpush.msra.mxu0 %v2528
        %v2530 = vand.u32 %v1997, 4294901760
        %v2531 = vsub.f32 %v1997, %v2530
        %2532 = vmatpush.msra.mxu0 %v2531
        %v2533 = vand.u32 %v1996, 4294901760
        %v2534 = vsub.f32 %v1996, %v2533
        %2535 = vmatpush.msra.mxu0 %v2534
        %v2536 = vand.u32 %v1995, 4294901760
        %v2537 = vsub.f32 %v1995, %v2536
        %2538 = vmatpush.msra.mxu0 %v2537
        %v2539 = vand.u32 %v1994, 4294901760
        %v2540 = vsub.f32 %v1994, %v2539
        %2541 = vmatpush.msra.mxu0 %v2540
        %v2542 = vand.u32 %v1993, 4294901760
        %v2543 = vsub.f32 %v1993, %v2542
        %2544 = vmatpush.msra.mxu0 %v2543
        %v2545 = vand.u32 %v1992, 4294901760
        %v2546 = vsub.f32 %v1992, %v2545
        %2547 = vmatpush.msra.mxu0 %v2546
        %v2548 = vand.u32 %v1991, 4294901760
        %v2549 = vsub.f32 %v1991, %v2548
        %2550 = vmatpush.msra.mxu0 %v2549
        %v2551 = vand.u32 %v1990, 4294901760
        %v2552 = vsub.f32 %v1990, %v2551
        %2553 = vmatpush.msra.mxu0 %v2552
        %v2554 = vand.u32 %v1989, 4294901760
        %v2555 = vsub.f32 %v1989, %v2554
        %2556 = vmatpush.msra.mxu0 %v2555
        %v2557 = vand.u32 %v1988, 4294901760
        %v2558 = vsub.f32 %v1988, %v2557
        %2559 = vmatpush.msra.mxu0 %v2558
        %v2560 = vand.u32 %v1987, 4294901760
        %v2561 = vsub.f32 %v1987, %v2560
        %2562 = vmatpush.msra.mxu0 %v2561
        %v2563 = vand.u32 %v1986, 4294901760
        %v2564 = vsub.f32 %v1986, %v2563
        %2565 = vmatpush.msra.mxu0 %v2564
        %v2566 = vand.u32 %v1969, 4294901760
        %v2567 = vsub.f32 %v1969, %v2566
        %2568 = vmatmul.f32.gmra.mxu0 %v2567
        %v2569 = vpop.f32.mrf.mxu0
        %v2570 = vadd.f32 %v2516, %v2569
        %2571 = vdwg.mxu0
        %v2572 = vand.u32 %v2001, 4294901760
        %2573 = vmatpush.msra.mxu0 %v2572
        %v2574 = vand.u32 %v2000, 4294901760
        %2575 = vmatpush.msra.mxu0 %v2574
        %v2576 = vand.u32 %v1999, 4294901760
        %2577 = vmatpush.msra.mxu0 %v2576
        %v2578 = vand.u32 %v1998, 4294901760
        %2579 = vmatpush.msra.mxu0 %v2578
        %v2580 = vand.u32 %v1997, 4294901760
        %2581 = vmatpush.msra.mxu0 %v2580
        %v2582 = vand.u32 %v1996, 4294901760
        %2583 = vmatpush.msra.mxu0 %v2582
        %v2584 = vand.u32 %v1995, 4294901760
        %2585 = vmatpush.msra.mxu0 %v2584
        %v2586 = vand.u32 %v1994, 4294901760
        %2587 = vmatpush.msra.mxu0 %v2586
        %v2588 = vand.u32 %v1993, 4294901760
        %2589 = vmatpush.msra.mxu0 %v2588
        %v2590 = vand.u32 %v1992, 4294901760
        %2591 = vmatpush.msra.mxu0 %v2590
        %v2592 = vand.u32 %v1991, 4294901760
        %2593 = vmatpush.msra.mxu0 %v2592
        %v2594 = vand.u32 %v1990, 4294901760
        %2595 = vmatpush.msra.mxu0 %v2594
        %v2596 = vand.u32 %v1989, 4294901760
        %2597 = vmatpush.msra.mxu0 %v2596
        %v2598 = vand.u32 %v1988, 4294901760
        %2599 = vmatpush.msra.mxu0 %v2598
        %v2600 = vand.u32 %v1987, 4294901760
        %2601 = vmatpush.msra.mxu0 %v2600
        %v2602 = vand.u32 %v1986, 4294901760
        %2603 = vmatpush.msra.mxu0 %v2602
        %v2604 = vand.u32 %v1969, 4294901760
        %v2605 = vsub.f32 %v1969, %v2604
        %v2606 = vand.u32 %v2605, 4294901760
        %2607 = vmatmul.f32.gmra.mxu0 %v2606
        %v2608 = vpop.f32.mrf.mxu0
        %v2609 = vadd.f32 %v2570, %v2608
        %2610 = vdwg.mxu0
        %v2611 = vand.u32 %v2001, 4294901760
        %v2612 = vsub.f32 %v2001, %v2611
        %v2613 = vand.u32 %v2612, 4294901760
        %2614 = vmatpush.msra.mxu0 %v2613
        %v2615 = vand.u32 %v2000, 4294901760
        %v2616 = vsub.f32 %v2000, %v2615
        %v2617 = vand.u32 %v2616, 4294901760
        %2618 = vmatpush.msra.mxu0 %v2617
        %v2619 = vand.u32 %v1999, 4294901760
        %v2620 = vsub.f32 %v1999, %v2619
        %v2621 = vand.u32 %v2620, 4294901760
        %2622 = vmatpush.msra.mxu0 %v2621
        %v2623 = vand.u32 %v1998, 4294901760
        %v2624 = vsub.f32 %v1998, %v2623
        %v2625 = vand.u32 %v2624, 4294901760
        %2626 = vmatpush.msra.mxu0 %v2625
        %v2627 = vand.u32 %v1997, 4294901760
        %v2628 = vsub.f32 %v1997, %v2627
        %v2629 = vand.u32 %v2628, 4294901760
        %2630 = vmatpush.msra.mxu0 %v2629
        %v2631 = vand.u32 %v1996, 4294901760
        %v2632 = vsub.f32 %v1996, %v2631
        %v2633 = vand.u32 %v2632, 4294901760
        %2634 = vmatpush.msra.mxu0 %v2633
        %v2635 = vand.u32 %v1995, 4294901760
        %v2636 = vsub.f32 %v1995, %v2635
        %v2637 = vand.u32 %v2636, 4294901760
        %2638 = vmatpush.msra.mxu0 %v2637
        %v2639 = vand.u32 %v1994, 4294901760
        %v2640 = vsub.f32 %v1994, %v2639
        %v2641 = vand.u32 %v2640, 4294901760
        %2642 = vmatpush.msra.mxu0 %v2641
        %v2643 = vand.u32 %v1993, 4294901760
        %v2644 = vsub.f32 %v1993, %v2643
        %v2645 = vand.u32 %v2644, 4294901760
        %2646 = vmatpush.msra.mxu0 %v2645
        %v2647 = vand.u32 %v1992, 4294901760
        %v2648 = vsub.f32 %v1992, %v2647
        %v2649 = vand.u32 %v2648, 4294901760
        %2650 = vmatpush.msra.mxu0 %v2649
        %v2651 = vand.u32 %v1991, 4294901760
        %v2652 = vsub.f32 %v1991, %v2651
        %v2653 = vand.u32 %v2652, 4294901760
        %2654 = vmatpush.msra.mxu0 %v2653
        %v2655 = vand.u32 %v1990, 4294901760
        %v2656 = vsub.f32 %v1990, %v2655
        %v2657 = vand.u32 %v2656, 4294901760
        %2658 = vmatpush.msra.mxu0 %v2657
        %v2659 = vand.u32 %v1989, 4294901760
        %v2660 = vsub.f32 %v1989, %v2659
        %v2661 = vand.u32 %v2660, 4294901760
        %2662 = vmatpush.msra.mxu0 %v2661
        %v2663 = vand.u32 %v1988, 4294901760
        %v2664 = vsub.f32 %v1988, %v2663
        %v2665 = vand.u32 %v2664, 4294901760
        %2666 = vmatpush.msra.mxu0 %v2665
        %v2667 = vand.u32 %v1987, 4294901760
        %v2668 = vsub.f32 %v1987, %v2667
        %v2669 = vand.u32 %v2668, 4294901760
        %2670 = vmatpush.msra.mxu0 %v2669
        %v2671 = vand.u32 %v1986, 4294901760
        %v2672 = vsub.f32 %v1986, %v2671
        %v2673 = vand.u32 %v2672, 4294901760
        %2674 = vmatpush.msra.mxu0 %v2673
        %v2675 = vand.u32 %v1969, 4294901760
        %2676 = vmatmul.f32.gmra.mxu0 %v2675
        %v2677 = vpop.f32.mrf.mxu0
        %v2678 = vadd.f32 %v2609, %v2677
        %2679 = vdwg.mxu0
        %v2680 = vand.u32 %v2001, 4294901760
        %2681 = vmatpush.msra.mxu0 %v2680
        %v2682 = vand.u32 %v2000, 4294901760
        %2683 = vmatpush.msra.mxu0 %v2682
        %v2684 = vand.u32 %v1999, 4294901760
        %2685 = vmatpush.msra.mxu0 %v2684
        %v2686 = vand.u32 %v1998, 4294901760
        %2687 = vmatpush.msra.mxu0 %v2686
        %v2688 = vand.u32 %v1997, 4294901760
        %2689 = vmatpush.msra.mxu0 %v2688
        %v2690 = vand.u32 %v1996, 4294901760
        %2691 = vmatpush.msra.mxu0 %v2690
        %v2692 = vand.u32 %v1995, 4294901760
        %2693 = vmatpush.msra.mxu0 %v2692
        %v2694 = vand.u32 %v1994, 4294901760
        %2695 = vmatpush.msra.mxu0 %v2694
        %v2696 = vand.u32 %v1993, 4294901760
        %2697 = vmatpush.msra.mxu0 %v2696
        %v2698 = vand.u32 %v1992, 4294901760
        %2699 = vmatpush.msra.mxu0 %v2698
        %v2700 = vand.u32 %v1991, 4294901760
        %2701 = vmatpush.msra.mxu0 %v2700
        %v2702 = vand.u32 %v1990, 4294901760
        %2703 = vmatpush.msra.mxu0 %v2702
        %v2704 = vand.u32 %v1989, 4294901760
        %2705 = vmatpush.msra.mxu0 %v2704
        %v2706 = vand.u32 %v1988, 4294901760
        %2707 = vmatpush.msra.mxu0 %v2706
        %v2708 = vand.u32 %v1987, 4294901760
        %2709 = vmatpush.msra.mxu0 %v2708
        %v2710 = vand.u32 %v1986, 4294901760
        %2711 = vmatpush.msra.mxu0 %v2710
        %v2712 = vand.u32 %v1969, 4294901760
        %2713 = vmatmul.f32.gmra.mxu0 %v2712
        %v2714 = vpop.f32.mrf.mxu0
        %v2715 = vadd.f32 %v2678, %v2714
        %2716 = vdwg.mxu0
        %v2717 = vand.u32 %v2017, 4294901760
        %2718 = vmatpush.msra.mxu0 %v2717
        %v2719 = vand.u32 %v2016, 4294901760
        %2720 = vmatpush.msra.mxu0 %v2719
        %v2721 = vand.u32 %v2015, 4294901760
        %2722 = vmatpush.msra.mxu0 %v2721
        %v2723 = vand.u32 %v2014, 4294901760
        %2724 = vmatpush.msra.mxu0 %v2723
        %v2725 = vand.u32 %v2013, 4294901760
        %2726 = vmatpush.msra.mxu0 %v2725
        %v2727 = vand.u32 %v2012, 4294901760
        %2728 = vmatpush.msra.mxu0 %v2727
        %v2729 = vand.u32 %v2011, 4294901760
        %2730 = vmatpush.msra.mxu0 %v2729
        %v2731 = vand.u32 %v2010, 4294901760
        %2732 = vmatpush.msra.mxu0 %v2731
        %v2733 = vand.u32 %v2009, 4294901760
        %2734 = vmatpush.msra.mxu0 %v2733
        %v2735 = vand.u32 %v2008, 4294901760
        %2736 = vmatpush.msra.mxu0 %v2735
        %v2737 = vand.u32 %v2007, 4294901760
        %2738 = vmatpush.msra.mxu0 %v2737
        %v2739 = vand.u32 %v2006, 4294901760
        %2740 = vmatpush.msra.mxu0 %v2739
        %v2741 = vand.u32 %v2005, 4294901760
        %2742 = vmatpush.msra.mxu0 %v2741
        %v2743 = vand.u32 %v2004, 4294901760
        %2744 = vmatpush.msra.mxu0 %v2743
        %v2745 = vand.u32 %v2003, 4294901760
        %2746 = vmatpush.msra.mxu0 %v2745
        %v2747 = vand.u32 %v2002, 4294901760
        %2748 = vmatpush.msra.mxu0 %v2747
        %v2749 = vand.u32 %v1969, 4294901760
        %v2750 = vsub.f32 %v1969, %v2749
        %v2751 = vand.u32 %v2750, 4294901760
        %v2752 = vsub.f32 %v2750, %v2751
        %v2753 = vand.u32 %v2752, 4294901760
        %2754 = vmatmul.f32.gmra.mxu0 %v2753
        %v2755 = vpop.f32.mrf.mxu0
        %v2756 = vadd.f32 0.0, %v2755
        %2757 = vdwg.mxu0
        %v2758 = vand.u32 %v2017, 4294901760
        %v2759 = vsub.f32 %v2017, %v2758
        %v2760 = vand.u32 %v2759, 4294901760
        %v2761 = vsub.f32 %v2759, %v2760
        %v2762 = vand.u32 %v2761, 4294901760
        %2763 = vmatpush.msra.mxu0 %v2762
        %v2764 = vand.u32 %v2016, 4294901760
        %v2765 = vsub.f32 %v2016, %v2764
        %v2766 = vand.u32 %v2765, 4294901760
        %v2767 = vsub.f32 %v2765, %v2766
        %v2768 = vand.u32 %v2767, 4294901760
        %2769 = vmatpush.msra.mxu0 %v2768
        %v2770 = vand.u32 %v2015, 4294901760
        %v2771 = vsub.f32 %v2015, %v2770
        %v2772 = vand.u32 %v2771, 4294901760
        %v2773 = vsub.f32 %v2771, %v2772
        %v2774 = vand.u32 %v2773, 4294901760
        %2775 = vmatpush.msra.mxu0 %v2774
        %v2776 = vand.u32 %v2014, 4294901760
        %v2777 = vsub.f32 %v2014, %v2776
        %v2778 = vand.u32 %v2777, 4294901760
        %v2779 = vsub.f32 %v2777, %v2778
        %v2780 = vand.u32 %v2779, 4294901760
        %2781 = vmatpush.msra.mxu0 %v2780
        %v2782 = vand.u32 %v2013, 4294901760
        %v2783 = vsub.f32 %v2013, %v2782
        %v2784 = vand.u32 %v2783, 4294901760
        %v2785 = vsub.f32 %v2783, %v2784
        %v2786 = vand.u32 %v2785, 4294901760
        %2787 = vmatpush.msra.mxu0 %v2786
        %v2788 = vand.u32 %v2012, 4294901760
        %v2789 = vsub.f32 %v2012, %v2788
        %v2790 = vand.u32 %v2789, 4294901760
        %v2791 = vsub.f32 %v2789, %v2790
        %v2792 = vand.u32 %v2791, 4294901760
        %2793 = vmatpush.msra.mxu0 %v2792
        %v2794 = vand.u32 %v2011, 4294901760
        %v2795 = vsub.f32 %v2011, %v2794
        %v2796 = vand.u32 %v2795, 4294901760
        %v2797 = vsub.f32 %v2795, %v2796
        %v2798 = vand.u32 %v2797, 4294901760
        %2799 = vmatpush.msra.mxu0 %v2798
        %v2800 = vand.u32 %v2010, 4294901760
        %v2801 = vsub.f32 %v2010, %v2800
        %v2802 = vand.u32 %v2801, 4294901760
        %v2803 = vsub.f32 %v2801, %v2802
        %v2804 = vand.u32 %v2803, 4294901760
        %2805 = vmatpush.msra.mxu0 %v2804
        %v2806 = vand.u32 %v2009, 4294901760
        %v2807 = vsub.f32 %v2009, %v2806
        %v2808 = vand.u32 %v2807, 4294901760
        %v2809 = vsub.f32 %v2807, %v2808
        %v2810 = vand.u32 %v2809, 4294901760
        %2811 = vmatpush.msra.mxu0 %v2810
        %v2812 = vand.u32 %v2008, 4294901760
        %v2813 = vsub.f32 %v2008, %v2812
        %v2814 = vand.u32 %v2813, 4294901760
        %v2815 = vsub.f32 %v2813, %v2814
        %v2816 = vand.u32 %v2815, 4294901760
        %2817 = vmatpush.msra.mxu0 %v2816
        %v2818 = vand.u32 %v2007, 4294901760
        %v2819 = vsub.f32 %v2007, %v2818
        %v2820 = vand.u32 %v2819, 4294901760
        %v2821 = vsub.f32 %v2819, %v2820
        %v2822 = vand.u32 %v2821, 4294901760
        %2823 = vmatpush.msra.mxu0 %v2822
        %v2824 = vand.u32 %v2006, 4294901760
        %v2825 = vsub.f32 %v2006, %v2824
        %v2826 = vand.u32 %v2825, 4294901760
        %v2827 = vsub.f32 %v2825, %v2826
        %v2828 = vand.u32 %v2827, 4294901760
        %2829 = vmatpush.msra.mxu0 %v2828
        %v2830 = vand.u32 %v2005, 4294901760
        %v2831 = vsub.f32 %v2005, %v2830
        %v2832 = vand.u32 %v2831, 4294901760
        %v2833 = vsub.f32 %v2831, %v2832
        %v2834 = vand.u32 %v2833, 4294901760
        %2835 = vmatpush.msra.mxu0 %v2834
        %v2836 = vand.u32 %v2004, 4294901760
        %v2837 = vsub.f32 %v2004, %v2836
        %v2838 = vand.u32 %v2837, 4294901760
        %v2839 = vsub.f32 %v2837, %v2838
        %v2840 = vand.u32 %v2839, 4294901760
        %2841 = vmatpush.msra.mxu0 %v2840
        %v2842 = vand.u32 %v2003, 4294901760
        %v2843 = vsub.f32 %v2003, %v2842
        %v2844 = vand.u32 %v2843, 4294901760
        %v2845 = vsub.f32 %v2843, %v2844
        %v2846 = vand.u32 %v2845, 4294901760
        %2847 = vmatpush.msra.mxu0 %v2846
        %v2848 = vand.u32 %v2002, 4294901760
        %v2849 = vsub.f32 %v2002, %v2848
        %v2850 = vand.u32 %v2849, 4294901760
        %v2851 = vsub.f32 %v2849, %v2850
        %v2852 = vand.u32 %v2851, 4294901760
        %2853 = vmatpush.msra.mxu0 %v2852
        %v2854 = vand.u32 %v1969, 4294901760
        %2855 = vmatmul.f32.gmra.mxu0 %v2854
        %v2856 = vpop.f32.mrf.mxu0
        %v2857 = vadd.f32 %v2756, %v2856
        %2858 = vdwg.mxu0
        %v2859 = vand.u32 %v2017, 4294901760
        %v2860 = vsub.f32 %v2017, %v2859
        %2861 = vmatpush.msra.mxu0 %v2860
        %v2862 = vand.u32 %v2016, 4294901760
        %v2863 = vsub.f32 %v2016, %v2862
        %2864 = vmatpush.msra.mxu0 %v2863
        %v2865 = vand.u32 %v2015, 4294901760
        %v2866 = vsub.f32 %v2015, %v2865
        %2867 = vmatpush.msra.mxu0 %v2866
        %v2868 = vand.u32 %v2014, 4294901760
        %v2869 = vsub.f32 %v2014, %v2868
        %2870 = vmatpush.msra.mxu0 %v2869
        %v2871 = vand.u32 %v2013, 4294901760
        %v2872 = vsub.f32 %v2013, %v2871
        %2873 = vmatpush.msra.mxu0 %v2872
        %v2874 = vand.u32 %v2012, 4294901760
        %v2875 = vsub.f32 %v2012, %v2874
        %2876 = vmatpush.msra.mxu0 %v2875
        %v2877 = vand.u32 %v2011, 4294901760
        %v2878 = vsub.f32 %v2011, %v2877
        %2879 = vmatpush.msra.mxu0 %v2878
        %v2880 = vand.u32 %v2010, 4294901760
        %v2881 = vsub.f32 %v2010, %v2880
        %2882 = vmatpush.msra.mxu0 %v2881
        %v2883 = vand.u32 %v2009, 4294901760
        %v2884 = vsub.f32 %v2009, %v2883
        %2885 = vmatpush.msra.mxu0 %v2884
        %v2886 = vand.u32 %v2008, 4294901760
        %v2887 = vsub.f32 %v2008, %v2886
        %2888 = vmatpush.msra.mxu0 %v2887
        %v2889 = vand.u32 %v2007, 4294901760
        %v2890 = vsub.f32 %v2007, %v2889
        %2891 = vmatpush.msra.mxu0 %v2890
        %v2892 = vand.u32 %v2006, 4294901760
        %v2893 = vsub.f32 %v2006, %v2892
        %2894 = vmatpush.msra.mxu0 %v2893
        %v2895 = vand.u32 %v2005, 4294901760
        %v2896 = vsub.f32 %v2005, %v2895
        %2897 = vmatpush.msra.mxu0 %v2896
        %v2898 = vand.u32 %v2004, 4294901760
        %v2899 = vsub.f32 %v2004, %v2898
        %2900 = vmatpush.msra.mxu0 %v2899
        %v2901 = vand.u32 %v2003, 4294901760
        %v2902 = vsub.f32 %v2003, %v2901
        %2903 = vmatpush.msra.mxu0 %v2902
        %v2904 = vand.u32 %v2002, 4294901760
        %v2905 = vsub.f32 %v2002, %v2904
        %2906 = vmatpush.msra.mxu0 %v2905
        %v2907 = vand.u32 %v1969, 4294901760
        %v2908 = vsub.f32 %v1969, %v2907
        %2909 = vmatmul.f32.gmra.mxu0 %v2908
        %v2910 = vpop.f32.mrf.mxu0
        %v2911 = vadd.f32 %v2857, %v2910
        %2912 = vdwg.mxu0
        %v2913 = vand.u32 %v2017, 4294901760
        %2914 = vmatpush.msra.mxu0 %v2913
        %v2915 = vand.u32 %v2016, 4294901760
        %2916 = vmatpush.msra.mxu0 %v2915
        %v2917 = vand.u32 %v2015, 4294901760
        %2918 = vmatpush.msra.mxu0 %v2917
        %v2919 = vand.u32 %v2014, 4294901760
        %2920 = vmatpush.msra.mxu0 %v2919
        %v2921 = vand.u32 %v2013, 4294901760
        %2922 = vmatpush.msra.mxu0 %v2921
        %v2923 = vand.u32 %v2012, 4294901760
        %2924 = vmatpush.msra.mxu0 %v2923
        %v2925 = vand.u32 %v2011, 4294901760
        %2926 = vmatpush.msra.mxu0 %v2925
        %v2927 = vand.u32 %v2010, 4294901760
        %2928 = vmatpush.msra.mxu0 %v2927
        %v2929 = vand.u32 %v2009, 4294901760
        %2930 = vmatpush.msra.mxu0 %v2929
        %v2931 = vand.u32 %v2008, 4294901760
        %2932 = vmatpush.msra.mxu0 %v2931
        %v2933 = vand.u32 %v2007, 4294901760
        %2934 = vmatpush.msra.mxu0 %v2933
        %v2935 = vand.u32 %v2006, 4294901760
        %2936 = vmatpush.msra.mxu0 %v2935
        %v2937 = vand.u32 %v2005, 4294901760
        %2938 = vmatpush.msra.mxu0 %v2937
        %v2939 = vand.u32 %v2004, 4294901760
        %2940 = vmatpush.msra.mxu0 %v2939
        %v2941 = vand.u32 %v2003, 4294901760
        %2942 = vmatpush.msra.mxu0 %v2941
        %v2943 = vand.u32 %v2002, 4294901760
        %2944 = vmatpush.msra.mxu0 %v2943
        %v2945 = vand.u32 %v1969, 4294901760
        %v2946 = vsub.f32 %v1969, %v2945
        %v2947 = vand.u32 %v2946, 4294901760
        %2948 = vmatmul.f32.gmra.mxu0 %v2947
        %v2949 = vpop.f32.mrf.mxu0
        %v2950 = vadd.f32 %v2911, %v2949
        %2951 = vdwg.mxu0
        %v2952 = vand.u32 %v2017, 4294901760
        %v2953 = vsub.f32 %v2017, %v2952
        %v2954 = vand.u32 %v2953, 4294901760
        %2955 = vmatpush.msra.mxu0 %v2954
        %v2956 = vand.u32 %v2016, 4294901760
        %v2957 = vsub.f32 %v2016, %v2956
        %v2958 = vand.u32 %v2957, 4294901760
        %2959 = vmatpush.msra.mxu0 %v2958
        %v2960 = vand.u32 %v2015, 4294901760
        %v2961 = vsub.f32 %v2015, %v2960
        %v2962 = vand.u32 %v2961, 4294901760
        %2963 = vmatpush.msra.mxu0 %v2962
        %v2964 = vand.u32 %v2014, 4294901760
        %v2965 = vsub.f32 %v2014, %v2964
        %v2966 = vand.u32 %v2965, 4294901760
        %2967 = vmatpush.msra.mxu0 %v2966
        %v2968 = vand.u32 %v2013, 4294901760
        %v2969 = vsub.f32 %v2013, %v2968
        %v2970 = vand.u32 %v2969, 4294901760
        %2971 = vmatpush.msra.mxu0 %v2970
        %v2972 = vand.u32 %v2012, 4294901760
        %v2973 = vsub.f32 %v2012, %v2972
        %v2974 = vand.u32 %v2973, 4294901760
        %2975 = vmatpush.msra.mxu0 %v2974
        %v2976 = vand.u32 %v2011, 4294901760
        %v2977 = vsub.f32 %v2011, %v2976
        %v2978 = vand.u32 %v2977, 4294901760
        %2979 = vmatpush.msra.mxu0 %v2978
        %v2980 = vand.u32 %v2010, 4294901760
        %v2981 = vsub.f32 %v2010, %v2980
        %v2982 = vand.u32 %v2981, 4294901760
        %2983 = vmatpush.msra.mxu0 %v2982
        %v2984 = vand.u32 %v2009, 4294901760
        %v2985 = vsub.f32 %v2009, %v2984
        %v2986 = vand.u32 %v2985, 4294901760
        %2987 = vmatpush.msra.mxu0 %v2986
        %v2988 = vand.u32 %v2008, 4294901760
        %v2989 = vsub.f32 %v2008, %v2988
        %v2990 = vand.u32 %v2989, 4294901760
        %2991 = vmatpush.msra.mxu0 %v2990
        %v2992 = vand.u32 %v2007, 4294901760
        %v2993 = vsub.f32 %v2007, %v2992
        %v2994 = vand.u32 %v2993, 4294901760
        %2995 = vmatpush.msra.mxu0 %v2994
        %v2996 = vand.u32 %v2006, 4294901760
        %v2997 = vsub.f32 %v2006, %v2996
        %v2998 = vand.u32 %v2997, 4294901760
        %2999 = vmatpush.msra.mxu0 %v2998
        %v3000 = vand.u32 %v2005, 4294901760
        %v3001 = vsub.f32 %v2005, %v3000
        %v3002 = vand.u32 %v3001, 4294901760
        %3003 = vmatpush.msra.mxu0 %v3002
        %v3004 = vand.u32 %v2004, 4294901760
        %v3005 = vsub.f32 %v2004, %v3004
        %v3006 = vand.u32 %v3005, 4294901760
        %3007 = vmatpush.msra.mxu0 %v3006
        %v3008 = vand.u32 %v2003, 4294901760
        %v3009 = vsub.f32 %v2003, %v3008
        %v3010 = vand.u32 %v3009, 4294901760
        %3011 = vmatpush.msra.mxu0 %v3010
        %v3012 = vand.u32 %v2002, 4294901760
        %v3013 = vsub.f32 %v2002, %v3012
        %v3014 = vand.u32 %v3013, 4294901760
        %3015 = vmatpush.msra.mxu0 %v3014
        %v3016 = vand.u32 %v1969, 4294901760
        %3017 = vmatmul.f32.gmra.mxu0 %v3016
        %v3018 = vpop.f32.mrf.mxu0
        %v3019 = vadd.f32 %v2950, %v3018
        %3020 = vdwg.mxu0
        %v3021 = vand.u32 %v2017, 4294901760
        %3022 = vmatpush.msra.mxu0 %v3021
        %v3023 = vand.u32 %v2016, 4294901760
        %3024 = vmatpush.msra.mxu0 %v3023
        %v3025 = vand.u32 %v2015, 4294901760
        %3026 = vmatpush.msra.mxu0 %v3025
        %v3027 = vand.u32 %v2014, 4294901760
        %3028 = vmatpush.msra.mxu0 %v3027
        %v3029 = vand.u32 %v2013, 4294901760
        %3030 = vmatpush.msra.mxu0 %v3029
        %v3031 = vand.u32 %v2012, 4294901760
        %3032 = vmatpush.msra.mxu0 %v3031
        %v3033 = vand.u32 %v2011, 4294901760
        %3034 = vmatpush.msra.mxu0 %v3033
        %v3035 = vand.u32 %v2010, 4294901760
        %3036 = vmatpush.msra.mxu0 %v3035
        %v3037 = vand.u32 %v2009, 4294901760
        %3038 = vmatpush.msra.mxu0 %v3037
        %v3039 = vand.u32 %v2008, 4294901760
        %3040 = vmatpush.msra.mxu0 %v3039
        %v3041 = vand.u32 %v2007, 4294901760
        %3042 = vmatpush.msra.mxu0 %v3041
        %v3043 = vand.u32 %v2006, 4294901760
        %3044 = vmatpush.msra.mxu0 %v3043
        %v3045 = vand.u32 %v2005, 4294901760
        %3046 = vmatpush.msra.mxu0 %v3045
        %v3047 = vand.u32 %v2004, 4294901760
        %3048 = vmatpush.msra.mxu0 %v3047
        %v3049 = vand.u32 %v2003, 4294901760
        %3050 = vmatpush.msra.mxu0 %v3049
        %v3051 = vand.u32 %v2002, 4294901760
        %3052 = vmatpush.msra.mxu0 %v3051
        %v3053 = vand.u32 %v1969, 4294901760
        %3054 = vmatmul.f32.gmra.mxu0 %v3053
        %v3055 = vpop.f32.mrf.mxu0
        %v3056 = vadd.f32 %v3019, %v3055
        %3057 = vdwg.mxu0
        %3058 = vmatpush.xpose.msra.mxu0 0.0
        %3059 = vmatpush.xpose.msra.mxu0 0.0
        %3060 = vmatpush.xpose.msra.mxu0 0.0
        %3061 = vmatpush.xpose.msra.mxu0 0.0
        %3062 = vmatpush.xpose.msra.mxu0 0.0
        %3063 = vmatpush.xpose.msra.mxu0 0.0
        %3064 = vmatpush.xpose.msra.mxu0 0.0
        %3065 = vmatpush.xpose.msra.mxu0 0.0
        %3066 = vmatpush.xpose.msra.mxu0 0.0
        %3067 = vmatpush.xpose.msra.mxu0 0.0
        %3068 = vmatpush.xpose.msra.mxu0 0.0
        %3069 = vmatpush.xpose.msra.mxu0 0.0
        %3070 = vmatpush.xpose.msra.mxu0 0.0
        %3071 = vmatpush.xpose.msra.mxu0 0.0
        %3072 = vmatpush.xpose.msra.mxu0 0.0
        %v3073 = vand.u32 %v2715, 4294901760
        %3074 = vmatpush.xpose.msra.mxu0 %v3073
        %v3075 = vand.u32 %v2374, 4294901760
        %v3076 = vsub.f32 %v2374, %v3075
        %v3077 = vand.u32 %v3076, 4294901760
        %v3078 = vsub.f32 %v3076, %v3077
        %v3079 = vand.u32 %v3078, 4294901760
        %3080 = vmatmul.f32.gmra.mxu0 %v3079
        %v3081 = vpop.f32.mrf.mxu0
        %v3082 = vadd.f32 0.0, %v3081
        %3083 = vdwg.mxu0
        %3084 = vmatpush.xpose.msra.mxu0 0.0
        %3085 = vmatpush.xpose.msra.mxu0 0.0
        %3086 = vmatpush.xpose.msra.mxu0 0.0
        %3087 = vmatpush.xpose.msra.mxu0 0.0
        %3088 = vmatpush.xpose.msra.mxu0 0.0
        %3089 = vmatpush.xpose.msra.mxu0 0.0
        %3090 = vmatpush.xpose.msra.mxu0 0.0
        %3091 = vmatpush.xpose.msra.mxu0 0.0
        %3092 = vmatpush.xpose.msra.mxu0 0.0
        %3093 = vmatpush.xpose.msra.mxu0 0.0
        %3094 = vmatpush.xpose.msra.mxu0 0.0
        %3095 = vmatpush.xpose.msra.mxu0 0.0
        %3096 = vmatpush.xpose.msra.mxu0 0.0
        %3097 = vmatpush.xpose.msra.mxu0 0.0
        %3098 = vmatpush.xpose.msra.mxu0 0.0
        %v3099 = vand.u32 %v2715, 4294901760
        %v3100 = vsub.f32 %v2715, %v3099
        %v3101 = vand.u32 %v3100, 4294901760
        %v3102 = vsub.f32 %v3100, %v3101
        %v3103 = vand.u32 %v3102, 4294901760
        %3104 = vmatpush.xpose.msra.mxu0 %v3103
        %v3105 = vand.u32 %v2374, 4294901760
        %3106 = vmatmul.f32.gmra.mxu0 %v3105
        %v3107 = vpop.f32.mrf.mxu0
        %v3108 = vadd.f32 %v3082, %v3107
        %3109 = vdwg.mxu0
        %3110 = vmatpush.xpose.msra.mxu0 0.0
        %3111 = vmatpush.xpose.msra.mxu0 0.0
        %3112 = vmatpush.xpose.msra.mxu0 0.0
        %3113 = vmatpush.xpose.msra.mxu0 0.0
        %3114 = vmatpush.xpose.msra.mxu0 0.0
        %3115 = vmatpush.xpose.msra.mxu0 0.0
        %3116 = vmatpush.xpose.msra.mxu0 0.0
        %3117 = vmatpush.xpose.msra.mxu0 0.0
        %3118 = vmatpush.xpose.msra.mxu0 0.0
        %3119 = vmatpush.xpose.msra.mxu0 0.0
        %3120 = vmatpush.xpose.msra.mxu0 0.0
        %3121 = vmatpush.xpose.msra.mxu0 0.0
        %3122 = vmatpush.xpose.msra.mxu0 0.0
        %3123 = vmatpush.xpose.msra.mxu0 0.0
        %3124 = vmatpush.xpose.msra.mxu0 0.0
        %v3125 = vand.u32 %v2715, 4294901760
        %v3126 = vsub.f32 %v2715, %v3125
        %3127 = vmatpush.xpose.msra.mxu0 %v3126
        %v3128 = vand.u32 %v2374, 4294901760
        %v3129 = vsub.f32 %v2374, %v3128
        %3130 = vmatmul.f32.gmra.mxu0 %v3129
        %v3131 = vpop.f32.mrf.mxu0
        %v3132 = vadd.f32 %v3108, %v3131
        %3133 = vdwg.mxu0
        %3134 = vmatpush.xpose.msra.mxu0 0.0
        %3135 = vmatpush.xpose.msra.mxu0 0.0
        %3136 = vmatpush.xpose.msra.mxu0 0.0
        %3137 = vmatpush.xpose.msra.mxu0 0.0
        %3138 = vmatpush.xpose.msra.mxu0 0.0
        %3139 = vmatpush.xpose.msra.mxu0 0.0
        %3140 = vmatpush.xpose.msra.mxu0 0.0
        %3141 = vmatpush.xpose.msra.mxu0 0.0
        %3142 = vmatpush.xpose.msra.mxu0 0.0
        %3143 = vmatpush.xpose.msra.mxu0 0.0
        %3144 = vmatpush.xpose.msra.mxu0 0.0
        %3145 = vmatpush.xpose.msra.mxu0 0.0
        %3146 = vmatpush.xpose.msra.mxu0 0.0
        %3147 = vmatpush.xpose.msra.mxu0 0.0
        %3148 = vmatpush.xpose.msra.mxu0 0.0
        %v3149 = vand.u32 %v2715, 4294901760
        %3150 = vmatpush.xpose.msra.mxu0 %v3149
        %v3151 = vand.u32 %v2374, 4294901760
        %v3152 = vsub.f32 %v2374, %v3151
        %v3153 = vand.u32 %v3152, 4294901760
        %3154 = vmatmul.f32.gmra.mxu0 %v3153
        %v3155 = vpop.f32.mrf.mxu0
        %v3156 = vadd.f32 %v3132, %v3155
        %3157 = vdwg.mxu0
        %3158 = vmatpush.xpose.msra.mxu0 0.0
        %3159 = vmatpush.xpose.msra.mxu0 0.0
        %3160 = vmatpush.xpose.msra.mxu0 0.0
        %3161 = vmatpush.xpose.msra.mxu0 0.0
        %3162 = vmatpush.xpose.msra.mxu0 0.0
        %3163 = vmatpush.xpose.msra.mxu0 0.0
        %3164 = vmatpush.xpose.msra.mxu0 0.0
        %3165 = vmatpush.xpose.msra.mxu0 0.0
        %3166 = vmatpush.xpose.msra.mxu0 0.0
        %3167 = vmatpush.xpose.msra.mxu0 0.0
        %3168 = vmatpush.xpose.msra.mxu0 0.0
        %3169 = vmatpush.xpose.msra.mxu0 0.0
        %3170 = vmatpush.xpose.msra.mxu0 0.0
        %3171 = vmatpush.xpose.msra.mxu0 0.0
        %3172 = vmatpush.xpose.msra.mxu0 0.0
        %v3173 = vand.u32 %v2715, 4294901760
        %v3174 = vsub.f32 %v2715, %v3173
        %v3175 = vand.u32 %v3174, 4294901760
        %3176 = vmatpush.xpose.msra.mxu0 %v3175
        %v3177 = vand.u32 %v2374, 4294901760
        %3178 = vmatmul.f32.gmra.mxu0 %v3177
        %v3179 = vpop.f32.mrf.mxu0
        %v3180 = vadd.f32 %v3156, %v3179
        %3181 = vdwg.mxu0
        %3182 = vmatpush.xpose.msra.mxu0 0.0
        %3183 = vmatpush.xpose.msra.mxu0 0.0
        %3184 = vmatpush.xpose.msra.mxu0 0.0
        %3185 = vmatpush.xpose.msra.mxu0 0.0
        %3186 = vmatpush.xpose.msra.mxu0 0.0
        %3187 = vmatpush.xpose.msra.mxu0 0.0
        %3188 = vmatpush.xpose.msra.mxu0 0.0
        %3189 = vmatpush.xpose.msra.mxu0 0.0
        %3190 = vmatpush.xpose.msra.mxu0 0.0
        %3191 = vmatpush.xpose.msra.mxu0 0.0
        %3192 = vmatpush.xpose.msra.mxu0 0.0
        %3193 = vmatpush.xpose.msra.mxu0 0.0
        %3194 = vmatpush.xpose.msra.mxu0 0.0
        %3195 = vmatpush.xpose.msra.mxu0 0.0
        %3196 = vmatpush.xpose.msra.mxu0 0.0
        %v3197 = vand.u32 %v2715, 4294901760
        %3198 = vmatpush.xpose.msra.mxu0 %v3197
        %v3199 = vand.u32 %v2374, 4294901760
        %3200 = vmatmul.f32.gmra.mxu0 %v3199
        %v3201 = vpop.f32.mrf.mxu0
        %v3202 = vadd.f32 %v3180, %v3201
        %3203 = vdwg.mxu0
        %v3204 = vmul.f32 %v3202, 0.088388346
        %vm3205 = vcmask 64512
        %v3206 = vsel %vm3205, %v3204, -inf
        %3207 = vmax.xlane.f32.xlu0 %v3206
        %v3208 = vpop.xlane.xlu0 %3207
        %v3209 = vsub.f32 %v3204, %v3208
        %v3210 = vmul.f32 %v3209, 1.442695
        %v3211 = vpow.pop %v3210
        %v3212 = vsel %vm3205, %v3211, 0.0
        %3213 = vadd.xlane.f32.xlu0 %v3212
        %v3214 = vpop.xlane.xlu0 %3213
        %v3215 = vrcp.pop %v3214
        %v3216 = vmul.f32 %v3214, %v3215
        %v3217 = vsub.f32 1.0, %v3216
        %v3218 = vmul.f32 %v3215, %v3217
        %v3219 = vadd.f32 %v3215, %v3218
        %vm3220 = vweird.f32 %v3214
        %vm3221 = vweird.f32 %v3215
        %vm3222 = vmor %vm3220, %vm3221
        %v3223 = vsel %vm3222, %v3215, %v3219
        %v3224 = vand.u32 2147483647, %v3214
        %vm3225 = vcmp.eq.f32.partialorder %v3224, 8.507059e+37
        %v3226 = vand.u32 %v3214, 2147483648
        %v3227 = vor.u32 1.1754944e-38, %v3226
        %v3228 = vsel %vm3225, %v3227, %v3223
        %v3229 = vmul.f32 %v3211, %v3228
        %v3231 = vsel %vm3205, %v3229, 0
        %3233 = vmatpush.msra.mxu0 0.0
        %3234 = vmatpush.msra.mxu0 0.0
        %3235 = vmatpush.msra.mxu0 0.0
        %3236 = vmatpush.msra.mxu0 0.0
        %3237 = vmatpush.msra.mxu0 0.0
        %3238 = vmatpush.msra.mxu0 0.0
        %3239 = vmatpush.msra.mxu0 0.0
        %3240 = vmatpush.msra.mxu0 0.0
        %3241 = vmatpush.msra.mxu0 0.0
        %3242 = vmatpush.msra.mxu0 0.0
        %3243 = vmatpush.msra.mxu0 0.0
        %3244 = vmatpush.msra.mxu0 0.0
        %3245 = vmatpush.msra.mxu0 0.0
        %3246 = vmatpush.msra.mxu0 0.0
        %3247 = vmatpush.msra.mxu0 0.0
        %v3248 = vand.u32 %v3056, 4294901760
        %3249 = vmatpush.msra.mxu0 %v3248
        %v3250 = vand.u32 %v3231, 4294901760
        %v3251 = vsub.f32 %v3231, %v3250
        %v3252 = vand.u32 %v3251, 4294901760
        %v3253 = vsub.f32 %v3251, %v3252
        %v3254 = vand.u32 %v3253, 4294901760
        %3255 = vmatmul.f32.gmra.mxu0 %v3254
        %v3256 = vpop.f32.mrf.mxu0
        %v3257 = vadd.f32 0.0, %v3256
        %3258 = vdwg.mxu0
        %3259 = vmatpush.msra.mxu0 0.0
        %3260 = vmatpush.msra.mxu0 0.0
        %3261 = vmatpush.msra.mxu0 0.0
        %3262 = vmatpush.msra.mxu0 0.0
        %3263 = vmatpush.msra.mxu0 0.0
        %3264 = vmatpush.msra.mxu0 0.0
        %3265 = vmatpush.msra.mxu0 0.0
        %3266 = vmatpush.msra.mxu0 0.0
        %3267 = vmatpush.msra.mxu0 0.0
        %3268 = vmatpush.msra.mxu0 0.0
        %3269 = vmatpush.msra.mxu0 0.0
        %3270 = vmatpush.msra.mxu0 0.0
        %3271 = vmatpush.msra.mxu0 0.0
        %3272 = vmatpush.msra.mxu0 0.0
        %3273 = vmatpush.msra.mxu0 0.0
        %v3274 = vand.u32 %v3056, 4294901760
        %v3275 = vsub.f32 %v3056, %v3274
        %v3276 = vand.u32 %v3275, 4294901760
        %v3277 = vsub.f32 %v3275, %v3276
        %v3278 = vand.u32 %v3277, 4294901760
        %3279 = vmatpush.msra.mxu0 %v3278
        %v3280 = vand.u32 %v3231, 4294901760
        %3281 = vmatmul.f32.gmra.mxu0 %v3280
        %v3282 = vpop.f32.mrf.mxu0
        %v3283 = vadd.f32 %v3257, %v3282
        %3284 = vdwg.mxu0
        %3285 = vmatpush.msra.mxu0 0.0
        %3286 = vmatpush.msra.mxu0 0.0
        %3287 = vmatpush.msra.mxu0 0.0
        %3288 = vmatpush.msra.mxu0 0.0
        %3289 = vmatpush.msra.mxu0 0.0
        %3290 = vmatpush.msra.mxu0 0.0
        %3291 = vmatpush.msra.mxu0 0.0
        %3292 = vmatpush.msra.mxu0 0.0
        %3293 = vmatpush.msra.mxu0 0.0
        %3294 = vmatpush.msra.mxu0 0.0
        %3295 = vmatpush.msra.mxu0 0.0
        %3296 = vmatpush.msra.mxu0 0.0
        %3297 = vmatpush.msra.mxu0 0.0
        %3298 = vmatpush.msra.mxu0 0.0
        %3299 = vmatpush.msra.mxu0 0.0
        %v3300 = vand.u32 %v3056, 4294901760
        %v3301 = vsub.f32 %v3056, %v3300
        %3302 = vmatpush.msra.mxu0 %v3301
        %v3303 = vand.u32 %v3231, 4294901760
        %v3304 = vsub.f32 %v3231, %v3303
        %3305 = vmatmul.f32.gmra.mxu0 %v3304
        %v3306 = vpop.f32.mrf.mxu0
        %v3307 = vadd.f32 %v3283, %v3306
        %3308 = vdwg.mxu0
        %3309 = vmatpush.msra.mxu0 0.0
        %3310 = vmatpush.msra.mxu0 0.0
        %3311 = vmatpush.msra.mxu0 0.0
        %3312 = vmatpush.msra.mxu0 0.0
        %3313 = vmatpush.msra.mxu0 0.0
        %3314 = vmatpush.msra.mxu0 0.0
        %3315 = vmatpush.msra.mxu0 0.0
        %3316 = vmatpush.msra.mxu0 0.0
        %3317 = vmatpush.msra.mxu0 0.0
        %3318 = vmatpush.msra.mxu0 0.0
        %3319 = vmatpush.msra.mxu0 0.0
        %3320 = vmatpush.msra.mxu0 0.0
        %3321 = vmatpush.msra.mxu0 0.0
        %3322 = vmatpush.msra.mxu0 0.0
        %3323 = vmatpush.msra.mxu0 0.0
        %v3324 = vand.u32 %v3056, 4294901760
        %3325 = vmatpush.msra.mxu0 %v3324
        %v3326 = vand.u32 %v3231, 4294901760
        %v3327 = vsub.f32 %v3231, %v3326
        %v3328 = vand.u32 %v3327, 4294901760
        %3329 = vmatmul.f32.gmra.mxu0 %v3328
        %v3330 = vpop.f32.mrf.mxu0
        %v3331 = vadd.f32 %v3307, %v3330
        %3332 = vdwg.mxu0
        %3333 = vmatpush.msra.mxu0 0.0
        %3334 = vmatpush.msra.mxu0 0.0
        %3335 = vmatpush.msra.mxu0 0.0
        %3336 = vmatpush.msra.mxu0 0.0
        %3337 = vmatpush.msra.mxu0 0.0
        %3338 = vmatpush.msra.mxu0 0.0
        %3339 = vmatpush.msra.mxu0 0.0
        %3340 = vmatpush.msra.mxu0 0.0
        %3341 = vmatpush.msra.mxu0 0.0
        %3342 = vmatpush.msra.mxu0 0.0
        %3343 = vmatpush.msra.mxu0 0.0
        %3344 = vmatpush.msra.mxu0 0.0
        %3345 = vmatpush.msra.mxu0 0.0
        %3346 = vmatpush.msra.mxu0 0.0
        %3347 = vmatpush.msra.mxu0 0.0
        %v3348 = vand.u32 %v3056, 4294901760
        %v3349 = vsub.f32 %v3056, %v3348
        %v3350 = vand.u32 %v3349, 4294901760
        %3351 = vmatpush.msra.mxu0 %v3350
        %v3352 = vand.u32 %v3231, 4294901760
        %3353 = vmatmul.f32.gmra.mxu0 %v3352
        %v3354 = vpop.f32.mrf.mxu0
        %v3355 = vadd.f32 %v3331, %v3354
        %3356 = vdwg.mxu0
        %3357 = vmatpush.msra.mxu0 0.0
        %3358 = vmatpush.msra.mxu0 0.0
        %3359 = vmatpush.msra.mxu0 0.0
        %3360 = vmatpush.msra.mxu0 0.0
        %3361 = vmatpush.msra.mxu0 0.0
        %3362 = vmatpush.msra.mxu0 0.0
        %3363 = vmatpush.msra.mxu0 0.0
        %3364 = vmatpush.msra.mxu0 0.0
        %3365 = vmatpush.msra.mxu0 0.0
        %3366 = vmatpush.msra.mxu0 0.0
        %3367 = vmatpush.msra.mxu0 0.0
        %3368 = vmatpush.msra.mxu0 0.0
        %3369 = vmatpush.msra.mxu0 0.0
        %3370 = vmatpush.msra.mxu0 0.0
        %3371 = vmatpush.msra.mxu0 0.0
        %v3372 = vand.u32 %v3056, 4294901760
        %3373 = vmatpush.msra.mxu0 %v3372
        %v3374 = vand.u32 %v3231, 4294901760
        %3375 = vmatmul.f32.gmra.mxu0 %v3374
        %v3376 = vpop.f32.mrf.mxu0
        %v3377 = vadd.f32 %v3355, %v3376
        %3378 = vdwg.mxu0
        %v3380 = vperm.slane %v2034, 0
        %v3382 = vand.u32 %v2033, 4294901760
        %3383 = vmatpush.msra.mxu0 %v3382
        %v3384 = vand.u32 %v2032, 4294901760
        %3385 = vmatpush.msra.mxu0 %v3384
        %v3386 = vand.u32 %v2031, 4294901760
        %3387 = vmatpush.msra.mxu0 %v3386
        %v3388 = vand.u32 %v2030, 4294901760
        %3389 = vmatpush.msra.mxu0 %v3388
        %v3390 = vand.u32 %v2029, 4294901760
        %3391 = vmatpush.msra.mxu0 %v3390
        %v3392 = vand.u32 %v2028, 4294901760
        %3393 = vmatpush.msra.mxu0 %v3392
        %v3394 = vand.u32 %v2027, 4294901760
        %3395 = vmatpush.msra.mxu0 %v3394
        %v3396 = vand.u32 %v2026, 4294901760
        %3397 = vmatpush.msra.mxu0 %v3396
        %v3398 = vand.u32 %v2025, 4294901760
        %3399 = vmatpush.msra.mxu0 %v3398
        %v3400 = vand.u32 %v2024, 4294901760
        %3401 = vmatpush.msra.mxu0 %v3400
        %v3402 = vand.u32 %v2023, 4294901760
        %3403 = vmatpush.msra.mxu0 %v3402
        %v3404 = vand.u32 %v2022, 4294901760
        %3405 = vmatpush.msra.mxu0 %v3404
        %v3406 = vand.u32 %v2021, 4294901760
        %3407 = vmatpush.msra.mxu0 %v3406
        %v3408 = vand.u32 %v2020, 4294901760
        %3409 = vmatpush.msra.mxu0 %v3408
        %v3410 = vand.u32 %v2019, 4294901760
        %3411 = vmatpush.msra.mxu0 %v3410
        %v3412 = vand.u32 %v2018, 4294901760
        %3413 = vmatpush.msra.mxu0 %v3412
        %v3414 = vand.u32 %v3377, 4294901760
        %v3415 = vsub.f32 %v3377, %v3414
        %v3416 = vand.u32 %v3415, 4294901760
        %v3417 = vsub.f32 %v3415, %v3416
        %v3418 = vand.u32 %v3417, 4294901760
        %3419 = vmatmul.f32.gmra.mxu0 %v3418
        %v3420 = vpop.f32.mrf.mxu0
        %v3421 = vadd.f32 %v3380, %v3420
        %3422 = vdwg.mxu0
        %v3423 = vand.u32 %v2033, 4294901760
        %v3424 = vsub.f32 %v2033, %v3423
        %v3425 = vand.u32 %v3424, 4294901760
        %v3426 = vsub.f32 %v3424, %v3425
        %v3427 = vand.u32 %v3426, 4294901760
        %3428 = vmatpush.msra.mxu0 %v3427
        %v3429 = vand.u32 %v2032, 4294901760
        %v3430 = vsub.f32 %v2032, %v3429
        %v3431 = vand.u32 %v3430, 4294901760
        %v3432 = vsub.f32 %v3430, %v3431
        %v3433 = vand.u32 %v3432, 4294901760
        %3434 = vmatpush.msra.mxu0 %v3433
        %v3435 = vand.u32 %v2031, 4294901760
        %v3436 = vsub.f32 %v2031, %v3435
        %v3437 = vand.u32 %v3436, 4294901760
        %v3438 = vsub.f32 %v3436, %v3437
        %v3439 = vand.u32 %v3438, 4294901760
        %3440 = vmatpush.msra.mxu0 %v3439
        %v3441 = vand.u32 %v2030, 4294901760
        %v3442 = vsub.f32 %v2030, %v3441
        %v3443 = vand.u32 %v3442, 4294901760
        %v3444 = vsub.f32 %v3442, %v3443
        %v3445 = vand.u32 %v3444, 4294901760
        %3446 = vmatpush.msra.mxu0 %v3445
        %v3447 = vand.u32 %v2029, 4294901760
        %v3448 = vsub.f32 %v2029, %v3447
        %v3449 = vand.u32 %v3448, 4294901760
        %v3450 = vsub.f32 %v3448, %v3449
        %v3451 = vand.u32 %v3450, 4294901760
        %3452 = vmatpush.msra.mxu0 %v3451
        %v3453 = vand.u32 %v2028, 4294901760
        %v3454 = vsub.f32 %v2028, %v3453
        %v3455 = vand.u32 %v3454, 4294901760
        %v3456 = vsub.f32 %v3454, %v3455
        %v3457 = vand.u32 %v3456, 4294901760
        %3458 = vmatpush.msra.mxu0 %v3457
        %v3459 = vand.u32 %v2027, 4294901760
        %v3460 = vsub.f32 %v2027, %v3459
        %v3461 = vand.u32 %v3460, 4294901760
        %v3462 = vsub.f32 %v3460, %v3461
        %v3463 = vand.u32 %v3462, 4294901760
        %3464 = vmatpush.msra.mxu0 %v3463
        %v3465 = vand.u32 %v2026, 4294901760
        %v3466 = vsub.f32 %v2026, %v3465
        %v3467 = vand.u32 %v3466, 4294901760
        %v3468 = vsub.f32 %v3466, %v3467
        %v3469 = vand.u32 %v3468, 4294901760
        %3470 = vmatpush.msra.mxu0 %v3469
        %v3471 = vand.u32 %v2025, 4294901760
        %v3472 = vsub.f32 %v2025, %v3471
        %v3473 = vand.u32 %v3472, 4294901760
        %v3474 = vsub.f32 %v3472, %v3473
        %v3475 = vand.u32 %v3474, 4294901760
        %3476 = vmatpush.msra.mxu0 %v3475
        %v3477 = vand.u32 %v2024, 4294901760
        %v3478 = vsub.f32 %v2024, %v3477
        %v3479 = vand.u32 %v3478, 4294901760
        %v3480 = vsub.f32 %v3478, %v3479
        %v3481 = vand.u32 %v3480, 4294901760
        %3482 = vmatpush.msra.mxu0 %v3481
        %v3483 = vand.u32 %v2023, 4294901760
        %v3484 = vsub.f32 %v2023, %v3483
        %v3485 = vand.u32 %v3484, 4294901760
        %v3486 = vsub.f32 %v3484, %v3485
        %v3487 = vand.u32 %v3486, 4294901760
        %3488 = vmatpush.msra.mxu0 %v3487
        %v3489 = vand.u32 %v2022, 4294901760
        %v3490 = vsub.f32 %v2022, %v3489
        %v3491 = vand.u32 %v3490, 4294901760
        %v3492 = vsub.f32 %v3490, %v3491
        %v3493 = vand.u32 %v3492, 4294901760
        %3494 = vmatpush.msra.mxu0 %v3493
        %v3495 = vand.u32 %v2021, 4294901760
        %v3496 = vsub.f32 %v2021, %v3495
        %v3497 = vand.u32 %v3496, 4294901760
        %v3498 = vsub.f32 %v3496, %v3497
        %v3499 = vand.u32 %v3498, 4294901760
        %3500 = vmatpush.msra.mxu0 %v3499
        %v3501 = vand.u32 %v2020, 4294901760
        %v3502 = vsub.f32 %v2020, %v3501
        %v3503 = vand.u32 %v3502, 4294901760
        %v3504 = vsub.f32 %v3502, %v3503
        %v3505 = vand.u32 %v3504, 4294901760
        %3506 = vmatpush.msra.mxu0 %v3505
        %v3507 = vand.u32 %v2019, 4294901760
        %v3508 = vsub.f32 %v2019, %v3507
        %v3509 = vand.u32 %v3508, 4294901760
        %v3510 = vsub.f32 %v3508, %v3509
        %v3511 = vand.u32 %v3510, 4294901760
        %3512 = vmatpush.msra.mxu0 %v3511
        %v3513 = vand.u32 %v2018, 4294901760
        %v3514 = vsub.f32 %v2018, %v3513
        %v3515 = vand.u32 %v3514, 4294901760
        %v3516 = vsub.f32 %v3514, %v3515
        %v3517 = vand.u32 %v3516, 4294901760
        %3518 = vmatpush.msra.mxu0 %v3517
        %v3519 = vand.u32 %v3377, 4294901760
        %3520 = vmatmul.f32.gmra.mxu0 %v3519
        %v3521 = vpop.f32.mrf.mxu0
        %v3522 = vadd.f32 %v3421, %v3521
        %3523 = vdwg.mxu0
        %v3524 = vand.u32 %v2033, 4294901760
        %v3525 = vsub.f32 %v2033, %v3524
        %3526 = vmatpush.msra.mxu0 %v3525
        %v3527 = vand.u32 %v2032, 4294901760
        %v3528 = vsub.f32 %v2032, %v3527
        %3529 = vmatpush.msra.mxu0 %v3528
        %v3530 = vand.u32 %v2031, 4294901760
        %v3531 = vsub.f32 %v2031, %v3530
        %3532 = vmatpush.msra.mxu0 %v3531
        %v3533 = vand.u32 %v2030, 4294901760
        %v3534 = vsub.f32 %v2030, %v3533
        %3535 = vmatpush.msra.mxu0 %v3534
        %v3536 = vand.u32 %v2029, 4294901760
        %v3537 = vsub.f32 %v2029, %v3536
        %3538 = vmatpush.msra.mxu0 %v3537
        %v3539 = vand.u32 %v2028, 4294901760
        %v3540 = vsub.f32 %v2028, %v3539
        %3541 = vmatpush.msra.mxu0 %v3540
        %v3542 = vand.u32 %v2027, 4294901760
        %v3543 = vsub.f32 %v2027, %v3542
        %3544 = vmatpush.msra.mxu0 %v3543
        %v3545 = vand.u32 %v2026, 4294901760
        %v3546 = vsub.f32 %v2026, %v3545
        %3547 = vmatpush.msra.mxu0 %v3546
        %v3548 = vand.u32 %v2025, 4294901760
        %v3549 = vsub.f32 %v2025, %v3548
        %3550 = vmatpush.msra.mxu0 %v3549
        %v3551 = vand.u32 %v2024, 4294901760
        %v3552 = vsub.f32 %v2024, %v3551
        %3553 = vmatpush.msra.mxu0 %v3552
        %v3554 = vand.u32 %v2023, 4294901760
        %v3555 = vsub.f32 %v2023, %v3554
        %3556 = vmatpush.msra.mxu0 %v3555
        %v3557 = vand.u32 %v2022, 4294901760
        %v3558 = vsub.f32 %v2022, %v3557
        %3559 = vmatpush.msra.mxu0 %v3558
        %v3560 = vand.u32 %v2021, 4294901760
        %v3561 = vsub.f32 %v2021, %v3560
        %3562 = vmatpush.msra.mxu0 %v3561
        %v3563 = vand.u32 %v2020, 4294901760
        %v3564 = vsub.f32 %v2020, %v3563
        %3565 = vmatpush.msra.mxu0 %v3564
        %v3566 = vand.u32 %v2019, 4294901760
        %v3567 = vsub.f32 %v2019, %v3566
        %3568 = vmatpush.msra.mxu0 %v3567
        %v3569 = vand.u32 %v2018, 4294901760
        %v3570 = vsub.f32 %v2018, %v3569
        %3571 = vmatpush.msra.mxu0 %v3570
        %v3572 = vand.u32 %v3377, 4294901760
        %v3573 = vsub.f32 %v3377, %v3572
        %3574 = vmatmul.f32.gmra.mxu0 %v3573
        %v3575 = vpop.f32.mrf.mxu0
        %v3576 = vadd.f32 %v3522, %v3575
        %3577 = vdwg.mxu0
        %v3578 = vand.u32 %v2033, 4294901760
        %3579 = vmatpush.msra.mxu0 %v3578
        %v3580 = vand.u32 %v2032, 4294901760
        %3581 = vmatpush.msra.mxu0 %v3580
        %v3582 = vand.u32 %v2031, 4294901760
        %3583 = vmatpush.msra.mxu0 %v3582
        %v3584 = vand.u32 %v2030, 4294901760
        %3585 = vmatpush.msra.mxu0 %v3584
        %v3586 = vand.u32 %v2029, 4294901760
        %3587 = vmatpush.msra.mxu0 %v3586
        %v3588 = vand.u32 %v2028, 4294901760
        %3589 = vmatpush.msra.mxu0 %v3588
        %v3590 = vand.u32 %v2027, 4294901760
        %3591 = vmatpush.msra.mxu0 %v3590
        %v3592 = vand.u32 %v2026, 4294901760
        %3593 = vmatpush.msra.mxu0 %v3592
        %v3594 = vand.u32 %v2025, 4294901760
        %3595 = vmatpush.msra.mxu0 %v3594
        %v3596 = vand.u32 %v2024, 4294901760
        %3597 = vmatpush.msra.mxu0 %v3596
        %v3598 = vand.u32 %v2023, 4294901760
        %3599 = vmatpush.msra.mxu0 %v3598
        %v3600 = vand.u32 %v2022, 4294901760
        %3601 = vmatpush.msra.mxu0 %v3600
        %v3602 = vand.u32 %v2021, 4294901760
        %3603 = vmatpush.msra.mxu0 %v3602
        %v3604 = vand.u32 %v2020, 4294901760
        %3605 = vmatpush.msra.mxu0 %v3604
        %v3606 = vand.u32 %v2019, 4294901760
        %3607 = vmatpush.msra.mxu0 %v3606
        %v3608 = vand.u32 %v2018, 4294901760
        %3609 = vmatpush.msra.mxu0 %v3608
        %v3610 = vand.u32 %v3377, 4294901760
        %v3611 = vsub.f32 %v3377, %v3610
        %v3612 = vand.u32 %v3611, 4294901760
        %3613 = vmatmul.f32.gmra.mxu0 %v3612
        %v3614 = vpop.f32.mrf.mxu0
        %v3615 = vadd.f32 %v3576, %v3614
        %3616 = vdwg.mxu0
        %v3617 = vand.u32 %v2033, 4294901760
        %v3618 = vsub.f32 %v2033, %v3617
        %v3619 = vand.u32 %v3618, 4294901760
        %3620 = vmatpush.msra.mxu0 %v3619
        %v3621 = vand.u32 %v2032, 4294901760
        %v3622 = vsub.f32 %v2032, %v3621
        %v3623 = vand.u32 %v3622, 4294901760
        %3624 = vmatpush.msra.mxu0 %v3623
        %v3625 = vand.u32 %v2031, 4294901760
        %v3626 = vsub.f32 %v2031, %v3625
        %v3627 = vand.u32 %v3626, 4294901760
        %3628 = vmatpush.msra.mxu0 %v3627
        %v3629 = vand.u32 %v2030, 4294901760
        %v3630 = vsub.f32 %v2030, %v3629
        %v3631 = vand.u32 %v3630, 4294901760
        %3632 = vmatpush.msra.mxu0 %v3631
        %v3633 = vand.u32 %v2029, 4294901760
        %v3634 = vsub.f32 %v2029, %v3633
        %v3635 = vand.u32 %v3634, 4294901760
        %3636 = vmatpush.msra.mxu0 %v3635
        %v3637 = vand.u32 %v2028, 4294901760
        %v3638 = vsub.f32 %v2028, %v3637
        %v3639 = vand.u32 %v3638, 4294901760
        %3640 = vmatpush.msra.mxu0 %v3639
        %v3641 = vand.u32 %v2027, 4294901760
        %v3642 = vsub.f32 %v2027, %v3641
        %v3643 = vand.u32 %v3642, 4294901760
        %3644 = vmatpush.msra.mxu0 %v3643
        %v3645 = vand.u32 %v2026, 4294901760
        %v3646 = vsub.f32 %v2026, %v3645
        %v3647 = vand.u32 %v3646, 4294901760
        %3648 = vmatpush.msra.mxu0 %v3647
        %v3649 = vand.u32 %v2025, 4294901760
        %v3650 = vsub.f32 %v2025, %v3649
        %v3651 = vand.u32 %v3650, 4294901760
        %3652 = vmatpush.msra.mxu0 %v3651
        %v3653 = vand.u32 %v2024, 4294901760
        %v3654 = vsub.f32 %v2024, %v3653
        %v3655 = vand.u32 %v3654, 4294901760
        %3656 = vmatpush.msra.mxu0 %v3655
        %v3657 = vand.u32 %v2023, 4294901760
        %v3658 = vsub.f32 %v2023, %v3657
        %v3659 = vand.u32 %v3658, 4294901760
        %3660 = vmatpush.msra.mxu0 %v3659
        %v3661 = vand.u32 %v2022, 4294901760
        %v3662 = vsub.f32 %v2022, %v3661
        %v3663 = vand.u32 %v3662, 4294901760
        %3664 = vmatpush.msra.mxu0 %v3663
        %v3665 = vand.u32 %v2021, 4294901760
        %v3666 = vsub.f32 %v2021, %v3665
        %v3667 = vand.u32 %v3666, 4294901760
        %3668 = vmatpush.msra.mxu0 %v3667
        %v3669 = vand.u32 %v2020, 4294901760
        %v3670 = vsub.f32 %v2020, %v3669
        %v3671 = vand.u32 %v3670, 4294901760
        %3672 = vmatpush.msra.mxu0 %v3671
        %v3673 = vand.u32 %v2019, 4294901760
        %v3674 = vsub.f32 %v2019, %v3673
        %v3675 = vand.u32 %v3674, 4294901760
        %3676 = vmatpush.msra.mxu0 %v3675
        %v3677 = vand.u32 %v2018, 4294901760
        %v3678 = vsub.f32 %v2018, %v3677
        %v3679 = vand.u32 %v3678, 4294901760
        %3680 = vmatpush.msra.mxu0 %v3679
        %v3681 = vand.u32 %v3377, 4294901760
        %3682 = vmatmul.f32.gmra.mxu0 %v3681
        %v3683 = vpop.f32.mrf.mxu0
        %v3684 = vadd.f32 %v3615, %v3683
        %3685 = vdwg.mxu0
        %v3686 = vand.u32 %v2033, 4294901760
        %3687 = vmatpush.msra.mxu0 %v3686
        %v3688 = vand.u32 %v2032, 4294901760
        %3689 = vmatpush.msra.mxu0 %v3688
        %v3690 = vand.u32 %v2031, 4294901760
        %3691 = vmatpush.msra.mxu0 %v3690
        %v3692 = vand.u32 %v2030, 4294901760
        %3693 = vmatpush.msra.mxu0 %v3692
        %v3694 = vand.u32 %v2029, 4294901760
        %3695 = vmatpush.msra.mxu0 %v3694
        %v3696 = vand.u32 %v2028, 4294901760
        %3697 = vmatpush.msra.mxu0 %v3696
        %v3698 = vand.u32 %v2027, 4294901760
        %3699 = vmatpush.msra.mxu0 %v3698
        %v3700 = vand.u32 %v2026, 4294901760
        %3701 = vmatpush.msra.mxu0 %v3700
        %v3702 = vand.u32 %v2025, 4294901760
        %3703 = vmatpush.msra.mxu0 %v3702
        %v3704 = vand.u32 %v2024, 4294901760
        %3705 = vmatpush.msra.mxu0 %v3704
        %v3706 = vand.u32 %v2023, 4294901760
        %3707 = vmatpush.msra.mxu0 %v3706
        %v3708 = vand.u32 %v2022, 4294901760
        %3709 = vmatpush.msra.mxu0 %v3708
        %v3710 = vand.u32 %v2021, 4294901760
        %3711 = vmatpush.msra.mxu0 %v3710
        %v3712 = vand.u32 %v2020, 4294901760
        %3713 = vmatpush.msra.mxu0 %v3712
        %v3714 = vand.u32 %v2019, 4294901760
        %3715 = vmatpush.msra.mxu0 %v3714
        %v3716 = vand.u32 %v2018, 4294901760
        %3717 = vmatpush.msra.mxu0 %v3716
        %v3718 = vand.u32 %v3377, 4294901760
        %3719 = vmatmul.f32.gmra.mxu0 %v3718
        %v3720 = vpop.f32.mrf.mxu0
        %v3721 = vadd.f32 %v3684, %v3720
        %3722 = vdwg.mxu0
        %v3723 = vadd.f32 %v1931, %v3721
        %v3724 = vld [vmem:[%s1558] sm:$0x1]
        %v3725 = vld [vmem:[%s1295] sm:$0x1]
        %3726 = vadd.xlane.f32.xlu0 %v3723
        %v3727 = vpop.xlane.xlu0 %3726
        %v3728 = vmul.f32 %v3727, %v1943
        %v3729 = vsub.f32 %v3723, %v3728
        %v3730 = vmul.f32 %v3729, %v3729
        %3731 = vadd.xlane.f32.xlu0 %v3730
        %v3732 = vpop.xlane.xlu0 %3731
        %v3733 = vmul.f32 %v3732, %v1943
        %v3734 = vadd.f32 %v3733, 1e-05
        %v3735 = vrsqrt.pop %v3734
        %v3736 = vmul.f32 %v3735, %v3734
        %v3737 = vmul.f32 %v3736, %v3735
        %v3738 = vmul.f32 0.5, %v3737
        %v3739 = vsub.f32 1.5, %v3738
        %v3740 = vmul.f32 %v3735, %v3739
        %vm3741 = vweird.f32 %v3734
        %vm3742 = vweird.f32 %v3735
        %vm3743 = vmor %vm3741, %vm3742
        %v3744 = vsel %vm3743, %v3735, %v3740
        %v3745 = vmul.f32 %v3729, %v3744
        %v3747 = vperm.slane %v3724, 0
        %v3749 = vmul.f32 %v3745, %v3747
        %v3751 = vperm.slane %v3725, 0
        %v3753 = vadd.f32 %v3749, %v3751
        %v3754 = vld [vmem:[%s1305] sm:$0xff]
        %v3755 = vld [vmem:[%s1305 + $0x8] sm:$0xff]
        %v3756 = vld [vmem:[%s1305 + $0x10] sm:$0xff]
        %v3757 = vld [vmem:[%s1305 + $0x18] sm:$0xff]
        %v3758 = vld [vmem:[%s1305 + $0x20] sm:$0xff]
        %v3759 = vld [vmem:[%s1305 + $0x28] sm:$0xff]
        %v3760 = vld [vmem:[%s1305 + $0x30] sm:$0xff]
        %v3761 = vld [vmem:[%s1305 + $0x38] sm:$0xff]
        %v3762 = vld [vmem:[%s1305 + $0x40] sm:$0xff]
        %v3763 = vld [vmem:[%s1305 + $0x48] sm:$0xff]
        %v3764 = vld [vmem:[%s1305 + $0x50] sm:$0xff]
        %v3765 = vld [vmem:[%s1305 + $0x58] sm:$0xff]
        %v3766 = vld [vmem:[%s1305 + $0x60] sm:$0xff]
        %v3767 = vld [vmem:[%s1305 + $0x68] sm:$0xff]
        %v3768 = vld [vmem:[%s1305 + $0x70] sm:$0xff]
        %v3769 = vld [vmem:[%s1305 + $0x78] sm:$0xff]
        %v3770 = vld [vmem:[%s1315] sm:$0xff]
        %v3771 = vld [vmem:[%s1315 + $0x8] sm:$0xff]
        %v3772 = vld [vmem:[%s1315 + $0x10] sm:$0xff]
        %v3773 = vld [vmem:[%s1315 + $0x18] sm:$0xff]
        %v3774 = vld [vmem:[%s1315 + $0x20] sm:$0xff]
        %v3775 = vld [vmem:[%s1315 + $0x28] sm:$0xff]
        %v3776 = vld [vmem:[%s1315 + $0x30] sm:$0xff]
        %v3777 = vld [vmem:[%s1315 + $0x38] sm:$0xff]
        %v3778 = vld [vmem:[%s1315 + $0x40] sm:$0xff]
        %v3779 = vld [vmem:[%s1315 + $0x48] sm:$0xff]
        %v3780 = vld [vmem:[%s1315 + $0x50] sm:$0xff]
        %v3781 = vld [vmem:[%s1315 + $0x58] sm:$0xff]
        %v3782 = vld [vmem:[%s1315 + $0x60] sm:$0xff]
        %v3783 = vld [vmem:[%s1315 + $0x68] sm:$0xff]
        %v3784 = vld [vmem:[%s1315 + $0x70] sm:$0xff]
        %v3785 = vld [vmem:[%s1315 + $0x78] sm:$0xff]
        %v3786 = vld [vmem:[%s1325] sm:$0xff]
        %v3787 = vld [vmem:[%s1325 + $0x8] sm:$0xff]
        %v3788 = vld [vmem:[%s1325 + $0x10] sm:$0xff]
        %v3789 = vld [vmem:[%s1325 + $0x18] sm:$0xff]
        %v3790 = vld [vmem:[%s1325 + $0x20] sm:$0xff]
        %v3791 = vld [vmem:[%s1325 + $0x28] sm:$0xff]
        %v3792 = vld [vmem:[%s1325 + $0x30] sm:$0xff]
        %v3793 = vld [vmem:[%s1325 + $0x38] sm:$0xff]
        %v3794 = vld [vmem:[%s1325 + $0x40] sm:$0xff]
        %v3795 = vld [vmem:[%s1325 + $0x48] sm:$0xff]
        %v3796 = vld [vmem:[%s1325 + $0x50] sm:$0xff]
        %v3797 = vld [vmem:[%s1325 + $0x58] sm:$0xff]
        %v3798 = vld [vmem:[%s1325 + $0x60] sm:$0xff]
        %v3799 = vld [vmem:[%s1325 + $0x68] sm:$0xff]
        %v3800 = vld [vmem:[%s1325 + $0x70] sm:$0xff]
        %v3801 = vld [vmem:[%s1325 + $0x78] sm:$0xff]
        %v3802 = vld [vmem:[%s1335] sm:$0xff]
        %v3803 = vld [vmem:[%s1335 + $0x8] sm:$0xff]
        %v3804 = vld [vmem:[%s1335 + $0x10] sm:$0xff]
        %v3805 = vld [vmem:[%s1335 + $0x18] sm:$0xff]
        %v3806 = vld [vmem:[%s1335 + $0x20] sm:$0xff]
        %v3807 = vld [vmem:[%s1335 + $0x28] sm:$0xff]
        %v3808 = vld [vmem:[%s1335 + $0x30] sm:$0xff]
        %v3809 = vld [vmem:[%s1335 + $0x38] sm:$0xff]
        %v3810 = vld [vmem:[%s1335 + $0x40] sm:$0xff]
        %v3811 = vld [vmem:[%s1335 + $0x48] sm:$0xff]
        %v3812 = vld [vmem:[%s1335 + $0x50] sm:$0xff]
        %v3813 = vld [vmem:[%s1335 + $0x58] sm:$0xff]
        %v3814 = vld [vmem:[%s1335 + $0x60] sm:$0xff]
        %v3815 = vld [vmem:[%s1335 + $0x68] sm:$0xff]
        %v3816 = vld [vmem:[%s1335 + $0x70] sm:$0xff]
        %v3817 = vld [vmem:[%s1335 + $0x78] sm:$0xff]
        %v3818 = vld [vmem:[%s1344] sm:$0x1]
        %v3819 = vand.u32 %v3769, 4294901760
        %3820 = vmatpush.msra.mxu0 %v3819
        %v3821 = vand.u32 %v3768, 4294901760
        %3822 = vmatpush.msra.mxu0 %v3821
        %v3823 = vand.u32 %v3767, 4294901760
        %3824 = vmatpush.msra.mxu0 %v3823
        %v3825 = vand.u32 %v3766, 4294901760
        %3826 = vmatpush.msra.mxu0 %v3825
        %v3827 = vand.u32 %v3765, 4294901760
        %3828 = vmatpush.msra.mxu0 %v3827
        %v3829 = vand.u32 %v3764, 4294901760
        %3830 = vmatpush.msra.mxu0 %v3829
        %v3831 = vand.u32 %v3763, 4294901760
        %3832 = vmatpush.msra.mxu0 %v3831
        %v3833 = vand.u32 %v3762, 4294901760
        %3834 = vmatpush.msra.mxu0 %v3833
        %v3835 = vand.u32 %v3761, 4294901760
        %3836 = vmatpush.msra.mxu0 %v3835
        %v3837 = vand.u32 %v3760, 4294901760
        %3838 = vmatpush.msra.mxu0 %v3837
        %v3839 = vand.u32 %v3759, 4294901760
        %3840 = vmatpush.msra.mxu0 %v3839
        %v3841 = vand.u32 %v3758, 4294901760
        %3842 = vmatpush.msra.mxu0 %v3841
        %v3843 = vand.u32 %v3757, 4294901760
        %3844 = vmatpush.msra.mxu0 %v3843
        %v3845 = vand.u32 %v3756, 4294901760
        %3846 = vmatpush.msra.mxu0 %v3845
        %v3847 = vand.u32 %v3755, 4294901760
        %3848 = vmatpush.msra.mxu0 %v3847
        %v3849 = vand.u32 %v3754, 4294901760
        %3850 = vmatpush.msra.mxu0 %v3849
        %v3851 = vand.u32 %v3753, 4294901760
        %v3852 = vsub.f32 %v3753, %v3851
        %v3853 = vand.u32 %v3852, 4294901760
        %v3854 = vsub.f32 %v3852, %v3853
        %v3855 = vand.u32 %v3854, 4294901760
        %3856 = vmatmul.f32.gmra.mxu0 %v3855
        %v3857 = vpop.f32.mrf.mxu0
        %v3858 = vadd.f32 0.0, %v3857
        %3859 = vdwg.mxu0
        %v3860 = vand.u32 %v3769, 4294901760
        %v3861 = vsub.f32 %v3769, %v3860
        %v3862 = vand.u32 %v3861, 4294901760
        %v3863 = vsub.f32 %v3861, %v3862
        %v3864 = vand.u32 %v3863, 4294901760
        %3865 = vmatpush.msra.mxu0 %v3864
        %v3866 = vand.u32 %v3768, 4294901760
        %v3867 = vsub.f32 %v3768, %v3866
        %v3868 = vand.u32 %v3867, 4294901760
        %v3869 = vsub.f32 %v3867, %v3868
        %v3870 = vand.u32 %v3869, 4294901760
        %3871 = vmatpush.msra.mxu0 %v3870
        %v3872 = vand.u32 %v3767, 4294901760
        %v3873 = vsub.f32 %v3767, %v3872
        %v3874 = vand.u32 %v3873, 4294901760
        %v3875 = vsub.f32 %v3873, %v3874
        %v3876 = vand.u32 %v3875, 4294901760
        %3877 = vmatpush.msra.mxu0 %v3876
        %v3878 = vand.u32 %v3766, 4294901760
        %v3879 = vsub.f32 %v3766, %v3878
        %v3880 = vand.u32 %v3879, 4294901760
        %v3881 = vsub.f32 %v3879, %v3880
        %v3882 = vand.u32 %v3881, 4294901760
        %3883 = vmatpush.msra.mxu0 %v3882
        %v3884 = vand.u32 %v3765, 4294901760
        %v3885 = vsub.f32 %v3765, %v3884
        %v3886 = vand.u32 %v3885, 4294901760
        %v3887 = vsub.f32 %v3885, %v3886
        %v3888 = vand.u32 %v3887, 4294901760
        %3889 = vmatpush.msra.mxu0 %v3888
        %v3890 = vand.u32 %v3764, 4294901760
        %v3891 = vsub.f32 %v3764, %v3890
        %v3892 = vand.u32 %v3891, 4294901760
        %v3893 = vsub.f32 %v3891, %v3892
        %v3894 = vand.u32 %v3893, 4294901760
        %3895 = vmatpush.msra.mxu0 %v3894
        %v3896 = vand.u32 %v3763, 4294901760
        %v3897 = vsub.f32 %v3763, %v3896
        %v3898 = vand.u32 %v3897, 4294901760
        %v3899 = vsub.f32 %v3897, %v3898
        %v3900 = vand.u32 %v3899, 4294901760
        %3901 = vmatpush.msra.mxu0 %v3900
        %v3902 = vand.u32 %v3762, 4294901760
        %v3903 = vsub.f32 %v3762, %v3902
        %v3904 = vand.u32 %v3903, 4294901760
        %v3905 = vsub.f32 %v3903, %v3904
        %v3906 = vand.u32 %v3905, 4294901760
        %3907 = vmatpush.msra.mxu0 %v3906
        %v3908 = vand.u32 %v3761, 4294901760
        %v3909 = vsub.f32 %v3761, %v3908
        %v3910 = vand.u32 %v3909, 4294901760
        %v3911 = vsub.f32 %v3909, %v3910
        %v3912 = vand.u32 %v3911, 4294901760
        %3913 = vmatpush.msra.mxu0 %v3912
        %v3914 = vand.u32 %v3760, 4294901760
        %v3915 = vsub.f32 %v3760, %v3914
        %v3916 = vand.u32 %v3915, 4294901760
        %v3917 = vsub.f32 %v3915, %v3916
        %v3918 = vand.u32 %v3917, 4294901760
        %3919 = vmatpush.msra.mxu0 %v3918
        %v3920 = vand.u32 %v3759, 4294901760
        %v3921 = vsub.f32 %v3759, %v3920
        %v3922 = vand.u32 %v3921, 4294901760
        %v3923 = vsub.f32 %v3921, %v3922
        %v3924 = vand.u32 %v3923, 4294901760
        %3925 = vmatpush.msra.mxu0 %v3924
        %v3926 = vand.u32 %v3758, 4294901760
        %v3927 = vsub.f32 %v3758, %v3926
        %v3928 = vand.u32 %v3927, 4294901760
        %v3929 = vsub.f32 %v3927, %v3928
        %v3930 = vand.u32 %v3929, 4294901760
        %3931 = vmatpush.msra.mxu0 %v3930
        %v3932 = vand.u32 %v3757, 4294901760
        %v3933 = vsub.f32 %v3757, %v3932
        %v3934 = vand.u32 %v3933, 4294901760
        %v3935 = vsub.f32 %v3933, %v3934
        %v3936 = vand.u32 %v3935, 4294901760
        %3937 = vmatpush.msra.mxu0 %v3936
        %v3938 = vand.u32 %v3756, 4294901760
        %v3939 = vsub.f32 %v3756, %v3938
        %v3940 = vand.u32 %v3939, 4294901760
        %v3941 = vsub.f32 %v3939, %v3940
        %v3942 = vand.u32 %v3941, 4294901760
        %3943 = vmatpush.msra.mxu0 %v3942
        %v3944 = vand.u32 %v3755, 4294901760
        %v3945 = vsub.f32 %v3755, %v3944
        %v3946 = vand.u32 %v3945, 4294901760
        %v3947 = vsub.f32 %v3945, %v3946
        %v3948 = vand.u32 %v3947, 4294901760
        %3949 = vmatpush.msra.mxu0 %v3948
        %v3950 = vand.u32 %v3754, 4294901760
        %v3951 = vsub.f32 %v3754, %v3950
        %v3952 = vand.u32 %v3951, 4294901760
        %v3953 = vsub.f32 %v3951, %v3952
        %v3954 = vand.u32 %v3953, 4294901760
        %3955 = vmatpush.msra.mxu0 %v3954
        %v3956 = vand.u32 %v3753, 4294901760
        %3957 = vmatmul.f32.gmra.mxu0 %v3956
        %v3958 = vpop.f32.mrf.mxu0
        %v3959 = vadd.f32 %v3858, %v3958
        %3960 = vdwg.mxu0
        %v3961 = vand.u32 %v3769, 4294901760
        %v3962 = vsub.f32 %v3769, %v3961
        %3963 = vmatpush.msra.mxu0 %v3962
        %v3964 = vand.u32 %v3768, 4294901760
        %v3965 = vsub.f32 %v3768, %v3964
        %3966 = vmatpush.msra.mxu0 %v3965
        %v3967 = vand.u32 %v3767, 4294901760
        %v3968 = vsub.f32 %v3767, %v3967
        %3969 = vmatpush.msra.mxu0 %v3968
        %v3970 = vand.u32 %v3766, 4294901760
        %v3971 = vsub.f32 %v3766, %v3970
        %3972 = vmatpush.msra.mxu0 %v3971
        %v3973 = vand.u32 %v3765, 4294901760
        %v3974 = vsub.f32 %v3765, %v3973
        %3975 = vmatpush.msra.mxu0 %v3974
        %v3976 = vand.u32 %v3764, 4294901760
        %v3977 = vsub.f32 %v3764, %v3976
        %3978 = vmatpush.msra.mxu0 %v3977
        %v3979 = vand.u32 %v3763, 4294901760
        %v3980 = vsub.f32 %v3763, %v3979
        %3981 = vmatpush.msra.mxu0 %v3980
        %v3982 = vand.u32 %v3762, 4294901760
        %v3983 = vsub.f32 %v3762, %v3982
        %3984 = vmatpush.msra.mxu0 %v3983
        %v3985 = vand.u32 %v3761, 4294901760
        %v3986 = vsub.f32 %v3761, %v3985
        %3987 = vmatpush.msra.mxu0 %v3986
        %v3988 = vand.u32 %v3760, 4294901760
        %v3989 = vsub.f32 %v3760, %v3988
        %3990 = vmatpush.msra.mxu0 %v3989
        %v3991 = vand.u32 %v3759, 4294901760
        %v3992 = vsub.f32 %v3759, %v3991
        %3993 = vmatpush.msra.mxu0 %v3992
        %v3994 = vand.u32 %v3758, 4294901760
        %v3995 = vsub.f32 %v3758, %v3994
        %3996 = vmatpush.msra.mxu0 %v3995
        %v3997 = vand.u32 %v3757, 4294901760
        %v3998 = vsub.f32 %v3757, %v3997
        %3999 = vmatpush.msra.mxu0 %v3998
        %v4000 = vand.u32 %v3756, 4294901760
        %v4001 = vsub.f32 %v3756, %v4000
        %4002 = vmatpush.msra.mxu0 %v4001
        %v4003 = vand.u32 %v3755, 4294901760
        %v4004 = vsub.f32 %v3755, %v4003
        %4005 = vmatpush.msra.mxu0 %v4004
        %v4006 = vand.u32 %v3754, 4294901760
        %v4007 = vsub.f32 %v3754, %v4006
        %4008 = vmatpush.msra.mxu0 %v4007
        %v4009 = vand.u32 %v3753, 4294901760
        %v4010 = vsub.f32 %v3753, %v4009
        %4011 = vmatmul.f32.gmra.mxu0 %v4010
        %v4012 = vpop.f32.mrf.mxu0
        %v4013 = vadd.f32 %v3959, %v4012
        %4014 = vdwg.mxu0
        %v4015 = vand.u32 %v3769, 4294901760
        %4016 = vmatpush.msra.mxu0 %v4015
        %v4017 = vand.u32 %v3768, 4294901760
        %4018 = vmatpush.msra.mxu0 %v4017
        %v4019 = vand.u32 %v3767, 4294901760
        %4020 = vmatpush.msra.mxu0 %v4019
        %v4021 = vand.u32 %v3766, 4294901760
        %4022 = vmatpush.msra.mxu0 %v4021
        %v4023 = vand.u32 %v3765, 4294901760
        %4024 = vmatpush.msra.mxu0 %v4023
        %v4025 = vand.u32 %v3764, 4294901760
        %4026 = vmatpush.msra.mxu0 %v4025
        %v4027 = vand.u32 %v3763, 4294901760
        %4028 = vmatpush.msra.mxu0 %v4027
        %v4029 = vand.u32 %v3762, 4294901760
        %4030 = vmatpush.msra.mxu0 %v4029
        %v4031 = vand.u32 %v3761, 4294901760
        %4032 = vmatpush.msra.mxu0 %v4031
        %v4033 = vand.u32 %v3760, 4294901760
        %4034 = vmatpush.msra.mxu0 %v4033
        %v4035 = vand.u32 %v3759, 4294901760
        %4036 = vmatpush.msra.mxu0 %v4035
        %v4037 = vand.u32 %v3758, 4294901760
        %4038 = vmatpush.msra.mxu0 %v4037
        %v4039 = vand.u32 %v3757, 4294901760
        %4040 = vmatpush.msra.mxu0 %v4039
        %v4041 = vand.u32 %v3756, 4294901760
        %4042 = vmatpush.msra.mxu0 %v4041
        %v4043 = vand.u32 %v3755, 4294901760
        %4044 = vmatpush.msra.mxu0 %v4043
        %v4045 = vand.u32 %v3754, 4294901760
        %4046 = vmatpush.msra.mxu0 %v4045
        %v4047 = vand.u32 %v3753, 4294901760
        %v4048 = vsub.f32 %v3753, %v4047
        %v4049 = vand.u32 %v4048, 4294901760
        %4050 = vmatmul.f32.gmra.mxu0 %v4049
        %v4051 = vpop.f32.mrf.mxu0
        %v4052 = vadd.f32 %v4013, %v4051
        %4053 = vdwg.mxu0
        %v4054 = vand.u32 %v3769, 4294901760
        %v4055 = vsub.f32 %v3769, %v4054
        %v4056 = vand.u32 %v4055, 4294901760
        %4057 = vmatpush.msra.mxu0 %v4056
        %v4058 = vand.u32 %v3768, 4294901760
        %v4059 = vsub.f32 %v3768, %v4058
        %v4060 = vand.u32 %v4059, 4294901760
        %4061 = vmatpush.msra.mxu0 %v4060
        %v4062 = vand.u32 %v3767, 4294901760
        %v4063 = vsub.f32 %v3767, %v4062
        %v4064 = vand.u32 %v4063, 4294901760
        %4065 = vmatpush.msra.mxu0 %v4064
        %v4066 = vand.u32 %v3766, 4294901760
        %v4067 = vsub.f32 %v3766, %v4066
        %v4068 = vand.u32 %v4067, 4294901760
        %4069 = vmatpush.msra.mxu0 %v4068
        %v4070 = vand.u32 %v3765, 4294901760
        %v4071 = vsub.f32 %v3765, %v4070
        %v4072 = vand.u32 %v4071, 4294901760
        %4073 = vmatpush.msra.mxu0 %v4072
        %v4074 = vand.u32 %v3764, 4294901760
        %v4075 = vsub.f32 %v3764, %v4074
        %v4076 = vand.u32 %v4075, 4294901760
        %4077 = vmatpush.msra.mxu0 %v4076
        %v4078 = vand.u32 %v3763, 4294901760
        %v4079 = vsub.f32 %v3763, %v4078
        %v4080 = vand.u32 %v4079, 4294901760
        %4081 = vmatpush.msra.mxu0 %v4080
        %v4082 = vand.u32 %v3762, 4294901760
        %v4083 = vsub.f32 %v3762, %v4082
        %v4084 = vand.u32 %v4083, 4294901760
        %4085 = vmatpush.msra.mxu0 %v4084
        %v4086 = vand.u32 %v3761, 4294901760
        %v4087 = vsub.f32 %v3761, %v4086
        %v4088 = vand.u32 %v4087, 4294901760
        %4089 = vmatpush.msra.mxu0 %v4088
        %v4090 = vand.u32 %v3760, 4294901760
        %v4091 = vsub.f32 %v3760, %v4090
        %v4092 = vand.u32 %v4091, 4294901760
        %4093 = vmatpush.msra.mxu0 %v4092
        %v4094 = vand.u32 %v3759, 4294901760
        %v4095 = vsub.f32 %v3759, %v4094
        %v4096 = vand.u32 %v4095, 4294901760
        %4097 = vmatpush.msra.mxu0 %v4096
        %v4098 = vand.u32 %v3758, 4294901760
        %v4099 = vsub.f32 %v3758, %v4098
        %v4100 = vand.u32 %v4099, 4294901760
        %4101 = vmatpush.msra.mxu0 %v4100
        %v4102 = vand.u32 %v3757, 4294901760
        %v4103 = vsub.f32 %v3757, %v4102
        %v4104 = vand.u32 %v4103, 4294901760
        %4105 = vmatpush.msra.mxu0 %v4104
        %v4106 = vand.u32 %v3756, 4294901760
        %v4107 = vsub.f32 %v3756, %v4106
        %v4108 = vand.u32 %v4107, 4294901760
        %4109 = vmatpush.msra.mxu0 %v4108
        %v4110 = vand.u32 %v3755, 4294901760
        %v4111 = vsub.f32 %v3755, %v4110
        %v4112 = vand.u32 %v4111, 4294901760
        %4113 = vmatpush.msra.mxu0 %v4112
        %v4114 = vand.u32 %v3754, 4294901760
        %v4115 = vsub.f32 %v3754, %v4114
        %v4116 = vand.u32 %v4115, 4294901760
        %4117 = vmatpush.msra.mxu0 %v4116
        %v4118 = vand.u32 %v3753, 4294901760
        %4119 = vmatmul.f32.gmra.mxu0 %v4118
        %v4120 = vpop.f32.mrf.mxu0
        %v4121 = vadd.f32 %v4052, %v4120
        %4122 = vdwg.mxu0
        %v4123 = vand.u32 %v3769, 4294901760
        %4124 = vmatpush.msra.mxu0 %v4123
        %v4125 = vand.u32 %v3768, 4294901760
        %4126 = vmatpush.msra.mxu0 %v4125
        %v4127 = vand.u32 %v3767, 4294901760
        %4128 = vmatpush.msra.mxu0 %v4127
        %v4129 = vand.u32 %v3766, 4294901760
        %4130 = vmatpush.msra.mxu0 %v4129
        %v4131 = vand.u32 %v3765, 4294901760
        %4132 = vmatpush.msra.mxu0 %v4131
        %v4133 = vand.u32 %v3764, 4294901760
        %4134 = vmatpush.msra.mxu0 %v4133
        %v4135 = vand.u32 %v3763, 4294901760
        %4136 = vmatpush.msra.mxu0 %v4135
        %v4137 = vand.u32 %v3762, 4294901760
        %4138 = vmatpush.msra.mxu0 %v4137
        %v4139 = vand.u32 %v3761, 4294901760
        %4140 = vmatpush.msra.mxu0 %v4139
        %v4141 = vand.u32 %v3760, 4294901760
        %4142 = vmatpush.msra.mxu0 %v4141
        %v4143 = vand.u32 %v3759, 4294901760
        %4144 = vmatpush.msra.mxu0 %v4143
        %v4145 = vand.u32 %v3758, 4294901760
        %4146 = vmatpush.msra.mxu0 %v4145
        %v4147 = vand.u32 %v3757, 4294901760
        %4148 = vmatpush.msra.mxu0 %v4147
        %v4149 = vand.u32 %v3756, 4294901760
        %4150 = vmatpush.msra.mxu0 %v4149
        %v4151 = vand.u32 %v3755, 4294901760
        %4152 = vmatpush.msra.mxu0 %v4151
        %v4153 = vand.u32 %v3754, 4294901760
        %4154 = vmatpush.msra.mxu0 %v4153
        %v4155 = vand.u32 %v3753, 4294901760
        %4156 = vmatmul.f32.gmra.mxu0 %v4155
        %v4157 = vpop.f32.mrf.mxu0
        %v4158 = vadd.f32 %v4121, %v4157
        %4159 = vdwg.mxu0
        %v4160 = vand.u32 %v3785, 4294901760
        %4161 = vmatpush.msra.mxu0 %v4160
        %v4162 = vand.u32 %v3784, 4294901760
        %4163 = vmatpush.msra.mxu0 %v4162
        %v4164 = vand.u32 %v3783, 4294901760
        %4165 = vmatpush.msra.mxu0 %v4164
        %v4166 = vand.u32 %v3782, 4294901760
        %4167 = vmatpush.msra.mxu0 %v4166
        %v4168 = vand.u32 %v3781, 4294901760
        %4169 = vmatpush.msra.mxu0 %v4168
        %v4170 = vand.u32 %v3780, 4294901760
        %4171 = vmatpush.msra.mxu0 %v4170
        %v4172 = vand.u32 %v3779, 4294901760
        %4173 = vmatpush.msra.mxu0 %v4172
        %v4174 = vand.u32 %v3778, 4294901760
        %4175 = vmatpush.msra.mxu0 %v4174
        %v4176 = vand.u32 %v3777, 4294901760
        %4177 = vmatpush.msra.mxu0 %v4176
        %v4178 = vand.u32 %v3776, 4294901760
        %4179 = vmatpush.msra.mxu0 %v4178
        %v4180 = vand.u32 %v3775, 4294901760
        %4181 = vmatpush.msra.mxu0 %v4180
        %v4182 = vand.u32 %v3774, 4294901760
        %4183 = vmatpush.msra.mxu0 %v4182
        %v4184 = vand.u32 %v3773, 4294901760
        %4185 = vmatpush.msra.mxu0 %v4184
        %v4186 = vand.u32 %v3772, 4294901760
        %4187 = vmatpush.msra.mxu0 %v4186
        %v4188 = vand.u32 %v3771, 4294901760
        %4189 = vmatpush.msra.mxu0 %v4188
        %v4190 = vand.u32 %v3770, 4294901760
        %4191 = vmatpush.msra.mxu0 %v4190
        %v4192 = vand.u32 %v1932, 4294901760
        %v4193 = vsub.f32 %v1932, %v4192
        %v4194 = vand.u32 %v4193, 4294901760
        %v4195 = vsub.f32 %v4193, %v4194
        %v4196 = vand.u32 %v4195, 4294901760
        %4197 = vmatmul.f32.gmra.mxu0 %v4196
        %v4198 = vpop.f32.mrf.mxu0
        %v4199 = vadd.f32 0.0, %v4198
        %4200 = vdwg.mxu0
        %v4201 = vand.u32 %v3785, 4294901760
        %v4202 = vsub.f32 %v3785, %v4201
        %v4203 = vand.u32 %v4202, 4294901760
        %v4204 = vsub.f32 %v4202, %v4203
        %v4205 = vand.u32 %v4204, 4294901760
        %4206 = vmatpush.msra.mxu0 %v4205
        %v4207 = vand.u32 %v3784, 4294901760
        %v4208 = vsub.f32 %v3784, %v4207
        %v4209 = vand.u32 %v4208, 4294901760
        %v4210 = vsub.f32 %v4208, %v4209
        %v4211 = vand.u32 %v4210, 4294901760
        %4212 = vmatpush.msra.mxu0 %v4211
        %v4213 = vand.u32 %v3783, 4294901760
        %v4214 = vsub.f32 %v3783, %v4213
        %v4215 = vand.u32 %v4214, 4294901760
        %v4216 = vsub.f32 %v4214, %v4215
        %v4217 = vand.u32 %v4216, 4294901760
        %4218 = vmatpush.msra.mxu0 %v4217
        %v4219 = vand.u32 %v3782, 4294901760
        %v4220 = vsub.f32 %v3782, %v4219
        %v4221 = vand.u32 %v4220, 4294901760
        %v4222 = vsub.f32 %v4220, %v4221
        %v4223 = vand.u32 %v4222, 4294901760
        %4224 = vmatpush.msra.mxu0 %v4223
        %v4225 = vand.u32 %v3781, 4294901760
        %v4226 = vsub.f32 %v3781, %v4225
        %v4227 = vand.u32 %v4226, 4294901760
        %v4228 = vsub.f32 %v4226, %v4227
        %v4229 = vand.u32 %v4228, 4294901760
        %4230 = vmatpush.msra.mxu0 %v4229
        %v4231 = vand.u32 %v3780, 4294901760
        %v4232 = vsub.f32 %v3780, %v4231
        %v4233 = vand.u32 %v4232, 4294901760
        %v4234 = vsub.f32 %v4232, %v4233
        %v4235 = vand.u32 %v4234, 4294901760
        %4236 = vmatpush.msra.mxu0 %v4235
        %v4237 = vand.u32 %v3779, 4294901760
        %v4238 = vsub.f32 %v3779, %v4237
        %v4239 = vand.u32 %v4238, 4294901760
        %v4240 = vsub.f32 %v4238, %v4239
        %v4241 = vand.u32 %v4240, 4294901760
        %4242 = vmatpush.msra.mxu0 %v4241
        %v4243 = vand.u32 %v3778, 4294901760
        %v4244 = vsub.f32 %v3778, %v4243
        %v4245 = vand.u32 %v4244, 4294901760
        %v4246 = vsub.f32 %v4244, %v4245
        %v4247 = vand.u32 %v4246, 4294901760
        %4248 = vmatpush.msra.mxu0 %v4247
        %v4249 = vand.u32 %v3777, 4294901760
        %v4250 = vsub.f32 %v3777, %v4249
        %v4251 = vand.u32 %v4250, 4294901760
        %v4252 = vsub.f32 %v4250, %v4251
        %v4253 = vand.u32 %v4252, 4294901760
        %4254 = vmatpush.msra.mxu0 %v4253
        %v4255 = vand.u32 %v3776, 4294901760
        %v4256 = vsub.f32 %v3776, %v4255
        %v4257 = vand.u32 %v4256, 4294901760
        %v4258 = vsub.f32 %v4256, %v4257
        %v4259 = vand.u32 %v4258, 4294901760
        %4260 = vmatpush.msra.mxu0 %v4259
        %v4261 = vand.u32 %v3775, 4294901760
        %v4262 = vsub.f32 %v3775, %v4261
        %v4263 = vand.u32 %v4262, 4294901760
        %v4264 = vsub.f32 %v4262, %v4263
        %v4265 = vand.u32 %v4264, 4294901760
        %4266 = vmatpush.msra.mxu0 %v4265
        %v4267 = vand.u32 %v3774, 4294901760
        %v4268 = vsub.f32 %v3774, %v4267
        %v4269 = vand.u32 %v4268, 4294901760
        %v4270 = vsub.f32 %v4268, %v4269
        %v4271 = vand.u32 %v4270, 4294901760
        %4272 = vmatpush.msra.mxu0 %v4271
        %v4273 = vand.u32 %v3773, 4294901760
        %v4274 = vsub.f32 %v3773, %v4273
        %v4275 = vand.u32 %v4274, 4294901760
        %v4276 = vsub.f32 %v4274, %v4275
        %v4277 = vand.u32 %v4276, 4294901760
        %4278 = vmatpush.msra.mxu0 %v4277
        %v4279 = vand.u32 %v3772, 4294901760
        %v4280 = vsub.f32 %v3772, %v4279
        %v4281 = vand.u32 %v4280, 4294901760
        %v4282 = vsub.f32 %v4280, %v4281
        %v4283 = vand.u32 %v4282, 4294901760
        %4284 = vmatpush.msra.mxu0 %v4283
        %v4285 = vand.u32 %v3771, 4294901760
        %v4286 = vsub.f32 %v3771, %v4285
        %v4287 = vand.u32 %v4286, 4294901760
        %v4288 = vsub.f32 %v4286, %v4287
        %v4289 = vand.u32 %v4288, 4294901760
        %4290 = vmatpush.msra.mxu0 %v4289
        %v4291 = vand.u32 %v3770, 4294901760
        %v4292 = vsub.f32 %v3770, %v4291
        %v4293 = vand.u32 %v4292, 4294901760
        %v4294 = vsub.f32 %v4292, %v4293
        %v4295 = vand.u32 %v4294, 4294901760
        %4296 = vmatpush.msra.mxu0 %v4295
        %v4297 = vand.u32 %v1932, 4294901760
        %4298 = vmatmul.f32.gmra.mxu0 %v4297
        %v4299 = vpop.f32.mrf.mxu0
        %v4300 = vadd.f32 %v4199, %v4299
        %4301 = vdwg.mxu0
        %v4302 = vand.u32 %v3785, 4294901760
        %v4303 = vsub.f32 %v3785, %v4302
        %4304 = vmatpush.msra.mxu0 %v4303
        %v4305 = vand.u32 %v3784, 4294901760
        %v4306 = vsub.f32 %v3784, %v4305
        %4307 = vmatpush.msra.mxu0 %v4306
        %v4308 = vand.u32 %v3783, 4294901760
        %v4309 = vsub.f32 %v3783, %v4308
        %4310 = vmatpush.msra.mxu0 %v4309
        %v4311 = vand.u32 %v3782, 4294901760
        %v4312 = vsub.f32 %v3782, %v4311
        %4313 = vmatpush.msra.mxu0 %v4312
        %v4314 = vand.u32 %v3781, 4294901760
        %v4315 = vsub.f32 %v3781, %v4314
        %4316 = vmatpush.msra.mxu0 %v4315
        %v4317 = vand.u32 %v3780, 4294901760
        %v4318 = vsub.f32 %v3780, %v4317
        %4319 = vmatpush.msra.mxu0 %v4318
        %v4320 = vand.u32 %v3779, 4294901760
        %v4321 = vsub.f32 %v3779, %v4320
        %4322 = vmatpush.msra.mxu0 %v4321
        %v4323 = vand.u32 %v3778, 4294901760
        %v4324 = vsub.f32 %v3778, %v4323
        %4325 = vmatpush.msra.mxu0 %v4324
        %v4326 = vand.u32 %v3777, 4294901760
        %v4327 = vsub.f32 %v3777, %v4326
        %4328 = vmatpush.msra.mxu0 %v4327
        %v4329 = vand.u32 %v3776, 4294901760
        %v4330 = vsub.f32 %v3776, %v4329
        %4331 = vmatpush.msra.mxu0 %v4330
        %v4332 = vand.u32 %v3775, 4294901760
        %v4333 = vsub.f32 %v3775, %v4332
        %4334 = vmatpush.msra.mxu0 %v4333
        %v4335 = vand.u32 %v3774, 4294901760
        %v4336 = vsub.f32 %v3774, %v4335
        %4337 = vmatpush.msra.mxu0 %v4336
        %v4338 = vand.u32 %v3773, 4294901760
        %v4339 = vsub.f32 %v3773, %v4338
        %4340 = vmatpush.msra.mxu0 %v4339
        %v4341 = vand.u32 %v3772, 4294901760
        %v4342 = vsub.f32 %v3772, %v4341
        %4343 = vmatpush.msra.mxu0 %v4342
        %v4344 = vand.u32 %v3771, 4294901760
        %v4345 = vsub.f32 %v3771, %v4344
        %4346 = vmatpush.msra.mxu0 %v4345
        %v4347 = vand.u32 %v3770, 4294901760
        %v4348 = vsub.f32 %v3770, %v4347
        %4349 = vmatpush.msra.mxu0 %v4348
        %v4350 = vand.u32 %v1932, 4294901760
        %v4351 = vsub.f32 %v1932, %v4350
        %4352 = vmatmul.f32.gmra.mxu0 %v4351
        %v4353 = vpop.f32.mrf.mxu0
        %v4354 = vadd.f32 %v4300, %v4353
        %4355 = vdwg.mxu0
        %v4356 = vand.u32 %v3785, 4294901760
        %4357 = vmatpush.msra.mxu0 %v4356
        %v4358 = vand.u32 %v3784, 4294901760
        %4359 = vmatpush.msra.mxu0 %v4358
        %v4360 = vand.u32 %v3783, 4294901760
        %4361 = vmatpush.msra.mxu0 %v4360
        %v4362 = vand.u32 %v3782, 4294901760
        %4363 = vmatpush.msra.mxu0 %v4362
        %v4364 = vand.u32 %v3781, 4294901760
        %4365 = vmatpush.msra.mxu0 %v4364
        %v4366 = vand.u32 %v3780, 4294901760
        %4367 = vmatpush.msra.mxu0 %v4366
        %v4368 = vand.u32 %v3779, 4294901760
        %4369 = vmatpush.msra.mxu0 %v4368
        %v4370 = vand.u32 %v3778, 4294901760
        %4371 = vmatpush.msra.mxu0 %v4370
        %v4372 = vand.u32 %v3777, 4294901760
        %4373 = vmatpush.msra.mxu0 %v4372
        %v4374 = vand.u32 %v3776, 4294901760
        %4375 = vmatpush.msra.mxu0 %v4374
        %v4376 = vand.u32 %v3775, 4294901760
        %4377 = vmatpush.msra.mxu0 %v4376
        %v4378 = vand.u32 %v3774, 4294901760
        %4379 = vmatpush.msra.mxu0 %v4378
        %v4380 = vand.u32 %v3773, 4294901760
        %4381 = vmatpush.msra.mxu0 %v4380
        %v4382 = vand.u32 %v3772, 4294901760
        %4383 = vmatpush.msra.mxu0 %v4382
        %v4384 = vand.u32 %v3771, 4294901760
        %4385 = vmatpush.msra.mxu0 %v4384
        %v4386 = vand.u32 %v3770, 4294901760
        %4387 = vmatpush.msra.mxu0 %v4386
        %v4388 = vand.u32 %v1932, 4294901760
        %v4389 = vsub.f32 %v1932, %v4388
        %v4390 = vand.u32 %v4389, 4294901760
        %4391 = vmatmul.f32.gmra.mxu0 %v4390
        %v4392 = vpop.f32.mrf.mxu0
        %v4393 = vadd.f32 %v4354, %v4392
        %4394 = vdwg.mxu0
        %v4395 = vand.u32 %v3785, 4294901760
        %v4396 = vsub.f32 %v3785, %v4395
        %v4397 = vand.u32 %v4396, 4294901760
        %4398 = vmatpush.msra.mxu0 %v4397
        %v4399 = vand.u32 %v3784, 4294901760
        %v4400 = vsub.f32 %v3784, %v4399
        %v4401 = vand.u32 %v4400, 4294901760
        %4402 = vmatpush.msra.mxu0 %v4401
        %v4403 = vand.u32 %v3783, 4294901760
        %v4404 = vsub.f32 %v3783, %v4403
        %v4405 = vand.u32 %v4404, 4294901760
        %4406 = vmatpush.msra.mxu0 %v4405
        %v4407 = vand.u32 %v3782, 4294901760
        %v4408 = vsub.f32 %v3782, %v4407
        %v4409 = vand.u32 %v4408, 4294901760
        %4410 = vmatpush.msra.mxu0 %v4409
        %v4411 = vand.u32 %v3781, 4294901760
        %v4412 = vsub.f32 %v3781, %v4411
        %v4413 = vand.u32 %v4412, 4294901760
        %4414 = vmatpush.msra.mxu0 %v4413
        %v4415 = vand.u32 %v3780, 4294901760
        %v4416 = vsub.f32 %v3780, %v4415
        %v4417 = vand.u32 %v4416, 4294901760
        %4418 = vmatpush.msra.mxu0 %v4417
        %v4419 = vand.u32 %v3779, 4294901760
        %v4420 = vsub.f32 %v3779, %v4419
        %v4421 = vand.u32 %v4420, 4294901760
        %4422 = vmatpush.msra.mxu0 %v4421
        %v4423 = vand.u32 %v3778, 4294901760
        %v4424 = vsub.f32 %v3778, %v4423
        %v4425 = vand.u32 %v4424, 4294901760
        %4426 = vmatpush.msra.mxu0 %v4425
        %v4427 = vand.u32 %v3777, 4294901760
        %v4428 = vsub.f32 %v3777, %v4427
        %v4429 = vand.u32 %v4428, 4294901760
        %4430 = vmatpush.msra.mxu0 %v4429
        %v4431 = vand.u32 %v3776, 4294901760
        %v4432 = vsub.f32 %v3776, %v4431
        %v4433 = vand.u32 %v4432, 4294901760
        %4434 = vmatpush.msra.mxu0 %v4433
        %v4435 = vand.u32 %v3775, 4294901760
        %v4436 = vsub.f32 %v3775, %v4435
        %v4437 = vand.u32 %v4436, 4294901760
        %4438 = vmatpush.msra.mxu0 %v4437
        %v4439 = vand.u32 %v3774, 4294901760
        %v4440 = vsub.f32 %v3774, %v4439
        %v4441 = vand.u32 %v4440, 4294901760
        %4442 = vmatpush.msra.mxu0 %v4441
        %v4443 = vand.u32 %v3773, 4294901760
        %v4444 = vsub.f32 %v3773, %v4443
        %v4445 = vand.u32 %v4444, 4294901760
        %4446 = vmatpush.msra.mxu0 %v4445
        %v4447 = vand.u32 %v3772, 4294901760
        %v4448 = vsub.f32 %v3772, %v4447
        %v4449 = vand.u32 %v4448, 4294901760
        %4450 = vmatpush.msra.mxu0 %v4449
        %v4451 = vand.u32 %v3771, 4294901760
        %v4452 = vsub.f32 %v3771, %v4451
        %v4453 = vand.u32 %v4452, 4294901760
        %4454 = vmatpush.msra.mxu0 %v4453
        %v4455 = vand.u32 %v3770, 4294901760
        %v4456 = vsub.f32 %v3770, %v4455
        %v4457 = vand.u32 %v4456, 4294901760
        %4458 = vmatpush.msra.mxu0 %v4457
        %v4459 = vand.u32 %v1932, 4294901760
        %4460 = vmatmul.f32.gmra.mxu0 %v4459
        %v4461 = vpop.f32.mrf.mxu0
        %v4462 = vadd.f32 %v4393, %v4461
        %4463 = vdwg.mxu0
        %v4464 = vand.u32 %v3785, 4294901760
        %4465 = vmatpush.msra.mxu0 %v4464
        %v4466 = vand.u32 %v3784, 4294901760
        %4467 = vmatpush.msra.mxu0 %v4466
        %v4468 = vand.u32 %v3783, 4294901760
        %4469 = vmatpush.msra.mxu0 %v4468
        %v4470 = vand.u32 %v3782, 4294901760
        %4471 = vmatpush.msra.mxu0 %v4470
        %v4472 = vand.u32 %v3781, 4294901760
        %4473 = vmatpush.msra.mxu0 %v4472
        %v4474 = vand.u32 %v3780, 4294901760
        %4475 = vmatpush.msra.mxu0 %v4474
        %v4476 = vand.u32 %v3779, 4294901760
        %4477 = vmatpush.msra.mxu0 %v4476
        %v4478 = vand.u32 %v3778, 4294901760
        %4479 = vmatpush.msra.mxu0 %v4478
        %v4480 = vand.u32 %v3777, 4294901760
        %4481 = vmatpush.msra.mxu0 %v4480
        %v4482 = vand.u32 %v3776, 4294901760
        %4483 = vmatpush.msra.mxu0 %v4482
        %v4484 = vand.u32 %v3775, 4294901760
        %4485 = vmatpush.msra.mxu0 %v4484
        %v4486 = vand.u32 %v3774, 4294901760
        %4487 = vmatpush.msra.mxu0 %v4486
        %v4488 = vand.u32 %v3773, 4294901760
        %4489 = vmatpush.msra.mxu0 %v4488
        %v4490 = vand.u32 %v3772, 4294901760
        %4491 = vmatpush.msra.mxu0 %v4490
        %v4492 = vand.u32 %v3771, 4294901760
        %4493 = vmatpush.msra.mxu0 %v4492
        %v4494 = vand.u32 %v3770, 4294901760
        %4495 = vmatpush.msra.mxu0 %v4494
        %v4496 = vand.u32 %v1932, 4294901760
        %4497 = vmatmul.f32.gmra.mxu0 %v4496
        %v4498 = vpop.f32.mrf.mxu0
        %v4499 = vadd.f32 %v4462, %v4498
        %4500 = vdwg.mxu0
        %v4501 = vand.u32 %v3801, 4294901760
        %4502 = vmatpush.msra.mxu0 %v4501
        %v4503 = vand.u32 %v3800, 4294901760
        %4504 = vmatpush.msra.mxu0 %v4503
        %v4505 = vand.u32 %v3799, 4294901760
        %4506 = vmatpush.msra.mxu0 %v4505
        %v4507 = vand.u32 %v3798, 4294901760
        %4508 = vmatpush.msra.mxu0 %v4507
        %v4509 = vand.u32 %v3797, 4294901760
        %4510 = vmatpush.msra.mxu0 %v4509
        %v4511 = vand.u32 %v3796, 4294901760
        %4512 = vmatpush.msra.mxu0 %v4511
        %v4513 = vand.u32 %v3795, 4294901760
        %4514 = vmatpush.msra.mxu0 %v4513
        %v4515 = vand.u32 %v3794, 4294901760
        %4516 = vmatpush.msra.mxu0 %v4515
        %v4517 = vand.u32 %v3793, 4294901760
        %4518 = vmatpush.msra.mxu0 %v4517
        %v4519 = vand.u32 %v3792, 4294901760
        %4520 = vmatpush.msra.mxu0 %v4519
        %v4521 = vand.u32 %v3791, 4294901760
        %4522 = vmatpush.msra.mxu0 %v4521
        %v4523 = vand.u32 %v3790, 4294901760
        %4524 = vmatpush.msra.mxu0 %v4523
        %v4525 = vand.u32 %v3789, 4294901760
        %4526 = vmatpush.msra.mxu0 %v4525
        %v4527 = vand.u32 %v3788, 4294901760
        %4528 = vmatpush.msra.mxu0 %v4527
        %v4529 = vand.u32 %v3787, 4294901760
        %4530 = vmatpush.msra.mxu0 %v4529
        %v4531 = vand.u32 %v3786, 4294901760
        %4532 = vmatpush.msra.mxu0 %v4531
        %v4533 = vand.u32 %v1932, 4294901760
        %v4534 = vsub.f32 %v1932, %v4533
        %v4535 = vand.u32 %v4534, 4294901760
        %v4536 = vsub.f32 %v4534, %v4535
        %v4537 = vand.u32 %v4536, 4294901760
        %4538 = vmatmul.f32.gmra.mxu0 %v4537
        %v4539 = vpop.f32.mrf.mxu0
        %v4540 = vadd.f32 0.0, %v4539
        %4541 = vdwg.mxu0
        %v4542 = vand.u32 %v3801, 4294901760
        %v4543 = vsub.f32 %v3801, %v4542
        %v4544 = vand.u32 %v4543, 4294901760
        %v4545 = vsub.f32 %v4543, %v4544
        %v4546 = vand.u32 %v4545, 4294901760
        %4547 = vmatpush.msra.mxu0 %v4546
        %v4548 = vand.u32 %v3800, 4294901760
        %v4549 = vsub.f32 %v3800, %v4548
        %v4550 = vand.u32 %v4549, 4294901760
        %v4551 = vsub.f32 %v4549, %v4550
        %v4552 = vand.u32 %v4551, 4294901760
        %4553 = vmatpush.msra.mxu0 %v4552
        %v4554 = vand.u32 %v3799, 4294901760
        %v4555 = vsub.f32 %v3799, %v4554
        %v4556 = vand.u32 %v4555, 4294901760
        %v4557 = vsub.f32 %v4555, %v4556
        %v4558 = vand.u32 %v4557, 4294901760
        %4559 = vmatpush.msra.mxu0 %v4558
        %v4560 = vand.u32 %v3798, 4294901760
        %v4561 = vsub.f32 %v3798, %v4560
        %v4562 = vand.u32 %v4561, 4294901760
        %v4563 = vsub.f32 %v4561, %v4562
        %v4564 = vand.u32 %v4563, 4294901760
        %4565 = vmatpush.msra.mxu0 %v4564
        %v4566 = vand.u32 %v3797, 4294901760
        %v4567 = vsub.f32 %v3797, %v4566
        %v4568 = vand.u32 %v4567, 4294901760
        %v4569 = vsub.f32 %v4567, %v4568
        %v4570 = vand.u32 %v4569, 4294901760
        %4571 = vmatpush.msra.mxu0 %v4570
        %v4572 = vand.u32 %v3796, 4294901760
        %v4573 = vsub.f32 %v3796, %v4572
        %v4574 = vand.u32 %v4573, 4294901760
        %v4575 = vsub.f32 %v4573, %v4574
        %v4576 = vand.u32 %v4575, 4294901760
        %4577 = vmatpush.msra.mxu0 %v4576
        %v4578 = vand.u32 %v3795, 4294901760
        %v4579 = vsub.f32 %v3795, %v4578
        %v4580 = vand.u32 %v4579, 4294901760
        %v4581 = vsub.f32 %v4579, %v4580
        %v4582 = vand.u32 %v4581, 4294901760
        %4583 = vmatpush.msra.mxu0 %v4582
        %v4584 = vand.u32 %v3794, 4294901760
        %v4585 = vsub.f32 %v3794, %v4584
        %v4586 = vand.u32 %v4585, 4294901760
        %v4587 = vsub.f32 %v4585, %v4586
        %v4588 = vand.u32 %v4587, 4294901760
        %4589 = vmatpush.msra.mxu0 %v4588
        %v4590 = vand.u32 %v3793, 4294901760
        %v4591 = vsub.f32 %v3793, %v4590
        %v4592 = vand.u32 %v4591, 4294901760
        %v4593 = vsub.f32 %v4591, %v4592
        %v4594 = vand.u32 %v4593, 4294901760
        %4595 = vmatpush.msra.mxu0 %v4594
        %v4596 = vand.u32 %v3792, 4294901760
        %v4597 = vsub.f32 %v3792, %v4596
        %v4598 = vand.u32 %v4597, 4294901760
        %v4599 = vsub.f32 %v4597, %v4598
        %v4600 = vand.u32 %v4599, 4294901760
        %4601 = vmatpush.msra.mxu0 %v4600
        %v4602 = vand.u32 %v3791, 4294901760
        %v4603 = vsub.f32 %v3791, %v4602
        %v4604 = vand.u32 %v4603, 4294901760
        %v4605 = vsub.f32 %v4603, %v4604
        %v4606 = vand.u32 %v4605, 4294901760
        %4607 = vmatpush.msra.mxu0 %v4606
        %v4608 = vand.u32 %v3790, 4294901760
        %v4609 = vsub.f32 %v3790, %v4608
        %v4610 = vand.u32 %v4609, 4294901760
        %v4611 = vsub.f32 %v4609, %v4610
        %v4612 = vand.u32 %v4611, 4294901760
        %4613 = vmatpush.msra.mxu0 %v4612
        %v4614 = vand.u32 %v3789, 4294901760
        %v4615 = vsub.f32 %v3789, %v4614
        %v4616 = vand.u32 %v4615, 4294901760
        %v4617 = vsub.f32 %v4615, %v4616
        %v4618 = vand.u32 %v4617, 4294901760
        %4619 = vmatpush.msra.mxu0 %v4618
        %v4620 = vand.u32 %v3788, 4294901760
        %v4621 = vsub.f32 %v3788, %v4620
        %v4622 = vand.u32 %v4621, 4294901760
        %v4623 = vsub.f32 %v4621, %v4622
        %v4624 = vand.u32 %v4623, 4294901760
        %4625 = vmatpush.msra.mxu0 %v4624
        %v4626 = vand.u32 %v3787, 4294901760
        %v4627 = vsub.f32 %v3787, %v4626
        %v4628 = vand.u32 %v4627, 4294901760
        %v4629 = vsub.f32 %v4627, %v4628
        %v4630 = vand.u32 %v4629, 4294901760
        %4631 = vmatpush.msra.mxu0 %v4630
        %v4632 = vand.u32 %v3786, 4294901760
        %v4633 = vsub.f32 %v3786, %v4632
        %v4634 = vand.u32 %v4633, 4294901760
        %v4635 = vsub.f32 %v4633, %v4634
        %v4636 = vand.u32 %v4635, 4294901760
        %4637 = vmatpush.msra.mxu0 %v4636
        %v4638 = vand.u32 %v1932, 4294901760
        %4639 = vmatmul.f32.gmra.mxu0 %v4638
        %v4640 = vpop.f32.mrf.mxu0
        %v4641 = vadd.f32 %v4540, %v4640
        %4642 = vdwg.mxu0
        %v4643 = vand.u32 %v3801, 4294901760
        %v4644 = vsub.f32 %v3801, %v4643
        %4645 = vmatpush.msra.mxu0 %v4644
        %v4646 = vand.u32 %v3800, 4294901760
        %v4647 = vsub.f32 %v3800, %v4646
        %4648 = vmatpush.msra.mxu0 %v4647
        %v4649 = vand.u32 %v3799, 4294901760
        %v4650 = vsub.f32 %v3799, %v4649
        %4651 = vmatpush.msra.mxu0 %v4650
        %v4652 = vand.u32 %v3798, 4294901760
        %v4653 = vsub.f32 %v3798, %v4652
        %4654 = vmatpush.msra.mxu0 %v4653
        %v4655 = vand.u32 %v3797, 4294901760
        %v4656 = vsub.f32 %v3797, %v4655
        %4657 = vmatpush.msra.mxu0 %v4656
        %v4658 = vand.u32 %v3796, 4294901760
        %v4659 = vsub.f32 %v3796, %v4658
        %4660 = vmatpush.msra.mxu0 %v4659
        %v4661 = vand.u32 %v3795, 4294901760
        %v4662 = vsub.f32 %v3795, %v4661
        %4663 = vmatpush.msra.mxu0 %v4662
        %v4664 = vand.u32 %v3794, 4294901760
        %v4665 = vsub.f32 %v3794, %v4664
        %4666 = vmatpush.msra.mxu0 %v4665
        %v4667 = vand.u32 %v3793, 4294901760
        %v4668 = vsub.f32 %v3793, %v4667
        %4669 = vmatpush.msra.mxu0 %v4668
        %v4670 = vand.u32 %v3792, 4294901760
        %v4671 = vsub.f32 %v3792, %v4670
        %4672 = vmatpush.msra.mxu0 %v4671
        %v4673 = vand.u32 %v3791, 4294901760
        %v4674 = vsub.f32 %v3791, %v4673
        %4675 = vmatpush.msra.mxu0 %v4674
        %v4676 = vand.u32 %v3790, 4294901760
        %v4677 = vsub.f32 %v3790, %v4676
        %4678 = vmatpush.msra.mxu0 %v4677
        %v4679 = vand.u32 %v3789, 4294901760
        %v4680 = vsub.f32 %v3789, %v4679
        %4681 = vmatpush.msra.mxu0 %v4680
        %v4682 = vand.u32 %v3788, 4294901760
        %v4683 = vsub.f32 %v3788, %v4682
        %4684 = vmatpush.msra.mxu0 %v4683
        %v4685 = vand.u32 %v3787, 4294901760
        %v4686 = vsub.f32 %v3787, %v4685
        %4687 = vmatpush.msra.mxu0 %v4686
        %v4688 = vand.u32 %v3786, 4294901760
        %v4689 = vsub.f32 %v3786, %v4688
        %4690 = vmatpush.msra.mxu0 %v4689
        %v4691 = vand.u32 %v1932, 4294901760
        %v4692 = vsub.f32 %v1932, %v4691
        %4693 = vmatmul.f32.gmra.mxu0 %v4692
        %v4694 = vpop.f32.mrf.mxu0
        %v4695 = vadd.f32 %v4641, %v4694
        %4696 = vdwg.mxu0
        %v4697 = vand.u32 %v3801, 4294901760
        %4698 = vmatpush.msra.mxu0 %v4697
        %v4699 = vand.u32 %v3800, 4294901760
        %4700 = vmatpush.msra.mxu0 %v4699
        %v4701 = vand.u32 %v3799, 4294901760
        %4702 = vmatpush.msra.mxu0 %v4701
        %v4703 = vand.u32 %v3798, 4294901760
        %4704 = vmatpush.msra.mxu0 %v4703
        %v4705 = vand.u32 %v3797, 4294901760
        %4706 = vmatpush.msra.mxu0 %v4705
        %v4707 = vand.u32 %v3796, 4294901760
        %4708 = vmatpush.msra.mxu0 %v4707
        %v4709 = vand.u32 %v3795, 4294901760
        %4710 = vmatpush.msra.mxu0 %v4709
        %v4711 = vand.u32 %v3794, 4294901760
        %4712 = vmatpush.msra.mxu0 %v4711
        %v4713 = vand.u32 %v3793, 4294901760
        %4714 = vmatpush.msra.mxu0 %v4713
        %v4715 = vand.u32 %v3792, 4294901760
        %4716 = vmatpush.msra.mxu0 %v4715
        %v4717 = vand.u32 %v3791, 4294901760
        %4718 = vmatpush.msra.mxu0 %v4717
        %v4719 = vand.u32 %v3790, 4294901760
        %4720 = vmatpush.msra.mxu0 %v4719
        %v4721 = vand.u32 %v3789, 4294901760
        %4722 = vmatpush.msra.mxu0 %v4721
        %v4723 = vand.u32 %v3788, 4294901760
        %4724 = vmatpush.msra.mxu0 %v4723
        %v4725 = vand.u32 %v3787, 4294901760
        %4726 = vmatpush.msra.mxu0 %v4725
        %v4727 = vand.u32 %v3786, 4294901760
        %4728 = vmatpush.msra.mxu0 %v4727
        %v4729 = vand.u32 %v1932, 4294901760
        %v4730 = vsub.f32 %v1932, %v4729
        %v4731 = vand.u32 %v4730, 4294901760
        %4732 = vmatmul.f32.gmra.mxu0 %v4731
        %v4733 = vpop.f32.mrf.mxu0
        %v4734 = vadd.f32 %v4695, %v4733
        %4735 = vdwg.mxu0
        %v4736 = vand.u32 %v3801, 4294901760
        %v4737 = vsub.f32 %v3801, %v4736
        %v4738 = vand.u32 %v4737, 4294901760
        %4739 = vmatpush.msra.mxu0 %v4738
        %v4740 = vand.u32 %v3800, 4294901760
        %v4741 = vsub.f32 %v3800, %v4740
        %v4742 = vand.u32 %v4741, 4294901760
        %4743 = vmatpush.msra.mxu0 %v4742
        %v4744 = vand.u32 %v3799, 4294901760
        %v4745 = vsub.f32 %v3799, %v4744
        %v4746 = vand.u32 %v4745, 4294901760
        %4747 = vmatpush.msra.mxu0 %v4746
        %v4748 = vand.u32 %v3798, 4294901760
        %v4749 = vsub.f32 %v3798, %v4748
        %v4750 = vand.u32 %v4749, 4294901760
        %4751 = vmatpush.msra.mxu0 %v4750
        %v4752 = vand.u32 %v3797, 4294901760
        %v4753 = vsub.f32 %v3797, %v4752
        %v4754 = vand.u32 %v4753, 4294901760
        %4755 = vmatpush.msra.mxu0 %v4754
        %v4756 = vand.u32 %v3796, 4294901760
        %v4757 = vsub.f32 %v3796, %v4756
        %v4758 = vand.u32 %v4757, 4294901760
        %4759 = vmatpush.msra.mxu0 %v4758
        %v4760 = vand.u32 %v3795, 4294901760
        %v4761 = vsub.f32 %v3795, %v4760
        %v4762 = vand.u32 %v4761, 4294901760
        %4763 = vmatpush.msra.mxu0 %v4762
        %v4764 = vand.u32 %v3794, 4294901760
        %v4765 = vsub.f32 %v3794, %v4764
        %v4766 = vand.u32 %v4765, 4294901760
        %4767 = vmatpush.msra.mxu0 %v4766
        %v4768 = vand.u32 %v3793, 4294901760
        %v4769 = vsub.f32 %v3793, %v4768
        %v4770 = vand.u32 %v4769, 4294901760
        %4771 = vmatpush.msra.mxu0 %v4770
        %v4772 = vand.u32 %v3792, 4294901760
        %v4773 = vsub.f32 %v3792, %v4772
        %v4774 = vand.u32 %v4773, 4294901760
        %4775 = vmatpush.msra.mxu0 %v4774
        %v4776 = vand.u32 %v3791, 4294901760
        %v4777 = vsub.f32 %v3791, %v4776
        %v4778 = vand.u32 %v4777, 4294901760
        %4779 = vmatpush.msra.mxu0 %v4778
        %v4780 = vand.u32 %v3790, 4294901760
        %v4781 = vsub.f32 %v3790, %v4780
        %v4782 = vand.u32 %v4781, 4294901760
        %4783 = vmatpush.msra.mxu0 %v4782
        %v4784 = vand.u32 %v3789, 4294901760
        %v4785 = vsub.f32 %v3789, %v4784
        %v4786 = vand.u32 %v4785, 4294901760
        %4787 = vmatpush.msra.mxu0 %v4786
        %v4788 = vand.u32 %v3788, 4294901760
        %v4789 = vsub.f32 %v3788, %v4788
        %v4790 = vand.u32 %v4789, 4294901760
        %4791 = vmatpush.msra.mxu0 %v4790
        %v4792 = vand.u32 %v3787, 4294901760
        %v4793 = vsub.f32 %v3787, %v4792
        %v4794 = vand.u32 %v4793, 4294901760
        %4795 = vmatpush.msra.mxu0 %v4794
        %v4796 = vand.u32 %v3786, 4294901760
        %v4797 = vsub.f32 %v3786, %v4796
        %v4798 = vand.u32 %v4797, 4294901760
        %4799 = vmatpush.msra.mxu0 %v4798
        %v4800 = vand.u32 %v1932, 4294901760
        %4801 = vmatmul.f32.gmra.mxu0 %v4800
        %v4802 = vpop.f32.mrf.mxu0
        %v4803 = vadd.f32 %v4734, %v4802
        %4804 = vdwg.mxu0
        %v4805 = vand.u32 %v3801, 4294901760
        %4806 = vmatpush.msra.mxu0 %v4805
        %v4807 = vand.u32 %v3800, 4294901760
        %4808 = vmatpush.msra.mxu0 %v4807
        %v4809 = vand.u32 %v3799, 4294901760
        %4810 = vmatpush.msra.mxu0 %v4809
        %v4811 = vand.u32 %v3798, 4294901760
        %4812 = vmatpush.msra.mxu0 %v4811
        %v4813 = vand.u32 %v3797, 4294901760
        %4814 = vmatpush.msra.mxu0 %v4813
        %v4815 = vand.u32 %v3796, 4294901760
        %4816 = vmatpush.msra.mxu0 %v4815
        %v4817 = vand.u32 %v3795, 4294901760
        %4818 = vmatpush.msra.mxu0 %v4817
        %v4819 = vand.u32 %v3794, 4294901760
        %4820 = vmatpush.msra.mxu0 %v4819
        %v4821 = vand.u32 %v3793, 4294901760
        %4822 = vmatpush.msra.mxu0 %v4821
        %v4823 = vand.u32 %v3792, 4294901760
        %4824 = vmatpush.msra.mxu0 %v4823
        %v4825 = vand.u32 %v3791, 4294901760
        %4826 = vmatpush.msra.mxu0 %v4825
        %v4827 = vand.u32 %v3790, 4294901760
        %4828 = vmatpush.msra.mxu0 %v4827
        %v4829 = vand.u32 %v3789, 4294901760
        %4830 = vmatpush.msra.mxu0 %v4829
        %v4831 = vand.u32 %v3788, 4294901760
        %4832 = vmatpush.msra.mxu0 %v4831
        %v4833 = vand.u32 %v3787, 4294901760
        %4834 = vmatpush.msra.mxu0 %v4833
        %v4835 = vand.u32 %v3786, 4294901760
        %4836 = vmatpush.msra.mxu0 %v4835
        %v4837 = vand.u32 %v1932, 4294901760
        %4838 = vmatmul.f32.gmra.mxu0 %v4837
        %v4839 = vpop.f32.mrf.mxu0
        %v4840 = vadd.f32 %v4803, %v4839
        %4841 = vdwg.mxu0
        %4842 = vmatpush.xpose.msra.mxu0 0.0
        %4843 = vmatpush.xpose.msra.mxu0 0.0
        %4844 = vmatpush.xpose.msra.mxu0 0.0
        %4845 = vmatpush.xpose.msra.mxu0 0.0
        %4846 = vmatpush.xpose.msra.mxu0 0.0
        %4847 = vmatpush.xpose.msra.mxu0 0.0
        %4848 = vmatpush.xpose.msra.mxu0 0.0
        %4849 = vmatpush.xpose.msra.mxu0 0.0
        %4850 = vmatpush.xpose.msra.mxu0 0.0
        %4851 = vmatpush.xpose.msra.mxu0 0.0
        %4852 = vmatpush.xpose.msra.mxu0 0.0
        %4853 = vmatpush.xpose.msra.mxu0 0.0
        %4854 = vmatpush.xpose.msra.mxu0 0.0
        %4855 = vmatpush.xpose.msra.mxu0 0.0
        %4856 = vmatpush.xpose.msra.mxu0 0.0
        %v4857 = vand.u32 %v4499, 4294901760
        %4858 = vmatpush.xpose.msra.mxu0 %v4857
        %v4859 = vand.u32 %v4158, 4294901760
        %v4860 = vsub.f32 %v4158, %v4859
        %v4861 = vand.u32 %v4860, 4294901760
        %v4862 = vsub.f32 %v4860, %v4861
        %v4863 = vand.u32 %v4862, 4294901760
        %4864 = vmatmul.f32.gmra.mxu0 %v4863
        %v4865 = vpop.f32.mrf.mxu0
        %v4866 = vadd.f32 0.0, %v4865
        %4867 = vdwg.mxu0
        %4868 = vmatpush.xpose.msra.mxu0 0.0
        %4869 = vmatpush.xpose.msra.mxu0 0.0
        %4870 = vmatpush.xpose.msra.mxu0 0.0
        %4871 = vmatpush.xpose.msra.mxu0 0.0
        %4872 = vmatpush.xpose.msra.mxu0 0.0
        %4873 = vmatpush.xpose.msra.mxu0 0.0
        %4874 = vmatpush.xpose.msra.mxu0 0.0
        %4875 = vmatpush.xpose.msra.mxu0 0.0
        %4876 = vmatpush.xpose.msra.mxu0 0.0
        %4877 = vmatpush.xpose.msra.mxu0 0.0
        %4878 = vmatpush.xpose.msra.mxu0 0.0
        %4879 = vmatpush.xpose.msra.mxu0 0.0
        %4880 = vmatpush.xpose.msra.mxu0 0.0
        %4881 = vmatpush.xpose.msra.mxu0 0.0
        %4882 = vmatpush.xpose.msra.mxu0 0.0
        %v4883 = vand.u32 %v4499, 4294901760
        %v4884 = vsub.f32 %v4499, %v4883
        %v4885 = vand.u32 %v4884, 4294901760
        %v4886 = vsub.f32 %v4884, %v4885
        %v4887 = vand.u32 %v4886, 4294901760
        %4888 = vmatpush.xpose.msra.mxu0 %v4887
        %v4889 = vand.u32 %v4158, 4294901760
        %4890 = vmatmul.f32.gmra.mxu0 %v4889
        %v4891 = vpop.f32.mrf.mxu0
        %v4892 = vadd.f32 %v4866, %v4891
        %4893 = vdwg.mxu0
        %4894 = vmatpush.xpose.msra.mxu0 0.0
        %4895 = vmatpush.xpose.msra.mxu0 0.0
        %4896 = vmatpush.xpose.msra.mxu0 0.0
        %4897 = vmatpush.xpose.msra.mxu0 0.0
        %4898 = vmatpush.xpose.msra.mxu0 0.0
        %4899 = vmatpush.xpose.msra.mxu0 0.0
        %4900 = vmatpush.xpose.msra.mxu0 0.0
        %4901 = vmatpush.xpose.msra.mxu0 0.0
        %4902 = vmatpush.xpose.msra.mxu0 0.0
        %4903 = vmatpush.xpose.msra.mxu0 0.0
        %4904 = vmatpush.xpose.msra.mxu0 0.0
        %4905 = vmatpush.xpose.msra.mxu0 0.0
        %4906 = vmatpush.xpose.msra.mxu0 0.0
        %4907 = vmatpush.xpose.msra.mxu0 0.0
        %4908 = vmatpush.xpose.msra.mxu0 0.0
        %v4909 = vand.u32 %v4499, 4294901760
        %v4910 = vsub.f32 %v4499, %v4909
        %4911 = vmatpush.xpose.msra.mxu0 %v4910
        %v4912 = vand.u32 %v4158, 4294901760
        %v4913 = vsub.f32 %v4158, %v4912
        %4914 = vmatmul.f32.gmra.mxu0 %v4913
        %v4915 = vpop.f32.mrf.mxu0
        %v4916 = vadd.f32 %v4892, %v4915
        %4917 = vdwg.mxu0
        %4918 = vmatpush.xpose.msra.mxu0 0.0
        %4919 = vmatpush.xpose.msra.mxu0 0.0
        %4920 = vmatpush.xpose.msra.mxu0 0.0
        %4921 = vmatpush.xpose.msra.mxu0 0.0
        %4922 = vmatpush.xpose.msra.mxu0 0.0
        %4923 = vmatpush.xpose.msra.mxu0 0.0
        %4924 = vmatpush.xpose.msra.mxu0 0.0
        %4925 = vmatpush.xpose.msra.mxu0 0.0
        %4926 = vmatpush.xpose.msra.mxu0 0.0
        %4927 = vmatpush.xpose.msra.mxu0 0.0
        %4928 = vmatpush.xpose.msra.mxu0 0.0
        %4929 = vmatpush.xpose.msra.mxu0 0.0
        %4930 = vmatpush.xpose.msra.mxu0 0.0
        %4931 = vmatpush.xpose.msra.mxu0 0.0
        %4932 = vmatpush.xpose.msra.mxu0 0.0
        %v4933 = vand.u32 %v4499, 4294901760
        %4934 = vmatpush.xpose.msra.mxu0 %v4933
        %v4935 = vand.u32 %v4158, 4294901760
        %v4936 = vsub.f32 %v4158, %v4935
        %v4937 = vand.u32 %v4936, 4294901760
        %4938 = vmatmul.f32.gmra.mxu0 %v4937
        %v4939 = vpop.f32.mrf.mxu0
        %v4940 = vadd.f32 %v4916, %v4939
        %4941 = vdwg.mxu0
        %4942 = vmatpush.xpose.msra.mxu0 0.0
        %4943 = vmatpush.xpose.msra.mxu0 0.0
        %4944 = vmatpush.xpose.msra.mxu0 0.0
        %4945 = vmatpush.xpose.msra.mxu0 0.0
        %4946 = vmatpush.xpose.msra.mxu0 0.0
        %4947 = vmatpush.xpose.msra.mxu0 0.0
        %4948 = vmatpush.xpose.msra.mxu0 0.0
        %4949 = vmatpush.xpose.msra.mxu0 0.0
        %4950 = vmatpush.xpose.msra.mxu0 0.0
        %4951 = vmatpush.xpose.msra.mxu0 0.0
        %4952 = vmatpush.xpose.msra.mxu0 0.0
        %4953 = vmatpush.xpose.msra.mxu0 0.0
        %4954 = vmatpush.xpose.msra.mxu0 0.0
        %4955 = vmatpush.xpose.msra.mxu0 0.0
        %4956 = vmatpush.xpose.msra.mxu0 0.0
        %v4957 = vand.u32 %v4499, 4294901760
        %v4958 = vsub.f32 %v4499, %v4957
        %v4959 = vand.u32 %v4958, 4294901760
        %4960 = vmatpush.xpose.msra.mxu0 %v4959
        %v4961 = vand.u32 %v4158, 4294901760
        %4962 = vmatmul.f32.gmra.mxu0 %v4961
        %v4963 = vpop.f32.mrf.mxu0
        %v4964 = vadd.f32 %v4940, %v4963
        %4965 = vdwg.mxu0
        %4966 = vmatpush.xpose.msra.mxu0 0.0
        %4967 = vmatpush.xpose.msra.mxu0 0.0
        %4968 = vmatpush.xpose.msra.mxu0 0.0
        %4969 = vmatpush.xpose.msra.mxu0 0.0
        %4970 = vmatpush.xpose.msra.mxu0 0.0
        %4971 = vmatpush.xpose.msra.mxu0 0.0
        %4972 = vmatpush.xpose.msra.mxu0 0.0
        %4973 = vmatpush.xpose.msra.mxu0 0.0
        %4974 = vmatpush.xpose.msra.mxu0 0.0
        %4975 = vmatpush.xpose.msra.mxu0 0.0
        %4976 = vmatpush.xpose.msra.mxu0 0.0
        %4977 = vmatpush.xpose.msra.mxu0 0.0
        %4978 = vmatpush.xpose.msra.mxu0 0.0
        %4979 = vmatpush.xpose.msra.mxu0 0.0
        %4980 = vmatpush.xpose.msra.mxu0 0.0
        %v4981 = vand.u32 %v4499, 4294901760
        %4982 = vmatpush.xpose.msra.mxu0 %v4981
        %v4983 = vand.u32 %v4158, 4294901760
        %4984 = vmatmul.f32.gmra.mxu0 %v4983
        %v4985 = vpop.f32.mrf.mxu0
        %v4986 = vadd.f32 %v4964, %v4985
        %4987 = vdwg.mxu0
        %v4988 = vmul.f32 %v4986, 0.088388346
        %v4989 = vsel %vm3205, %v4988, -inf
        %4990 = vmax.xlane.f32.xlu0 %v4989
        %v4991 = vpop.xlane.xlu0 %4990
        %v4992 = vsub.f32 %v4988, %v4991
        %v4993 = vmul.f32 %v4992, 1.442695
        %v4994 = vpow.pop %v4993
        %v4995 = vsel %vm3205, %v4994, 0.0
        %4996 = vadd.xlane.f32.xlu0 %v4995
        %v4997 = vpop.xlane.xlu0 %4996
        %v4998 = vrcp.pop %v4997
        %v4999 = vmul.f32 %v4997, %v4998
        %v5000 = vsub.f32 1.0, %v4999
        %v5001 = vmul.f32 %v4998, %v5000
        %v5002 = vadd.f32 %v4998, %v5001
        %vm5003 = vweird.f32 %v4997
        %vm5004 = vweird.f32 %v4998
        %vm5005 = vmor %vm5003, %vm5004
        %v5006 = vsel %vm5005, %v4998, %v5002
        %v5007 = vand.u32 2147483647, %v4997
        %vm5008 = vcmp.eq.f32.partialorder %v5007, 8.507059e+37
        %v5009 = vand.u32 %v4997, 2147483648
        %v5010 = vor.u32 1.1754944e-38, %v5009
        %v5011 = vsel %vm5008, %v5010, %v5006
        %v5012 = vmul.f32 %v4994, %v5011
        %v5014 = vsel %vm3205, %v5012, 0
        %5016 = vmatpush.msra.mxu0 0.0
        %5017 = vmatpush.msra.mxu0 0.0
        %5018 = vmatpush.msra.mxu0 0.0
        %5019 = vmatpush.msra.mxu0 0.0
        %5020 = vmatpush.msra.mxu0 0.0
        %5021 = vmatpush.msra.mxu0 0.0
        %5022 = vmatpush.msra.mxu0 0.0
        %5023 = vmatpush.msra.mxu0 0.0
        %5024 = vmatpush.msra.mxu0 0.0
        %5025 = vmatpush.msra.mxu0 0.0
        %5026 = vmatpush.msra.mxu0 0.0
        %5027 = vmatpush.msra.mxu0 0.0
        %5028 = vmatpush.msra.mxu0 0.0
        %5029 = vmatpush.msra.mxu0 0.0
        %5030 = vmatpush.msra.mxu0 0.0
        %v5031 = vand.u32 %v4840, 4294901760
        %5032 = vmatpush.msra.mxu0 %v5031
        %v5033 = vand.u32 %v5014, 4294901760
        %v5034 = vsub.f32 %v5014, %v5033
        %v5035 = vand.u32 %v5034, 4294901760
        %v5036 = vsub.f32 %v5034, %v5035
        %v5037 = vand.u32 %v5036, 4294901760
        %5038 = vmatmul.f32.gmra.mxu0 %v5037
        %v5039 = vpop.f32.mrf.mxu0
        %v5040 = vadd.f32 0.0, %v5039
        %5041 = vdwg.mxu0
        %5042 = vmatpush.msra.mxu0 0.0
        %5043 = vmatpush.msra.mxu0 0.0
        %5044 = vmatpush.msra.mxu0 0.0
        %5045 = vmatpush.msra.mxu0 0.0
        %5046 = vmatpush.msra.mxu0 0.0
        %5047 = vmatpush.msra.mxu0 0.0
        %5048 = vmatpush.msra.mxu0 0.0
        %5049 = vmatpush.msra.mxu0 0.0
        %5050 = vmatpush.msra.mxu0 0.0
        %5051 = vmatpush.msra.mxu0 0.0
        %5052 = vmatpush.msra.mxu0 0.0
        %5053 = vmatpush.msra.mxu0 0.0
        %5054 = vmatpush.msra.mxu0 0.0
        %5055 = vmatpush.msra.mxu0 0.0
        %5056 = vmatpush.msra.mxu0 0.0
        %v5057 = vand.u32 %v4840, 4294901760
        %v5058 = vsub.f32 %v4840, %v5057
        %v5059 = vand.u32 %v5058, 4294901760
        %v5060 = vsub.f32 %v5058, %v5059
        %v5061 = vand.u32 %v5060, 4294901760
        %5062 = vmatpush.msra.mxu0 %v5061
        %v5063 = vand.u32 %v5014, 4294901760
        %5064 = vmatmul.f32.gmra.mxu0 %v5063
        %v5065 = vpop.f32.mrf.mxu0
        %v5066 = vadd.f32 %v5040, %v5065
        %5067 = vdwg.mxu0
        %5068 = vmatpush.msra.mxu0 0.0
        %5069 = vmatpush.msra.mxu0 0.0
        %5070 = vmatpush.msra.mxu0 0.0
        %5071 = vmatpush.msra.mxu0 0.0
        %5072 = vmatpush.msra.mxu0 0.0
        %5073 = vmatpush.msra.mxu0 0.0
        %5074 = vmatpush.msra.mxu0 0.0
        %5075 = vmatpush.msra.mxu0 0.0
        %5076 = vmatpush.msra.mxu0 0.0
        %5077 = vmatpush.msra.mxu0 0.0
        %5078 = vmatpush.msra.mxu0 0.0
        %5079 = vmatpush.msra.mxu0 0.0
        %5080 = vmatpush.msra.mxu0 0.0
        %5081 = vmatpush.msra.mxu0 0.0
        %5082 = vmatpush.msra.mxu0 0.0
        %v5083 = vand.u32 %v4840, 4294901760
        %v5084 = vsub.f32 %v4840, %v5083
        %5085 = vmatpush.msra.mxu0 %v5084
        %v5086 = vand.u32 %v5014, 4294901760
        %v5087 = vsub.f32 %v5014, %v5086
        %5088 = vmatmul.f32.gmra.mxu0 %v5087
        %v5089 = vpop.f32.mrf.mxu0
        %v5090 = vadd.f32 %v5066, %v5089
        %5091 = vdwg.mxu0
        %5092 = vmatpush.msra.mxu0 0.0
        %5093 = vmatpush.msra.mxu0 0.0
        %5094 = vmatpush.msra.mxu0 0.0
        %5095 = vmatpush.msra.mxu0 0.0
        %5096 = vmatpush.msra.mxu0 0.0
        %5097 = vmatpush.msra.mxu0 0.0
        %5098 = vmatpush.msra.mxu0 0.0
        %5099 = vmatpush.msra.mxu0 0.0
        %5100 = vmatpush.msra.mxu0 0.0
        %5101 = vmatpush.msra.mxu0 0.0
        %5102 = vmatpush.msra.mxu0 0.0
        %5103 = vmatpush.msra.mxu0 0.0
        %5104 = vmatpush.msra.mxu0 0.0
        %5105 = vmatpush.msra.mxu0 0.0
        %5106 = vmatpush.msra.mxu0 0.0
        %v5107 = vand.u32 %v4840, 4294901760
        %5108 = vmatpush.msra.mxu0 %v5107
        %v5109 = vand.u32 %v5014, 4294901760
        %v5110 = vsub.f32 %v5014, %v5109
        %v5111 = vand.u32 %v5110, 4294901760
        %5112 = vmatmul.f32.gmra.mxu0 %v5111
        %v5113 = vpop.f32.mrf.mxu0
        %v5114 = vadd.f32 %v5090, %v5113
        %5115 = vdwg.mxu0
        %5116 = vmatpush.msra.mxu0 0.0
        %5117 = vmatpush.msra.mxu0 0.0
        %5118 = vmatpush.msra.mxu0 0.0
        %5119 = vmatpush.msra.mxu0 0.0
        %5120 = vmatpush.msra.mxu0 0.0
        %5121 = vmatpush.msra.mxu0 0.0
        %5122 = vmatpush.msra.mxu0 0.0
        %5123 = vmatpush.msra.mxu0 0.0
        %5124 = vmatpush.msra.mxu0 0.0
        %5125 = vmatpush.msra.mxu0 0.0
        %5126 = vmatpush.msra.mxu0 0.0
        %5127 = vmatpush.msra.mxu0 0.0
        %5128 = vmatpush.msra.mxu0 0.0
        %5129 = vmatpush.msra.mxu0 0.0
        %5130 = vmatpush.msra.mxu0 0.0
        %v5131 = vand.u32 %v4840, 4294901760
        %v5132 = vsub.f32 %v4840, %v5131
        %v5133 = vand.u32 %v5132, 4294901760
        %5134 = vmatpush.msra.mxu0 %v5133
        %v5135 = vand.u32 %v5014, 4294901760
        %5136 = vmatmul.f32.gmra.mxu0 %v5135
        %v5137 = vpop.f32.mrf.mxu0
        %v5138 = vadd.f32 %v5114, %v5137
        %5139 = vdwg.mxu0
        %5140 = vmatpush.msra.mxu0 0.0
        %5141 = vmatpush.msra.mxu0 0.0
        %5142 = vmatpush.msra.mxu0 0.0
        %5143 = vmatpush.msra.mxu0 0.0
        %5144 = vmatpush.msra.mxu0 0.0
        %5145 = vmatpush.msra.mxu0 0.0
        %5146 = vmatpush.msra.mxu0 0.0
        %5147 = vmatpush.msra.mxu0 0.0
        %5148 = vmatpush.msra.mxu0 0.0
        %5149 = vmatpush.msra.mxu0 0.0
        %5150 = vmatpush.msra.mxu0 0.0
        %5151 = vmatpush.msra.mxu0 0.0
        %5152 = vmatpush.msra.mxu0 0.0
        %5153 = vmatpush.msra.mxu0 0.0
        %5154 = vmatpush.msra.mxu0 0.0
        %v5155 = vand.u32 %v4840, 4294901760
        %5156 = vmatpush.msra.mxu0 %v5155
        %v5157 = vand.u32 %v5014, 4294901760
        %5158 = vmatmul.f32.gmra.mxu0 %v5157
        %v5159 = vpop.f32.mrf.mxu0
        %v5160 = vadd.f32 %v5138, %v5159
        %5161 = vdwg.mxu0
        %v5163 = vperm.slane %v3818, 0
        %v5165 = vand.u32 %v3817, 4294901760
        %5166 = vmatpush.msra.mxu0 %v5165
        %v5167 = vand.u32 %v3816, 4294901760
        %5168 = vmatpush.msra.mxu0 %v5167
        %v5169 = vand.u32 %v3815, 4294901760
        %5170 = vmatpush.msra.mxu0 %v5169
        %v5171 = vand.u32 %v3814, 4294901760
        %5172 = vmatpush.msra.mxu0 %v5171
        %v5173 = vand.u32 %v3813, 4294901760
        %5174 = vmatpush.msra.mxu0 %v5173
        %v5175 = vand.u32 %v3812, 4294901760
        %5176 = vmatpush.msra.mxu0 %v5175
        %v5177 = vand.u32 %v3811, 4294901760
        %5178 = vmatpush.msra.mxu0 %v5177
        %v5179 = vand.u32 %v3810, 4294901760
        %5180 = vmatpush.msra.mxu0 %v5179
        %v5181 = vand.u32 %v3809, 4294901760
        %5182 = vmatpush.msra.mxu0 %v5181
        %v5183 = vand.u32 %v3808, 4294901760
        %5184 = vmatpush.msra.mxu0 %v5183
        %v5185 = vand.u32 %v3807, 4294901760
        %5186 = vmatpush.msra.mxu0 %v5185
        %v5187 = vand.u32 %v3806, 4294901760
        %5188 = vmatpush.msra.mxu0 %v5187
        %v5189 = vand.u32 %v3805, 4294901760
        %5190 = vmatpush.msra.mxu0 %v5189
        %v5191 = vand.u32 %v3804, 4294901760
        %5192 = vmatpush.msra.mxu0 %v5191
        %v5193 = vand.u32 %v3803, 4294901760
        %5194 = vmatpush.msra.mxu0 %v5193
        %v5195 = vand.u32 %v3802, 4294901760
        %5196 = vmatpush.msra.mxu0 %v5195
        %v5197 = vand.u32 %v5160, 4294901760
        %v5198 = vsub.f32 %v5160, %v5197
        %v5199 = vand.u32 %v5198, 4294901760
        %v5200 = vsub.f32 %v5198, %v5199
        %v5201 = vand.u32 %v5200, 4294901760
        %5202 = vmatmul.f32.gmra.mxu0 %v5201
        %v5203 = vpop.f32.mrf.mxu0
        %v5204 = vadd.f32 %v5163, %v5203
        %5205 = vdwg.mxu0
        %v5206 = vand.u32 %v3817, 4294901760
        %v5207 = vsub.f32 %v3817, %v5206
        %v5208 = vand.u32 %v5207, 4294901760
        %v5209 = vsub.f32 %v5207, %v5208
        %v5210 = vand.u32 %v5209, 4294901760
        %5211 = vmatpush.msra.mxu0 %v5210
        %v5212 = vand.u32 %v3816, 4294901760
        %v5213 = vsub.f32 %v3816, %v5212
        %v5214 = vand.u32 %v5213, 4294901760
        %v5215 = vsub.f32 %v5213, %v5214
        %v5216 = vand.u32 %v5215, 4294901760
        %5217 = vmatpush.msra.mxu0 %v5216
        %v5218 = vand.u32 %v3815, 4294901760
        %v5219 = vsub.f32 %v3815, %v5218
        %v5220 = vand.u32 %v5219, 4294901760
        %v5221 = vsub.f32 %v5219, %v5220
        %v5222 = vand.u32 %v5221, 4294901760
        %5223 = vmatpush.msra.mxu0 %v5222
        %v5224 = vand.u32 %v3814, 4294901760
        %v5225 = vsub.f32 %v3814, %v5224
        %v5226 = vand.u32 %v5225, 4294901760
        %v5227 = vsub.f32 %v5225, %v5226
        %v5228 = vand.u32 %v5227, 4294901760
        %5229 = vmatpush.msra.mxu0 %v5228
        %v5230 = vand.u32 %v3813, 4294901760
        %v5231 = vsub.f32 %v3813, %v5230
        %v5232 = vand.u32 %v5231, 4294901760
        %v5233 = vsub.f32 %v5231, %v5232
        %v5234 = vand.u32 %v5233, 4294901760
        %5235 = vmatpush.msra.mxu0 %v5234
        %v5236 = vand.u32 %v3812, 4294901760
        %v5237 = vsub.f32 %v3812, %v5236
        %v5238 = vand.u32 %v5237, 4294901760
        %v5239 = vsub.f32 %v5237, %v5238
        %v5240 = vand.u32 %v5239, 4294901760
        %5241 = vmatpush.msra.mxu0 %v5240
        %v5242 = vand.u32 %v3811, 4294901760
        %v5243 = vsub.f32 %v3811, %v5242
        %v5244 = vand.u32 %v5243, 4294901760
        %v5245 = vsub.f32 %v5243, %v5244
        %v5246 = vand.u32 %v5245, 4294901760
        %5247 = vmatpush.msra.mxu0 %v5246
        %v5248 = vand.u32 %v3810, 4294901760
        %v5249 = vsub.f32 %v3810, %v5248
        %v5250 = vand.u32 %v5249, 4294901760
        %v5251 = vsub.f32 %v5249, %v5250
        %v5252 = vand.u32 %v5251, 4294901760
        %5253 = vmatpush.msra.mxu0 %v5252
        %v5254 = vand.u32 %v3809, 4294901760
        %v5255 = vsub.f32 %v3809, %v5254
        %v5256 = vand.u32 %v5255, 4294901760
        %v5257 = vsub.f32 %v5255, %v5256
        %v5258 = vand.u32 %v5257, 4294901760
        %5259 = vmatpush.msra.mxu0 %v5258
        %v5260 = vand.u32 %v3808, 4294901760
        %v5261 = vsub.f32 %v3808, %v5260
        %v5262 = vand.u32 %v5261, 4294901760
        %v5263 = vsub.f32 %v5261, %v5262
        %v5264 = vand.u32 %v5263, 4294901760
        %5265 = vmatpush.msra.mxu0 %v5264
        %v5266 = vand.u32 %v3807, 4294901760
        %v5267 = vsub.f32 %v3807, %v5266
        %v5268 = vand.u32 %v5267, 4294901760
        %v5269 = vsub.f32 %v5267, %v5268
        %v5270 = vand.u32 %v5269, 4294901760
        %5271 = vmatpush.msra.mxu0 %v5270
        %v5272 = vand.u32 %v3806, 4294901760
        %v5273 = vsub.f32 %v3806, %v5272
        %v5274 = vand.u32 %v5273, 4294901760
        %v5275 = vsub.f32 %v5273, %v5274
        %v5276 = vand.u32 %v5275, 4294901760
        %5277 = vmatpush.msra.mxu0 %v5276
        %v5278 = vand.u32 %v3805, 4294901760
        %v5279 = vsub.f32 %v3805, %v5278
        %v5280 = vand.u32 %v5279, 4294901760
        %v5281 = vsub.f32 %v5279, %v5280
        %v5282 = vand.u32 %v5281, 4294901760
        %5283 = vmatpush.msra.mxu0 %v5282
        %v5284 = vand.u32 %v3804, 4294901760
        %v5285 = vsub.f32 %v3804, %v5284
        %v5286 = vand.u32 %v5285, 4294901760
        %v5287 = vsub.f32 %v5285, %v5286
        %v5288 = vand.u32 %v5287, 4294901760
        %5289 = vmatpush.msra.mxu0 %v5288
        %v5290 = vand.u32 %v3803, 4294901760
        %v5291 = vsub.f32 %v3803, %v5290
        %v5292 = vand.u32 %v5291, 4294901760
        %v5293 = vsub.f32 %v5291, %v5292
        %v5294 = vand.u32 %v5293, 4294901760
        %5295 = vmatpush.msra.mxu0 %v5294
        %v5296 = vand.u32 %v3802, 4294901760
        %v5297 = vsub.f32 %v3802, %v5296
        %v5298 = vand.u32 %v5297, 4294901760
        %v5299 = vsub.f32 %v5297, %v5298
        %v5300 = vand.u32 %v5299, 4294901760
        %5301 = vmatpush.msra.mxu0 %v5300
        %v5302 = vand.u32 %v5160, 4294901760
        %5303 = vmatmul.f32.gmra.mxu0 %v5302
        %v5304 = vpop.f32.mrf.mxu0
        %v5305 = vadd.f32 %v5204, %v5304
        %5306 = vdwg.mxu0
        %v5307 = vand.u32 %v3817, 4294901760
        %v5308 = vsub.f32 %v3817, %v5307
        %5309 = vmatpush.msra.mxu0 %v5308
        %v5310 = vand.u32 %v3816, 4294901760
        %v5311 = vsub.f32 %v3816, %v5310
        %5312 = vmatpush.msra.mxu0 %v5311
        %v5313 = vand.u32 %v3815, 4294901760
        %v5314 = vsub.f32 %v3815, %v5313
        %5315 = vmatpush.msra.mxu0 %v5314
        %v5316 = vand.u32 %v3814, 4294901760
        %v5317 = vsub.f32 %v3814, %v5316
        %5318 = vmatpush.msra.mxu0 %v5317
        %v5319 = vand.u32 %v3813, 4294901760
        %v5320 = vsub.f32 %v3813, %v5319
        %5321 = vmatpush.msra.mxu0 %v5320
        %v5322 = vand.u32 %v3812, 4294901760
        %v5323 = vsub.f32 %v3812, %v5322
        %5324 = vmatpush.msra.mxu0 %v5323
        %v5325 = vand.u32 %v3811, 4294901760
        %v5326 = vsub.f32 %v3811, %v5325
        %5327 = vmatpush.msra.mxu0 %v5326
        %v5328 = vand.u32 %v3810, 4294901760
        %v5329 = vsub.f32 %v3810, %v5328
        %5330 = vmatpush.msra.mxu0 %v5329
        %v5331 = vand.u32 %v3809, 4294901760
        %v5332 = vsub.f32 %v3809, %v5331
        %5333 = vmatpush.msra.mxu0 %v5332
        %v5334 = vand.u32 %v3808, 4294901760
        %v5335 = vsub.f32 %v3808, %v5334
        %5336 = vmatpush.msra.mxu0 %v5335
        %v5337 = vand.u32 %v3807, 4294901760
        %v5338 = vsub.f32 %v3807, %v5337
        %5339 = vmatpush.msra.mxu0 %v5338
        %v5340 = vand.u32 %v3806, 4294901760
        %v5341 = vsub.f32 %v3806, %v5340
        %5342 = vmatpush.msra.mxu0 %v5341
        %v5343 = vand.u32 %v3805, 4294901760
        %v5344 = vsub.f32 %v3805, %v5343
        %5345 = vmatpush.msra.mxu0 %v5344
        %v5346 = vand.u32 %v3804, 4294901760
        %v5347 = vsub.f32 %v3804, %v5346
        %5348 = vmatpush.msra.mxu0 %v5347
        %v5349 = vand.u32 %v3803, 4294901760
        %v5350 = vsub.f32 %v3803, %v5349
        %5351 = vmatpush.msra.mxu0 %v5350
        %v5352 = vand.u32 %v3802, 4294901760
        %v5353 = vsub.f32 %v3802, %v5352
        %5354 = vmatpush.msra.mxu0 %v5353
        %v5355 = vand.u32 %v5160, 4294901760
        %v5356 = vsub.f32 %v5160, %v5355
        %5357 = vmatmul.f32.gmra.mxu0 %v5356
        %v5358 = vpop.f32.mrf.mxu0
        %v5359 = vadd.f32 %v5305, %v5358
        %5360 = vdwg.mxu0
        %v5361 = vand.u32 %v3817, 4294901760
        %5362 = vmatpush.msra.mxu0 %v5361
        %v5363 = vand.u32 %v3816, 4294901760
        %5364 = vmatpush.msra.mxu0 %v5363
        %v5365 = vand.u32 %v3815, 4294901760
        %5366 = vmatpush.msra.mxu0 %v5365
        %v5367 = vand.u32 %v3814, 4294901760
        %5368 = vmatpush.msra.mxu0 %v5367
        %v5369 = vand.u32 %v3813, 4294901760
        %5370 = vmatpush.msra.mxu0 %v5369
        %v5371 = vand.u32 %v3812, 4294901760
        %5372 = vmatpush.msra.mxu0 %v5371
        %v5373 = vand.u32 %v3811, 4294901760
        %5374 = vmatpush.msra.mxu0 %v5373
        %v5375 = vand.u32 %v3810, 4294901760
        %5376 = vmatpush.msra.mxu0 %v5375
        %v5377 = vand.u32 %v3809, 4294901760
        %5378 = vmatpush.msra.mxu0 %v5377
        %v5379 = vand.u32 %v3808, 4294901760
        %5380 = vmatpush.msra.mxu0 %v5379
        %v5381 = vand.u32 %v3807, 4294901760
        %5382 = vmatpush.msra.mxu0 %v5381
        %v5383 = vand.u32 %v3806, 4294901760
        %5384 = vmatpush.msra.mxu0 %v5383
        %v5385 = vand.u32 %v3805, 4294901760
        %5386 = vmatpush.msra.mxu0 %v5385
        %v5387 = vand.u32 %v3804, 4294901760
        %5388 = vmatpush.msra.mxu0 %v5387
        %v5389 = vand.u32 %v3803, 4294901760
        %5390 = vmatpush.msra.mxu0 %v5389
        %v5391 = vand.u32 %v3802, 4294901760
        %5392 = vmatpush.msra.mxu0 %v5391
        %v5393 = vand.u32 %v5160, 4294901760
        %v5394 = vsub.f32 %v5160, %v5393
        %v5395 = vand.u32 %v5394, 4294901760
        %5396 = vmatmul.f32.gmra.mxu0 %v5395
        %v5397 = vpop.f32.mrf.mxu0
        %v5398 = vadd.f32 %v5359, %v5397
        %5399 = vdwg.mxu0
        %v5400 = vand.u32 %v3817, 4294901760
        %v5401 = vsub.f32 %v3817, %v5400
        %v5402 = vand.u32 %v5401, 4294901760
        %5403 = vmatpush.msra.mxu0 %v5402
        %v5404 = vand.u32 %v3816, 4294901760
        %v5405 = vsub.f32 %v3816, %v5404
        %v5406 = vand.u32 %v5405, 4294901760
        %5407 = vmatpush.msra.mxu0 %v5406
        %v5408 = vand.u32 %v3815, 4294901760
        %v5409 = vsub.f32 %v3815, %v5408
        %v5410 = vand.u32 %v5409, 4294901760
        %5411 = vmatpush.msra.mxu0 %v5410
        %v5412 = vand.u32 %v3814, 4294901760
        %v5413 = vsub.f32 %v3814, %v5412
        %v5414 = vand.u32 %v5413, 4294901760
        %5415 = vmatpush.msra.mxu0 %v5414
        %v5416 = vand.u32 %v3813, 4294901760
        %v5417 = vsub.f32 %v3813, %v5416
        %v5418 = vand.u32 %v5417, 4294901760
        %5419 = vmatpush.msra.mxu0 %v5418
        %v5420 = vand.u32 %v3812, 4294901760
        %v5421 = vsub.f32 %v3812, %v5420
        %v5422 = vand.u32 %v5421, 4294901760
        %5423 = vmatpush.msra.mxu0 %v5422
        %v5424 = vand.u32 %v3811, 4294901760
        %v5425 = vsub.f32 %v3811, %v5424
        %v5426 = vand.u32 %v5425, 4294901760
        %5427 = vmatpush.msra.mxu0 %v5426
        %v5428 = vand.u32 %v3810, 4294901760
        %v5429 = vsub.f32 %v3810, %v5428
        %v5430 = vand.u32 %v5429, 4294901760
        %5431 = vmatpush.msra.mxu0 %v5430
        %v5432 = vand.u32 %v3809, 4294901760
        %v5433 = vsub.f32 %v3809, %v5432
        %v5434 = vand.u32 %v5433, 4294901760
        %5435 = vmatpush.msra.mxu0 %v5434
        %v5436 = vand.u32 %v3808, 4294901760
        %v5437 = vsub.f32 %v3808, %v5436
        %v5438 = vand.u32 %v5437, 4294901760
        %5439 = vmatpush.msra.mxu0 %v5438
        %v5440 = vand.u32 %v3807, 4294901760
        %v5441 = vsub.f32 %v3807, %v5440
        %v5442 = vand.u32 %v5441, 4294901760
        %5443 = vmatpush.msra.mxu0 %v5442
        %v5444 = vand.u32 %v3806, 4294901760
        %v5445 = vsub.f32 %v3806, %v5444
        %v5446 = vand.u32 %v5445, 4294901760
        %5447 = vmatpush.msra.mxu0 %v5446
        %v5448 = vand.u32 %v3805, 4294901760
        %v5449 = vsub.f32 %v3805, %v5448
        %v5450 = vand.u32 %v5449, 4294901760
        %5451 = vmatpush.msra.mxu0 %v5450
        %v5452 = vand.u32 %v3804, 4294901760
        %v5453 = vsub.f32 %v3804, %v5452
        %v5454 = vand.u32 %v5453, 4294901760
        %5455 = vmatpush.msra.mxu0 %v5454
        %v5456 = vand.u32 %v3803, 4294901760
        %v5457 = vsub.f32 %v3803, %v5456
        %v5458 = vand.u32 %v5457, 4294901760
        %5459 = vmatpush.msra.mxu0 %v5458
        %v5460 = vand.u32 %v3802, 4294901760
        %v5461 = vsub.f32 %v3802, %v5460
        %v5462 = vand.u32 %v5461, 4294901760
        %5463 = vmatpush.msra.mxu0 %v5462
        %v5464 = vand.u32 %v5160, 4294901760
        %5465 = vmatmul.f32.gmra.mxu0 %v5464
        %v5466 = vpop.f32.mrf.mxu0
        %v5467 = vadd.f32 %v5398, %v5466
        %5468 = vdwg.mxu0
        %v5469 = vand.u32 %v3817, 4294901760
        %5470 = vmatpush.msra.mxu0 %v5469
        %v5471 = vand.u32 %v3816, 4294901760
        %5472 = vmatpush.msra.mxu0 %v5471
        %v5473 = vand.u32 %v3815, 4294901760
        %5474 = vmatpush.msra.mxu0 %v5473
        %v5475 = vand.u32 %v3814, 4294901760
        %5476 = vmatpush.msra.mxu0 %v5475
        %v5477 = vand.u32 %v3813, 4294901760
        %5478 = vmatpush.msra.mxu0 %v5477
        %v5479 = vand.u32 %v3812, 4294901760
        %5480 = vmatpush.msra.mxu0 %v5479
        %v5481 = vand.u32 %v3811, 4294901760
        %5482 = vmatpush.msra.mxu0 %v5481
        %v5483 = vand.u32 %v3810, 4294901760
        %5484 = vmatpush.msra.mxu0 %v5483
        %v5485 = vand.u32 %v3809, 4294901760
        %5486 = vmatpush.msra.mxu0 %v5485
        %v5487 = vand.u32 %v3808, 4294901760
        %5488 = vmatpush.msra.mxu0 %v5487
        %v5489 = vand.u32 %v3807, 4294901760
        %5490 = vmatpush.msra.mxu0 %v5489
        %v5491 = vand.u32 %v3806, 4294901760
        %5492 = vmatpush.msra.mxu0 %v5491
        %v5493 = vand.u32 %v3805, 4294901760
        %5494 = vmatpush.msra.mxu0 %v5493
        %v5495 = vand.u32 %v3804, 4294901760
        %5496 = vmatpush.msra.mxu0 %v5495
        %v5497 = vand.u32 %v3803, 4294901760
        %5498 = vmatpush.msra.mxu0 %v5497
        %v5499 = vand.u32 %v3802, 4294901760
        %5500 = vmatpush.msra.mxu0 %v5499
        %v5501 = vand.u32 %v5160, 4294901760
        %5502 = vmatmul.f32.gmra.mxu0 %v5501
        %v5503 = vpop.f32.mrf.mxu0
        %v5504 = vadd.f32 %v5467, %v5503
        %5505 = vdwg.mxu0
        %v5506 = vadd.f32 %v3723, %v5504
        %v5507 = vld [vmem:[%s1561] sm:$0x1]
        %v5508 = vld [vmem:[%s1353] sm:$0x1]
        %5509 = vadd.xlane.f32.xlu0 %v5506
        %v5510 = vpop.xlane.xlu0 %5509
        %v5511 = vmul.f32 %v5510, %v1943
        %v5512 = vsub.f32 %v5506, %v5511
        %v5513 = vmul.f32 %v5512, %v5512
        %5514 = vadd.xlane.f32.xlu0 %v5513
        %v5515 = vpop.xlane.xlu0 %5514
        %v5516 = vmul.f32 %v5515, %v1943
        %v5517 = vadd.f32 %v5516, 1e-05
        %v5518 = vrsqrt.pop %v5517
        %v5519 = vmul.f32 %v5518, %v5517
        %v5520 = vmul.f32 %v5519, %v5518
        %v5521 = vmul.f32 0.5, %v5520
        %v5522 = vsub.f32 1.5, %v5521
        %v5523 = vmul.f32 %v5518, %v5522
        %vm5524 = vweird.f32 %v5517
        %vm5525 = vweird.f32 %v5518
        %vm5526 = vmor %vm5524, %vm5525
        %v5527 = vsel %vm5526, %v5518, %v5523
        %v5528 = vmul.f32 %v5512, %v5527
        %v5530 = vperm.slane %v5507, 0
        %v5532 = vmul.f32 %v5528, %v5530
        %v5534 = vperm.slane %v5508, 0
        %v5536 = vadd.f32 %v5532, %v5534
        %v5537 = vld [vmem:[%s1363] sm:$0xff]
        %v5538 = vld [vmem:[%s1363 + $0x8] sm:$0xff]
        %v5539 = vld [vmem:[%s1363 + $0x10] sm:$0xff]
        %v5540 = vld [vmem:[%s1363 + $0x18] sm:$0xff]
        %v5541 = vld [vmem:[%s1363 + $0x20] sm:$0xff]
        %v5542 = vld [vmem:[%s1363 + $0x28] sm:$0xff]
        %v5543 = vld [vmem:[%s1363 + $0x30] sm:$0xff]
        %v5544 = vld [vmem:[%s1363 + $0x38] sm:$0xff]
        %v5545 = vld [vmem:[%s1363 + $0x40] sm:$0xff]
        %v5546 = vld [vmem:[%s1363 + $0x48] sm:$0xff]
        %v5547 = vld [vmem:[%s1363 + $0x50] sm:$0xff]
        %v5548 = vld [vmem:[%s1363 + $0x58] sm:$0xff]
        %v5549 = vld [vmem:[%s1363 + $0x60] sm:$0xff]
        %v5550 = vld [vmem:[%s1363 + $0x68] sm:$0xff]
        %v5551 = vld [vmem:[%s1363 + $0x70] sm:$0xff]
        %v5552 = vld [vmem:[%s1363 + $0x78] sm:$0xff]
        %v5553 = vld [vmem:[%s1363 + $0x80] sm:$0xff]
        %v5554 = vld [vmem:[%s1363 + $0x88] sm:$0xff]
        %v5555 = vld [vmem:[%s1363 + $0x90] sm:$0xff]
        %v5556 = vld [vmem:[%s1363 + $0x98] sm:$0xff]
        %v5557 = vld [vmem:[%s1363 + $0xa0] sm:$0xff]
        %v5558 = vld [vmem:[%s1363 + $0xa8] sm:$0xff]
        %v5559 = vld [vmem:[%s1363 + $0xb0] sm:$0xff]
        %v5560 = vld [vmem:[%s1363 + $0xb8] sm:$0xff]
        %v5561 = vld [vmem:[%s1363 + $0xc0] sm:$0xff]
        %v5562 = vld [vmem:[%s1363 + $0xc8] sm:$0xff]
        %v5563 = vld [vmem:[%s1363 + $0xd0] sm:$0xff]
        %v5564 = vld [vmem:[%s1363 + $0xd8] sm:$0xff]
        %v5565 = vld [vmem:[%s1363 + $0xe0] sm:$0xff]
        %v5566 = vld [vmem:[%s1363 + $0xe8] sm:$0xff]
        %v5567 = vld [vmem:[%s1363 + $0xf0] sm:$0xff]
        %v5568 = vld [vmem:[%s1363 + $0xf8] sm:$0xff]
        %v5569 = vld [vmem:[%s1363 + $0x100] sm:$0xff]
        %v5570 = vld [vmem:[%s1363 + $0x108] sm:$0xff]
        %v5571 = vld [vmem:[%s1363 + $0x110] sm:$0xff]
        %v5572 = vld [vmem:[%s1363 + $0x118] sm:$0xff]
        %v5573 = vld [vmem:[%s1363 + $0x120] sm:$0xff]
        %v5574 = vld [vmem:[%s1363 + $0x128] sm:$0xff]
        %v5575 = vld [vmem:[%s1363 + $0x130] sm:$0xff]
        %v5576 = vld [vmem:[%s1363 + $0x138] sm:$0xff]
        %v5577 = vld [vmem:[%s1363 + $0x140] sm:$0xff]
        %v5578 = vld [vmem:[%s1363 + $0x148] sm:$0xff]
        %v5579 = vld [vmem:[%s1363 + $0x150] sm:$0xff]
        %v5580 = vld [vmem:[%s1363 + $0x158] sm:$0xff]
        %v5581 = vld [vmem:[%s1363 + $0x160] sm:$0xff]
        %v5582 = vld [vmem:[%s1363 + $0x168] sm:$0xff]
        %v5583 = vld [vmem:[%s1363 + $0x170] sm:$0xff]
        %v5584 = vld [vmem:[%s1363 + $0x178] sm:$0xff]
        %v5585 = vld [vmem:[%s1363 + $0x180] sm:$0xff]
        %v5586 = vld [vmem:[%s1363 + $0x188] sm:$0xff]
        %v5587 = vld [vmem:[%s1363 + $0x190] sm:$0xff]
        %v5588 = vld [vmem:[%s1363 + $0x198] sm:$0xff]
        %v5589 = vld [vmem:[%s1363 + $0x1a0] sm:$0xff]
        %v5590 = vld [vmem:[%s1363 + $0x1a8] sm:$0xff]
        %v5591 = vld [vmem:[%s1363 + $0x1b0] sm:$0xff]
        %v5592 = vld [vmem:[%s1363 + $0x1b8] sm:$0xff]
        %v5593 = vld [vmem:[%s1363 + $0x1c0] sm:$0xff]
        %v5594 = vld [vmem:[%s1363 + $0x1c8] sm:$0xff]
        %v5595 = vld [vmem:[%s1363 + $0x1d0] sm:$0xff]
        %v5596 = vld [vmem:[%s1363 + $0x1d8] sm:$0xff]
        %v5597 = vld [vmem:[%s1363 + $0x1e0] sm:$0xff]
        %v5598 = vld [vmem:[%s1363 + $0x1e8] sm:$0xff]
        %v5599 = vld [vmem:[%s1363 + $0x1f0] sm:$0xff]
        %v5600 = vld [vmem:[%s1363 + $0x1f8] sm:$0xff]
        %v5601 = vld [vmem:[%s1565] sm:$0xf]
        %v5603 = vperm.slane %v5601, 0
        %v5604 = vperm.slane %v5601, 1
        %v5605 = vperm.slane %v5601, 2
        %v5606 = vperm.slane %v5601, 3
        %v5611 = vand.u32 %v5597, 4294901760
        %5612 = vmatpush.msra.mxu0 %v5611
        %v5613 = vand.u32 %v5593, 4294901760
        %5614 = vmatpush.msra.mxu0 %v5613
        %v5615 = vand.u32 %v5589, 4294901760
        %5616 = vmatpush.msra.mxu0 %v5615
        %v5617 = vand.u32 %v5585, 4294901760
        %5618 = vmatpush.msra.mxu0 %v5617
        %v5619 = vand.u32 %v5581, 4294901760
        %5620 = vmatpush.msra.mxu0 %v5619
        %v5621 = vand.u32 %v5577, 4294901760
        %5622 = vmatpush.msra.mxu0 %v5621
        %v5623 = vand.u32 %v5573, 4294901760
        %5624 = vmatpush.msra.mxu0 %v5623
        %v5625 = vand.u32 %v5569, 4294901760
        %5626 = vmatpush.msra.mxu0 %v5625
        %v5627 = vand.u32 %v5565, 4294901760
        %5628 = vmatpush.msra.mxu0 %v5627
        %v5629 = vand.u32 %v5561, 4294901760
        %5630 = vmatpush.msra.mxu0 %v5629
        %v5631 = vand.u32 %v5557, 4294901760
        %5632 = vmatpush.msra.mxu0 %v5631
        %v5633 = vand.u32 %v5553, 4294901760
        %5634 = vmatpush.msra.mxu0 %v5633
        %v5635 = vand.u32 %v5549, 4294901760
        %5636 = vmatpush.msra.mxu0 %v5635
        %v5637 = vand.u32 %v5545, 4294901760
        %5638 = vmatpush.msra.mxu0 %v5637
        %v5639 = vand.u32 %v5541, 4294901760
        %5640 = vmatpush.msra.mxu0 %v5639
        %v5641 = vand.u32 %v5537, 4294901760
        %5642 = vmatpush.msra.mxu0 %v5641
        %v5643 = vand.u32 %v5536, 4294901760
        %v5644 = vsub.f32 %v5536, %v5643
        %v5645 = vand.u32 %v5644, 4294901760
        %v5646 = vsub.f32 %v5644, %v5645
        %v5647 = vand.u32 %v5646, 4294901760
        %5648 = vmatmul.f32.gmra.mxu0 %v5647
        %v5649 = vpop.f32.mrf.mxu0
        %v5650 = vadd.f32 %v5603, %v5649
        %5651 = vdwg.mxu0
        %v5652 = vand.u32 %v5597, 4294901760
        %v5653 = vsub.f32 %v5597, %v5652
        %v5654 = vand.u32 %v5653, 4294901760
        %v5655 = vsub.f32 %v5653, %v5654
        %v5656 = vand.u32 %v5655, 4294901760
        %5657 = vmatpush.msra.mxu0 %v5656
        %v5658 = vand.u32 %v5593, 4294901760
        %v5659 = vsub.f32 %v5593, %v5658
        %v5660 = vand.u32 %v5659, 4294901760
        %v5661 = vsub.f32 %v5659, %v5660
        %v5662 = vand.u32 %v5661, 4294901760
        %5663 = vmatpush.msra.mxu0 %v5662
        %v5664 = vand.u32 %v5589, 4294901760
        %v5665 = vsub.f32 %v5589, %v5664
        %v5666 = vand.u32 %v5665, 4294901760
        %v5667 = vsub.f32 %v5665, %v5666
        %v5668 = vand.u32 %v5667, 4294901760
        %5669 = vmatpush.msra.mxu0 %v5668
        %v5670 = vand.u32 %v5585, 4294901760
        %v5671 = vsub.f32 %v5585, %v5670
        %v5672 = vand.u32 %v5671, 4294901760
        %v5673 = vsub.f32 %v5671, %v5672
        %v5674 = vand.u32 %v5673, 4294901760
        %5675 = vmatpush.msra.mxu0 %v5674
        %v5676 = vand.u32 %v5581, 4294901760
        %v5677 = vsub.f32 %v5581, %v5676
        %v5678 = vand.u32 %v5677, 4294901760
        %v5679 = vsub.f32 %v5677, %v5678
        %v5680 = vand.u32 %v5679, 4294901760
        %5681 = vmatpush.msra.mxu0 %v5680
        %v5682 = vand.u32 %v5577, 4294901760
        %v5683 = vsub.f32 %v5577, %v5682
        %v5684 = vand.u32 %v5683, 4294901760
        %v5685 = vsub.f32 %v5683, %v5684
        %v5686 = vand.u32 %v5685, 4294901760
        %5687 = vmatpush.msra.mxu0 %v5686
        %v5688 = vand.u32 %v5573, 4294901760
        %v5689 = vsub.f32 %v5573, %v5688
        %v5690 = vand.u32 %v5689, 4294901760
        %v5691 = vsub.f32 %v5689, %v5690
        %v5692 = vand.u32 %v5691, 4294901760
        %5693 = vmatpush.msra.mxu0 %v5692
        %v5694 = vand.u32 %v5569, 4294901760
        %v5695 = vsub.f32 %v5569, %v5694
        %v5696 = vand.u32 %v5695, 4294901760
        %v5697 = vsub.f32 %v5695, %v5696
        %v5698 = vand.u32 %v5697, 4294901760
        %5699 = vmatpush.msra.mxu0 %v5698
        %v5700 = vand.u32 %v5565, 4294901760
        %v5701 = vsub.f32 %v5565, %v5700
        %v5702 = vand.u32 %v5701, 4294901760
        %v5703 = vsub.f32 %v5701, %v5702
        %v5704 = vand.u32 %v5703, 4294901760
        %5705 = vmatpush.msra.mxu0 %v5704
        %v5706 = vand.u32 %v5561, 4294901760
        %v5707 = vsub.f32 %v5561, %v5706
        %v5708 = vand.u32 %v5707, 4294901760
        %v5709 = vsub.f32 %v5707, %v5708
        %v5710 = vand.u32 %v5709, 4294901760
        %5711 = vmatpush.msra.mxu0 %v5710
        %v5712 = vand.u32 %v5557, 4294901760
        %v5713 = vsub.f32 %v5557, %v5712
        %v5714 = vand.u32 %v5713, 4294901760
        %v5715 = vsub.f32 %v5713, %v5714
        %v5716 = vand.u32 %v5715, 4294901760
        %5717 = vmatpush.msra.mxu0 %v5716
        %v5718 = vand.u32 %v5553, 4294901760
        %v5719 = vsub.f32 %v5553, %v5718
        %v5720 = vand.u32 %v5719, 4294901760
        %v5721 = vsub.f32 %v5719, %v5720
        %v5722 = vand.u32 %v5721, 4294901760
        %5723 = vmatpush.msra.mxu0 %v5722
        %v5724 = vand.u32 %v5549, 4294901760
        %v5725 = vsub.f32 %v5549, %v5724
        %v5726 = vand.u32 %v5725, 4294901760
        %v5727 = vsub.f32 %v5725, %v5726
        %v5728 = vand.u32 %v5727, 4294901760
        %5729 = vmatpush.msra.mxu0 %v5728
        %v5730 = vand.u32 %v5545, 4294901760
        %v5731 = vsub.f32 %v5545, %v5730
        %v5732 = vand.u32 %v5731, 4294901760
        %v5733 = vsub.f32 %v5731, %v5732
        %v5734 = vand.u32 %v5733, 4294901760
        %5735 = vmatpush.msra.mxu0 %v5734
        %v5736 = vand.u32 %v5541, 4294901760
        %v5737 = vsub.f32 %v5541, %v5736
        %v5738 = vand.u32 %v5737, 4294901760
        %v5739 = vsub.f32 %v5737, %v5738
        %v5740 = vand.u32 %v5739, 4294901760
        %5741 = vmatpush.msra.mxu0 %v5740
        %v5742 = vand.u32 %v5537, 4294901760
        %v5743 = vsub.f32 %v5537, %v5742
        %v5744 = vand.u32 %v5743, 4294901760
        %v5745 = vsub.f32 %v5743, %v5744
        %v5746 = vand.u32 %v5745, 4294901760
        %5747 = vmatpush.msra.mxu0 %v5746
        %v5748 = vand.u32 %v5536, 4294901760
        %5749 = vmatmul.f32.gmra.mxu0 %v5748
        %v5750 = vpop.f32.mrf.mxu0
        %v5751 = vadd.f32 %v5650, %v5750
        %5752 = vdwg.mxu0
        %v5753 = vand.u32 %v5597, 4294901760
        %v5754 = vsub.f32 %v5597, %v5753
        %5755 = vmatpush.msra.mxu0 %v5754
        %v5756 = vand.u32 %v5593, 4294901760
        %v5757 = vsub.f32 %v5593, %v5756
        %5758 = vmatpush.msra.mxu0 %v5757
        %v5759 = vand.u32 %v5589, 4294901760
        %v5760 = vsub.f32 %v5589, %v5759
        %5761 = vmatpush.msra.mxu0 %v5760
        %v5762 = vand.u32 %v5585, 4294901760
        %v5763 = vsub.f32 %v5585, %v5762
        %5764 = vmatpush.msra.mxu0 %v5763
        %v5765 = vand.u32 %v5581, 4294901760
        %v5766 = vsub.f32 %v5581, %v5765
        %5767 = vmatpush.msra.mxu0 %v5766
        %v5768 = vand.u32 %v5577, 4294901760
        %v5769 = vsub.f32 %v5577, %v5768
        %5770 = vmatpush.msra.mxu0 %v5769
        %v5771 = vand.u32 %v5573, 4294901760
        %v5772 = vsub.f32 %v5573, %v5771
        %5773 = vmatpush.msra.mxu0 %v5772
        %v5774 = vand.u32 %v5569, 4294901760
        %v5775 = vsub.f32 %v5569, %v5774
        %5776 = vmatpush.msra.mxu0 %v5775
        %v5777 = vand.u32 %v5565, 4294901760
        %v5778 = vsub.f32 %v5565, %v5777
        %5779 = vmatpush.msra.mxu0 %v5778
        %v5780 = vand.u32 %v5561, 4294901760
        %v5781 = vsub.f32 %v5561, %v5780
        %5782 = vmatpush.msra.mxu0 %v5781
        %v5783 = vand.u32 %v5557, 4294901760
        %v5784 = vsub.f32 %v5557, %v5783
        %5785 = vmatpush.msra.mxu0 %v5784
        %v5786 = vand.u32 %v5553, 4294901760
        %v5787 = vsub.f32 %v5553, %v5786
        %5788 = vmatpush.msra.mxu0 %v5787
        %v5789 = vand.u32 %v5549, 4294901760
        %v5790 = vsub.f32 %v5549, %v5789
        %5791 = vmatpush.msra.mxu0 %v5790
        %v5792 = vand.u32 %v5545, 4294901760
        %v5793 = vsub.f32 %v5545, %v5792
        %5794 = vmatpush.msra.mxu0 %v5793
        %v5795 = vand.u32 %v5541, 4294901760
        %v5796 = vsub.f32 %v5541, %v5795
        %5797 = vmatpush.msra.mxu0 %v5796
        %v5798 = vand.u32 %v5537, 4294901760
        %v5799 = vsub.f32 %v5537, %v5798
        %5800 = vmatpush.msra.mxu0 %v5799
        %v5801 = vand.u32 %v5536, 4294901760
        %v5802 = vsub.f32 %v5536, %v5801
        %5803 = vmatmul.f32.gmra.mxu0 %v5802
        %v5804 = vpop.f32.mrf.mxu0
        %v5805 = vadd.f32 %v5751, %v5804
        %5806 = vdwg.mxu0
        %v5807 = vand.u32 %v5597, 4294901760
        %5808 = vmatpush.msra.mxu0 %v5807
        %v5809 = vand.u32 %v5593, 4294901760
        %5810 = vmatpush.msra.mxu0 %v5809
        %v5811 = vand.u32 %v5589, 4294901760
        %5812 = vmatpush.msra.mxu0 %v5811
        %v5813 = vand.u32 %v5585, 4294901760
        %5814 = vmatpush.msra.mxu0 %v5813
        %v5815 = vand.u32 %v5581, 4294901760
        %5816 = vmatpush.msra.mxu0 %v5815
        %v5817 = vand.u32 %v5577, 4294901760
        %5818 = vmatpush.msra.mxu0 %v5817
        %v5819 = vand.u32 %v5573, 4294901760
        %5820 = vmatpush.msra.mxu0 %v5819
        %v5821 = vand.u32 %v5569, 4294901760
        %5822 = vmatpush.msra.mxu0 %v5821
        %v5823 = vand.u32 %v5565, 4294901760
        %5824 = vmatpush.msra.mxu0 %v5823
        %v5825 = vand.u32 %v5561, 4294901760
        %5826 = vmatpush.msra.mxu0 %v5825
        %v5827 = vand.u32 %v5557, 4294901760
        %5828 = vmatpush.msra.mxu0 %v5827
        %v5829 = vand.u32 %v5553, 4294901760
        %5830 = vmatpush.msra.mxu0 %v5829
        %v5831 = vand.u32 %v5549, 4294901760
        %5832 = vmatpush.msra.mxu0 %v5831
        %v5833 = vand.u32 %v5545, 4294901760
        %5834 = vmatpush.msra.mxu0 %v5833
        %v5835 = vand.u32 %v5541, 4294901760
        %5836 = vmatpush.msra.mxu0 %v5835
        %v5837 = vand.u32 %v5537, 4294901760
        %5838 = vmatpush.msra.mxu0 %v5837
        %v5839 = vand.u32 %v5536, 4294901760
        %v5840 = vsub.f32 %v5536, %v5839
        %v5841 = vand.u32 %v5840, 4294901760
        %5842 = vmatmul.f32.gmra.mxu0 %v5841
        %v5843 = vpop.f32.mrf.mxu0
        %v5844 = vadd.f32 %v5805, %v5843
        %5845 = vdwg.mxu0
        %v5846 = vand.u32 %v5597, 4294901760
        %v5847 = vsub.f32 %v5597, %v5846
        %v5848 = vand.u32 %v5847, 4294901760
        %5849 = vmatpush.msra.mxu0 %v5848
        %v5850 = vand.u32 %v5593, 4294901760
        %v5851 = vsub.f32 %v5593, %v5850
        %v5852 = vand.u32 %v5851, 4294901760
        %5853 = vmatpush.msra.mxu0 %v5852
        %v5854 = vand.u32 %v5589, 4294901760
        %v5855 = vsub.f32 %v5589, %v5854
        %v5856 = vand.u32 %v5855, 4294901760
        %5857 = vmatpush.msra.mxu0 %v5856
        %v5858 = vand.u32 %v5585, 4294901760
        %v5859 = vsub.f32 %v5585, %v5858
        %v5860 = vand.u32 %v5859, 4294901760
        %5861 = vmatpush.msra.mxu0 %v5860
        %v5862 = vand.u32 %v5581, 4294901760
        %v5863 = vsub.f32 %v5581, %v5862
        %v5864 = vand.u32 %v5863, 4294901760
        %5865 = vmatpush.msra.mxu0 %v5864
        %v5866 = vand.u32 %v5577, 4294901760
        %v5867 = vsub.f32 %v5577, %v5866
        %v5868 = vand.u32 %v5867, 4294901760
        %5869 = vmatpush.msra.mxu0 %v5868
        %v5870 = vand.u32 %v5573, 4294901760
        %v5871 = vsub.f32 %v5573, %v5870
        %v5872 = vand.u32 %v5871, 4294901760
        %5873 = vmatpush.msra.mxu0 %v5872
        %v5874 = vand.u32 %v5569, 4294901760
        %v5875 = vsub.f32 %v5569, %v5874
        %v5876 = vand.u32 %v5875, 4294901760
        %5877 = vmatpush.msra.mxu0 %v5876
        %v5878 = vand.u32 %v5565, 4294901760
        %v5879 = vsub.f32 %v5565, %v5878
        %v5880 = vand.u32 %v5879, 4294901760
        %5881 = vmatpush.msra.mxu0 %v5880
        %v5882 = vand.u32 %v5561, 4294901760
        %v5883 = vsub.f32 %v5561, %v5882
        %v5884 = vand.u32 %v5883, 4294901760
        %5885 = vmatpush.msra.mxu0 %v5884
        %v5886 = vand.u32 %v5557, 4294901760
        %v5887 = vsub.f32 %v5557, %v5886
        %v5888 = vand.u32 %v5887, 4294901760
        %5889 = vmatpush.msra.mxu0 %v5888
        %v5890 = vand.u32 %v5553, 4294901760
        %v5891 = vsub.f32 %v5553, %v5890
        %v5892 = vand.u32 %v5891, 4294901760
        %5893 = vmatpush.msra.mxu0 %v5892
        %v5894 = vand.u32 %v5549, 4294901760
        %v5895 = vsub.f32 %v5549, %v5894
        %v5896 = vand.u32 %v5895, 4294901760
        %5897 = vmatpush.msra.mxu0 %v5896
        %v5898 = vand.u32 %v5545, 4294901760
        %v5899 = vsub.f32 %v5545, %v5898
        %v5900 = vand.u32 %v5899, 4294901760
        %5901 = vmatpush.msra.mxu0 %v5900
        %v5902 = vand.u32 %v5541, 4294901760
        %v5903 = vsub.f32 %v5541, %v5902
        %v5904 = vand.u32 %v5903, 4294901760
        %5905 = vmatpush.msra.mxu0 %v5904
        %v5906 = vand.u32 %v5537, 4294901760
        %v5907 = vsub.f32 %v5537, %v5906
        %v5908 = vand.u32 %v5907, 4294901760
        %5909 = vmatpush.msra.mxu0 %v5908
        %v5910 = vand.u32 %v5536, 4294901760
        %5911 = vmatmul.f32.gmra.mxu0 %v5910
        %v5912 = vpop.f32.mrf.mxu0
        %v5913 = vadd.f32 %v5844, %v5912
        %5914 = vdwg.mxu0
        %v5915 = vand.u32 %v5597, 4294901760
        %5916 = vmatpush.msra.mxu0 %v5915
        %v5917 = vand.u32 %v5593, 4294901760
        %5918 = vmatpush.msra.mxu0 %v5917
        %v5919 = vand.u32 %v5589, 4294901760
        %5920 = vmatpush.msra.mxu0 %v5919
        %v5921 = vand.u32 %v5585, 4294901760
        %5922 = vmatpush.msra.mxu0 %v5921
        %v5923 = vand.u32 %v5581, 4294901760
        %5924 = vmatpush.msra.mxu0 %v5923
        %v5925 = vand.u32 %v5577, 4294901760
        %5926 = vmatpush.msra.mxu0 %v5925
        %v5927 = vand.u32 %v5573, 4294901760
        %5928 = vmatpush.msra.mxu0 %v5927
        %v5929 = vand.u32 %v5569, 4294901760
        %5930 = vmatpush.msra.mxu0 %v5929
        %v5931 = vand.u32 %v5565, 4294901760
        %5932 = vmatpush.msra.mxu0 %v5931
        %v5933 = vand.u32 %v5561, 4294901760
        %5934 = vmatpush.msra.mxu0 %v5933
        %v5935 = vand.u32 %v5557, 4294901760
        %5936 = vmatpush.msra.mxu0 %v5935
        %v5937 = vand.u32 %v5553, 4294901760
        %5938 = vmatpush.msra.mxu0 %v5937
        %v5939 = vand.u32 %v5549, 4294901760
        %5940 = vmatpush.msra.mxu0 %v5939
        %v5941 = vand.u32 %v5545, 4294901760
        %5942 = vmatpush.msra.mxu0 %v5941
        %v5943 = vand.u32 %v5541, 4294901760
        %5944 = vmatpush.msra.mxu0 %v5943
        %v5945 = vand.u32 %v5537, 4294901760
        %5946 = vmatpush.msra.mxu0 %v5945
        %v5947 = vand.u32 %v5536, 4294901760
        %5948 = vmatmul.f32.gmra.mxu0 %v5947
        %v5949 = vpop.f32.mrf.mxu0
        %v5950 = vadd.f32 %v5913, %v5949
        %5951 = vdwg.mxu0
        %v5952 = vand.u32 %v5598, 4294901760
        %5953 = vmatpush.msra.mxu0 %v5952
        %v5954 = vand.u32 %v5594, 4294901760
        %5955 = vmatpush.msra.mxu0 %v5954
        %v5956 = vand.u32 %v5590, 4294901760
        %5957 = vmatpush.msra.mxu0 %v5956
        %v5958 = vand.u32 %v5586, 4294901760
        %5959 = vmatpush.msra.mxu0 %v5958
        %v5960 = vand.u32 %v5582, 4294901760
        %5961 = vmatpush.msra.mxu0 %v5960
        %v5962 = vand.u32 %v5578, 4294901760
        %5963 = vmatpush.msra.mxu0 %v5962
        %v5964 = vand.u32 %v5574, 4294901760
        %5965 = vmatpush.msra.mxu0 %v5964
        %v5966 = vand.u32 %v5570, 4294901760
        %5967 = vmatpush.msra.mxu0 %v5966
        %v5968 = vand.u32 %v5566, 4294901760
        %5969 = vmatpush.msra.mxu0 %v5968
        %v5970 = vand.u32 %v5562, 4294901760
        %5971 = vmatpush.msra.mxu0 %v5970
        %v5972 = vand.u32 %v5558, 4294901760
        %5973 = vmatpush.msra.mxu0 %v5972
        %v5974 = vand.u32 %v5554, 4294901760
        %5975 = vmatpush.msra.mxu0 %v5974
        %v5976 = vand.u32 %v5550, 4294901760
        %5977 = vmatpush.msra.mxu0 %v5976
        %v5978 = vand.u32 %v5546, 4294901760
        %5979 = vmatpush.msra.mxu0 %v5978
        %v5980 = vand.u32 %v5542, 4294901760
        %5981 = vmatpush.msra.mxu0 %v5980
        %v5982 = vand.u32 %v5538, 4294901760
        %5983 = vmatpush.msra.mxu0 %v5982
        %v5984 = vand.u32 %v5536, 4294901760
        %v5985 = vsub.f32 %v5536, %v5984
        %v5986 = vand.u32 %v5985, 4294901760
        %v5987 = vsub.f32 %v5985, %v5986
        %v5988 = vand.u32 %v5987, 4294901760
        %5989 = vmatmul.f32.gmra.mxu0 %v5988
        %v5990 = vpop.f32.mrf.mxu0
        %v5991 = vadd.f32 %v5604, %v5990
        %5992 = vdwg.mxu0
        %v5993 = vand.u32 %v5598, 4294901760
        %v5994 = vsub.f32 %v5598, %v5993
        %v5995 = vand.u32 %v5994, 4294901760
        %v5996 = vsub.f32 %v5994, %v5995
        %v5997 = vand.u32 %v5996, 4294901760
        %5998 = vmatpush.msra.mxu0 %v5997
        %v5999 = vand.u32 %v5594, 4294901760
        %v6000 = vsub.f32 %v5594, %v5999
        %v6001 = vand.u32 %v6000, 4294901760
        %v6002 = vsub.f32 %v6000, %v6001
        %v6003 = vand.u32 %v6002, 4294901760
        %6004 = vmatpush.msra.mxu0 %v6003
        %v6005 = vand.u32 %v5590, 4294901760
        %v6006 = vsub.f32 %v5590, %v6005
        %v6007 = vand.u32 %v6006, 4294901760
        %v6008 = vsub.f32 %v6006, %v6007
        %v6009 = vand.u32 %v6008, 4294901760
        %6010 = vmatpush.msra.mxu0 %v6009
        %v6011 = vand.u32 %v5586, 4294901760
        %v6012 = vsub.f32 %v5586, %v6011
        %v6013 = vand.u32 %v6012, 4294901760
        %v6014 = vsub.f32 %v6012, %v6013
        %v6015 = vand.u32 %v6014, 4294901760
        %6016 = vmatpush.msra.mxu0 %v6015
        %v6017 = vand.u32 %v5582, 4294901760
        %v6018 = vsub.f32 %v5582, %v6017
        %v6019 = vand.u32 %v6018, 4294901760
        %v6020 = vsub.f32 %v6018, %v6019
        %v6021 = vand.u32 %v6020, 4294901760
        %6022 = vmatpush.msra.mxu0 %v6021
        %v6023 = vand.u32 %v5578, 4294901760
        %v6024 = vsub.f32 %v5578, %v6023
        %v6025 = vand.u32 %v6024, 4294901760
        %v6026 = vsub.f32 %v6024, %v6025
        %v6027 = vand.u32 %v6026, 4294901760
        %6028 = vmatpush.msra.mxu0 %v6027
        %v6029 = vand.u32 %v5574, 4294901760
        %v6030 = vsub.f32 %v5574, %v6029
        %v6031 = vand.u32 %v6030, 4294901760
        %v6032 = vsub.f32 %v6030, %v6031
        %v6033 = vand.u32 %v6032, 4294901760
        %6034 = vmatpush.msra.mxu0 %v6033
        %v6035 = vand.u32 %v5570, 4294901760
        %v6036 = vsub.f32 %v5570, %v6035
        %v6037 = vand.u32 %v6036, 4294901760
        %v6038 = vsub.f32 %v6036, %v6037
        %v6039 = vand.u32 %v6038, 4294901760
        %6040 = vmatpush.msra.mxu0 %v6039
        %v6041 = vand.u32 %v5566, 4294901760
        %v6042 = vsub.f32 %v5566, %v6041
        %v6043 = vand.u32 %v6042, 4294901760
        %v6044 = vsub.f32 %v6042, %v6043
        %v6045 = vand.u32 %v6044, 4294901760
        %6046 = vmatpush.msra.mxu0 %v6045
        %v6047 = vand.u32 %v5562, 4294901760
        %v6048 = vsub.f32 %v5562, %v6047
        %v6049 = vand.u32 %v6048, 4294901760
        %v6050 = vsub.f32 %v6048, %v6049
        %v6051 = vand.u32 %v6050, 4294901760
        %6052 = vmatpush.msra.mxu0 %v6051
        %v6053 = vand.u32 %v5558, 4294901760
        %v6054 = vsub.f32 %v5558, %v6053
        %v6055 = vand.u32 %v6054, 4294901760
        %v6056 = vsub.f32 %v6054, %v6055
        %v6057 = vand.u32 %v6056, 4294901760
        %6058 = vmatpush.msra.mxu0 %v6057
        %v6059 = vand.u32 %v5554, 4294901760
        %v6060 = vsub.f32 %v5554, %v6059
        %v6061 = vand.u32 %v6060, 4294901760
        %v6062 = vsub.f32 %v6060, %v6061
        %v6063 = vand.u32 %v6062, 4294901760
        %6064 = vmatpush.msra.mxu0 %v6063
        %v6065 = vand.u32 %v5550, 4294901760
        %v6066 = vsub.f32 %v5550, %v6065
        %v6067 = vand.u32 %v6066, 4294901760
        %v6068 = vsub.f32 %v6066, %v6067
        %v6069 = vand.u32 %v6068, 4294901760
        %6070 = vmatpush.msra.mxu0 %v6069
        %v6071 = vand.u32 %v5546, 4294901760
        %v6072 = vsub.f32 %v5546, %v6071
        %v6073 = vand.u32 %v6072, 4294901760
        %v6074 = vsub.f32 %v6072, %v6073
        %v6075 = vand.u32 %v6074, 4294901760
        %6076 = vmatpush.msra.mxu0 %v6075
        %v6077 = vand.u32 %v5542, 4294901760
        %v6078 = vsub.f32 %v5542, %v6077
        %v6079 = vand.u32 %v6078, 4294901760
        %v6080 = vsub.f32 %v6078, %v6079
        %v6081 = vand.u32 %v6080, 4294901760
        %6082 = vmatpush.msra.mxu0 %v6081
        %v6083 = vand.u32 %v5538, 4294901760
        %v6084 = vsub.f32 %v5538, %v6083
        %v6085 = vand.u32 %v6084, 4294901760
        %v6086 = vsub.f32 %v6084, %v6085
        %v6087 = vand.u32 %v6086, 4294901760
        %6088 = vmatpush.msra.mxu0 %v6087
        %v6089 = vand.u32 %v5536, 4294901760
        %6090 = vmatmul.f32.gmra.mxu0 %v6089
        %v6091 = vpop.f32.mrf.mxu0
        %v6092 = vadd.f32 %v5991, %v6091
        %6093 = vdwg.mxu0
        %v6094 = vand.u32 %v5598, 4294901760
        %v6095 = vsub.f32 %v5598, %v6094
        %6096 = vmatpush.msra.mxu0 %v6095
        %v6097 = vand.u32 %v5594, 4294901760
        %v6098 = vsub.f32 %v5594, %v6097
        %6099 = vmatpush.msra.mxu0 %v6098
        %v6100 = vand.u32 %v5590, 4294901760
        %v6101 = vsub.f32 %v5590, %v6100
        %6102 = vmatpush.msra.mxu0 %v6101
        %v6103 = vand.u32 %v5586, 4294901760
        %v6104 = vsub.f32 %v5586, %v6103
        %6105 = vmatpush.msra.mxu0 %v6104
        %v6106 = vand.u32 %v5582, 4294901760
        %v6107 = vsub.f32 %v5582, %v6106
        %6108 = vmatpush.msra.mxu0 %v6107
        %v6109 = vand.u32 %v5578, 4294901760
        %v6110 = vsub.f32 %v5578, %v6109
        %6111 = vmatpush.msra.mxu0 %v6110
        %v6112 = vand.u32 %v5574, 4294901760
        %v6113 = vsub.f32 %v5574, %v6112
        %6114 = vmatpush.msra.mxu0 %v6113
        %v6115 = vand.u32 %v5570, 4294901760
        %v6116 = vsub.f32 %v5570, %v6115
        %6117 = vmatpush.msra.mxu0 %v6116
        %v6118 = vand.u32 %v5566, 4294901760
        %v6119 = vsub.f32 %v5566, %v6118
        %6120 = vmatpush.msra.mxu0 %v6119
        %v6121 = vand.u32 %v5562, 4294901760
        %v6122 = vsub.f32 %v5562, %v6121
        %6123 = vmatpush.msra.mxu0 %v6122
        %v6124 = vand.u32 %v5558, 4294901760
        %v6125 = vsub.f32 %v5558, %v6124
        %6126 = vmatpush.msra.mxu0 %v6125
        %v6127 = vand.u32 %v5554, 4294901760
        %v6128 = vsub.f32 %v5554, %v6127
        %6129 = vmatpush.msra.mxu0 %v6128
        %v6130 = vand.u32 %v5550, 4294901760
        %v6131 = vsub.f32 %v5550, %v6130
        %6132 = vmatpush.msra.mxu0 %v6131
        %v6133 = vand.u32 %v5546, 4294901760
        %v6134 = vsub.f32 %v5546, %v6133
        %6135 = vmatpush.msra.mxu0 %v6134
        %v6136 = vand.u32 %v5542, 4294901760
        %v6137 = vsub.f32 %v5542, %v6136
        %6138 = vmatpush.msra.mxu0 %v6137
        %v6139 = vand.u32 %v5538, 4294901760
        %v6140 = vsub.f32 %v5538, %v6139
        %6141 = vmatpush.msra.mxu0 %v6140
        %v6142 = vand.u32 %v5536, 4294901760
        %v6143 = vsub.f32 %v5536, %v6142
        %6144 = vmatmul.f32.gmra.mxu0 %v6143
        %v6145 = vpop.f32.mrf.mxu0
        %v6146 = vadd.f32 %v6092, %v6145
        %6147 = vdwg.mxu0
        %v6148 = vand.u32 %v5598, 4294901760
        %6149 = vmatpush.msra.mxu0 %v6148
        %v6150 = vand.u32 %v5594, 4294901760
        %6151 = vmatpush.msra.mxu0 %v6150
        %v6152 = vand.u32 %v5590, 4294901760
        %6153 = vmatpush.msra.mxu0 %v6152
        %v6154 = vand.u32 %v5586, 4294901760
        %6155 = vmatpush.msra.mxu0 %v6154
        %v6156 = vand.u32 %v5582, 4294901760
        %6157 = vmatpush.msra.mxu0 %v6156
        %v6158 = vand.u32 %v5578, 4294901760
        %6159 = vmatpush.msra.mxu0 %v6158
        %v6160 = vand.u32 %v5574, 4294901760
        %6161 = vmatpush.msra.mxu0 %v6160
        %v6162 = vand.u32 %v5570, 4294901760
        %6163 = vmatpush.msra.mxu0 %v6162
        %v6164 = vand.u32 %v5566, 4294901760
        %6165 = vmatpush.msra.mxu0 %v6164
        %v6166 = vand.u32 %v5562, 4294901760
        %6167 = vmatpush.msra.mxu0 %v6166
        %v6168 = vand.u32 %v5558, 4294901760
        %6169 = vmatpush.msra.mxu0 %v6168
        %v6170 = vand.u32 %v5554, 4294901760
        %6171 = vmatpush.msra.mxu0 %v6170
        %v6172 = vand.u32 %v5550, 4294901760
        %6173 = vmatpush.msra.mxu0 %v6172
        %v6174 = vand.u32 %v5546, 4294901760
        %6175 = vmatpush.msra.mxu0 %v6174
        %v6176 = vand.u32 %v5542, 4294901760
        %6177 = vmatpush.msra.mxu0 %v6176
        %v6178 = vand.u32 %v5538, 4294901760
        %6179 = vmatpush.msra.mxu0 %v6178
        %v6180 = vand.u32 %v5536, 4294901760
        %v6181 = vsub.f32 %v5536, %v6180
        %v6182 = vand.u32 %v6181, 4294901760
        %6183 = vmatmul.f32.gmra.mxu0 %v6182
        %v6184 = vpop.f32.mrf.mxu0
        %v6185 = vadd.f32 %v6146, %v6184
        %6186 = vdwg.mxu0
        %v6187 = vand.u32 %v5598, 4294901760
        %v6188 = vsub.f32 %v5598, %v6187
        %v6189 = vand.u32 %v6188, 4294901760
        %6190 = vmatpush.msra.mxu0 %v6189
        %v6191 = vand.u32 %v5594, 4294901760
        %v6192 = vsub.f32 %v5594, %v6191
        %v6193 = vand.u32 %v6192, 4294901760
        %6194 = vmatpush.msra.mxu0 %v6193
        %v6195 = vand.u32 %v5590, 4294901760
        %v6196 = vsub.f32 %v5590, %v6195
        %v6197 = vand.u32 %v6196, 4294901760
        %6198 = vmatpush.msra.mxu0 %v6197
        %v6199 = vand.u32 %v5586, 4294901760
        %v6200 = vsub.f32 %v5586, %v6199
        %v6201 = vand.u32 %v6200, 4294901760
        %6202 = vmatpush.msra.mxu0 %v6201
        %v6203 = vand.u32 %v5582, 4294901760
        %v6204 = vsub.f32 %v5582, %v6203
        %v6205 = vand.u32 %v6204, 4294901760
        %6206 = vmatpush.msra.mxu0 %v6205
        %v6207 = vand.u32 %v5578, 4294901760
        %v6208 = vsub.f32 %v5578, %v6207
        %v6209 = vand.u32 %v6208, 4294901760
        %6210 = vmatpush.msra.mxu0 %v6209
        %v6211 = vand.u32 %v5574, 4294901760
        %v6212 = vsub.f32 %v5574, %v6211
        %v6213 = vand.u32 %v6212, 4294901760
        %6214 = vmatpush.msra.mxu0 %v6213
        %v6215 = vand.u32 %v5570, 4294901760
        %v6216 = vsub.f32 %v5570, %v6215
        %v6217 = vand.u32 %v6216, 4294901760
        %6218 = vmatpush.msra.mxu0 %v6217
        %v6219 = vand.u32 %v5566, 4294901760
        %v6220 = vsub.f32 %v5566, %v6219
        %v6221 = vand.u32 %v6220, 4294901760
        %6222 = vmatpush.msra.mxu0 %v6221
        %v6223 = vand.u32 %v5562, 4294901760
        %v6224 = vsub.f32 %v5562, %v6223
        %v6225 = vand.u32 %v6224, 4294901760
        %6226 = vmatpush.msra.mxu0 %v6225
        %v6227 = vand.u32 %v5558, 4294901760
        %v6228 = vsub.f32 %v5558, %v6227
        %v6229 = vand.u32 %v6228, 4294901760
        %6230 = vmatpush.msra.mxu0 %v6229
        %v6231 = vand.u32 %v5554, 4294901760
        %v6232 = vsub.f32 %v5554, %v6231
        %v6233 = vand.u32 %v6232, 4294901760
        %6234 = vmatpush.msra.mxu0 %v6233
        %v6235 = vand.u32 %v5550, 4294901760
        %v6236 = vsub.f32 %v5550, %v6235
        %v6237 = vand.u32 %v6236, 4294901760
        %6238 = vmatpush.msra.mxu0 %v6237
        %v6239 = vand.u32 %v5546, 4294901760
        %v6240 = vsub.f32 %v5546, %v6239
        %v6241 = vand.u32 %v6240, 4294901760
        %6242 = vmatpush.msra.mxu0 %v6241
        %v6243 = vand.u32 %v5542, 4294901760
        %v6244 = vsub.f32 %v5542, %v6243
        %v6245 = vand.u32 %v6244, 4294901760
        %6246 = vmatpush.msra.mxu0 %v6245
        %v6247 = vand.u32 %v5538, 4294901760
        %v6248 = vsub.f32 %v5538, %v6247
        %v6249 = vand.u32 %v6248, 4294901760
        %6250 = vmatpush.msra.mxu0 %v6249
        %v6251 = vand.u32 %v5536, 4294901760
        %6252 = vmatmul.f32.gmra.mxu0 %v6251
        %v6253 = vpop.f32.mrf.mxu0
        %v6254 = vadd.f32 %v6185, %v6253
        %6255 = vdwg.mxu0
        %v6256 = vand.u32 %v5598, 4294901760
        %6257 = vmatpush.msra.mxu0 %v6256
        %v6258 = vand.u32 %v5594, 4294901760
        %6259 = vmatpush.msra.mxu0 %v6258
        %v6260 = vand.u32 %v5590, 4294901760
        %6261 = vmatpush.msra.mxu0 %v6260
        %v6262 = vand.u32 %v5586, 4294901760
        %6263 = vmatpush.msra.mxu0 %v6262
        %v6264 = vand.u32 %v5582, 4294901760
        %6265 = vmatpush.msra.mxu0 %v6264
        %v6266 = vand.u32 %v5578, 4294901760
        %6267 = vmatpush.msra.mxu0 %v6266
        %v6268 = vand.u32 %v5574, 4294901760
        %6269 = vmatpush.msra.mxu0 %v6268
        %v6270 = vand.u32 %v5570, 4294901760
        %6271 = vmatpush.msra.mxu0 %v6270
        %v6272 = vand.u32 %v5566, 4294901760
        %6273 = vmatpush.msra.mxu0 %v6272
        %v6274 = vand.u32 %v5562, 4294901760
        %6275 = vmatpush.msra.mxu0 %v6274
        %v6276 = vand.u32 %v5558, 4294901760
        %6277 = vmatpush.msra.mxu0 %v6276
        %v6278 = vand.u32 %v5554, 4294901760
        %6279 = vmatpush.msra.mxu0 %v6278
        %v6280 = vand.u32 %v5550, 4294901760
        %6281 = vmatpush.msra.mxu0 %v6280
        %v6282 = vand.u32 %v5546, 4294901760
        %6283 = vmatpush.msra.mxu0 %v6282
        %v6284 = vand.u32 %v5542, 4294901760
        %6285 = vmatpush.msra.mxu0 %v6284
        %v6286 = vand.u32 %v5538, 4294901760
        %6287 = vmatpush.msra.mxu0 %v6286
        %v6288 = vand.u32 %v5536, 4294901760
        %6289 = vmatmul.f32.gmra.mxu0 %v6288
        %v6290 = vpop.f32.mrf.mxu0
        %v6291 = vadd.f32 %v6254, %v6290
        %6292 = vdwg.mxu0
        %v6293 = vand.u32 %v5599, 4294901760
        %6294 = vmatpush.msra.mxu0 %v6293
        %v6295 = vand.u32 %v5595, 4294901760
        %6296 = vmatpush.msra.mxu0 %v6295
        %v6297 = vand.u32 %v5591, 4294901760
        %6298 = vmatpush.msra.mxu0 %v6297
        %v6299 = vand.u32 %v5587, 4294901760
        %6300 = vmatpush.msra.mxu0 %v6299
        %v6301 = vand.u32 %v5583, 4294901760
        %6302 = vmatpush.msra.mxu0 %v6301
        %v6303 = vand.u32 %v5579, 4294901760
        %6304 = vmatpush.msra.mxu0 %v6303
        %v6305 = vand.u32 %v5575, 4294901760
        %6306 = vmatpush.msra.mxu0 %v6305
        %v6307 = vand.u32 %v5571, 4294901760
        %6308 = vmatpush.msra.mxu0 %v6307
        %v6309 = vand.u32 %v5567, 4294901760
        %6310 = vmatpush.msra.mxu0 %v6309
        %v6311 = vand.u32 %v5563, 4294901760
        %6312 = vmatpush.msra.mxu0 %v6311
        %v6313 = vand.u32 %v5559, 4294901760
        %6314 = vmatpush.msra.mxu0 %v6313
        %v6315 = vand.u32 %v5555, 4294901760
        %6316 = vmatpush.msra.mxu0 %v6315
        %v6317 = vand.u32 %v5551, 4294901760
        %6318 = vmatpush.msra.mxu0 %v6317
        %v6319 = vand.u32 %v5547, 4294901760
        %6320 = vmatpush.msra.mxu0 %v6319
        %v6321 = vand.u32 %v5543, 4294901760
        %6322 = vmatpush.msra.mxu0 %v6321
        %v6323 = vand.u32 %v5539, 4294901760
        %6324 = vmatpush.msra.mxu0 %v6323
        %v6325 = vand.u32 %v5536, 4294901760
        %v6326 = vsub.f32 %v5536, %v6325
        %v6327 = vand.u32 %v6326, 4294901760
        %v6328 = vsub.f32 %v6326, %v6327
        %v6329 = vand.u32 %v6328, 4294901760
        %6330 = vmatmul.f32.gmra.mxu0 %v6329
        %v6331 = vpop.f32.mrf.mxu0
        %v6332 = vadd.f32 %v5605, %v6331
        %6333 = vdwg.mxu0
        %v6334 = vand.u32 %v5599, 4294901760
        %v6335 = vsub.f32 %v5599, %v6334
        %v6336 = vand.u32 %v6335, 4294901760
        %v6337 = vsub.f32 %v6335, %v6336
        %v6338 = vand.u32 %v6337, 4294901760
        %6339 = vmatpush.msra.mxu0 %v6338
        %v6340 = vand.u32 %v5595, 4294901760
        %v6341 = vsub.f32 %v5595, %v6340
        %v6342 = vand.u32 %v6341, 4294901760
        %v6343 = vsub.f32 %v6341, %v6342
        %v6344 = vand.u32 %v6343, 4294901760
        %6345 = vmatpush.msra.mxu0 %v6344
        %v6346 = vand.u32 %v5591, 4294901760
        %v6347 = vsub.f32 %v5591, %v6346
        %v6348 = vand.u32 %v6347, 4294901760
        %v6349 = vsub.f32 %v6347, %v6348
        %v6350 = vand.u32 %v6349, 4294901760
        %6351 = vmatpush.msra.mxu0 %v6350
        %v6352 = vand.u32 %v5587, 4294901760
        %v6353 = vsub.f32 %v5587, %v6352
        %v6354 = vand.u32 %v6353, 4294901760
        %v6355 = vsub.f32 %v6353, %v6354
        %v6356 = vand.u32 %v6355, 4294901760
        %6357 = vmatpush.msra.mxu0 %v6356
        %v6358 = vand.u32 %v5583, 4294901760
        %v6359 = vsub.f32 %v5583, %v6358
        %v6360 = vand.u32 %v6359, 4294901760
        %v6361 = vsub.f32 %v6359, %v6360
        %v6362 = vand.u32 %v6361, 4294901760
        %6363 = vmatpush.msra.mxu0 %v6362
        %v6364 = vand.u32 %v5579, 4294901760
        %v6365 = vsub.f32 %v5579, %v6364
        %v6366 = vand.u32 %v6365, 4294901760
        %v6367 = vsub.f32 %v6365, %v6366
        %v6368 = vand.u32 %v6367, 4294901760
        %6369 = vmatpush.msra.mxu0 %v6368
        %v6370 = vand.u32 %v5575, 4294901760
        %v6371 = vsub.f32 %v5575, %v6370
        %v6372 = vand.u32 %v6371, 4294901760
        %v6373 = vsub.f32 %v6371, %v6372
        %v6374 = vand.u32 %v6373, 4294901760
        %6375 = vmatpush.msra.mxu0 %v6374
        %v6376 = vand.u32 %v5571, 4294901760
        %v6377 = vsub.f32 %v5571, %v6376
        %v6378 = vand.u32 %v6377, 4294901760
        %v6379 = vsub.f32 %v6377, %v6378
        %v6380 = vand.u32 %v6379, 4294901760
        %6381 = vmatpush.msra.mxu0 %v6380
        %v6382 = vand.u32 %v5567, 4294901760
        %v6383 = vsub.f32 %v5567, %v6382
        %v6384 = vand.u32 %v6383, 4294901760
        %v6385 = vsub.f32 %v6383, %v6384
        %v6386 = vand.u32 %v6385, 4294901760
        %6387 = vmatpush.msra.mxu0 %v6386
        %v6388 = vand.u32 %v5563, 4294901760
        %v6389 = vsub.f32 %v5563, %v6388
        %v6390 = vand.u32 %v6389, 4294901760
        %v6391 = vsub.f32 %v6389, %v6390
        %v6392 = vand.u32 %v6391, 4294901760
        %6393 = vmatpush.msra.mxu0 %v6392
        %v6394 = vand.u32 %v5559, 4294901760
        %v6395 = vsub.f32 %v5559, %v6394
        %v6396 = vand.u32 %v6395, 4294901760
        %v6397 = vsub.f32 %v6395, %v6396
        %v6398 = vand.u32 %v6397, 4294901760
        %6399 = vmatpush.msra.mxu0 %v6398
        %v6400 = vand.u32 %v5555, 4294901760
        %v6401 = vsub.f32 %v5555, %v6400
        %v6402 = vand.u32 %v6401, 4294901760
        %v6403 = vsub.f32 %v6401, %v6402
        %v6404 = vand.u32 %v6403, 4294901760
        %6405 = vmatpush.msra.mxu0 %v6404
        %v6406 = vand.u32 %v5551, 4294901760
        %v6407 = vsub.f32 %v5551, %v6406
        %v6408 = vand.u32 %v6407, 4294901760
        %v6409 = vsub.f32 %v6407, %v6408
        %v6410 = vand.u32 %v6409, 4294901760
        %6411 = vmatpush.msra.mxu0 %v6410
        %v6412 = vand.u32 %v5547, 4294901760
        %v6413 = vsub.f32 %v5547, %v6412
        %v6414 = vand.u32 %v6413, 4294901760
        %v6415 = vsub.f32 %v6413, %v6414
        %v6416 = vand.u32 %v6415, 4294901760
        %6417 = vmatpush.msra.mxu0 %v6416
        %v6418 = vand.u32 %v5543, 4294901760
        %v6419 = vsub.f32 %v5543, %v6418
        %v6420 = vand.u32 %v6419, 4294901760
        %v6421 = vsub.f32 %v6419, %v6420
        %v6422 = vand.u32 %v6421, 4294901760
        %6423 = vmatpush.msra.mxu0 %v6422
        %v6424 = vand.u32 %v5539, 4294901760
        %v6425 = vsub.f32 %v5539, %v6424
        %v6426 = vand.u32 %v6425, 4294901760
        %v6427 = vsub.f32 %v6425, %v6426
        %v6428 = vand.u32 %v6427, 4294901760
        %6429 = vmatpush.msra.mxu0 %v6428
        %v6430 = vand.u32 %v5536, 4294901760
        %6431 = vmatmul.f32.gmra.mxu0 %v6430
        %v6432 = vpop.f32.mrf.mxu0
        %v6433 = vadd.f32 %v6332, %v6432
        %6434 = vdwg.mxu0
        %v6435 = vand.u32 %v5599, 4294901760
        %v6436 = vsub.f32 %v5599, %v6435
        %6437 = vmatpush.msra.mxu0 %v6436
        %v6438 = vand.u32 %v5595, 4294901760
        %v6439 = vsub.f32 %v5595, %v6438
        %6440 = vmatpush.msra.mxu0 %v6439
        %v6441 = vand.u32 %v5591, 4294901760
        %v6442 = vsub.f32 %v5591, %v6441
        %6443 = vmatpush.msra.mxu0 %v6442
        %v6444 = vand.u32 %v5587, 4294901760
        %v6445 = vsub.f32 %v5587, %v6444
        %6446 = vmatpush.msra.mxu0 %v6445
        %v6447 = vand.u32 %v5583, 4294901760
        %v6448 = vsub.f32 %v5583, %v6447
        %6449 = vmatpush.msra.mxu0 %v6448
        %v6450 = vand.u32 %v5579, 4294901760
        %v6451 = vsub.f32 %v5579, %v6450
        %6452 = vmatpush.msra.mxu0 %v6451
        %v6453 = vand.u32 %v5575, 4294901760
        %v6454 = vsub.f32 %v5575, %v6453
        %6455 = vmatpush.msra.mxu0 %v6454
        %v6456 = vand.u32 %v5571, 4294901760
        %v6457 = vsub.f32 %v5571, %v6456
        %6458 = vmatpush.msra.mxu0 %v6457
        %v6459 = vand.u32 %v5567, 4294901760
        %v6460 = vsub.f32 %v5567, %v6459
        %6461 = vmatpush.msra.mxu0 %v6460
        %v6462 = vand.u32 %v5563, 4294901760
        %v6463 = vsub.f32 %v5563, %v6462
        %6464 = vmatpush.msra.mxu0 %v6463
        %v6465 = vand.u32 %v5559, 4294901760
        %v6466 = vsub.f32 %v5559, %v6465
        %6467 = vmatpush.msra.mxu0 %v6466
        %v6468 = vand.u32 %v5555, 4294901760
        %v6469 = vsub.f32 %v5555, %v6468
        %6470 = vmatpush.msra.mxu0 %v6469
        %v6471 = vand.u32 %v5551, 4294901760
        %v6472 = vsub.f32 %v5551, %v6471
        %6473 = vmatpush.msra.mxu0 %v6472
        %v6474 = vand.u32 %v5547, 4294901760
        %v6475 = vsub.f32 %v5547, %v6474
        %6476 = vmatpush.msra.mxu0 %v6475
        %v6477 = vand.u32 %v5543, 4294901760
        %v6478 = vsub.f32 %v5543, %v6477
        %6479 = vmatpush.msra.mxu0 %v6478
        %v6480 = vand.u32 %v5539, 4294901760
        %v6481 = vsub.f32 %v5539, %v6480
        %6482 = vmatpush.msra.mxu0 %v6481
        %v6483 = vand.u32 %v5536, 4294901760
        %v6484 = vsub.f32 %v5536, %v6483
        %6485 = vmatmul.f32.gmra.mxu0 %v6484
        %v6486 = vpop.f32.mrf.mxu0
        %v6487 = vadd.f32 %v6433, %v6486
        %6488 = vdwg.mxu0
        %v6489 = vand.u32 %v5599, 4294901760
        %6490 = vmatpush.msra.mxu0 %v6489
        %v6491 = vand.u32 %v5595, 4294901760
        %6492 = vmatpush.msra.mxu0 %v6491
        %v6493 = vand.u32 %v5591, 4294901760
        %6494 = vmatpush.msra.mxu0 %v6493
        %v6495 = vand.u32 %v5587, 4294901760
        %6496 = vmatpush.msra.mxu0 %v6495
        %v6497 = vand.u32 %v5583, 4294901760
        %6498 = vmatpush.msra.mxu0 %v6497
        %v6499 = vand.u32 %v5579, 4294901760
        %6500 = vmatpush.msra.mxu0 %v6499
        %v6501 = vand.u32 %v5575, 4294901760
        %6502 = vmatpush.msra.mxu0 %v6501
        %v6503 = vand.u32 %v5571, 4294901760
        %6504 = vmatpush.msra.mxu0 %v6503
        %v6505 = vand.u32 %v5567, 4294901760
        %6506 = vmatpush.msra.mxu0 %v6505
        %v6507 = vand.u32 %v5563, 4294901760
        %6508 = vmatpush.msra.mxu0 %v6507
        %v6509 = vand.u32 %v5559, 4294901760
        %6510 = vmatpush.msra.mxu0 %v6509
        %v6511 = vand.u32 %v5555, 4294901760
        %6512 = vmatpush.msra.mxu0 %v6511
        %v6513 = vand.u32 %v5551, 4294901760
        %6514 = vmatpush.msra.mxu0 %v6513
        %v6515 = vand.u32 %v5547, 4294901760
        %6516 = vmatpush.msra.mxu0 %v6515
        %v6517 = vand.u32 %v5543, 4294901760
        %6518 = vmatpush.msra.mxu0 %v6517
        %v6519 = vand.u32 %v5539, 4294901760
        %6520 = vmatpush.msra.mxu0 %v6519
        %v6521 = vand.u32 %v5536, 4294901760
        %v6522 = vsub.f32 %v5536, %v6521
        %v6523 = vand.u32 %v6522, 4294901760
        %6524 = vmatmul.f32.gmra.mxu0 %v6523
        %v6525 = vpop.f32.mrf.mxu0
        %v6526 = vadd.f32 %v6487, %v6525
        %6527 = vdwg.mxu0
        %v6528 = vand.u32 %v5599, 4294901760
        %v6529 = vsub.f32 %v5599, %v6528
        %v6530 = vand.u32 %v6529, 4294901760
        %6531 = vmatpush.msra.mxu0 %v6530
        %v6532 = vand.u32 %v5595, 4294901760
        %v6533 = vsub.f32 %v5595, %v6532
        %v6534 = vand.u32 %v6533, 4294901760
        %6535 = vmatpush.msra.mxu0 %v6534
        %v6536 = vand.u32 %v5591, 4294901760
        %v6537 = vsub.f32 %v5591, %v6536
        %v6538 = vand.u32 %v6537, 4294901760
        %6539 = vmatpush.msra.mxu0 %v6538
        %v6540 = vand.u32 %v5587, 4294901760
        %v6541 = vsub.f32 %v5587, %v6540
        %v6542 = vand.u32 %v6541, 4294901760
        %6543 = vmatpush.msra.mxu0 %v6542
        %v6544 = vand.u32 %v5583, 4294901760
        %v6545 = vsub.f32 %v5583, %v6544
        %v6546 = vand.u32 %v6545, 4294901760
        %6547 = vmatpush.msra.mxu0 %v6546
        %v6548 = vand.u32 %v5579, 4294901760
        %v6549 = vsub.f32 %v5579, %v6548
        %v6550 = vand.u32 %v6549, 4294901760
        %6551 = vmatpush.msra.mxu0 %v6550
        %v6552 = vand.u32 %v5575, 4294901760
        %v6553 = vsub.f32 %v5575, %v6552
        %v6554 = vand.u32 %v6553, 4294901760
        %6555 = vmatpush.msra.mxu0 %v6554
        %v6556 = vand.u32 %v5571, 4294901760
        %v6557 = vsub.f32 %v5571, %v6556
        %v6558 = vand.u32 %v6557, 4294901760
        %6559 = vmatpush.msra.mxu0 %v6558
        %v6560 = vand.u32 %v5567, 4294901760
        %v6561 = vsub.f32 %v5567, %v6560
        %v6562 = vand.u32 %v6561, 4294901760
        %6563 = vmatpush.msra.mxu0 %v6562
        %v6564 = vand.u32 %v5563, 4294901760
        %v6565 = vsub.f32 %v5563, %v6564
        %v6566 = vand.u32 %v6565, 4294901760
        %6567 = vmatpush.msra.mxu0 %v6566
        %v6568 = vand.u32 %v5559, 4294901760
        %v6569 = vsub.f32 %v5559, %v6568
        %v6570 = vand.u32 %v6569, 4294901760
        %6571 = vmatpush.msra.mxu0 %v6570
        %v6572 = vand.u32 %v5555, 4294901760
        %v6573 = vsub.f32 %v5555, %v6572
        %v6574 = vand.u32 %v6573, 4294901760
        %6575 = vmatpush.msra.mxu0 %v6574
        %v6576 = vand.u32 %v5551, 4294901760
        %v6577 = vsub.f32 %v5551, %v6576
        %v6578 = vand.u32 %v6577, 4294901760
        %6579 = vmatpush.msra.mxu0 %v6578
        %v6580 = vand.u32 %v5547, 4294901760
        %v6581 = vsub.f32 %v5547, %v6580
        %v6582 = vand.u32 %v6581, 4294901760
        %6583 = vmatpush.msra.mxu0 %v6582
        %v6584 = vand.u32 %v5543, 4294901760
        %v6585 = vsub.f32 %v5543, %v6584
        %v6586 = vand.u32 %v6585, 4294901760
        %6587 = vmatpush.msra.mxu0 %v6586
        %v6588 = vand.u32 %v5539, 4294901760
        %v6589 = vsub.f32 %v5539, %v6588
        %v6590 = vand.u32 %v6589, 4294901760
        %6591 = vmatpush.msra.mxu0 %v6590
        %v6592 = vand.u32 %v5536, 4294901760
        %6593 = vmatmul.f32.gmra.mxu0 %v6592
        %v6594 = vpop.f32.mrf.mxu0
        %v6595 = vadd.f32 %v6526, %v6594
        %6596 = vdwg.mxu0
        %v6597 = vand.u32 %v5599, 4294901760
        %6598 = vmatpush.msra.mxu0 %v6597
        %v6599 = vand.u32 %v5595, 4294901760
        %6600 = vmatpush.msra.mxu0 %v6599
        %v6601 = vand.u32 %v5591, 4294901760
        %6602 = vmatpush.msra.mxu0 %v6601
        %v6603 = vand.u32 %v5587, 4294901760
        %6604 = vmatpush.msra.mxu0 %v6603
        %v6605 = vand.u32 %v5583, 4294901760
        %6606 = vmatpush.msra.mxu0 %v6605
        %v6607 = vand.u32 %v5579, 4294901760
        %6608 = vmatpush.msra.mxu0 %v6607
        %v6609 = vand.u32 %v5575, 4294901760
        %6610 = vmatpush.msra.mxu0 %v6609
        %v6611 = vand.u32 %v5571, 4294901760
        %6612 = vmatpush.msra.mxu0 %v6611
        %v6613 = vand.u32 %v5567, 4294901760
        %6614 = vmatpush.msra.mxu0 %v6613
        %v6615 = vand.u32 %v5563, 4294901760
        %6616 = vmatpush.msra.mxu0 %v6615
        %v6617 = vand.u32 %v5559, 4294901760
        %6618 = vmatpush.msra.mxu0 %v6617
        %v6619 = vand.u32 %v5555, 4294901760
        %6620 = vmatpush.msra.mxu0 %v6619
        %v6621 = vand.u32 %v5551, 4294901760
        %6622 = vmatpush.msra.mxu0 %v6621
        %v6623 = vand.u32 %v5547, 4294901760
        %6624 = vmatpush.msra.mxu0 %v6623
        %v6625 = vand.u32 %v5543, 4294901760
        %6626 = vmatpush.msra.mxu0 %v6625
        %v6627 = vand.u32 %v5539, 4294901760
        %6628 = vmatpush.msra.mxu0 %v6627
        %v6629 = vand.u32 %v5536, 4294901760
        %6630 = vmatmul.f32.gmra.mxu0 %v6629
        %v6631 = vpop.f32.mrf.mxu0
        %v6632 = vadd.f32 %v6595, %v6631
        %6633 = vdwg.mxu0
        %v6634 = vand.u32 %v5600, 4294901760
        %6635 = vmatpush.msra.mxu0 %v6634
        %v6636 = vand.u32 %v5596, 4294901760
        %6637 = vmatpush.msra.mxu0 %v6636
        %v6638 = vand.u32 %v5592, 4294901760
        %6639 = vmatpush.msra.mxu0 %v6638
        %v6640 = vand.u32 %v5588, 4294901760
        %6641 = vmatpush.msra.mxu0 %v6640
        %v6642 = vand.u32 %v5584, 4294901760
        %6643 = vmatpush.msra.mxu0 %v6642
        %v6644 = vand.u32 %v5580, 4294901760
        %6645 = vmatpush.msra.mxu0 %v6644
        %v6646 = vand.u32 %v5576, 4294901760
        %6647 = vmatpush.msra.mxu0 %v6646
        %v6648 = vand.u32 %v5572, 4294901760
        %6649 = vmatpush.msra.mxu0 %v6648
        %v6650 = vand.u32 %v5568, 4294901760
        %6651 = vmatpush.msra.mxu0 %v6650
        %v6652 = vand.u32 %v5564, 4294901760
        %6653 = vmatpush.msra.mxu0 %v6652
        %v6654 = vand.u32 %v5560, 4294901760
        %6655 = vmatpush.msra.mxu0 %v6654
        %v6656 = vand.u32 %v5556, 4294901760
        %6657 = vmatpush.msra.mxu0 %v6656
        %v6658 = vand.u32 %v5552, 4294901760
        %6659 = vmatpush.msra.mxu0 %v6658
        %v6660 = vand.u32 %v5548, 4294901760
        %6661 = vmatpush.msra.mxu0 %v6660
        %v6662 = vand.u32 %v5544, 4294901760
        %6663 = vmatpush.msra.mxu0 %v6662
        %v6664 = vand.u32 %v5540, 4294901760
        %6665 = vmatpush.msra.mxu0 %v6664
        %v6666 = vand.u32 %v5536, 4294901760
        %v6667 = vsub.f32 %v5536, %v6666
        %v6668 = vand.u32 %v6667, 4294901760
        %v6669 = vsub.f32 %v6667, %v6668
        %v6670 = vand.u32 %v6669, 4294901760
        %6671 = vmatmul.f32.gmra.mxu0 %v6670
        %v6672 = vpop.f32.mrf.mxu0
        %v6673 = vadd.f32 %v5606, %v6672
        %6674 = vdwg.mxu0
        %v6675 = vand.u32 %v5600, 4294901760
        %v6676 = vsub.f32 %v5600, %v6675
        %v6677 = vand.u32 %v6676, 4294901760
        %v6678 = vsub.f32 %v6676, %v6677
        %v6679 = vand.u32 %v6678, 4294901760
        %6680 = vmatpush.msra.mxu0 %v6679
        %v6681 = vand.u32 %v5596, 4294901760
        %v6682 = vsub.f32 %v5596, %v6681
        %v6683 = vand.u32 %v6682, 4294901760
        %v6684 = vsub.f32 %v6682, %v6683
        %v6685 = vand.u32 %v6684, 4294901760
        %6686 = vmatpush.msra.mxu0 %v6685
        %v6687 = vand.u32 %v5592, 4294901760
        %v6688 = vsub.f32 %v5592, %v6687
        %v6689 = vand.u32 %v6688, 4294901760
        %v6690 = vsub.f32 %v6688, %v6689
        %v6691 = vand.u32 %v6690, 4294901760
        %6692 = vmatpush.msra.mxu0 %v6691
        %v6693 = vand.u32 %v5588, 4294901760
        %v6694 = vsub.f32 %v5588, %v6693
        %v6695 = vand.u32 %v6694, 4294901760
        %v6696 = vsub.f32 %v6694, %v6695
        %v6697 = vand.u32 %v6696, 4294901760
        %6698 = vmatpush.msra.mxu0 %v6697
        %v6699 = vand.u32 %v5584, 4294901760
        %v6700 = vsub.f32 %v5584, %v6699
        %v6701 = vand.u32 %v6700, 4294901760
        %v6702 = vsub.f32 %v6700, %v6701
        %v6703 = vand.u32 %v6702, 4294901760
        %6704 = vmatpush.msra.mxu0 %v6703
        %v6705 = vand.u32 %v5580, 4294901760
        %v6706 = vsub.f32 %v5580, %v6705
        %v6707 = vand.u32 %v6706, 4294901760
        %v6708 = vsub.f32 %v6706, %v6707
        %v6709 = vand.u32 %v6708, 4294901760
        %6710 = vmatpush.msra.mxu0 %v6709
        %v6711 = vand.u32 %v5576, 4294901760
        %v6712 = vsub.f32 %v5576, %v6711
        %v6713 = vand.u32 %v6712, 4294901760
        %v6714 = vsub.f32 %v6712, %v6713
        %v6715 = vand.u32 %v6714, 4294901760
        %6716 = vmatpush.msra.mxu0 %v6715
        %v6717 = vand.u32 %v5572, 4294901760
        %v6718 = vsub.f32 %v5572, %v6717
        %v6719 = vand.u32 %v6718, 4294901760
        %v6720 = vsub.f32 %v6718, %v6719
        %v6721 = vand.u32 %v6720, 4294901760
        %6722 = vmatpush.msra.mxu0 %v6721
        %v6723 = vand.u32 %v5568, 4294901760
        %v6724 = vsub.f32 %v5568, %v6723
        %v6725 = vand.u32 %v6724, 4294901760
        %v6726 = vsub.f32 %v6724, %v6725
        %v6727 = vand.u32 %v6726, 4294901760
        %6728 = vmatpush.msra.mxu0 %v6727
        %v6729 = vand.u32 %v5564, 4294901760
        %v6730 = vsub.f32 %v5564, %v6729
        %v6731 = vand.u32 %v6730, 4294901760
        %v6732 = vsub.f32 %v6730, %v6731
        %v6733 = vand.u32 %v6732, 4294901760
        %6734 = vmatpush.msra.mxu0 %v6733
        %v6735 = vand.u32 %v5560, 4294901760
        %v6736 = vsub.f32 %v5560, %v6735
        %v6737 = vand.u32 %v6736, 4294901760
        %v6738 = vsub.f32 %v6736, %v6737
        %v6739 = vand.u32 %v6738, 4294901760
        %6740 = vmatpush.msra.mxu0 %v6739
        %v6741 = vand.u32 %v5556, 4294901760
        %v6742 = vsub.f32 %v5556, %v6741
        %v6743 = vand.u32 %v6742, 4294901760
        %v6744 = vsub.f32 %v6742, %v6743
        %v6745 = vand.u32 %v6744, 4294901760
        %6746 = vmatpush.msra.mxu0 %v6745
        %v6747 = vand.u32 %v5552, 4294901760
        %v6748 = vsub.f32 %v5552, %v6747
        %v6749 = vand.u32 %v6748, 4294901760
        %v6750 = vsub.f32 %v6748, %v6749
        %v6751 = vand.u32 %v6750, 4294901760
        %6752 = vmatpush.msra.mxu0 %v6751
        %v6753 = vand.u32 %v5548, 4294901760
        %v6754 = vsub.f32 %v5548, %v6753
        %v6755 = vand.u32 %v6754, 4294901760
        %v6756 = vsub.f32 %v6754, %v6755
        %v6757 = vand.u32 %v6756, 4294901760
        %6758 = vmatpush.msra.mxu0 %v6757
        %v6759 = vand.u32 %v5544, 4294901760
        %v6760 = vsub.f32 %v5544, %v6759
        %v6761 = vand.u32 %v6760, 4294901760
        %v6762 = vsub.f32 %v6760, %v6761
        %v6763 = vand.u32 %v6762, 4294901760
        %6764 = vmatpush.msra.mxu0 %v6763
        %v6765 = vand.u32 %v5540, 4294901760
        %v6766 = vsub.f32 %v5540, %v6765
        %v6767 = vand.u32 %v6766, 4294901760
        %v6768 = vsub.f32 %v6766, %v6767
        %v6769 = vand.u32 %v6768, 4294901760
        %6770 = vmatpush.msra.mxu0 %v6769
        %v6771 = vand.u32 %v5536, 4294901760
        %6772 = vmatmul.f32.gmra.mxu0 %v6771
        %v6773 = vpop.f32.mrf.mxu0
        %v6774 = vadd.f32 %v6673, %v6773
        %6775 = vdwg.mxu0
        %v6776 = vand.u32 %v5600, 4294901760
        %v6777 = vsub.f32 %v5600, %v6776
        %6778 = vmatpush.msra.mxu0 %v6777
        %v6779 = vand.u32 %v5596, 4294901760
        %v6780 = vsub.f32 %v5596, %v6779
        %6781 = vmatpush.msra.mxu0 %v6780
        %v6782 = vand.u32 %v5592, 4294901760
        %v6783 = vsub.f32 %v5592, %v6782
        %6784 = vmatpush.msra.mxu0 %v6783
        %v6785 = vand.u32 %v5588, 4294901760
        %v6786 = vsub.f32 %v5588, %v6785
        %6787 = vmatpush.msra.mxu0 %v6786
        %v6788 = vand.u32 %v5584, 4294901760
        %v6789 = vsub.f32 %v5584, %v6788
        %6790 = vmatpush.msra.mxu0 %v6789
        %v6791 = vand.u32 %v5580, 4294901760
        %v6792 = vsub.f32 %v5580, %v6791
        %6793 = vmatpush.msra.mxu0 %v6792
        %v6794 = vand.u32 %v5576, 4294901760
        %v6795 = vsub.f32 %v5576, %v6794
        %6796 = vmatpush.msra.mxu0 %v6795
        %v6797 = vand.u32 %v5572, 4294901760
        %v6798 = vsub.f32 %v5572, %v6797
        %6799 = vmatpush.msra.mxu0 %v6798
        %v6800 = vand.u32 %v5568, 4294901760
        %v6801 = vsub.f32 %v5568, %v6800
        %6802 = vmatpush.msra.mxu0 %v6801
        %v6803 = vand.u32 %v5564, 4294901760
        %v6804 = vsub.f32 %v5564, %v6803
        %6805 = vmatpush.msra.mxu0 %v6804
        %v6806 = vand.u32 %v5560, 4294901760
        %v6807 = vsub.f32 %v5560, %v6806
        %6808 = vmatpush.msra.mxu0 %v6807
        %v6809 = vand.u32 %v5556, 4294901760
        %v6810 = vsub.f32 %v5556, %v6809
        %6811 = vmatpush.msra.mxu0 %v6810
        %v6812 = vand.u32 %v5552, 4294901760
        %v6813 = vsub.f32 %v5552, %v6812
        %6814 = vmatpush.msra.mxu0 %v6813
        %v6815 = vand.u32 %v5548, 4294901760
        %v6816 = vsub.f32 %v5548, %v6815
        %6817 = vmatpush.msra.mxu0 %v6816
        %v6818 = vand.u32 %v5544, 4294901760
        %v6819 = vsub.f32 %v5544, %v6818
        %6820 = vmatpush.msra.mxu0 %v6819
        %v6821 = vand.u32 %v5540, 4294901760
        %v6822 = vsub.f32 %v5540, %v6821
        %6823 = vmatpush.msra.mxu0 %v6822
        %v6824 = vand.u32 %v5536, 4294901760
        %v6825 = vsub.f32 %v5536, %v6824
        %6826 = vmatmul.f32.gmra.mxu0 %v6825
        %v6827 = vpop.f32.mrf.mxu0
        %v6828 = vadd.f32 %v6774, %v6827
        %6829 = vdwg.mxu0
        %v6830 = vand.u32 %v5600, 4294901760
        %6831 = vmatpush.msra.mxu0 %v6830
        %v6832 = vand.u32 %v5596, 4294901760
        %6833 = vmatpush.msra.mxu0 %v6832
        %v6834 = vand.u32 %v5592, 4294901760
        %6835 = vmatpush.msra.mxu0 %v6834
        %v6836 = vand.u32 %v5588, 4294901760
        %6837 = vmatpush.msra.mxu0 %v6836
        %v6838 = vand.u32 %v5584, 4294901760
        %6839 = vmatpush.msra.mxu0 %v6838
        %v6840 = vand.u32 %v5580, 4294901760
        %6841 = vmatpush.msra.mxu0 %v6840
        %v6842 = vand.u32 %v5576, 4294901760
        %6843 = vmatpush.msra.mxu0 %v6842
        %v6844 = vand.u32 %v5572, 4294901760
        %6845 = vmatpush.msra.mxu0 %v6844
        %v6846 = vand.u32 %v5568, 4294901760
        %6847 = vmatpush.msra.mxu0 %v6846
        %v6848 = vand.u32 %v5564, 4294901760
        %6849 = vmatpush.msra.mxu0 %v6848
        %v6850 = vand.u32 %v5560, 4294901760
        %6851 = vmatpush.msra.mxu0 %v6850
        %v6852 = vand.u32 %v5556, 4294901760
        %6853 = vmatpush.msra.mxu0 %v6852
        %v6854 = vand.u32 %v5552, 4294901760
        %6855 = vmatpush.msra.mxu0 %v6854
        %v6856 = vand.u32 %v5548, 4294901760
        %6857 = vmatpush.msra.mxu0 %v6856
        %v6858 = vand.u32 %v5544, 4294901760
        %6859 = vmatpush.msra.mxu0 %v6858
        %v6860 = vand.u32 %v5540, 4294901760
        %6861 = vmatpush.msra.mxu0 %v6860
        %v6862 = vand.u32 %v5536, 4294901760
        %v6863 = vsub.f32 %v5536, %v6862
        %v6864 = vand.u32 %v6863, 4294901760
        %6865 = vmatmul.f32.gmra.mxu0 %v6864
        %v6866 = vpop.f32.mrf.mxu0
        %v6867 = vadd.f32 %v6828, %v6866
        %6868 = vdwg.mxu0
        %v6869 = vand.u32 %v5600, 4294901760
        %v6870 = vsub.f32 %v5600, %v6869
        %v6871 = vand.u32 %v6870, 4294901760
        %6872 = vmatpush.msra.mxu0 %v6871
        %v6873 = vand.u32 %v5596, 4294901760
        %v6874 = vsub.f32 %v5596, %v6873
        %v6875 = vand.u32 %v6874, 4294901760
        %6876 = vmatpush.msra.mxu0 %v6875
        %v6877 = vand.u32 %v5592, 4294901760
        %v6878 = vsub.f32 %v5592, %v6877
        %v6879 = vand.u32 %v6878, 4294901760
        %6880 = vmatpush.msra.mxu0 %v6879
        %v6881 = vand.u32 %v5588, 4294901760
        %v6882 = vsub.f32 %v5588, %v6881
        %v6883 = vand.u32 %v6882, 4294901760
        %6884 = vmatpush.msra.mxu0 %v6883
        %v6885 = vand.u32 %v5584, 4294901760
        %v6886 = vsub.f32 %v5584, %v6885
        %v6887 = vand.u32 %v6886, 4294901760
        %6888 = vmatpush.msra.mxu0 %v6887
        %v6889 = vand.u32 %v5580, 4294901760
        %v6890 = vsub.f32 %v5580, %v6889
        %v6891 = vand.u32 %v6890, 4294901760
        %6892 = vmatpush.msra.mxu0 %v6891
        %v6893 = vand.u32 %v5576, 4294901760
        %v6894 = vsub.f32 %v5576, %v6893
        %v6895 = vand.u32 %v6894, 4294901760
        %6896 = vmatpush.msra.mxu0 %v6895
        %v6897 = vand.u32 %v5572, 4294901760
        %v6898 = vsub.f32 %v5572, %v6897
        %v6899 = vand.u32 %v6898, 4294901760
        %6900 = vmatpush.msra.mxu0 %v6899
        %v6901 = vand.u32 %v5568, 4294901760
        %v6902 = vsub.f32 %v5568, %v6901
        %v6903 = vand.u32 %v6902, 4294901760
        %6904 = vmatpush.msra.mxu0 %v6903
        %v6905 = vand.u32 %v5564, 4294901760
        %v6906 = vsub.f32 %v5564, %v6905
        %v6907 = vand.u32 %v6906, 4294901760
        %6908 = vmatpush.msra.mxu0 %v6907
        %v6909 = vand.u32 %v5560, 4294901760
        %v6910 = vsub.f32 %v5560, %v6909
        %v6911 = vand.u32 %v6910, 4294901760
        %6912 = vmatpush.msra.mxu0 %v6911
        %v6913 = vand.u32 %v5556, 4294901760
        %v6914 = vsub.f32 %v5556, %v6913
        %v6915 = vand.u32 %v6914, 4294901760
        %6916 = vmatpush.msra.mxu0 %v6915
        %v6917 = vand.u32 %v5552, 4294901760
        %v6918 = vsub.f32 %v5552, %v6917
        %v6919 = vand.u32 %v6918, 4294901760
        %6920 = vmatpush.msra.mxu0 %v6919
        %v6921 = vand.u32 %v5548, 4294901760
        %v6922 = vsub.f32 %v5548, %v6921
        %v6923 = vand.u32 %v6922, 4294901760
        %6924 = vmatpush.msra.mxu0 %v6923
        %v6925 = vand.u32 %v5544, 4294901760
        %v6926 = vsub.f32 %v5544, %v6925
        %v6927 = vand.u32 %v6926, 4294901760
        %6928 = vmatpush.msra.mxu0 %v6927
        %v6929 = vand.u32 %v5540, 4294901760
        %v6930 = vsub.f32 %v5540, %v6929
        %v6931 = vand.u32 %v6930, 4294901760
        %6932 = vmatpush.msra.mxu0 %v6931
        %v6933 = vand.u32 %v5536, 4294901760
        %6934 = vmatmul.f32.gmra.mxu0 %v6933
        %v6935 = vpop.f32.mrf.mxu0
        %v6936 = vadd.f32 %v6867, %v6935
        %6937 = vdwg.mxu0
        %v6938 = vand.u32 %v5600, 4294901760
        %6939 = vmatpush.msra.mxu0 %v6938
        %v6940 = vand.u32 %v5596, 4294901760
        %6941 = vmatpush.msra.mxu0 %v6940
        %v6942 = vand.u32 %v5592, 4294901760
        %6943 = vmatpush.msra.mxu0 %v6942
        %v6944 = vand.u32 %v5588, 4294901760
        %6945 = vmatpush.msra.mxu0 %v6944
        %v6946 = vand.u32 %v5584, 4294901760
        %6947 = vmatpush.msra.mxu0 %v6946
        %v6948 = vand.u32 %v5580, 4294901760
        %6949 = vmatpush.msra.mxu0 %v6948
        %v6950 = vand.u32 %v5576, 4294901760
        %6951 = vmatpush.msra.mxu0 %v6950
        %v6952 = vand.u32 %v5572, 4294901760
        %6953 = vmatpush.msra.mxu0 %v6952
        %v6954 = vand.u32 %v5568, 4294901760
        %6955 = vmatpush.msra.mxu0 %v6954
        %v6956 = vand.u32 %v5564, 4294901760
        %6957 = vmatpush.msra.mxu0 %v6956
        %v6958 = vand.u32 %v5560, 4294901760
        %6959 = vmatpush.msra.mxu0 %v6958
        %v6960 = vand.u32 %v5556, 4294901760
        %6961 = vmatpush.msra.mxu0 %v6960
        %v6962 = vand.u32 %v5552, 4294901760
        %6963 = vmatpush.msra.mxu0 %v6962
        %v6964 = vand.u32 %v5548, 4294901760
        %6965 = vmatpush.msra.mxu0 %v6964
        %v6966 = vand.u32 %v5544, 4294901760
        %6967 = vmatpush.msra.mxu0 %v6966
        %v6968 = vand.u32 %v5540, 4294901760
        %6969 = vmatpush.msra.mxu0 %v6968
        %v6970 = vand.u32 %v5536, 4294901760
        %6971 = vmatmul.f32.gmra.mxu0 %v6970
        %v6972 = vpop.f32.mrf.mxu0
        %v6973 = vadd.f32 %v6936, %v6972
        %6974 = vdwg.mxu0
        %v6975 = vmul.f32 %v5950, %v5950
        %v6976 = vmul.f32 %v6291, %v6291
        %v6977 = vmul.f32 %v6632, %v6632
        %v6978 = vmul.f32 %v6973, %v6973
        %v6979 = vmul.f32 %v5950, %v6975
        %v6980 = vmul.f32 %v6291, %v6976
        %v6981 = vmul.f32 %v6632, %v6977
        %v6982 = vmul.f32 %v6973, %v6978
        %v6983 = vmul.f32 %v6979, 0.044715
        %v6984 = vmul.f32 %v6980, 0.044715
        %v6985 = vmul.f32 %v6981, 0.044715
        %v6986 = vmul.f32 %v6982, 0.044715
        %v6987 = vadd.f32 %v5950, %v6983
        %v6988 = vadd.f32 %v6291, %v6984
        %v6989 = vadd.f32 %v6632, %v6985
        %v6990 = vadd.f32 %v6973, %v6986
        %v6991 = vmul.f32 %v6987, 0.7978846
        %v6992 = vmul.f32 %v6988, 0.7978846
        %v6993 = vmul.f32 %v6989, 0.7978846
        %v6994 = vmul.f32 %v6990, 0.7978846
        %v6995 = vtanh.pop %v6991
        %v6996 = vtanh.pop %v6992
        %v6997 = vtanh.pop %v6993
        %v6998 = vtanh.pop %v6994
        %v6999 = vadd.f32 %v6995, 1.0
        %v7000 = vadd.f32 %v6996, 1.0
        %v7001 = vadd.f32 %v6997, 1.0
        %v7002 = vadd.f32 %v6998, 1.0
        %v7003 = vmul.f32 %v6999, 0.5
        %v7004 = vmul.f32 %v7000, 0.5
        %v7005 = vmul.f32 %v7001, 0.5
        %v7006 = vmul.f32 %v7002, 0.5
        %v7007 = vmul.f32 %v5950, %v7003
        %v7008 = vmul.f32 %v6291, %v7004
        %v7009 = vmul.f32 %v6632, %v7005
        %v7010 = vmul.f32 %v6973, %v7006
        %v7011 = vld [vmem:[%s1373] sm:$0xff]
        %v7012 = vld [vmem:[%s1373 + $0x8] sm:$0xff]
        %v7013 = vld [vmem:[%s1373 + $0x10] sm:$0xff]
        %v7014 = vld [vmem:[%s1373 + $0x18] sm:$0xff]
        %v7015 = vld [vmem:[%s1373 + $0x20] sm:$0xff]
        %v7016 = vld [vmem:[%s1373 + $0x28] sm:$0xff]
        %v7017 = vld [vmem:[%s1373 + $0x30] sm:$0xff]
        %v7018 = vld [vmem:[%s1373 + $0x38] sm:$0xff]
        %v7019 = vld [vmem:[%s1373 + $0x40] sm:$0xff]
        %v7020 = vld [vmem:[%s1373 + $0x48] sm:$0xff]
        %v7021 = vld [vmem:[%s1373 + $0x50] sm:$0xff]
        %v7022 = vld [vmem:[%s1373 + $0x58] sm:$0xff]
        %v7023 = vld [vmem:[%s1373 + $0x60] sm:$0xff]
        %v7024 = vld [vmem:[%s1373 + $0x68] sm:$0xff]
        %v7025 = vld [vmem:[%s1373 + $0x70] sm:$0xff]
        %v7026 = vld [vmem:[%s1373 + $0x78] sm:$0xff]
        %v7027 = vld [vmem:[%s1373 + $0x80] sm:$0xff]
        %v7028 = vld [vmem:[%s1373 + $0x88] sm:$0xff]
        %v7029 = vld [vmem:[%s1373 + $0x90] sm:$0xff]
        %v7030 = vld [vmem:[%s1373 + $0x98] sm:$0xff]
        %v7031 = vld [vmem:[%s1373 + $0xa0] sm:$0xff]
        %v7032 = vld [vmem:[%s1373 + $0xa8] sm:$0xff]
        %v7033 = vld [vmem:[%s1373 + $0xb0] sm:$0xff]
        %v7034 = vld [vmem:[%s1373 + $0xb8] sm:$0xff]
        %v7035 = vld [vmem:[%s1373 + $0xc0] sm:$0xff]
        %v7036 = vld [vmem:[%s1373 + $0xc8] sm:$0xff]
        %v7037 = vld [vmem:[%s1373 + $0xd0] sm:$0xff]
        %v7038 = vld [vmem:[%s1373 + $0xd8] sm:$0xff]
        %v7039 = vld [vmem:[%s1373 + $0xe0] sm:$0xff]
        %v7040 = vld [vmem:[%s1373 + $0xe8] sm:$0xff]
        %v7041 = vld [vmem:[%s1373 + $0xf0] sm:$0xff]
        %v7042 = vld [vmem:[%s1373 + $0xf8] sm:$0xff]
        %v7043 = vld [vmem:[%s1373 + $0x100] sm:$0xff]
        %v7044 = vld [vmem:[%s1373 + $0x108] sm:$0xff]
        %v7045 = vld [vmem:[%s1373 + $0x110] sm:$0xff]
        %v7046 = vld [vmem:[%s1373 + $0x118] sm:$0xff]
        %v7047 = vld [vmem:[%s1373 + $0x120] sm:$0xff]
        %v7048 = vld [vmem:[%s1373 + $0x128] sm:$0xff]
        %v7049 = vld [vmem:[%s1373 + $0x130] sm:$0xff]
        %v7050 = vld [vmem:[%s1373 + $0x138] sm:$0xff]
        %v7051 = vld [vmem:[%s1373 + $0x140] sm:$0xff]
        %v7052 = vld [vmem:[%s1373 + $0x148] sm:$0xff]
        %v7053 = vld [vmem:[%s1373 + $0x150] sm:$0xff]
        %v7054 = vld [vmem:[%s1373 + $0x158] sm:$0xff]
        %v7055 = vld [vmem:[%s1373 + $0x160] sm:$0xff]
        %v7056 = vld [vmem:[%s1373 + $0x168] sm:$0xff]
        %v7057 = vld [vmem:[%s1373 + $0x170] sm:$0xff]
        %v7058 = vld [vmem:[%s1373 + $0x178] sm:$0xff]
        %v7059 = vld [vmem:[%s1373 + $0x180] sm:$0xff]
        %v7060 = vld [vmem:[%s1373 + $0x188] sm:$0xff]
        %v7061 = vld [vmem:[%s1373 + $0x190] sm:$0xff]
        %v7062 = vld [vmem:[%s1373 + $0x198] sm:$0xff]
        %v7063 = vld [vmem:[%s1373 + $0x1a0] sm:$0xff]
        %v7064 = vld [vmem:[%s1373 + $0x1a8] sm:$0xff]
        %v7065 = vld [vmem:[%s1373 + $0x1b0] sm:$0xff]
        %v7066 = vld [vmem:[%s1373 + $0x1b8] sm:$0xff]
        %v7067 = vld [vmem:[%s1373 + $0x1c0] sm:$0xff]
        %v7068 = vld [vmem:[%s1373 + $0x1c8] sm:$0xff]
        %v7069 = vld [vmem:[%s1373 + $0x1d0] sm:$0xff]
        %v7070 = vld [vmem:[%s1373 + $0x1d8] sm:$0xff]
        %v7071 = vld [vmem:[%s1373 + $0x1e0] sm:$0xff]
        %v7072 = vld [vmem:[%s1373 + $0x1e8] sm:$0xff]
        %v7073 = vld [vmem:[%s1373 + $0x1f0] sm:$0xff]
        %v7074 = vld [vmem:[%s1373 + $0x1f8] sm:$0xff]
        %v7075 = vand.u32 %v7026, 4294901760
        %7076 = vmatpush.msra.mxu0 %v7075
        %v7077 = vand.u32 %v7025, 4294901760
        %7078 = vmatpush.msra.mxu0 %v7077
        %v7079 = vand.u32 %v7024, 4294901760
        %7080 = vmatpush.msra.mxu0 %v7079
        %v7081 = vand.u32 %v7023, 4294901760
        %7082 = vmatpush.msra.mxu0 %v7081
        %v7083 = vand.u32 %v7022, 4294901760
        %7084 = vmatpush.msra.mxu0 %v7083
        %v7085 = vand.u32 %v7021, 4294901760
        %7086 = vmatpush.msra.mxu0 %v7085
        %v7087 = vand.u32 %v7020, 4294901760
        %7088 = vmatpush.msra.mxu0 %v7087
        %v7089 = vand.u32 %v7019, 4294901760
        %7090 = vmatpush.msra.mxu0 %v7089
        %v7091 = vand.u32 %v7018, 4294901760
        %7092 = vmatpush.msra.mxu0 %v7091
        %v7093 = vand.u32 %v7017, 4294901760
        %7094 = vmatpush.msra.mxu0 %v7093
        %v7095 = vand.u32 %v7016, 4294901760
        %7096 = vmatpush.msra.mxu0 %v7095
        %v7097 = vand.u32 %v7015, 4294901760
        %7098 = vmatpush.msra.mxu0 %v7097
        %v7099 = vand.u32 %v7014, 4294901760
        %7100 = vmatpush.msra.mxu0 %v7099
        %v7101 = vand.u32 %v7013, 4294901760
        %7102 = vmatpush.msra.mxu0 %v7101
        %v7103 = vand.u32 %v7012, 4294901760
        %7104 = vmatpush.msra.mxu0 %v7103
        %v7105 = vand.u32 %v7011, 4294901760
        %7106 = vmatpush.msra.mxu0 %v7105
        %v7107 = vand.u32 %v7007, 4294901760
        %v7108 = vsub.f32 %v7007, %v7107
        %v7109 = vand.u32 %v7108, 4294901760
        %v7110 = vsub.f32 %v7108, %v7109
        %v7111 = vand.u32 %v7110, 4294901760
        %7112 = vmatmul.f32.gmra.mxu0 %v7111
        %v7113 = vpop.f32.mrf.mxu0
        %v7114 = vadd.f32 0.0, %v7113
        %7115 = vdwg.mxu0
        %v7116 = vand.u32 %v7026, 4294901760
        %v7117 = vsub.f32 %v7026, %v7116
        %v7118 = vand.u32 %v7117, 4294901760
        %v7119 = vsub.f32 %v7117, %v7118
        %v7120 = vand.u32 %v7119, 4294901760
        %7121 = vmatpush.msra.mxu0 %v7120
        %v7122 = vand.u32 %v7025, 4294901760
        %v7123 = vsub.f32 %v7025, %v7122
        %v7124 = vand.u32 %v7123, 4294901760
        %v7125 = vsub.f32 %v7123, %v7124
        %v7126 = vand.u32 %v7125, 4294901760
        %7127 = vmatpush.msra.mxu0 %v7126
        %v7128 = vand.u32 %v7024, 4294901760
        %v7129 = vsub.f32 %v7024, %v7128
        %v7130 = vand.u32 %v7129, 4294901760
        %v7131 = vsub.f32 %v7129, %v7130
        %v7132 = vand.u32 %v7131, 4294901760
        %7133 = vmatpush.msra.mxu0 %v7132
        %v7134 = vand.u32 %v7023, 4294901760
        %v7135 = vsub.f32 %v7023, %v7134
        %v7136 = vand.u32 %v7135, 4294901760
        %v7137 = vsub.f32 %v7135, %v7136
        %v7138 = vand.u32 %v7137, 4294901760
        %7139 = vmatpush.msra.mxu0 %v7138
        %v7140 = vand.u32 %v7022, 4294901760
        %v7141 = vsub.f32 %v7022, %v7140
        %v7142 = vand.u32 %v7141, 4294901760
        %v7143 = vsub.f32 %v7141, %v7142
        %v7144 = vand.u32 %v7143, 4294901760
        %7145 = vmatpush.msra.mxu0 %v7144
        %v7146 = vand.u32 %v7021, 4294901760
        %v7147 = vsub.f32 %v7021, %v7146
        %v7148 = vand.u32 %v7147, 4294901760
        %v7149 = vsub.f32 %v7147, %v7148
        %v7150 = vand.u32 %v7149, 4294901760
        %7151 = vmatpush.msra.mxu0 %v7150
        %v7152 = vand.u32 %v7020, 4294901760
        %v7153 = vsub.f32 %v7020, %v7152
        %v7154 = vand.u32 %v7153, 4294901760
        %v7155 = vsub.f32 %v7153, %v7154
        %v7156 = vand.u32 %v7155, 4294901760
        %7157 = vmatpush.msra.mxu0 %v7156
        %v7158 = vand.u32 %v7019, 4294901760
        %v7159 = vsub.f32 %v7019, %v7158
        %v7160 = vand.u32 %v7159, 4294901760
        %v7161 = vsub.f32 %v7159, %v7160
        %v7162 = vand.u32 %v7161, 4294901760
        %7163 = vmatpush.msra.mxu0 %v7162
        %v7164 = vand.u32 %v7018, 4294901760
        %v7165 = vsub.f32 %v7018, %v7164
        %v7166 = vand.u32 %v7165, 4294901760
        %v7167 = vsub.f32 %v7165, %v7166
        %v7168 = vand.u32 %v7167, 4294901760
        %7169 = vmatpush.msra.mxu0 %v7168
        %v7170 = vand.u32 %v7017, 4294901760
        %v7171 = vsub.f32 %v7017, %v7170
        %v7172 = vand.u32 %v7171, 4294901760
        %v7173 = vsub.f32 %v7171, %v7172
        %v7174 = vand.u32 %v7173, 4294901760
        %7175 = vmatpush.msra.mxu0 %v7174
        %v7176 = vand.u32 %v7016, 4294901760
        %v7177 = vsub.f32 %v7016, %v7176
        %v7178 = vand.u32 %v7177, 4294901760
        %v7179 = vsub.f32 %v7177, %v7178
        %v7180 = vand.u32 %v7179, 4294901760
        %7181 = vmatpush.msra.mxu0 %v7180
        %v7182 = vand.u32 %v7015, 4294901760
        %v7183 = vsub.f32 %v7015, %v7182
        %v7184 = vand.u32 %v7183, 4294901760
        %v7185 = vsub.f32 %v7183, %v7184
        %v7186 = vand.u32 %v7185, 4294901760
        %7187 = vmatpush.msra.mxu0 %v7186
        %v7188 = vand.u32 %v7014, 4294901760
        %v7189 = vsub.f32 %v7014, %v7188
        %v7190 = vand.u32 %v7189, 4294901760
        %v7191 = vsub.f32 %v7189, %v7190
        %v7192 = vand.u32 %v7191, 4294901760
        %7193 = vmatpush.msra.mxu0 %v7192
        %v7194 = vand.u32 %v7013, 4294901760
        %v7195 = vsub.f32 %v7013, %v7194
        %v7196 = vand.u32 %v7195, 4294901760
        %v7197 = vsub.f32 %v7195, %v7196
        %v7198 = vand.u32 %v7197, 4294901760
        %7199 = vmatpush.msra.mxu0 %v7198
        %v7200 = vand.u32 %v7012, 4294901760
        %v7201 = vsub.f32 %v7012, %v7200
        %v7202 = vand.u32 %v7201, 4294901760
        %v7203 = vsub.f32 %v7201, %v7202
        %v7204 = vand.u32 %v7203, 4294901760
        %7205 = vmatpush.msra.mxu0 %v7204
        %v7206 = vand.u32 %v7011, 4294901760
        %v7207 = vsub.f32 %v7011, %v7206
        %v7208 = vand.u32 %v7207, 4294901760
        %v7209 = vsub.f32 %v7207, %v7208
        %v7210 = vand.u32 %v7209, 4294901760
        %7211 = vmatpush.msra.mxu0 %v7210
        %v7212 = vand.u32 %v7007, 4294901760
        %7213 = vmatmul.f32.gmra.mxu0 %v7212
        %v7214 = vpop.f32.mrf.mxu0
        %v7215 = vadd.f32 %v7114, %v7214
        %7216 = vdwg.mxu0
        %v7217 = vand.u32 %v7026, 4294901760
        %v7218 = vsub.f32 %v7026, %v7217
        %7219 = vmatpush.msra.mxu0 %v7218
        %v7220 = vand.u32 %v7025, 4294901760
        %v7221 = vsub.f32 %v7025, %v7220
        %7222 = vmatpush.msra.mxu0 %v7221
        %v7223 = vand.u32 %v7024, 4294901760
        %v7224 = vsub.f32 %v7024, %v7223
        %7225 = vmatpush.msra.mxu0 %v7224
        %v7226 = vand.u32 %v7023, 4294901760
        %v7227 = vsub.f32 %v7023, %v7226
        %7228 = vmatpush.msra.mxu0 %v7227
        %v7229 = vand.u32 %v7022, 4294901760
        %v7230 = vsub.f32 %v7022, %v7229
        %7231 = vmatpush.msra.mxu0 %v7230
        %v7232 = vand.u32 %v7021, 4294901760
        %v7233 = vsub.f32 %v7021, %v7232
        %7234 = vmatpush.msra.mxu0 %v7233
        %v7235 = vand.u32 %v7020, 4294901760
        %v7236 = vsub.f32 %v7020, %v7235
        %7237 = vmatpush.msra.mxu0 %v7236
        %v7238 = vand.u32 %v7019, 4294901760
        %v7239 = vsub.f32 %v7019, %v7238
        %7240 = vmatpush.msra.mxu0 %v7239
        %v7241 = vand.u32 %v7018, 4294901760
        %v7242 = vsub.f32 %v7018, %v7241
        %7243 = vmatpush.msra.mxu0 %v7242
        %v7244 = vand.u32 %v7017, 4294901760
        %v7245 = vsub.f32 %v7017, %v7244
        %7246 = vmatpush.msra.mxu0 %v7245
        %v7247 = vand.u32 %v7016, 4294901760
        %v7248 = vsub.f32 %v7016, %v7247
        %7249 = vmatpush.msra.mxu0 %v7248
        %v7250 = vand.u32 %v7015, 4294901760
        %v7251 = vsub.f32 %v7015, %v7250
        %7252 = vmatpush.msra.mxu0 %v7251
        %v7253 = vand.u32 %v7014, 4294901760
        %v7254 = vsub.f32 %v7014, %v7253
        %7255 = vmatpush.msra.mxu0 %v7254
        %v7256 = vand.u32 %v7013, 4294901760
        %v7257 = vsub.f32 %v7013, %v7256
        %7258 = vmatpush.msra.mxu0 %v7257
        %v7259 = vand.u32 %v7012, 4294901760
        %v7260 = vsub.f32 %v7012, %v7259
        %7261 = vmatpush.msra.mxu0 %v7260
        %v7262 = vand.u32 %v7011, 4294901760
        %v7263 = vsub.f32 %v7011, %v7262
        %7264 = vmatpush.msra.mxu0 %v7263
        %v7265 = vand.u32 %v7007, 4294901760
        %v7266 = vsub.f32 %v7007, %v7265
        %7267 = vmatmul.f32.gmra.mxu0 %v7266
        %v7268 = vpop.f32.mrf.mxu0
        %v7269 = vadd.f32 %v7215, %v7268
        %7270 = vdwg.mxu0
        %v7271 = vand.u32 %v7026, 4294901760
        %7272 = vmatpush.msra.mxu0 %v7271
        %v7273 = vand.u32 %v7025, 4294901760
        %7274 = vmatpush.msra.mxu0 %v7273
        %v7275 = vand.u32 %v7024, 4294901760
        %7276 = vmatpush.msra.mxu0 %v7275
        %v7277 = vand.u32 %v7023, 4294901760
        %7278 = vmatpush.msra.mxu0 %v7277
        %v7279 = vand.u32 %v7022, 4294901760
        %7280 = vmatpush.msra.mxu0 %v7279
        %v7281 = vand.u32 %v7021, 4294901760
        %7282 = vmatpush.msra.mxu0 %v7281
        %v7283 = vand.u32 %v7020, 4294901760
        %7284 = vmatpush.msra.mxu0 %v7283
        %v7285 = vand.u32 %v7019, 4294901760
        %7286 = vmatpush.msra.mxu0 %v7285
        %v7287 = vand.u32 %v7018, 4294901760
        %7288 = vmatpush.msra.mxu0 %v7287
        %v7289 = vand.u32 %v7017, 4294901760
        %7290 = vmatpush.msra.mxu0 %v7289
        %v7291 = vand.u32 %v7016, 4294901760
        %7292 = vmatpush.msra.mxu0 %v7291
        %v7293 = vand.u32 %v7015, 4294901760
        %7294 = vmatpush.msra.mxu0 %v7293
        %v7295 = vand.u32 %v7014, 4294901760
        %7296 = vmatpush.msra.mxu0 %v7295
        %v7297 = vand.u32 %v7013, 4294901760
        %7298 = vmatpush.msra.mxu0 %v7297
        %v7299 = vand.u32 %v7012, 4294901760
        %7300 = vmatpush.msra.mxu0 %v7299
        %v7301 = vand.u32 %v7011, 4294901760
        %7302 = vmatpush.msra.mxu0 %v7301
        %v7303 = vand.u32 %v7007, 4294901760
        %v7304 = vsub.f32 %v7007, %v7303
        %v7305 = vand.u32 %v7304, 4294901760
        %7306 = vmatmul.f32.gmra.mxu0 %v7305
        %v7307 = vpop.f32.mrf.mxu0
        %v7308 = vadd.f32 %v7269, %v7307
        %7309 = vdwg.mxu0
        %v7310 = vand.u32 %v7026, 4294901760
        %v7311 = vsub.f32 %v7026, %v7310
        %v7312 = vand.u32 %v7311, 4294901760
        %7313 = vmatpush.msra.mxu0 %v7312
        %v7314 = vand.u32 %v7025, 4294901760
        %v7315 = vsub.f32 %v7025, %v7314
        %v7316 = vand.u32 %v7315, 4294901760
        %7317 = vmatpush.msra.mxu0 %v7316
        %v7318 = vand.u32 %v7024, 4294901760
        %v7319 = vsub.f32 %v7024, %v7318
        %v7320 = vand.u32 %v7319, 4294901760
        %7321 = vmatpush.msra.mxu0 %v7320
        %v7322 = vand.u32 %v7023, 4294901760
        %v7323 = vsub.f32 %v7023, %v7322
        %v7324 = vand.u32 %v7323, 4294901760
        %7325 = vmatpush.msra.mxu0 %v7324
        %v7326 = vand.u32 %v7022, 4294901760
        %v7327 = vsub.f32 %v7022, %v7326
        %v7328 = vand.u32 %v7327, 4294901760
        %7329 = vmatpush.msra.mxu0 %v7328
        %v7330 = vand.u32 %v7021, 4294901760
        %v7331 = vsub.f32 %v7021, %v7330
        %v7332 = vand.u32 %v7331, 4294901760
        %7333 = vmatpush.msra.mxu0 %v7332
        %v7334 = vand.u32 %v7020, 4294901760
        %v7335 = vsub.f32 %v7020, %v7334
        %v7336 = vand.u32 %v7335, 4294901760
        %7337 = vmatpush.msra.mxu0 %v7336
        %v7338 = vand.u32 %v7019, 4294901760
        %v7339 = vsub.f32 %v7019, %v7338
        %v7340 = vand.u32 %v7339, 4294901760
        %7341 = vmatpush.msra.mxu0 %v7340
        %v7342 = vand.u32 %v7018, 4294901760
        %v7343 = vsub.f32 %v7018, %v7342
        %v7344 = vand.u32 %v7343, 4294901760
        %7345 = vmatpush.msra.mxu0 %v7344
        %v7346 = vand.u32 %v7017, 4294901760
        %v7347 = vsub.f32 %v7017, %v7346
        %v7348 = vand.u32 %v7347, 4294901760
        %7349 = vmatpush.msra.mxu0 %v7348
        %v7350 = vand.u32 %v7016, 4294901760
        %v7351 = vsub.f32 %v7016, %v7350
        %v7352 = vand.u32 %v7351, 4294901760
        %7353 = vmatpush.msra.mxu0 %v7352
        %v7354 = vand.u32 %v7015, 4294901760
        %v7355 = vsub.f32 %v7015, %v7354
        %v7356 = vand.u32 %v7355, 4294901760
        %7357 = vmatpush.msra.mxu0 %v7356
        %v7358 = vand.u32 %v7014, 4294901760
        %v7359 = vsub.f32 %v7014, %v7358
        %v7360 = vand.u32 %v7359, 4294901760
        %7361 = vmatpush.msra.mxu0 %v7360
        %v7362 = vand.u32 %v7013, 4294901760
        %v7363 = vsub.f32 %v7013, %v7362
        %v7364 = vand.u32 %v7363, 4294901760
        %7365 = vmatpush.msra.mxu0 %v7364
        %v7366 = vand.u32 %v7012, 4294901760
        %v7367 = vsub.f32 %v7012, %v7366
        %v7368 = vand.u32 %v7367, 4294901760
        %7369 = vmatpush.msra.mxu0 %v7368
        %v7370 = vand.u32 %v7011, 4294901760
        %v7371 = vsub.f32 %v7011, %v7370
        %v7372 = vand.u32 %v7371, 4294901760
        %7373 = vmatpush.msra.mxu0 %v7372
        %v7374 = vand.u32 %v7007, 4294901760
        %7375 = vmatmul.f32.gmra.mxu0 %v7374
        %v7376 = vpop.f32.mrf.mxu0
        %v7377 = vadd.f32 %v7308, %v7376
        %7378 = vdwg.mxu0
        %v7379 = vand.u32 %v7026, 4294901760
        %7380 = vmatpush.msra.mxu0 %v7379
        %v7381 = vand.u32 %v7025, 4294901760
        %7382 = vmatpush.msra.mxu0 %v7381
        %v7383 = vand.u32 %v7024, 4294901760
        %7384 = vmatpush.msra.mxu0 %v7383
        %v7385 = vand.u32 %v7023, 4294901760
        %7386 = vmatpush.msra.mxu0 %v7385
        %v7387 = vand.u32 %v7022, 4294901760
        %7388 = vmatpush.msra.mxu0 %v7387
        %v7389 = vand.u32 %v7021, 4294901760
        %7390 = vmatpush.msra.mxu0 %v7389
        %v7391 = vand.u32 %v7020, 4294901760
        %7392 = vmatpush.msra.mxu0 %v7391
        %v7393 = vand.u32 %v7019, 4294901760
        %7394 = vmatpush.msra.mxu0 %v7393
        %v7395 = vand.u32 %v7018, 4294901760
        %7396 = vmatpush.msra.mxu0 %v7395
        %v7397 = vand.u32 %v7017, 4294901760
        %7398 = vmatpush.msra.mxu0 %v7397
        %v7399 = vand.u32 %v7016, 4294901760
        %7400 = vmatpush.msra.mxu0 %v7399
        %v7401 = vand.u32 %v7015, 4294901760
        %7402 = vmatpush.msra.mxu0 %v7401
        %v7403 = vand.u32 %v7014, 4294901760
        %7404 = vmatpush.msra.mxu0 %v7403
        %v7405 = vand.u32 %v7013, 4294901760
        %7406 = vmatpush.msra.mxu0 %v7405
        %v7407 = vand.u32 %v7012, 4294901760
        %7408 = vmatpush.msra.mxu0 %v7407
        %v7409 = vand.u32 %v7011, 4294901760
        %7410 = vmatpush.msra.mxu0 %v7409
        %v7411 = vand.u32 %v7007, 4294901760
        %7412 = vmatmul.f32.gmra.mxu0 %v7411
        %v7413 = vpop.f32.mrf.mxu0
        %v7414 = vadd.f32 %v7377, %v7413
        %7415 = vdwg.mxu0
        %v7416 = vand.u32 %v7042, 4294901760
        %7417 = vmatpush.msra.mxu0 %v7416
        %v7418 = vand.u32 %v7041, 4294901760
        %7419 = vmatpush.msra.mxu0 %v7418
        %v7420 = vand.u32 %v7040, 4294901760
        %7421 = vmatpush.msra.mxu0 %v7420
        %v7422 = vand.u32 %v7039, 4294901760
        %7423 = vmatpush.msra.mxu0 %v7422
        %v7424 = vand.u32 %v7038, 4294901760
        %7425 = vmatpush.msra.mxu0 %v7424
        %v7426 = vand.u32 %v7037, 4294901760
        %7427 = vmatpush.msra.mxu0 %v7426
        %v7428 = vand.u32 %v7036, 4294901760
        %7429 = vmatpush.msra.mxu0 %v7428
        %v7430 = vand.u32 %v7035, 4294901760
        %7431 = vmatpush.msra.mxu0 %v7430
        %v7432 = vand.u32 %v7034, 4294901760
        %7433 = vmatpush.msra.mxu0 %v7432
        %v7434 = vand.u32 %v7033, 4294901760
        %7435 = vmatpush.msra.mxu0 %v7434
        %v7436 = vand.u32 %v7032, 4294901760
        %7437 = vmatpush.msra.mxu0 %v7436
        %v7438 = vand.u32 %v7031, 4294901760
        %7439 = vmatpush.msra.mxu0 %v7438
        %v7440 = vand.u32 %v7030, 4294901760
        %7441 = vmatpush.msra.mxu0 %v7440
        %v7442 = vand.u32 %v7029, 4294901760
        %7443 = vmatpush.msra.mxu0 %v7442
        %v7444 = vand.u32 %v7028, 4294901760
        %7445 = vmatpush.msra.mxu0 %v7444
        %v7446 = vand.u32 %v7027, 4294901760
        %7447 = vmatpush.msra.mxu0 %v7446
        %v7448 = vand.u32 %v7008, 4294901760
        %v7449 = vsub.f32 %v7008, %v7448
        %v7450 = vand.u32 %v7449, 4294901760
        %v7451 = vsub.f32 %v7449, %v7450
        %v7452 = vand.u32 %v7451, 4294901760
        %7453 = vmatmul.f32.gmra.mxu0 %v7452
        %v7454 = vpop.f32.mrf.mxu0
        %v7455 = vadd.f32 %v7414, %v7454
        %7456 = vdwg.mxu0
        %v7457 = vand.u32 %v7042, 4294901760
        %v7458 = vsub.f32 %v7042, %v7457
        %v7459 = vand.u32 %v7458, 4294901760
        %v7460 = vsub.f32 %v7458, %v7459
        %v7461 = vand.u32 %v7460, 4294901760
        %7462 = vmatpush.msra.mxu0 %v7461
        %v7463 = vand.u32 %v7041, 4294901760
        %v7464 = vsub.f32 %v7041, %v7463
        %v7465 = vand.u32 %v7464, 4294901760
        %v7466 = vsub.f32 %v7464, %v7465
        %v7467 = vand.u32 %v7466, 4294901760
        %7468 = vmatpush.msra.mxu0 %v7467
        %v7469 = vand.u32 %v7040, 4294901760
        %v7470 = vsub.f32 %v7040, %v7469
        %v7471 = vand.u32 %v7470, 4294901760
        %v7472 = vsub.f32 %v7470, %v7471
        %v7473 = vand.u32 %v7472, 4294901760
        %7474 = vmatpush.msra.mxu0 %v7473
        %v7475 = vand.u32 %v7039, 4294901760
        %v7476 = vsub.f32 %v7039, %v7475
        %v7477 = vand.u32 %v7476, 4294901760
        %v7478 = vsub.f32 %v7476, %v7477
        %v7479 = vand.u32 %v7478, 4294901760
        %7480 = vmatpush.msra.mxu0 %v7479
        %v7481 = vand.u32 %v7038, 4294901760
        %v7482 = vsub.f32 %v7038, %v7481
        %v7483 = vand.u32 %v7482, 4294901760
        %v7484 = vsub.f32 %v7482, %v7483
        %v7485 = vand.u32 %v7484, 4294901760
        %7486 = vmatpush.msra.mxu0 %v7485
        %v7487 = vand.u32 %v7037, 4294901760
        %v7488 = vsub.f32 %v7037, %v7487
        %v7489 = vand.u32 %v7488, 4294901760
        %v7490 = vsub.f32 %v7488, %v7489
        %v7491 = vand.u32 %v7490, 4294901760
        %7492 = vmatpush.msra.mxu0 %v7491
        %v7493 = vand.u32 %v7036, 4294901760
        %v7494 = vsub.f32 %v7036, %v7493
        %v7495 = vand.u32 %v7494, 4294901760
        %v7496 = vsub.f32 %v7494, %v7495
        %v7497 = vand.u32 %v7496, 4294901760
        %7498 = vmatpush.msra.mxu0 %v7497
        %v7499 = vand.u32 %v7035, 4294901760
        %v7500 = vsub.f32 %v7035, %v7499
        %v7501 = vand.u32 %v7500, 4294901760
        %v7502 = vsub.f32 %v7500, %v7501
        %v7503 = vand.u32 %v7502, 4294901760
        %7504 = vmatpush.msra.mxu0 %v7503
        %v7505 = vand.u32 %v7034, 4294901760
        %v7506 = vsub.f32 %v7034, %v7505
        %v7507 = vand.u32 %v7506, 4294901760
        %v7508 = vsub.f32 %v7506, %v7507
        %v7509 = vand.u32 %v7508, 4294901760
        %7510 = vmatpush.msra.mxu0 %v7509
        %v7511 = vand.u32 %v7033, 4294901760
        %v7512 = vsub.f32 %v7033, %v7511
        %v7513 = vand.u32 %v7512, 4294901760
        %v7514 = vsub.f32 %v7512, %v7513
        %v7515 = vand.u32 %v7514, 4294901760
        %7516 = vmatpush.msra.mxu0 %v7515
        %v7517 = vand.u32 %v7032, 4294901760
        %v7518 = vsub.f32 %v7032, %v7517
        %v7519 = vand.u32 %v7518, 4294901760
        %v7520 = vsub.f32 %v7518, %v7519
        %v7521 = vand.u32 %v7520, 4294901760
        %7522 = vmatpush.msra.mxu0 %v7521
        %v7523 = vand.u32 %v7031, 4294901760
        %v7524 = vsub.f32 %v7031, %v7523
        %v7525 = vand.u32 %v7524, 4294901760
        %v7526 = vsub.f32 %v7524, %v7525
        %v7527 = vand.u32 %v7526, 4294901760
        %7528 = vmatpush.msra.mxu0 %v7527
        %v7529 = vand.u32 %v7030, 4294901760
        %v7530 = vsub.f32 %v7030, %v7529
        %v7531 = vand.u32 %v7530, 4294901760
        %v7532 = vsub.f32 %v7530, %v7531
        %v7533 = vand.u32 %v7532, 4294901760
        %7534 = vmatpush.msra.mxu0 %v7533
        %v7535 = vand.u32 %v7029, 4294901760
        %v7536 = vsub.f32 %v7029, %v7535
        %v7537 = vand.u32 %v7536, 4294901760
        %v7538 = vsub.f32 %v7536, %v7537
        %v7539 = vand.u32 %v7538, 4294901760
        %7540 = vmatpush.msra.mxu0 %v7539
        %v7541 = vand.u32 %v7028, 4294901760
        %v7542 = vsub.f32 %v7028, %v7541
        %v7543 = vand.u32 %v7542, 4294901760
        %v7544 = vsub.f32 %v7542, %v7543
        %v7545 = vand.u32 %v7544, 4294901760
        %7546 = vmatpush.msra.mxu0 %v7545
        %v7547 = vand.u32 %v7027, 4294901760
        %v7548 = vsub.f32 %v7027, %v7547
        %v7549 = vand.u32 %v7548, 4294901760
        %v7550 = vsub.f32 %v7548, %v7549
        %v7551 = vand.u32 %v7550, 4294901760
        %7552 = vmatpush.msra.mxu0 %v7551
        %v7553 = vand.u32 %v7008, 4294901760
        %7554 = vmatmul.f32.gmra.mxu0 %v7553
        %v7555 = vpop.f32.mrf.mxu0
        %v7556 = vadd.f32 %v7455, %v7555
        %7557 = vdwg.mxu0
        %v7558 = vand.u32 %v7042, 4294901760
        %v7559 = vsub.f32 %v7042, %v7558
        %7560 = vmatpush.msra.mxu0 %v7559
        %v7561 = vand.u32 %v7041, 4294901760
        %v7562 = vsub.f32 %v7041, %v7561
        %7563 = vmatpush.msra.mxu0 %v7562
        %v7564 = vand.u32 %v7040, 4294901760
        %v7565 = vsub.f32 %v7040, %v7564
        %7566 = vmatpush.msra.mxu0 %v7565
        %v7567 = vand.u32 %v7039, 4294901760
        %v7568 = vsub.f32 %v7039, %v7567
        %7569 = vmatpush.msra.mxu0 %v7568
        %v7570 = vand.u32 %v7038, 4294901760
        %v7571 = vsub.f32 %v7038, %v7570
        %7572 = vmatpush.msra.mxu0 %v7571
        %v7573 = vand.u32 %v7037, 4294901760
        %v7574 = vsub.f32 %v7037, %v7573
        %7575 = vmatpush.msra.mxu0 %v7574
        %v7576 = vand.u32 %v7036, 4294901760
        %v7577 = vsub.f32 %v7036, %v7576
        %7578 = vmatpush.msra.mxu0 %v7577
        %v7579 = vand.u32 %v7035, 4294901760
        %v7580 = vsub.f32 %v7035, %v7579
        %7581 = vmatpush.msra.mxu0 %v7580
        %v7582 = vand.u32 %v7034, 4294901760
        %v7583 = vsub.f32 %v7034, %v7582
        %7584 = vmatpush.msra.mxu0 %v7583
        %v7585 = vand.u32 %v7033, 4294901760
        %v7586 = vsub.f32 %v7033, %v7585
        %7587 = vmatpush.msra.mxu0 %v7586
        %v7588 = vand.u32 %v7032, 4294901760
        %v7589 = vsub.f32 %v7032, %v7588
        %7590 = vmatpush.msra.mxu0 %v7589
        %v7591 = vand.u32 %v7031, 4294901760
        %v7592 = vsub.f32 %v7031, %v7591
        %7593 = vmatpush.msra.mxu0 %v7592
        %v7594 = vand.u32 %v7030, 4294901760
        %v7595 = vsub.f32 %v7030, %v7594
        %7596 = vmatpush.msra.mxu0 %v7595
        %v7597 = vand.u32 %v7029, 4294901760
        %v7598 = vsub.f32 %v7029, %v7597
        %7599 = vmatpush.msra.mxu0 %v7598
        %v7600 = vand.u32 %v7028, 4294901760
        %v7601 = vsub.f32 %v7028, %v7600
        %7602 = vmatpush.msra.mxu0 %v7601
        %v7603 = vand.u32 %v7027, 4294901760
        %v7604 = vsub.f32 %v7027, %v7603
        %7605 = vmatpush.msra.mxu0 %v7604
        %v7606 = vand.u32 %v7008, 4294901760
        %v7607 = vsub.f32 %v7008, %v7606
        %7608 = vmatmul.f32.gmra.mxu0 %v7607
        %v7609 = vpop.f32.mrf.mxu0
        %v7610 = vadd.f32 %v7556, %v7609
        %7611 = vdwg.mxu0
        %v7612 = vand.u32 %v7042, 4294901760
        %7613 = vmatpush.msra.mxu0 %v7612
        %v7614 = vand.u32 %v7041, 4294901760
        %7615 = vmatpush.msra.mxu0 %v7614
        %v7616 = vand.u32 %v7040, 4294901760
        %7617 = vmatpush.msra.mxu0 %v7616
        %v7618 = vand.u32 %v7039, 4294901760
        %7619 = vmatpush.msra.mxu0 %v7618
        %v7620 = vand.u32 %v7038, 4294901760
        %7621 = vmatpush.msra.mxu0 %v7620
        %v7622 = vand.u32 %v7037, 4294901760
        %7623 = vmatpush.msra.mxu0 %v7622
        %v7624 = vand.u32 %v7036, 4294901760
        %7625 = vmatpush.msra.mxu0 %v7624
        %v7626 = vand.u32 %v7035, 4294901760
        %7627 = vmatpush.msra.mxu0 %v7626
        %v7628 = vand.u32 %v7034, 4294901760
        %7629 = vmatpush.msra.mxu0 %v7628
        %v7630 = vand.u32 %v7033, 4294901760
        %7631 = vmatpush.msra.mxu0 %v7630
        %v7632 = vand.u32 %v7032, 4294901760
        %7633 = vmatpush.msra.mxu0 %v7632
        %v7634 = vand.u32 %v7031, 4294901760
        %7635 = vmatpush.msra.mxu0 %v7634
        %v7636 = vand.u32 %v7030, 4294901760
        %7637 = vmatpush.msra.mxu0 %v7636
        %v7638 = vand.u32 %v7029, 4294901760
        %7639 = vmatpush.msra.mxu0 %v7638
        %v7640 = vand.u32 %v7028, 4294901760
        %7641 = vmatpush.msra.mxu0 %v7640
        %v7642 = vand.u32 %v7027, 4294901760
        %7643 = vmatpush.msra.mxu0 %v7642
        %v7644 = vand.u32 %v7008, 4294901760
        %v7645 = vsub.f32 %v7008, %v7644
        %v7646 = vand.u32 %v7645, 4294901760
        %7647 = vmatmul.f32.gmra.mxu0 %v7646
        %v7648 = vpop.f32.mrf.mxu0
        %v7649 = vadd.f32 %v7610, %v7648
        %7650 = vdwg.mxu0
        %v7651 = vand.u32 %v7042, 4294901760
        %v7652 = vsub.f32 %v7042, %v7651
        %v7653 = vand.u32 %v7652, 4294901760
        %7654 = vmatpush.msra.mxu0 %v7653
        %v7655 = vand.u32 %v7041, 4294901760
        %v7656 = vsub.f32 %v7041, %v7655
        %v7657 = vand.u32 %v7656, 4294901760
        %7658 = vmatpush.msra.mxu0 %v7657
        %v7659 = vand.u32 %v7040, 4294901760
        %v7660 = vsub.f32 %v7040, %v7659
        %v7661 = vand.u32 %v7660, 4294901760
        %7662 = vmatpush.msra.mxu0 %v7661
        %v7663 = vand.u32 %v7039, 4294901760
        %v7664 = vsub.f32 %v7039, %v7663
        %v7665 = vand.u32 %v7664, 4294901760
        %7666 = vmatpush.msra.mxu0 %v7665
        %v7667 = vand.u32 %v7038, 4294901760
        %v7668 = vsub.f32 %v7038, %v7667
        %v7669 = vand.u32 %v7668, 4294901760
        %7670 = vmatpush.msra.mxu0 %v7669
        %v7671 = vand.u32 %v7037, 4294901760
        %v7672 = vsub.f32 %v7037, %v7671
        %v7673 = vand.u32 %v7672, 4294901760
        %7674 = vmatpush.msra.mxu0 %v7673
        %v7675 = vand.u32 %v7036, 4294901760
        %v7676 = vsub.f32 %v7036, %v7675
        %v7677 = vand.u32 %v7676, 4294901760
        %7678 = vmatpush.msra.mxu0 %v7677
        %v7679 = vand.u32 %v7035, 4294901760
        %v7680 = vsub.f32 %v7035, %v7679
        %v7681 = vand.u32 %v7680, 4294901760
        %7682 = vmatpush.msra.mxu0 %v7681
        %v7683 = vand.u32 %v7034, 4294901760
        %v7684 = vsub.f32 %v7034, %v7683
        %v7685 = vand.u32 %v7684, 4294901760
        %7686 = vmatpush.msra.mxu0 %v7685
        %v7687 = vand.u32 %v7033, 4294901760
        %v7688 = vsub.f32 %v7033, %v7687
        %v7689 = vand.u32 %v7688, 4294901760
        %7690 = vmatpush.msra.mxu0 %v7689
        %v7691 = vand.u32 %v7032, 4294901760
        %v7692 = vsub.f32 %v7032, %v7691
        %v7693 = vand.u32 %v7692, 4294901760
        %7694 = vmatpush.msra.mxu0 %v7693
        %v7695 = vand.u32 %v7031, 4294901760
        %v7696 = vsub.f32 %v7031, %v7695
        %v7697 = vand.u32 %v7696, 4294901760
        %7698 = vmatpush.msra.mxu0 %v7697
        %v7699 = vand.u32 %v7030, 4294901760
        %v7700 = vsub.f32 %v7030, %v7699
        %v7701 = vand.u32 %v7700, 4294901760
        %7702 = vmatpush.msra.mxu0 %v7701
        %v7703 = vand.u32 %v7029, 4294901760
        %v7704 = vsub.f32 %v7029, %v7703
        %v7705 = vand.u32 %v7704, 4294901760
        %7706 = vmatpush.msra.mxu0 %v7705
        %v7707 = vand.u32 %v7028, 4294901760
        %v7708 = vsub.f32 %v7028, %v7707
        %v7709 = vand.u32 %v7708, 4294901760
        %7710 = vmatpush.msra.mxu0 %v7709
        %v7711 = vand.u32 %v7027, 4294901760
        %v7712 = vsub.f32 %v7027, %v7711
        %v7713 = vand.u32 %v7712, 4294901760
        %7714 = vmatpush.msra.mxu0 %v7713
        %v7715 = vand.u32 %v7008, 4294901760
        %7716 = vmatmul.f32.gmra.mxu0 %v7715
        %v7717 = vpop.f32.mrf.mxu0
        %v7718 = vadd.f32 %v7649, %v7717
        %7719 = vdwg.mxu0
        %v7720 = vand.u32 %v7042, 4294901760
        %7721 = vmatpush.msra.mxu0 %v7720
        %v7722 = vand.u32 %v7041, 4294901760
        %7723 = vmatpush.msra.mxu0 %v7722
        %v7724 = vand.u32 %v7040, 4294901760
        %7725 = vmatpush.msra.mxu0 %v7724
        %v7726 = vand.u32 %v7039, 4294901760
        %7727 = vmatpush.msra.mxu0 %v7726
        %v7728 = vand.u32 %v7038, 4294901760
        %7729 = vmatpush.msra.mxu0 %v7728
        %v7730 = vand.u32 %v7037, 4294901760
        %7731 = vmatpush.msra.mxu0 %v7730
        %v7732 = vand.u32 %v7036, 4294901760
        %7733 = vmatpush.msra.mxu0 %v7732
        %v7734 = vand.u32 %v7035, 4294901760
        %7735 = vmatpush.msra.mxu0 %v7734
        %v7736 = vand.u32 %v7034, 4294901760
        %7737 = vmatpush.msra.mxu0 %v7736
        %v7738 = vand.u32 %v7033, 4294901760
        %7739 = vmatpush.msra.mxu0 %v7738
        %v7740 = vand.u32 %v7032, 4294901760
        %7741 = vmatpush.msra.mxu0 %v7740
        %v7742 = vand.u32 %v7031, 4294901760
        %7743 = vmatpush.msra.mxu0 %v7742
        %v7744 = vand.u32 %v7030, 4294901760
        %7745 = vmatpush.msra.mxu0 %v7744
        %v7746 = vand.u32 %v7029, 4294901760
        %7747 = vmatpush.msra.mxu0 %v7746
        %v7748 = vand.u32 %v7028, 4294901760
        %7749 = vmatpush.msra.mxu0 %v7748
        %v7750 = vand.u32 %v7027, 4294901760
        %7751 = vmatpush.msra.mxu0 %v7750
        %v7752 = vand.u32 %v7008, 4294901760
        %7753 = vmatmul.f32.gmra.mxu0 %v7752
        %v7754 = vpop.f32.mrf.mxu0
        %v7755 = vadd.f32 %v7718, %v7754
        %7756 = vdwg.mxu0
        %v7757 = vand.u32 %v7058, 4294901760
        %7758 = vmatpush.msra.mxu0 %v7757
        %v7759 = vand.u32 %v7057, 4294901760
        %7760 = vmatpush.msra.mxu0 %v7759
        %v7761 = vand.u32 %v7056, 4294901760
        %7762 = vmatpush.msra.mxu0 %v7761
        %v7763 = vand.u32 %v7055, 4294901760
        %7764 = vmatpush.msra.mxu0 %v7763
        %v7765 = vand.u32 %v7054, 4294901760
        %7766 = vmatpush.msra.mxu0 %v7765
        %v7767 = vand.u32 %v7053, 4294901760
        %7768 = vmatpush.msra.mxu0 %v7767
        %v7769 = vand.u32 %v7052, 4294901760
        %7770 = vmatpush.msra.mxu0 %v7769
        %v7771 = vand.u32 %v7051, 4294901760
        %7772 = vmatpush.msra.mxu0 %v7771
        %v7773 = vand.u32 %v7050, 4294901760
        %7774 = vmatpush.msra.mxu0 %v7773
        %v7775 = vand.u32 %v7049, 4294901760
        %7776 = vmatpush.msra.mxu0 %v7775
        %v7777 = vand.u32 %v7048, 4294901760
        %7778 = vmatpush.msra.mxu0 %v7777
        %v7779 = vand.u32 %v7047, 4294901760
        %7780 = vmatpush.msra.mxu0 %v7779
        %v7781 = vand.u32 %v7046, 4294901760
        %7782 = vmatpush.msra.mxu0 %v7781
        %v7783 = vand.u32 %v7045, 4294901760
        %7784 = vmatpush.msra.mxu0 %v7783
        %v7785 = vand.u32 %v7044, 4294901760
        %7786 = vmatpush.msra.mxu0 %v7785
        %v7787 = vand.u32 %v7043, 4294901760
        %7788 = vmatpush.msra.mxu0 %v7787
        %v7789 = vand.u32 %v7009, 4294901760
        %v7790 = vsub.f32 %v7009, %v7789
        %v7791 = vand.u32 %v7790, 4294901760
        %v7792 = vsub.f32 %v7790, %v7791
        %v7793 = vand.u32 %v7792, 4294901760
        %7794 = vmatmul.f32.gmra.mxu0 %v7793
        %v7795 = vpop.f32.mrf.mxu0
        %v7796 = vadd.f32 %v7755, %v7795
        %7797 = vdwg.mxu0
        %v7798 = vand.u32 %v7058, 4294901760
        %v7799 = vsub.f32 %v7058, %v7798
        %v7800 = vand.u32 %v7799, 4294901760
        %v7801 = vsub.f32 %v7799, %v7800
        %v7802 = vand.u32 %v7801, 4294901760
        %7803 = vmatpush.msra.mxu0 %v7802
        %v7804 = vand.u32 %v7057, 4294901760
        %v7805 = vsub.f32 %v7057, %v7804
        %v7806 = vand.u32 %v7805, 4294901760
        %v7807 = vsub.f32 %v7805, %v7806
        %v7808 = vand.u32 %v7807, 4294901760
        %7809 = vmatpush.msra.mxu0 %v7808
        %v7810 = vand.u32 %v7056, 4294901760
        %v7811 = vsub.f32 %v7056, %v7810
        %v7812 = vand.u32 %v7811, 4294901760
        %v7813 = vsub.f32 %v7811, %v7812
        %v7814 = vand.u32 %v7813, 4294901760
        %7815 = vmatpush.msra.mxu0 %v7814
        %v7816 = vand.u32 %v7055, 4294901760
        %v7817 = vsub.f32 %v7055, %v7816
        %v7818 = vand.u32 %v7817, 4294901760
        %v7819 = vsub.f32 %v7817, %v7818
        %v7820 = vand.u32 %v7819, 4294901760
        %7821 = vmatpush.msra.mxu0 %v7820
        %v7822 = vand.u32 %v7054, 4294901760
        %v7823 = vsub.f32 %v7054, %v7822
        %v7824 = vand.u32 %v7823, 4294901760
        %v7825 = vsub.f32 %v7823, %v7824
        %v7826 = vand.u32 %v7825, 4294901760
        %7827 = vmatpush.msra.mxu0 %v7826
        %v7828 = vand.u32 %v7053, 4294901760
        %v7829 = vsub.f32 %v7053, %v7828
        %v7830 = vand.u32 %v7829, 4294901760
        %v7831 = vsub.f32 %v7829, %v7830
        %v7832 = vand.u32 %v7831, 4294901760
        %7833 = vmatpush.msra.mxu0 %v7832
        %v7834 = vand.u32 %v7052, 4294901760
        %v7835 = vsub.f32 %v7052, %v7834
        %v7836 = vand.u32 %v7835, 4294901760
        %v7837 = vsub.f32 %v7835, %v7836
        %v7838 = vand.u32 %v7837, 4294901760
        %7839 = vmatpush.msra.mxu0 %v7838
        %v7840 = vand.u32 %v7051, 4294901760
        %v7841 = vsub.f32 %v7051, %v7840
        %v7842 = vand.u32 %v7841, 4294901760
        %v7843 = vsub.f32 %v7841, %v7842
        %v7844 = vand.u32 %v7843, 4294901760
        %7845 = vmatpush.msra.mxu0 %v7844
        %v7846 = vand.u32 %v7050, 4294901760
        %v7847 = vsub.f32 %v7050, %v7846
        %v7848 = vand.u32 %v7847, 4294901760
        %v7849 = vsub.f32 %v7847, %v7848
        %v7850 = vand.u32 %v7849, 4294901760
        %7851 = vmatpush.msra.mxu0 %v7850
        %v7852 = vand.u32 %v7049, 4294901760
        %v7853 = vsub.f32 %v7049, %v7852
        %v7854 = vand.u32 %v7853, 4294901760
        %v7855 = vsub.f32 %v7853, %v7854
        %v7856 = vand.u32 %v7855, 4294901760
        %7857 = vmatpush.msra.mxu0 %v7856
        %v7858 = vand.u32 %v7048, 4294901760
        %v7859 = vsub.f32 %v7048, %v7858
        %v7860 = vand.u32 %v7859, 4294901760
        %v7861 = vsub.f32 %v7859, %v7860
        %v7862 = vand.u32 %v7861, 4294901760
        %7863 = vmatpush.msra.mxu0 %v7862
        %v7864 = vand.u32 %v7047, 4294901760
        %v7865 = vsub.f32 %v7047, %v7864
        %v7866 = vand.u32 %v7865, 4294901760
        %v7867 = vsub.f32 %v7865, %v7866
        %v7868 = vand.u32 %v7867, 4294901760
        %7869 = vmatpush.msra.mxu0 %v7868
        %v7870 = vand.u32 %v7046, 4294901760
        %v7871 = vsub.f32 %v7046, %v7870
        %v7872 = vand.u32 %v7871, 4294901760
        %v7873 = vsub.f32 %v7871, %v7872
        %v7874 = vand.u32 %v7873, 4294901760
        %7875 = vmatpush.msra.mxu0 %v7874
        %v7876 = vand.u32 %v7045, 4294901760
        %v7877 = vsub.f32 %v7045, %v7876
        %v7878 = vand.u32 %v7877, 4294901760
        %v7879 = vsub.f32 %v7877, %v7878
        %v7880 = vand.u32 %v7879, 4294901760
        %7881 = vmatpush.msra.mxu0 %v7880
        %v7882 = vand.u32 %v7044, 4294901760
        %v7883 = vsub.f32 %v7044, %v7882
        %v7884 = vand.u32 %v7883, 4294901760
        %v7885 = vsub.f32 %v7883, %v7884
        %v7886 = vand.u32 %v7885, 4294901760
        %7887 = vmatpush.msra.mxu0 %v7886
        %v7888 = vand.u32 %v7043, 4294901760
        %v7889 = vsub.f32 %v7043, %v7888
        %v7890 = vand.u32 %v7889, 4294901760
        %v7891 = vsub.f32 %v7889, %v7890
        %v7892 = vand.u32 %v7891, 4294901760
        %7893 = vmatpush.msra.mxu0 %v7892
        %v7894 = vand.u32 %v7009, 4294901760
        %7895 = vmatmul.f32.gmra.mxu0 %v7894
        %v7896 = vpop.f32.mrf.mxu0
        %v7897 = vadd.f32 %v7796, %v7896
        %7898 = vdwg.mxu0
        %v7899 = vand.u32 %v7058, 4294901760
        %v7900 = vsub.f32 %v7058, %v7899
        %7901 = vmatpush.msra.mxu0 %v7900
        %v7902 = vand.u32 %v7057, 4294901760
        %v7903 = vsub.f32 %v7057, %v7902
        %7904 = vmatpush.msra.mxu0 %v7903
        %v7905 = vand.u32 %v7056, 4294901760
        %v7906 = vsub.f32 %v7056, %v7905
        %7907 = vmatpush.msra.mxu0 %v7906
        %v7908 = vand.u32 %v7055, 4294901760
        %v7909 = vsub.f32 %v7055, %v7908
        %7910 = vmatpush.msra.mxu0 %v7909
        %v7911 = vand.u32 %v7054, 4294901760
        %v7912 = vsub.f32 %v7054, %v7911
        %7913 = vmatpush.msra.mxu0 %v7912
        %v7914 = vand.u32 %v7053, 4294901760
        %v7915 = vsub.f32 %v7053, %v7914
        %7916 = vmatpush.msra.mxu0 %v7915
        %v7917 = vand.u32 %v7052, 4294901760
        %v7918 = vsub.f32 %v7052, %v7917
        %7919 = vmatpush.msra.mxu0 %v7918
        %v7920 = vand.u32 %v7051, 4294901760
        %v7921 = vsub.f32 %v7051, %v7920
        %7922 = vmatpush.msra.mxu0 %v7921
        %v7923 = vand.u32 %v7050, 4294901760
        %v7924 = vsub.f32 %v7050, %v7923
        %7925 = vmatpush.msra.mxu0 %v7924
        %v7926 = vand.u32 %v7049, 4294901760
        %v7927 = vsub.f32 %v7049, %v7926
        %7928 = vmatpush.msra.mxu0 %v7927
        %v7929 = vand.u32 %v7048, 4294901760
        %v7930 = vsub.f32 %v7048, %v7929
        %7931 = vmatpush.msra.mxu0 %v7930
        %v7932 = vand.u32 %v7047, 4294901760
        %v7933 = vsub.f32 %v7047, %v7932
        %7934 = vmatpush.msra.mxu0 %v7933
        %v7935 = vand.u32 %v7046, 4294901760
        %v7936 = vsub.f32 %v7046, %v7935
        %7937 = vmatpush.msra.mxu0 %v7936
        %v7938 = vand.u32 %v7045, 4294901760
        %v7939 = vsub.f32 %v7045, %v7938
        %7940 = vmatpush.msra.mxu0 %v7939
        %v7941 = vand.u32 %v7044, 4294901760
        %v7942 = vsub.f32 %v7044, %v7941
        %7943 = vmatpush.msra.mxu0 %v7942
        %v7944 = vand.u32 %v7043, 4294901760
        %v7945 = vsub.f32 %v7043, %v7944
        %7946 = vmatpush.msra.mxu0 %v7945
        %v7947 = vand.u32 %v7009, 4294901760
        %v7948 = vsub.f32 %v7009, %v7947
        %7949 = vmatmul.f32.gmra.mxu0 %v7948
        %v7950 = vpop.f32.mrf.mxu0
        %v7951 = vadd.f32 %v7897, %v7950
        %7952 = vdwg.mxu0
        %v7953 = vand.u32 %v7058, 4294901760
        %7954 = vmatpush.msra.mxu0 %v7953
        %v7955 = vand.u32 %v7057, 4294901760
        %7956 = vmatpush.msra.mxu0 %v7955
        %v7957 = vand.u32 %v7056, 4294901760
        %7958 = vmatpush.msra.mxu0 %v7957
        %v7959 = vand.u32 %v7055, 4294901760
        %7960 = vmatpush.msra.mxu0 %v7959
        %v7961 = vand.u32 %v7054, 4294901760
        %7962 = vmatpush.msra.mxu0 %v7961
        %v7963 = vand.u32 %v7053, 4294901760
        %7964 = vmatpush.msra.mxu0 %v7963
        %v7965 = vand.u32 %v7052, 4294901760
        %7966 = vmatpush.msra.mxu0 %v7965
        %v7967 = vand.u32 %v7051, 4294901760
        %7968 = vmatpush.msra.mxu0 %v7967
        %v7969 = vand.u32 %v7050, 4294901760
        %7970 = vmatpush.msra.mxu0 %v7969
        %v7971 = vand.u32 %v7049, 4294901760
        %7972 = vmatpush.msra.mxu0 %v7971
        %v7973 = vand.u32 %v7048, 4294901760
        %7974 = vmatpush.msra.mxu0 %v7973
        %v7975 = vand.u32 %v7047, 4294901760
        %7976 = vmatpush.msra.mxu0 %v7975
        %v7977 = vand.u32 %v7046, 4294901760
        %7978 = vmatpush.msra.mxu0 %v7977
        %v7979 = vand.u32 %v7045, 4294901760
        %7980 = vmatpush.msra.mxu0 %v7979
        %v7981 = vand.u32 %v7044, 4294901760
        %7982 = vmatpush.msra.mxu0 %v7981
        %v7983 = vand.u32 %v7043, 4294901760
        %7984 = vmatpush.msra.mxu0 %v7983
        %v7985 = vand.u32 %v7009, 4294901760
        %v7986 = vsub.f32 %v7009, %v7985
        %v7987 = vand.u32 %v7986, 4294901760
        %7988 = vmatmul.f32.gmra.mxu0 %v7987
        %v7989 = vpop.f32.mrf.mxu0
        %v7990 = vadd.f32 %v7951, %v7989
        %7991 = vdwg.mxu0
        %v7992 = vand.u32 %v7058, 4294901760
        %v7993 = vsub.f32 %v7058, %v7992
        %v7994 = vand.u32 %v7993, 4294901760
        %7995 = vmatpush.msra.mxu0 %v7994
        %v7996 = vand.u32 %v7057, 4294901760
        %v7997 = vsub.f32 %v7057, %v7996
        %v7998 = vand.u32 %v7997, 4294901760
        %7999 = vmatpush.msra.mxu0 %v7998
        %v8000 = vand.u32 %v7056, 4294901760
        %v8001 = vsub.f32 %v7056, %v8000
        %v8002 = vand.u32 %v8001, 4294901760
        %8003 = vmatpush.msra.mxu0 %v8002
        %v8004 = vand.u32 %v7055, 4294901760
        %v8005 = vsub.f32 %v7055, %v8004
        %v8006 = vand.u32 %v8005, 4294901760
        %8007 = vmatpush.msra.mxu0 %v8006
        %v8008 = vand.u32 %v7054, 4294901760
        %v8009 = vsub.f32 %v7054, %v8008
        %v8010 = vand.u32 %v8009, 4294901760
        %8011 = vmatpush.msra.mxu0 %v8010
        %v8012 = vand.u32 %v7053, 4294901760
        %v8013 = vsub.f32 %v7053, %v8012
        %v8014 = vand.u32 %v8013, 4294901760
        %8015 = vmatpush.msra.mxu0 %v8014
        %v8016 = vand.u32 %v7052, 4294901760
        %v8017 = vsub.f32 %v7052, %v8016
        %v8018 = vand.u32 %v8017, 4294901760
        %8019 = vmatpush.msra.mxu0 %v8018
        %v8020 = vand.u32 %v7051, 4294901760
        %v8021 = vsub.f32 %v7051, %v8020
        %v8022 = vand.u32 %v8021, 4294901760
        %8023 = vmatpush.msra.mxu0 %v8022
        %v8024 = vand.u32 %v7050, 4294901760
        %v8025 = vsub.f32 %v7050, %v8024
        %v8026 = vand.u32 %v8025, 4294901760
        %8027 = vmatpush.msra.mxu0 %v8026
        %v8028 = vand.u32 %v7049, 4294901760
        %v8029 = vsub.f32 %v7049, %v8028
        %v8030 = vand.u32 %v8029, 4294901760
        %8031 = vmatpush.msra.mxu0 %v8030
        %v8032 = vand.u32 %v7048, 4294901760
        %v8033 = vsub.f32 %v7048, %v8032
        %v8034 = vand.u32 %v8033, 4294901760
        %8035 = vmatpush.msra.mxu0 %v8034
        %v8036 = vand.u32 %v7047, 4294901760
        %v8037 = vsub.f32 %v7047, %v8036
        %v8038 = vand.u32 %v8037, 4294901760
        %8039 = vmatpush.msra.mxu0 %v8038
        %v8040 = vand.u32 %v7046, 4294901760
        %v8041 = vsub.f32 %v7046, %v8040
        %v8042 = vand.u32 %v8041, 4294901760
        %8043 = vmatpush.msra.mxu0 %v8042
        %v8044 = vand.u32 %v7045, 4294901760
        %v8045 = vsub.f32 %v7045, %v8044
        %v8046 = vand.u32 %v8045, 4294901760
        %8047 = vmatpush.msra.mxu0 %v8046
        %v8048 = vand.u32 %v7044, 4294901760
        %v8049 = vsub.f32 %v7044, %v8048
        %v8050 = vand.u32 %v8049, 4294901760
        %8051 = vmatpush.msra.mxu0 %v8050
        %v8052 = vand.u32 %v7043, 4294901760
        %v8053 = vsub.f32 %v7043, %v8052
        %v8054 = vand.u32 %v8053, 4294901760
        %8055 = vmatpush.msra.mxu0 %v8054
        %v8056 = vand.u32 %v7009, 4294901760
        %8057 = vmatmul.f32.gmra.mxu0 %v8056
        %v8058 = vpop.f32.mrf.mxu0
        %v8059 = vadd.f32 %v7990, %v8058
        %8060 = vdwg.mxu0
        %v8061 = vand.u32 %v7058, 4294901760
        %8062 = vmatpush.msra.mxu0 %v8061
        %v8063 = vand.u32 %v7057, 4294901760
        %8064 = vmatpush.msra.mxu0 %v8063
        %v8065 = vand.u32 %v7056, 4294901760
        %8066 = vmatpush.msra.mxu0 %v8065
        %v8067 = vand.u32 %v7055, 4294901760
        %8068 = vmatpush.msra.mxu0 %v8067
        %v8069 = vand.u32 %v7054, 4294901760
        %8070 = vmatpush.msra.mxu0 %v8069
        %v8071 = vand.u32 %v7053, 4294901760
        %8072 = vmatpush.msra.mxu0 %v8071
        %v8073 = vand.u32 %v7052, 4294901760
        %8074 = vmatpush.msra.mxu0 %v8073
        %v8075 = vand.u32 %v7051, 4294901760
        %8076 = vmatpush.msra.mxu0 %v8075
        %v8077 = vand.u32 %v7050, 4294901760
        %8078 = vmatpush.msra.mxu0 %v8077
        %v8079 = vand.u32 %v7049, 4294901760
        %8080 = vmatpush.msra.mxu0 %v8079
        %v8081 = vand.u32 %v7048, 4294901760
        %8082 = vmatpush.msra.mxu0 %v8081
        %v8083 = vand.u32 %v7047, 4294901760
        %8084 = vmatpush.msra.mxu0 %v8083
        %v8085 = vand.u32 %v7046, 4294901760
        %8086 = vmatpush.msra.mxu0 %v8085
        %v8087 = vand.u32 %v7045, 4294901760
        %8088 = vmatpush.msra.mxu0 %v8087
        %v8089 = vand.u32 %v7044, 4294901760
        %8090 = vmatpush.msra.mxu0 %v8089
        %v8091 = vand.u32 %v7043, 4294901760
        %8092 = vmatpush.msra.mxu0 %v8091
        %v8093 = vand.u32 %v7009, 4294901760
        %8094 = vmatmul.f32.gmra.mxu0 %v8093
        %v8095 = vpop.f32.mrf.mxu0
        %v8096 = vadd.f32 %v8059, %v8095
        %8097 = vdwg.mxu0
        %v8098 = vand.u32 %v7074, 4294901760
        %8099 = vmatpush.msra.mxu0 %v8098
        %v8100 = vand.u32 %v7073, 4294901760
        %8101 = vmatpush.msra.mxu0 %v8100
        %v8102 = vand.u32 %v7072, 4294901760
        %8103 = vmatpush.msra.mxu0 %v8102
        %v8104 = vand.u32 %v7071, 4294901760
        %8105 = vmatpush.msra.mxu0 %v8104
        %v8106 = vand.u32 %v7070, 4294901760
        %8107 = vmatpush.msra.mxu0 %v8106
        %v8108 = vand.u32 %v7069, 4294901760
        %8109 = vmatpush.msra.mxu0 %v8108
        %v8110 = vand.u32 %v7068, 4294901760
        %8111 = vmatpush.msra.mxu0 %v8110
        %v8112 = vand.u32 %v7067, 4294901760
        %8113 = vmatpush.msra.mxu0 %v8112
        %v8114 = vand.u32 %v7066, 4294901760
        %8115 = vmatpush.msra.mxu0 %v8114
        %v8116 = vand.u32 %v7065, 4294901760
        %8117 = vmatpush.msra.mxu0 %v8116
        %v8118 = vand.u32 %v7064, 4294901760
        %8119 = vmatpush.msra.mxu0 %v8118
        %v8120 = vand.u32 %v7063, 4294901760
        %8121 = vmatpush.msra.mxu0 %v8120
        %v8122 = vand.u32 %v7062, 4294901760
        %8123 = vmatpush.msra.mxu0 %v8122
        %v8124 = vand.u32 %v7061, 4294901760
        %8125 = vmatpush.msra.mxu0 %v8124
        %v8126 = vand.u32 %v7060, 4294901760
        %8127 = vmatpush.msra.mxu0 %v8126
        %v8128 = vand.u32 %v7059, 4294901760
        %8129 = vmatpush.msra.mxu0 %v8128
        %v8130 = vand.u32 %v7010, 4294901760
        %v8131 = vsub.f32 %v7010, %v8130
        %v8132 = vand.u32 %v8131, 4294901760
        %v8133 = vsub.f32 %v8131, %v8132
        %v8134 = vand.u32 %v8133, 4294901760
        %8135 = vmatmul.f32.gmra.mxu0 %v8134
        %v8136 = vpop.f32.mrf.mxu0
        %v8137 = vadd.f32 %v8096, %v8136
        %8138 = vdwg.mxu0
        %v8139 = vand.u32 %v7074, 4294901760
        %v8140 = vsub.f32 %v7074, %v8139
        %v8141 = vand.u32 %v8140, 4294901760
        %v8142 = vsub.f32 %v8140, %v8141
        %v8143 = vand.u32 %v8142, 4294901760
        %8144 = vmatpush.msra.mxu0 %v8143
        %v8145 = vand.u32 %v7073, 4294901760
        %v8146 = vsub.f32 %v7073, %v8145
        %v8147 = vand.u32 %v8146, 4294901760
        %v8148 = vsub.f32 %v8146, %v8147
        %v8149 = vand.u32 %v8148, 4294901760
        %8150 = vmatpush.msra.mxu0 %v8149
        %v8151 = vand.u32 %v7072, 4294901760
        %v8152 = vsub.f32 %v7072, %v8151
        %v8153 = vand.u32 %v8152, 4294901760
        %v8154 = vsub.f32 %v8152, %v8153
        %v8155 = vand.u32 %v8154, 4294901760
        %8156 = vmatpush.msra.mxu0 %v8155
        %v8157 = vand.u32 %v7071, 4294901760
        %v8158 = vsub.f32 %v7071, %v8157
        %v8159 = vand.u32 %v8158, 4294901760
        %v8160 = vsub.f32 %v8158, %v8159
        %v8161 = vand.u32 %v8160, 4294901760
        %8162 = vmatpush.msra.mxu0 %v8161
        %v8163 = vand.u32 %v7070, 4294901760
        %v8164 = vsub.f32 %v7070, %v8163
        %v8165 = vand.u32 %v8164, 4294901760
        %v8166 = vsub.f32 %v8164, %v8165
        %v8167 = vand.u32 %v8166, 4294901760
        %8168 = vmatpush.msra.mxu0 %v8167
        %v8169 = vand.u32 %v7069, 4294901760
        %v8170 = vsub.f32 %v7069, %v8169
        %v8171 = vand.u32 %v8170, 4294901760
        %v8172 = vsub.f32 %v8170, %v8171
        %v8173 = vand.u32 %v8172, 4294901760
        %8174 = vmatpush.msra.mxu0 %v8173
        %v8175 = vand.u32 %v7068, 4294901760
        %v8176 = vsub.f32 %v7068, %v8175
        %v8177 = vand.u32 %v8176, 4294901760
        %v8178 = vsub.f32 %v8176, %v8177
        %v8179 = vand.u32 %v8178, 4294901760
        %8180 = vmatpush.msra.mxu0 %v8179
        %v8181 = vand.u32 %v7067, 4294901760
        %v8182 = vsub.f32 %v7067, %v8181
        %v8183 = vand.u32 %v8182, 4294901760
        %v8184 = vsub.f32 %v8182, %v8183
        %v8185 = vand.u32 %v8184, 4294901760
        %8186 = vmatpush.msra.mxu0 %v8185
        %v8187 = vand.u32 %v7066, 4294901760
        %v8188 = vsub.f32 %v7066, %v8187
        %v8189 = vand.u32 %v8188, 4294901760
        %v8190 = vsub.f32 %v8188, %v8189
        %v8191 = vand.u32 %v8190, 4294901760
        %8192 = vmatpush.msra.mxu0 %v8191
        %v8193 = vand.u32 %v7065, 4294901760
        %v8194 = vsub.f32 %v7065, %v8193
        %v8195 = vand.u32 %v8194, 4294901760
        %v8196 = vsub.f32 %v8194, %v8195
        %v8197 = vand.u32 %v8196, 4294901760
        %8198 = vmatpush.msra.mxu0 %v8197
        %v8199 = vand.u32 %v7064, 4294901760
        %v8200 = vsub.f32 %v7064, %v8199
        %v8201 = vand.u32 %v8200, 4294901760
        %v8202 = vsub.f32 %v8200, %v8201
        %v8203 = vand.u32 %v8202, 4294901760
        %8204 = vmatpush.msra.mxu0 %v8203
        %v8205 = vand.u32 %v7063, 4294901760
        %v8206 = vsub.f32 %v7063, %v8205
        %v8207 = vand.u32 %v8206, 4294901760
        %v8208 = vsub.f32 %v8206, %v8207
        %v8209 = vand.u32 %v8208, 4294901760
        %8210 = vmatpush.msra.mxu0 %v8209
        %v8211 = vand.u32 %v7062, 4294901760
        %v8212 = vsub.f32 %v7062, %v8211
        %v8213 = vand.u32 %v8212, 4294901760
        %v8214 = vsub.f32 %v8212, %v8213
        %v8215 = vand.u32 %v8214, 4294901760
        %8216 = vmatpush.msra.mxu0 %v8215
        %v8217 = vand.u32 %v7061, 4294901760
        %v8218 = vsub.f32 %v7061, %v8217
        %v8219 = vand.u32 %v8218, 4294901760
        %v8220 = vsub.f32 %v8218, %v8219
        %v8221 = vand.u32 %v8220, 4294901760
        %8222 = vmatpush.msra.mxu0 %v8221
        %v8223 = vand.u32 %v7060, 4294901760
        %v8224 = vsub.f32 %v7060, %v8223
        %v8225 = vand.u32 %v8224, 4294901760
        %v8226 = vsub.f32 %v8224, %v8225
        %v8227 = vand.u32 %v8226, 4294901760
        %8228 = vmatpush.msra.mxu0 %v8227
        %v8229 = vand.u32 %v7059, 4294901760
        %v8230 = vsub.f32 %v7059, %v8229
        %v8231 = vand.u32 %v8230, 4294901760
        %v8232 = vsub.f32 %v8230, %v8231
        %v8233 = vand.u32 %v8232, 4294901760
        %8234 = vmatpush.msra.mxu0 %v8233
        %v8235 = vand.u32 %v7010, 4294901760
        %8236 = vmatmul.f32.gmra.mxu0 %v8235
        %v8237 = vpop.f32.mrf.mxu0
        %v8238 = vadd.f32 %v8137, %v8237
        %8239 = vdwg.mxu0
        %v8240 = vand.u32 %v7074, 4294901760
        %v8241 = vsub.f32 %v7074, %v8240
        %8242 = vmatpush.msra.mxu0 %v8241
        %v8243 = vand.u32 %v7073, 4294901760
        %v8244 = vsub.f32 %v7073, %v8243
        %8245 = vmatpush.msra.mxu0 %v8244
        %v8246 = vand.u32 %v7072, 4294901760
        %v8247 = vsub.f32 %v7072, %v8246
        %8248 = vmatpush.msra.mxu0 %v8247
        %v8249 = vand.u32 %v7071, 4294901760
        %v8250 = vsub.f32 %v7071, %v8249
        %8251 = vmatpush.msra.mxu0 %v8250
        %v8252 = vand.u32 %v7070, 4294901760
        %v8253 = vsub.f32 %v7070, %v8252
        %8254 = vmatpush.msra.mxu0 %v8253
        %v8255 = vand.u32 %v7069, 4294901760
        %v8256 = vsub.f32 %v7069, %v8255
        %8257 = vmatpush.msra.mxu0 %v8256
        %v8258 = vand.u32 %v7068, 4294901760
        %v8259 = vsub.f32 %v7068, %v8258
        %8260 = vmatpush.msra.mxu0 %v8259
        %v8261 = vand.u32 %v7067, 4294901760
        %v8262 = vsub.f32 %v7067, %v8261
        %8263 = vmatpush.msra.mxu0 %v8262
        %v8264 = vand.u32 %v7066, 4294901760
        %v8265 = vsub.f32 %v7066, %v8264
        %8266 = vmatpush.msra.mxu0 %v8265
        %v8267 = vand.u32 %v7065, 4294901760
        %v8268 = vsub.f32 %v7065, %v8267
        %8269 = vmatpush.msra.mxu0 %v8268
        %v8270 = vand.u32 %v7064, 4294901760
        %v8271 = vsub.f32 %v7064, %v8270
        %8272 = vmatpush.msra.mxu0 %v8271
        %v8273 = vand.u32 %v7063, 4294901760
        %v8274 = vsub.f32 %v7063, %v8273
        %8275 = vmatpush.msra.mxu0 %v8274
        %v8276 = vand.u32 %v7062, 4294901760
        %v8277 = vsub.f32 %v7062, %v8276
        %8278 = vmatpush.msra.mxu0 %v8277
        %v8279 = vand.u32 %v7061, 4294901760
        %v8280 = vsub.f32 %v7061, %v8279
        %8281 = vmatpush.msra.mxu0 %v8280
        %v8282 = vand.u32 %v7060, 4294901760
        %v8283 = vsub.f32 %v7060, %v8282
        %8284 = vmatpush.msra.mxu0 %v8283
        %v8285 = vand.u32 %v7059, 4294901760
        %v8286 = vsub.f32 %v7059, %v8285
        %8287 = vmatpush.msra.mxu0 %v8286
        %v8288 = vand.u32 %v7010, 4294901760
        %v8289 = vsub.f32 %v7010, %v8288
        %8290 = vmatmul.f32.gmra.mxu0 %v8289
        %v8291 = vpop.f32.mrf.mxu0
        %v8292 = vadd.f32 %v8238, %v8291
        %8293 = vdwg.mxu0
        %v8294 = vand.u32 %v7074, 4294901760
        %8295 = vmatpush.msra.mxu0 %v8294
        %v8296 = vand.u32 %v7073, 4294901760
        %8297 = vmatpush.msra.mxu0 %v8296
        %v8298 = vand.u32 %v7072, 4294901760
        %8299 = vmatpush.msra.mxu0 %v8298
        %v8300 = vand.u32 %v7071, 4294901760
        %8301 = vmatpush.msra.mxu0 %v8300
        %v8302 = vand.u32 %v7070, 4294901760
        %8303 = vmatpush.msra.mxu0 %v8302
        %v8304 = vand.u32 %v7069, 4294901760
        %8305 = vmatpush.msra.mxu0 %v8304
        %v8306 = vand.u32 %v7068, 4294901760
        %8307 = vmatpush.msra.mxu0 %v8306
        %v8308 = vand.u32 %v7067, 4294901760
        %8309 = vmatpush.msra.mxu0 %v8308
        %v8310 = vand.u32 %v7066, 4294901760
        %8311 = vmatpush.msra.mxu0 %v8310
        %v8312 = vand.u32 %v7065, 4294901760
        %8313 = vmatpush.msra.mxu0 %v8312
        %v8314 = vand.u32 %v7064, 4294901760
        %8315 = vmatpush.msra.mxu0 %v8314
        %v8316 = vand.u32 %v7063, 4294901760
        %8317 = vmatpush.msra.mxu0 %v8316
        %v8318 = vand.u32 %v7062, 4294901760
        %8319 = vmatpush.msra.mxu0 %v8318
        %v8320 = vand.u32 %v7061, 4294901760
        %8321 = vmatpush.msra.mxu0 %v8320
        %v8322 = vand.u32 %v7060, 4294901760
        %8323 = vmatpush.msra.mxu0 %v8322
        %v8324 = vand.u32 %v7059, 4294901760
        %8325 = vmatpush.msra.mxu0 %v8324
        %v8326 = vand.u32 %v7010, 4294901760
        %v8327 = vsub.f32 %v7010, %v8326
        %v8328 = vand.u32 %v8327, 4294901760
        %8329 = vmatmul.f32.gmra.mxu0 %v8328
        %v8330 = vpop.f32.mrf.mxu0
        %v8331 = vadd.f32 %v8292, %v8330
        %8332 = vdwg.mxu0
        %v8333 = vand.u32 %v7074, 4294901760
        %v8334 = vsub.f32 %v7074, %v8333
        %v8335 = vand.u32 %v8334, 4294901760
        %8336 = vmatpush.msra.mxu0 %v8335
        %v8337 = vand.u32 %v7073, 4294901760
        %v8338 = vsub.f32 %v7073, %v8337
        %v8339 = vand.u32 %v8338, 4294901760
        %8340 = vmatpush.msra.mxu0 %v8339
        %v8341 = vand.u32 %v7072, 4294901760
        %v8342 = vsub.f32 %v7072, %v8341
        %v8343 = vand.u32 %v8342, 4294901760
        %8344 = vmatpush.msra.mxu0 %v8343
        %v8345 = vand.u32 %v7071, 4294901760
        %v8346 = vsub.f32 %v7071, %v8345
        %v8347 = vand.u32 %v8346, 4294901760
        %8348 = vmatpush.msra.mxu0 %v8347
        %v8349 = vand.u32 %v7070, 4294901760
        %v8350 = vsub.f32 %v7070, %v8349
        %v8351 = vand.u32 %v8350, 4294901760
        %8352 = vmatpush.msra.mxu0 %v8351
        %v8353 = vand.u32 %v7069, 4294901760
        %v8354 = vsub.f32 %v7069, %v8353
        %v8355 = vand.u32 %v8354, 4294901760
        %8356 = vmatpush.msra.mxu0 %v8355
        %v8357 = vand.u32 %v7068, 4294901760
        %v8358 = vsub.f32 %v7068, %v8357
        %v8359 = vand.u32 %v8358, 4294901760
        %8360 = vmatpush.msra.mxu0 %v8359
        %v8361 = vand.u32 %v7067, 4294901760
        %v8362 = vsub.f32 %v7067, %v8361
        %v8363 = vand.u32 %v8362, 4294901760
        %8364 = vmatpush.msra.mxu0 %v8363
        %v8365 = vand.u32 %v7066, 4294901760
        %v8366 = vsub.f32 %v7066, %v8365
        %v8367 = vand.u32 %v8366, 4294901760
        %8368 = vmatpush.msra.mxu0 %v8367
        %v8369 = vand.u32 %v7065, 4294901760
        %v8370 = vsub.f32 %v7065, %v8369
        %v8371 = vand.u32 %v8370, 4294901760
        %8372 = vmatpush.msra.mxu0 %v8371
        %v8373 = vand.u32 %v7064, 4294901760
        %v8374 = vsub.f32 %v7064, %v8373
        %v8375 = vand.u32 %v8374, 4294901760
        %8376 = vmatpush.msra.mxu0 %v8375
        %v8377 = vand.u32 %v7063, 4294901760
        %v8378 = vsub.f32 %v7063, %v8377
        %v8379 = vand.u32 %v8378, 4294901760
        %8380 = vmatpush.msra.mxu0 %v8379
        %v8381 = vand.u32 %v7062, 4294901760
        %v8382 = vsub.f32 %v7062, %v8381
        %v8383 = vand.u32 %v8382, 4294901760
        %8384 = vmatpush.msra.mxu0 %v8383
        %v8385 = vand.u32 %v7061, 4294901760
        %v8386 = vsub.f32 %v7061, %v8385
        %v8387 = vand.u32 %v8386, 4294901760
        %8388 = vmatpush.msra.mxu0 %v8387
        %v8389 = vand.u32 %v7060, 4294901760
        %v8390 = vsub.f32 %v7060, %v8389
        %v8391 = vand.u32 %v8390, 4294901760
        %8392 = vmatpush.msra.mxu0 %v8391
        %v8393 = vand.u32 %v7059, 4294901760
        %v8394 = vsub.f32 %v7059, %v8393
        %v8395 = vand.u32 %v8394, 4294901760
        %8396 = vmatpush.msra.mxu0 %v8395
        %v8397 = vand.u32 %v7010, 4294901760
        %8398 = vmatmul.f32.gmra.mxu0 %v8397
        %v8399 = vpop.f32.mrf.mxu0
        %v8400 = vadd.f32 %v8331, %v8399
        %8401 = vdwg.mxu0
        %v8402 = vand.u32 %v7074, 4294901760
        %8403 = vmatpush.msra.mxu0 %v8402
        %v8404 = vand.u32 %v7073, 4294901760
        %8405 = vmatpush.msra.mxu0 %v8404
        %v8406 = vand.u32 %v7072, 4294901760
        %8407 = vmatpush.msra.mxu0 %v8406
        %v8408 = vand.u32 %v7071, 4294901760
        %8409 = vmatpush.msra.mxu0 %v8408
        %v8410 = vand.u32 %v7070, 4294901760
        %8411 = vmatpush.msra.mxu0 %v8410
        %v8412 = vand.u32 %v7069, 4294901760
        %8413 = vmatpush.msra.mxu0 %v8412
        %v8414 = vand.u32 %v7068, 4294901760
        %8415 = vmatpush.msra.mxu0 %v8414
        %v8416 = vand.u32 %v7067, 4294901760
        %8417 = vmatpush.msra.mxu0 %v8416
        %v8418 = vand.u32 %v7066, 4294901760
        %8419 = vmatpush.msra.mxu0 %v8418
        %v8420 = vand.u32 %v7065, 4294901760
        %8421 = vmatpush.msra.mxu0 %v8420
        %v8422 = vand.u32 %v7064, 4294901760
        %8423 = vmatpush.msra.mxu0 %v8422
        %v8424 = vand.u32 %v7063, 4294901760
        %8425 = vmatpush.msra.mxu0 %v8424
        %v8426 = vand.u32 %v7062, 4294901760
        %8427 = vmatpush.msra.mxu0 %v8426
        %v8428 = vand.u32 %v7061, 4294901760
        %8429 = vmatpush.msra.mxu0 %v8428
        %v8430 = vand.u32 %v7060, 4294901760
        %8431 = vmatpush.msra.mxu0 %v8430
        %v8432 = vand.u32 %v7059, 4294901760
        %8433 = vmatpush.msra.mxu0 %v8432
        %v8434 = vand.u32 %v7010, 4294901760
        %8435 = vmatmul.f32.gmra.mxu0 %v8434
        %v8436 = vpop.f32.mrf.mxu0
        %v8437 = vadd.f32 %v8400, %v8436
        %8438 = vdwg.mxu0
        %v8439 = vadd.f32 %v5506, %v8437
        %v8440 = vld [vmem:[%s1382] sm:$0x1]
        %v8442 = vperm.slane %v8440, 0
        %v8444 = vadd.f32 %v8439, %v8442
        %8445 = vst [vmem:[#allocation2] sm:$0xff] %v8444
        %p8446 = scmp.eq.s32.totalorder %s76, 1
        // Predicated region
        $region209: #{weight_decoder_forward.1} parent=127 // pred_check
          %p8447 = pneg %p8446
        $region210: #{weight_decoder_forward.1} parent=127 // pred_check_branch
          %8449 = sbr.rel (%p8447) target = $region212
        $region211: #{weight_decoder_forward.1} parent=127 // pred_region
          %v8450 = vld [vmem:[%s24] sm:$0x1]
          %v8451 = vld [vmem:[%s25] sm:$0x1]
          %8452 = vadd.xlane.f32.xlu0 %v8444
          %v8453 = vpop.xlane.xlu0 %8452
          %v8454 = vmul.f32 %v8453, %v1943
          %v8455 = vsub.f32 %v8444, %v8454
          %v8456 = vmul.f32 %v8455, %v8455
          %8457 = vadd.xlane.f32.xlu0 %v8456
          %v8458 = vpop.xlane.xlu0 %8457
          %v8459 = vmul.f32 %v8458, %v1943
          %v8460 = vadd.f32 %v8459, 1e-05
          %v8461 = vrsqrt.pop %v8460
          %v8462 = vmul.f32 %v8461, %v8460
          %v8463 = vmul.f32 %v8462, %v8461
          %v8464 = vmul.f32 0.5, %v8463
          %v8465 = vsub.f32 1.5, %v8464
          %v8466 = vmul.f32 %v8461, %v8465
          %vm8467 = vweird.f32 %v8460
          %vm8468 = vweird.f32 %v8461
          %vm8469 = vmor %vm8467, %vm8468
          %v8470 = vsel %vm8469, %v8461, %v8466
          %v8471 = vmul.f32 %v8455, %v8470
          %v8473 = vperm.slane %v8450, 0
          %v8475 = vmul.f32 %v8471, %v8473
          %v8477 = vperm.slane %v8451, 0
          %v8479 = vadd.f32 %v8475, %v8477
          %v8480 = vld [vmem:[#allocation32] sm:$0xff]
          %v8481 = vld [vmem:[#allocation32 + $0x8] sm:$0xff]
          %v8482 = vld [vmem:[#allocation32 + $0x10] sm:$0xff]
          %v8483 = vld [vmem:[#allocation32 + $0x18] sm:$0xff]
          %v8484 = vld [vmem:[#allocation32 + $0x20] sm:$0xff]
          %v8485 = vld [vmem:[#allocation32 + $0x28] sm:$0xff]
          %v8486 = vld [vmem:[#allocation32 + $0x30] sm:$0xff]
          %v8487 = vld [vmem:[#allocation32 + $0x38] sm:$0xff]
          %v8488 = vld [vmem:[#allocation32 + $0x40] sm:$0xff]
          %v8489 = vld [vmem:[#allocation32 + $0x48] sm:$0xff]
          %v8490 = vld [vmem:[#allocation32 + $0x50] sm:$0xff]
          %v8491 = vld [vmem:[#allocation32 + $0x58] sm:$0xff]
          %v8492 = vld [vmem:[#allocation32 + $0x60] sm:$0xff]
          %v8493 = vld [vmem:[#allocation32 + $0x68] sm:$0xff]
          %v8494 = vld [vmem:[#allocation32 + $0x70] sm:$0xff]
          %v8495 = vld [vmem:[#allocation32 + $0x78] sm:$0xff]
          %v8496 = vand.u32 %v8495, 4294901760
          %8497 = vmatpush.msra.mxu0 %v8496
          %v8498 = vand.u32 %v8494, 4294901760
          %8499 = vmatpush.msra.mxu0 %v8498
          %v8500 = vand.u32 %v8493, 4294901760
          %8501 = vmatpush.msra.mxu0 %v8500
          %v8502 = vand.u32 %v8492, 4294901760
          %8503 = vmatpush.msra.mxu0 %v8502
          %v8504 = vand.u32 %v8491, 4294901760
          %8505 = vmatpush.msra.mxu0 %v8504
          %v8506 = vand.u32 %v8490, 4294901760
          %8507 = vmatpush.msra.mxu0 %v8506
          %v8508 = vand.u32 %v8489, 4294901760
          %8509 = vmatpush.msra.mxu0 %v8508
          %v8510 = vand.u32 %v8488, 4294901760
          %8511 = vmatpush.msra.mxu0 %v8510
          %v8512 = vand.u32 %v8487, 4294901760
          %8513 = vmatpush.msra.mxu0 %v8512
          %v8514 = vand.u32 %v8486, 4294901760
          %8515 = vmatpush.msra.mxu0 %v8514
          %v8516 = vand.u32 %v8485, 4294901760
          %8517 = vmatpush.msra.mxu0 %v8516
          %v8518 = vand.u32 %v8484, 4294901760
          %8519 = vmatpush.msra.mxu0 %v8518
          %v8520 = vand.u32 %v8483, 4294901760
          %8521 = vmatpush.msra.mxu0 %v8520
          %v8522 = vand.u32 %v8482, 4294901760
          %8523 = vmatpush.msra.mxu0 %v8522
          %v8524 = vand.u32 %v8481, 4294901760
          %8525 = vmatpush.msra.mxu0 %v8524
          %v8526 = vand.u32 %v8480, 4294901760
          %8527 = vmatpush.msra.mxu0 %v8526
          %v8528 = vand.u32 %v8479, 4294901760
          %v8529 = vsub.f32 %v8479, %v8528
          %v8530 = vand.u32 %v8529, 4294901760
          %v8531 = vsub.f32 %v8529, %v8530
          %v8532 = vand.u32 %v8531, 4294901760
          %8533 = vmatmul.f32.gmra.mxu0 %v8532
          %v8534 = vpop.f32.mrf.mxu0
          %v8535 = vadd.f32 0.0, %v8534
          %8536 = vdwg.mxu0
          %v8537 = vand.u32 %v8495, 4294901760
          %v8538 = vsub.f32 %v8495, %v8537
          %v8539 = vand.u32 %v8538, 4294901760
          %v8540 = vsub.f32 %v8538, %v8539
          %v8541 = vand.u32 %v8540, 4294901760
          %8542 = vmatpush.msra.mxu0 %v8541
          %v8543 = vand.u32 %v8494, 4294901760
          %v8544 = vsub.f32 %v8494, %v8543
          %v8545 = vand.u32 %v8544, 4294901760
          %v8546 = vsub.f32 %v8544, %v8545
          %v8547 = vand.u32 %v8546, 4294901760
          %8548 = vmatpush.msra.mxu0 %v8547
          %v8549 = vand.u32 %v8493, 4294901760
          %v8550 = vsub.f32 %v8493, %v8549
          %v8551 = vand.u32 %v8550, 4294901760
          %v8552 = vsub.f32 %v8550, %v8551
          %v8553 = vand.u32 %v8552, 4294901760
          %8554 = vmatpush.msra.mxu0 %v8553
          %v8555 = vand.u32 %v8492, 4294901760
          %v8556 = vsub.f32 %v8492, %v8555
          %v8557 = vand.u32 %v8556, 4294901760
          %v8558 = vsub.f32 %v8556, %v8557
          %v8559 = vand.u32 %v8558, 4294901760
          %8560 = vmatpush.msra.mxu0 %v8559
          %v8561 = vand.u32 %v8491, 4294901760
          %v8562 = vsub.f32 %v8491, %v8561
          %v8563 = vand.u32 %v8562, 4294901760
          %v8564 = vsub.f32 %v8562, %v8563
          %v8565 = vand.u32 %v8564, 4294901760
          %8566 = vmatpush.msra.mxu0 %v8565
          %v8567 = vand.u32 %v8490, 4294901760
          %v8568 = vsub.f32 %v8490, %v8567
          %v8569 = vand.u32 %v8568, 4294901760
          %v8570 = vsub.f32 %v8568, %v8569
          %v8571 = vand.u32 %v8570, 4294901760
          %8572 = vmatpush.msra.mxu0 %v8571
          %v8573 = vand.u32 %v8489, 4294901760
          %v8574 = vsub.f32 %v8489, %v8573
          %v8575 = vand.u32 %v8574, 4294901760
          %v8576 = vsub.f32 %v8574, %v8575
          %v8577 = vand.u32 %v8576, 4294901760
          %8578 = vmatpush.msra.mxu0 %v8577
          %v8579 = vand.u32 %v8488, 4294901760
          %v8580 = vsub.f32 %v8488, %v8579
          %v8581 = vand.u32 %v8580, 4294901760
          %v8582 = vsub.f32 %v8580, %v8581
          %v8583 = vand.u32 %v8582, 4294901760
          %8584 = vmatpush.msra.mxu0 %v8583
          %v8585 = vand.u32 %v8487, 4294901760
          %v8586 = vsub.f32 %v8487, %v8585
          %v8587 = vand.u32 %v8586, 4294901760
          %v8588 = vsub.f32 %v8586, %v8587
          %v8589 = vand.u32 %v8588, 4294901760
          %8590 = vmatpush.msra.mxu0 %v8589
          %v8591 = vand.u32 %v8486, 4294901760
          %v8592 = vsub.f32 %v8486, %v8591
          %v8593 = vand.u32 %v8592, 4294901760
          %v8594 = vsub.f32 %v8592, %v8593
          %v8595 = vand.u32 %v8594, 4294901760
          %8596 = vmatpush.msra.mxu0 %v8595
          %v8597 = vand.u32 %v8485, 4294901760
          %v8598 = vsub.f32 %v8485, %v8597
          %v8599 = vand.u32 %v8598, 4294901760
          %v8600 = vsub.f32 %v8598, %v8599
          %v8601 = vand.u32 %v8600, 4294901760
          %8602 = vmatpush.msra.mxu0 %v8601
          %v8603 = vand.u32 %v8484, 4294901760
          %v8604 = vsub.f32 %v8484, %v8603
          %v8605 = vand.u32 %v8604, 4294901760
          %v8606 = vsub.f32 %v8604, %v8605
          %v8607 = vand.u32 %v8606, 4294901760
          %8608 = vmatpush.msra.mxu0 %v8607
          %v8609 = vand.u32 %v8483, 4294901760
          %v8610 = vsub.f32 %v8483, %v8609
          %v8611 = vand.u32 %v8610, 4294901760
          %v8612 = vsub.f32 %v8610, %v8611
          %v8613 = vand.u32 %v8612, 4294901760
          %8614 = vmatpush.msra.mxu0 %v8613
          %v8615 = vand.u32 %v8482, 4294901760
          %v8616 = vsub.f32 %v8482, %v8615
          %v8617 = vand.u32 %v8616, 4294901760
          %v8618 = vsub.f32 %v8616, %v8617
          %v8619 = vand.u32 %v8618, 4294901760
          %8620 = vmatpush.msra.mxu0 %v8619
          %v8621 = vand.u32 %v8481, 4294901760
          %v8622 = vsub.f32 %v8481, %v8621
          %v8623 = vand.u32 %v8622, 4294901760
          %v8624 = vsub.f32 %v8622, %v8623
          %v8625 = vand.u32 %v8624, 4294901760
          %8626 = vmatpush.msra.mxu0 %v8625
          %v8627 = vand.u32 %v8480, 4294901760
          %v8628 = vsub.f32 %v8480, %v8627
          %v8629 = vand.u32 %v8628, 4294901760
          %v8630 = vsub.f32 %v8628, %v8629
          %v8631 = vand.u32 %v8630, 4294901760
          %8632 = vmatpush.msra.mxu0 %v8631
          %v8633 = vand.u32 %v8479, 4294901760
          %8634 = vmatmul.f32.gmra.mxu0 %v8633
          %v8635 = vpop.f32.mrf.mxu0
          %v8636 = vadd.f32 %v8535, %v8635
          %8637 = vdwg.mxu0
          %v8638 = vand.u32 %v8495, 4294901760
          %v8639 = vsub.f32 %v8495, %v8638
          %8640 = vmatpush.msra.mxu0 %v8639
          %v8641 = vand.u32 %v8494, 4294901760
          %v8642 = vsub.f32 %v8494, %v8641
          %8643 = vmatpush.msra.mxu0 %v8642
          %v8644 = vand.u32 %v8493, 4294901760
          %v8645 = vsub.f32 %v8493, %v8644
          %8646 = vmatpush.msra.mxu0 %v8645
          %v8647 = vand.u32 %v8492, 4294901760
          %v8648 = vsub.f32 %v8492, %v8647
          %8649 = vmatpush.msra.mxu0 %v8648
          %v8650 = vand.u32 %v8491, 4294901760
          %v8651 = vsub.f32 %v8491, %v8650
          %8652 = vmatpush.msra.mxu0 %v8651
          %v8653 = vand.u32 %v8490, 4294901760
          %v8654 = vsub.f32 %v8490, %v8653
          %8655 = vmatpush.msra.mxu0 %v8654
          %v8656 = vand.u32 %v8489, 4294901760
          %v8657 = vsub.f32 %v8489, %v8656
          %8658 = vmatpush.msra.mxu0 %v8657
          %v8659 = vand.u32 %v8488, 4294901760
          %v8660 = vsub.f32 %v8488, %v8659
          %8661 = vmatpush.msra.mxu0 %v8660
          %v8662 = vand.u32 %v8487, 4294901760
          %v8663 = vsub.f32 %v8487, %v8662
          %8664 = vmatpush.msra.mxu0 %v8663
          %v8665 = vand.u32 %v8486, 4294901760
          %v8666 = vsub.f32 %v8486, %v8665
          %8667 = vmatpush.msra.mxu0 %v8666
          %v8668 = vand.u32 %v8485, 4294901760
          %v8669 = vsub.f32 %v8485, %v8668
          %8670 = vmatpush.msra.mxu0 %v8669
          %v8671 = vand.u32 %v8484, 4294901760
          %v8672 = vsub.f32 %v8484, %v8671
          %8673 = vmatpush.msra.mxu0 %v8672
          %v8674 = vand.u32 %v8483, 4294901760
          %v8675 = vsub.f32 %v8483, %v8674
          %8676 = vmatpush.msra.mxu0 %v8675
          %v8677 = vand.u32 %v8482, 4294901760
          %v8678 = vsub.f32 %v8482, %v8677
          %8679 = vmatpush.msra.mxu0 %v8678
          %v8680 = vand.u32 %v8481, 4294901760
          %v8681 = vsub.f32 %v8481, %v8680
          %8682 = vmatpush.msra.mxu0 %v8681
          %v8683 = vand.u32 %v8480, 4294901760
          %v8684 = vsub.f32 %v8480, %v8683
          %8685 = vmatpush.msra.mxu0 %v8684
          %v8686 = vand.u32 %v8479, 4294901760
          %v8687 = vsub.f32 %v8479, %v8686
          %8688 = vmatmul.f32.gmra.mxu0 %v8687
          %v8689 = vpop.f32.mrf.mxu0
          %v8690 = vadd.f32 %v8636, %v8689
          %8691 = vdwg.mxu0
          %v8692 = vand.u32 %v8495, 4294901760
          %8693 = vmatpush.msra.mxu0 %v8692
          %v8694 = vand.u32 %v8494, 4294901760
          %8695 = vmatpush.msra.mxu0 %v8694
          %v8696 = vand.u32 %v8493, 4294901760
          %8697 = vmatpush.msra.mxu0 %v8696
          %v8698 = vand.u32 %v8492, 4294901760
          %8699 = vmatpush.msra.mxu0 %v8698
          %v8700 = vand.u32 %v8491, 4294901760
          %8701 = vmatpush.msra.mxu0 %v8700
          %v8702 = vand.u32 %v8490, 4294901760
          %8703 = vmatpush.msra.mxu0 %v8702
          %v8704 = vand.u32 %v8489, 4294901760
          %8705 = vmatpush.msra.mxu0 %v8704
          %v8706 = vand.u32 %v8488, 4294901760
          %8707 = vmatpush.msra.mxu0 %v8706
          %v8708 = vand.u32 %v8487, 4294901760
          %8709 = vmatpush.msra.mxu0 %v8708
          %v8710 = vand.u32 %v8486, 4294901760
          %8711 = vmatpush.msra.mxu0 %v8710
          %v8712 = vand.u32 %v8485, 4294901760
          %8713 = vmatpush.msra.mxu0 %v8712
          %v8714 = vand.u32 %v8484, 4294901760
          %8715 = vmatpush.msra.mxu0 %v8714
          %v8716 = vand.u32 %v8483, 4294901760
          %8717 = vmatpush.msra.mxu0 %v8716
          %v8718 = vand.u32 %v8482, 4294901760
          %8719 = vmatpush.msra.mxu0 %v8718
          %v8720 = vand.u32 %v8481, 4294901760
          %8721 = vmatpush.msra.mxu0 %v8720
          %v8722 = vand.u32 %v8480, 4294901760
          %8723 = vmatpush.msra.mxu0 %v8722
          %v8724 = vand.u32 %v8479, 4294901760
          %v8725 = vsub.f32 %v8479, %v8724
          %v8726 = vand.u32 %v8725, 4294901760
          %8727 = vmatmul.f32.gmra.mxu0 %v8726
          %v8728 = vpop.f32.mrf.mxu0
          %v8729 = vadd.f32 %v8690, %v8728
          %8730 = vdwg.mxu0
          %v8731 = vand.u32 %v8495, 4294901760
          %v8732 = vsub.f32 %v8495, %v8731
          %v8733 = vand.u32 %v8732, 4294901760
          %8734 = vmatpush.msra.mxu0 %v8733
          %v8735 = vand.u32 %v8494, 4294901760
          %v8736 = vsub.f32 %v8494, %v8735
          %v8737 = vand.u32 %v8736, 4294901760
          %8738 = vmatpush.msra.mxu0 %v8737
          %v8739 = vand.u32 %v8493, 4294901760
          %v8740 = vsub.f32 %v8493, %v8739
          %v8741 = vand.u32 %v8740, 4294901760
          %8742 = vmatpush.msra.mxu0 %v8741
          %v8743 = vand.u32 %v8492, 4294901760
          %v8744 = vsub.f32 %v8492, %v8743
          %v8745 = vand.u32 %v8744, 4294901760
          %8746 = vmatpush.msra.mxu0 %v8745
          %v8747 = vand.u32 %v8491, 4294901760
          %v8748 = vsub.f32 %v8491, %v8747
          %v8749 = vand.u32 %v8748, 4294901760
          %8750 = vmatpush.msra.mxu0 %v8749
          %v8751 = vand.u32 %v8490, 4294901760
          %v8752 = vsub.f32 %v8490, %v8751
          %v8753 = vand.u32 %v8752, 4294901760
          %8754 = vmatpush.msra.mxu0 %v8753
          %v8755 = vand.u32 %v8489, 4294901760
          %v8756 = vsub.f32 %v8489, %v8755
          %v8757 = vand.u32 %v8756, 4294901760
          %8758 = vmatpush.msra.mxu0 %v8757
          %v8759 = vand.u32 %v8488, 4294901760
          %v8760 = vsub.f32 %v8488, %v8759
          %v8761 = vand.u32 %v8760, 4294901760
          %8762 = vmatpush.msra.mxu0 %v8761
          %v8763 = vand.u32 %v8487, 4294901760
          %v8764 = vsub.f32 %v8487, %v8763
          %v8765 = vand.u32 %v8764, 4294901760
          %8766 = vmatpush.msra.mxu0 %v8765
          %v8767 = vand.u32 %v8486, 4294901760
          %v8768 = vsub.f32 %v8486, %v8767
          %v8769 = vand.u32 %v8768, 4294901760
          %8770 = vmatpush.msra.mxu0 %v8769
          %v8771 = vand.u32 %v8485, 4294901760
          %v8772 = vsub.f32 %v8485, %v8771
          %v8773 = vand.u32 %v8772, 4294901760
          %8774 = vmatpush.msra.mxu0 %v8773
          %v8775 = vand.u32 %v8484, 4294901760
          %v8776 = vsub.f32 %v8484, %v8775
          %v8777 = vand.u32 %v8776, 4294901760
          %8778 = vmatpush.msra.mxu0 %v8777
          %v8779 = vand.u32 %v8483, 4294901760
          %v8780 = vsub.f32 %v8483, %v8779
          %v8781 = vand.u32 %v8780, 4294901760
          %8782 = vmatpush.msra.mxu0 %v8781
          %v8783 = vand.u32 %v8482, 4294901760
          %v8784 = vsub.f32 %v8482, %v8783
          %v8785 = vand.u32 %v8784, 4294901760
          %8786 = vmatpush.msra.mxu0 %v8785
          %v8787 = vand.u32 %v8481, 4294901760
          %v8788 = vsub.f32 %v8481, %v8787
          %v8789 = vand.u32 %v8788, 4294901760
          %8790 = vmatpush.msra.mxu0 %v8789
          %v8791 = vand.u32 %v8480, 4294901760
          %v8792 = vsub.f32 %v8480, %v8791
          %v8793 = vand.u32 %v8792, 4294901760
          %8794 = vmatpush.msra.mxu0 %v8793
          %v8795 = vand.u32 %v8479, 4294901760
          %8796 = vmatmul.f32.gmra.mxu0 %v8795
          %v8797 = vpop.f32.mrf.mxu0
          %v8798 = vadd.f32 %v8729, %v8797
          %8799 = vdwg.mxu0
          %v8800 = vand.u32 %v8495, 4294901760
          %8801 = vmatpush.msra.mxu0 %v8800
          %v8802 = vand.u32 %v8494, 4294901760
          %8803 = vmatpush.msra.mxu0 %v8802
          %v8804 = vand.u32 %v8493, 4294901760
          %8805 = vmatpush.msra.mxu0 %v8804
          %v8806 = vand.u32 %v8492, 4294901760
          %8807 = vmatpush.msra.mxu0 %v8806
          %v8808 = vand.u32 %v8491, 4294901760
          %8809 = vmatpush.msra.mxu0 %v8808
          %v8810 = vand.u32 %v8490, 4294901760
          %8811 = vmatpush.msra.mxu0 %v8810
          %v8812 = vand.u32 %v8489, 4294901760
          %8813 = vmatpush.msra.mxu0 %v8812
          %v8814 = vand.u32 %v8488, 4294901760
          %8815 = vmatpush.msra.mxu0 %v8814
          %v8816 = vand.u32 %v8487, 4294901760
          %8817 = vmatpush.msra.mxu0 %v8816
          %v8818 = vand.u32 %v8486, 4294901760
          %8819 = vmatpush.msra.mxu0 %v8818
          %v8820 = vand.u32 %v8485, 4294901760
          %8821 = vmatpush.msra.mxu0 %v8820
          %v8822 = vand.u32 %v8484, 4294901760
          %8823 = vmatpush.msra.mxu0 %v8822
          %v8824 = vand.u32 %v8483, 4294901760
          %8825 = vmatpush.msra.mxu0 %v8824
          %v8826 = vand.u32 %v8482, 4294901760
          %8827 = vmatpush.msra.mxu0 %v8826
          %v8828 = vand.u32 %v8481, 4294901760
          %8829 = vmatpush.msra.mxu0 %v8828
          %v8830 = vand.u32 %v8480, 4294901760
          %8831 = vmatpush.msra.mxu0 %v8830
          %v8832 = vand.u32 %v8479, 4294901760
          %8833 = vmatmul.f32.gmra.mxu0 %v8832
          %v8834 = vpop.f32.mrf.mxu0
          %v8835 = vadd.f32 %v8798, %v8834
          %8836 = vdwg.mxu0
          %v8837 = vld [vmem:[%s1222] sm:$0xff]
          %v8838 = vadd.f32 %v8837, %v8835
          %8839 = vst [vmem:[%s1549] sm:$0xff] %v8838
        $region212: #{weight_decoder_forward.1} parent=127 // pred_fallthru
          _
        %s8840 = sand.u32 %s768, 1
        %s8841 = scalar_lea.sflag [#allocation5], %s8840
        %s8842 = sand.u32 %s768, 1
        %s8843 = smul.addr %s8842, 8
        %s8844 = scalar_lea.vmem [#allocation33], %s8843
        // Predicated region
        $region213: #{weight_decoder_forward.1} parent=127 // pred_check
          %p8845 = pneg %p778
        $region214: #{weight_decoder_forward.1} parent=127 // pred_check_branch
          %8847 = sbr.rel (%p8845) target = $region216
        $region215: #{weight_decoder_forward.1} parent=127 // pred_region
          %8849 = vsyncadd %s8841, 0
          %s8850 = smul.addr %s75, 8
          %s8851 = scalar_lea.hbm %s27, %s8850
          %s8853 = sshll.u32 %s8844, 4
          %s8854 = int_to_ptr.vmem [resolvable:$true] %s8853
          %s8855 = sshll.u32 %s8851, 4
          %s8856 = int_to_ptr.hbm [resolvable:$true] %s8855
          %8858 = dma.vmem_to_hbm [thread:$0]  %s8854, 128, %s8856, %s8841
        $region216: #{weight_decoder_forward.1} parent=127 // pred_fallthru
          _
      $region128: #{weight_decoder_forward.1} parent=5 // pred_fallthru
        _
      %p8859 = scmp.le.s32.totalorder 2, %s66
      // Predicated region
      $region217: #{weight_decoder_forward.1} parent=5 // pred_check
        %p8860 = pneg %p8859
      $region218: #{weight_decoder_forward.1} parent=5 // pred_check_branch
        %8862 = sbr.rel (%p8860) target = $region220
      $region219: #{weight_decoder_forward.1} parent=5 // pred_region
        %s8863 = ssub.s32 %s66, 2
        // Predicated region
        $region221: #{weight_decoder_forward.1} parent=219 // pred_check
          %p8864 = pneg %p784
        $region222: #{weight_decoder_forward.1} parent=219 // pred_check_branch
          %8866 = sbr.rel (%p8864) target = $region224
        $region223: #{weight_decoder_forward.1} parent=219 // pred_region
          %s8867 = sand.u32 %s769, 1
          %s8868 = scalar_lea.sflag [#allocation5], %s8867
          %s8869 = sand.u32 %s769, 1
          %s8870 = smul.addr %s8869, 8
          %s8871 = scalar_lea.vmem [#allocation33], %s8870
          %8873 = dma.done %s8868, 128
        $region224: #{weight_decoder_forward.1} parent=219 // pred_fallthru
          _
      $region220: #{weight_decoder_forward.1} parent=5 // pred_fallthru
        _
    $region6: #{weight_decoder_forward.1} parent=1 // loop_footer
      %s70 = sadd.s32 1, %s66
    $region7: #{weight_decoder_forward.1} parent=1 // loop_footer_branch
      %65 = sbr.rel target = $region3
    $region8: #{weight_decoder_forward.1} parent=1 // loop_exit
      _
    %8874 = vsyncpa [#allocation4], 1
    %s8875 = scalar_lea.sflag [#allocation4], 1
    %8876 = vsyncpa %s8875, 1
    %8877 = vsyncpa [#allocation7], 1
    %s8878 = scalar_lea.sflag [#allocation7], 1
    %8879 = vsyncpa %s8878, 1
    %8880 = vsyncpa [#allocation10], 1
    %s8881 = scalar_lea.sflag [#allocation10], 1
    %8882 = vsyncpa %s8881, 1
    %8883 = vsyncpa [#allocation13], 1
    %s8884 = scalar_lea.sflag [#allocation13], 1
    %8885 = vsyncpa %s8884, 1
    %8886 = vsyncpa [#allocation16], 1
    %s8887 = scalar_lea.sflag [#allocation16], 1
    %8888 = vsyncpa %s8887, 1
    %8889 = vsyncpa [#allocation19], 1
    %s8890 = scalar_lea.sflag [#allocation19], 1
    %8891 = vsyncpa %s8890, 1
    %8892 = vsyncpa [#allocation22], 1
    %s8893 = scalar_lea.sflag [#allocation22], 1
    %8894 = vsyncpa %s8893, 1
    %8895 = vsyncpa [#allocation25], 1
    %s8896 = scalar_lea.sflag [#allocation25], 1
    %8897 = vsyncpa %s8896, 1
    %8898 = vsyncpa [#allocation28], 1
    %s8899 = scalar_lea.sflag [#allocation28], 1
    %8900 = vsyncpa %s8899, 1
    %8901 = vsyncpa [#allocation31], 1
    %s8902 = scalar_lea.sflag [#allocation31], 1
    %8903 = vsyncpa %s8902, 1
    %8904 = vsyncpa [#allocation5], 1
    %s8905 = scalar_lea.sflag [#allocation5], 1
    %8906 = vsyncpa %s8905, 1

</llo_original>
